<compile_context>
chip_gen: v5e
topology: v5e:2x2
jax: 0.10.0
libtpu: 0.0.40
codegen_flags: <defaults>
</compile_context>

<pallas_src>
import functools
import math

import jax
import jax.numpy as jnp
from jax.experimental import pallas as pl
from jax.experimental.pallas import tpu as pltpu


_MAX_LANES_PER_TILE = 2048  # 2F=128 sublanes x 2048 lanes x 4 B = 1 MiB / block


def _row_group(w: int, max_group_lanes: int = 512) -> int:
    """Smallest g such that g*w is a multiple of 128 (lane-aligned stores).

    Falls back to 1 (per-row, possibly masked stores) when that group would be
    unreasonably wide (w with no power-of-two factors).  Perf-only fallback.
    """
    g = 128 // math.gcd(w, 128)
    if g * w > max_group_lanes:
        return 1
    return g


def _pick_rows_per_tile(h: int, w: int, group: int,
                        max_lanes: int = _MAX_LANES_PER_TILE) -> int:
    """Rows per grid tile.

    Prefers (in order): tile fits the lane budget, at least two tiles (v7x
    megacore split + compute/writeback overlap), an even tile count, then the
    largest tile.  Requires exact division of h; if the resulting lane width is
    not a multiple of 128, falls back to a single full-extent tile (BlockSpec
    last-dim constraint) — correctness-preserving, perf-only degradation.
    """
    candidates = [r for r in range(1, h + 1) if h % r == 0 and r % group == 0]
    if not candidates:
        candidates = [r for r in range(1, h + 1) if h % r == 0]

    def key(r):
        fits = r * w <= max_lanes
        two_tiles = (h // r) >= 2
        even_tiles = (h // r) % 2 == 0
        return (fits, two_tiles, even_tiles, r)

    r = max(candidates, key=key)
    if (r * w) % 128 != 0 and r != h:
        # Last block dim must be a multiple of 128 or the full axis extent.
        r = h
    return r


def _pe_kernel(g_ref, out_ref, *, h, w, rows_per_tile, group):
    """g_ref:   (F, 2) Gaussian frequency matrix, transposed, 2*pi pre-folded
               (column 0 = x frequencies, column 1 = y frequencies).
    out_ref: (2F, rows_per_tile*w) output tile in CHW-flat layout; rows [0, F)
             hold sin, rows [F, 2F) hold cos.  Tile t covers image rows
             [t*rows_per_tile, (t+1)*rows_per_tile), columns flattened as
             p = r*w + j on the lane axis.
    """
    f = g_ref.shape[0]
    gx = g_ref[:, 0:1]                                  # (F, 1), includes 2*pi
    gy = g_ref[:, 1:2]                                  # (F, 1)

    # ---- separable angle tables: the only transcendentals in the kernel ----
    # A[c, j] = 2*pi*gx[c] * (2*(j+0.5)/w - 1)                      -> (F, w)
    col = jax.lax.broadcasted_iota(jnp.int32, (1, w), 1).astype(jnp.float32)
    x = (col + 0.5) * (2.0 / w) - 1.0
    a = gx * x
    sin_a = jnp.sin(a)                                  # (F, w)
    cos_a = jnp.cos(a)

    # B[c, r] = 2*pi*gy[c] * (2*(i+0.5)/h - 1), i = tile_row0 + r  -> (F, R)
    row0 = (pl.program_id(0) * rows_per_tile).astype(jnp.float32)
    row = jax.lax.broadcasted_iota(
        jnp.int32, (1, rows_per_tile), 1).astype(jnp.float32) + row0
    y = (row + 0.5) * (2.0 / h) - 1.0
    b = gy * y
    sin_b = jnp.sin(b)                                  # (F, R)
    cos_b = jnp.cos(b)

    # ---- combine via the angle-addition identity, `group` image rows at a
    #      time so each store is a lane-aligned slice of >= 128 lanes, and no
    #      (F, T) temporary is ever materialized. ----
    gw = group * w
    for q in range(rows_per_tile // group):
        sin_rows = []
        cos_rows = []
        for g_i in range(group):
            r = q * group + g_i
            sb = sin_b[:, r:r + 1]                      # (F, 1)
            cb = cos_b[:, r:r + 1]                      # (F, 1)
            sin_rows.append(sin_a * cb + cos_a * sb)    # (F, w) broadcast FMAs
            cos_rows.append(cos_a * cb - sin_a * sb)    # (F, w)
        if group > 1:
            sin_grp = jnp.concatenate(sin_rows, axis=1)  # (F, group*w)
            cos_grp = jnp.concatenate(cos_rows, axis=1)
        else:
            sin_grp = sin_rows[0]
            cos_grp = cos_rows[0]
        out_ref[0:f, q * gw:(q + 1) * gw] = sin_grp      # lane-aligned stores
        out_ref[f:, q * gw:(q + 1) * gw] = cos_grp


def position_embedding_random(size, gaussian_matrix):
    """JAX/Pallas equivalent of PositionEmbeddingRandom.forward(size).

    Returns (2*num_pos_feats, h, w) float32, matching torch's pe.permute(2, 0, 1).
    """
    h, w = size
    two, f = gaussian_matrix.shape
    assert two == 2
    hw = h * w

    # Fold the 2*pi scale into the tiny frequency matrix once, outside the
    # kernel; transpose so frequencies sit on sublanes.
    g = (gaussian_matrix.astype(jnp.float32) * (2.0 * math.pi)).T   # (F, 2)

    group = _row_group(w)
    rows_per_tile = _pick_rows_per_tile(h, w, group)
    if rows_per_tile % group != 0:
        group = 1            # perf-only fallback: per-row (masked) stores
    n_tiles = h // rows_per_tile
    tile_lanes = rows_per_tile * w

    kernel = functools.partial(
        _pe_kernel, h=h, w=w, rows_per_tile=rows_per_tile, group=group)

    pe_flat = pl.pallas_call(
        kernel,
        grid=(n_tiles,),
        in_specs=[pl.BlockSpec((f, 2), lambda t: (0, 0))],
        out_specs=pl.BlockSpec((2 * f, tile_lanes), lambda t: (0, t)),
        out_shape=jax.ShapeDtypeStruct((2 * f, hw), jnp.float32),
        compiler_params=pltpu.CompilerParams(
            dimension_semantics=("parallel",),
        ),
    )(g)

    # Contiguous (free) reshape, NOT a transpose: (2F, h*w) -> (2F, h, w).
    return pe_flat.reshape(2 * f, h, w)


def _reference(size, gaussian_matrix):
    """Pure-JAX reference mirroring the PyTorch module exactly."""
    h, w = size
    grid = jnp.ones((h, w), jnp.float32)
    y_embed = (jnp.cumsum(grid, axis=0) - 0.5) / h
    x_embed = (jnp.cumsum(grid, axis=1) - 0.5) / w
    coords = jnp.stack([x_embed, y_embed], axis=-1)          # (h, w, 2)
    coords = 2.0 * coords - 1.0
    coords = coords @ gaussian_matrix                         # (h, w, F)
    coords = 2.0 * math.pi * coords
    pe = jnp.concatenate([jnp.sin(coords), jnp.cos(coords)], axis=-1)
    return jnp.transpose(pe, (2, 0, 1))


if __name__ == "__main__":
    num_pos_feats = 64
    scale = 1.0          # scale=None / <=0 maps to 1.0 in the module
    h, w = 64, 64        # canonical grid for this module; h*w = 4096 -> 2 tiles

    # Deterministic stand-in for `scale * torch.randn((2, num_pos_feats))`
    key = jax.random.PRNGKey(0)
    gaussian_matrix = scale * jax.random.normal(
        key, (2, num_pos_feats), dtype=jnp.float32
    )

    out = position_embedding_random((h, w), gaussian_matrix)
    out = jax.block_until_ready(out)

    assert out.shape == (2 * num_pos_feats, h, w)
    assert out.dtype == jnp.float32

    ref = _reference((h, w), gaussian_matrix)
    max_err = float(jnp.max(jnp.abs(out - ref)))
    assert max_err < 1e-4, f"max abs error {max_err}"

    print("KERNEL_OK")
</pallas_src>

<mosaic_0001>
module attributes {stable_mosaic.version = 11 : i64} {
  func.func @_pe_kernel(%arg0: i32, %arg1: memref<64x2xf32, #tpu.memory_space<vmem>>, %arg2: memref<128x2048xf32, #tpu.memory_space<vmem>>) attributes {dimension_semantics = [#tpu.dimension_semantics<parallel>], iteration_bounds = array<i64: 2>, scalar_prefetch = 0 : i64, scratch_operands = 0 : i64, tpu.core_type = #tpu.core_type<tc>, window_params = [{pipeline_mode = #tpu.pipeline_mode<synchronous>, transform_indices = @transform_0, window_bounds = array<i64: 64, 2>}, {transform_indices = @transform_1, window_bounds = array<i64: 128, 2048>}]} {
    %c0 = arith.constant 0 : index
    %c0_0 = arith.constant 0 : index
    %0 = vector.load %arg1[%c0, %c0_0] : memref<64x2xf32, #tpu.memory_space<vmem>>, vector<64x1xf32>
    %c0_1 = arith.constant 0 : index
    %c1 = arith.constant 1 : index
    %1 = vector.load %arg1[%c0_1, %c1] : memref<64x2xf32, #tpu.memory_space<vmem>>, vector<64x1xf32>
    %2 = tpu.iota {dimensions = array<i32: 1>} : vector<1x64xi32>
    %3 = arith.sitofp %2 : vector<1x64xi32> to vector<1x64xf32>
    %cst = arith.constant 5.000000e-01 : f32
    %4 = vector.broadcast %cst : f32 to vector<1x64xf32>
    %5 = arith.addf %3, %4 : vector<1x64xf32>
    %cst_2 = arith.constant 3.125000e-02 : f32
    %6 = vector.broadcast %cst_2 : f32 to vector<1x64xf32>
    %7 = arith.mulf %5, %6 : vector<1x64xf32>
    %cst_3 = arith.constant 1.000000e+00 : f32
    %8 = vector.broadcast %cst_3 : f32 to vector<1x64xf32>
    %9 = arith.subf %7, %8 : vector<1x64xf32>
    %10 = vector.broadcast %0 : vector<64x1xf32> to vector<64x64xf32>
    %11 = vector.broadcast %9 : vector<1x64xf32> to vector<64x64xf32>
    %12 = arith.mulf %10, %11 : vector<64x64xf32>
    %13 = math.sin %12 : vector<64x64xf32>
    %14 = math.cos %12 : vector<64x64xf32>
    %c32_i32 = arith.constant 32 : i32
    %15 = arith.muli %arg0, %c32_i32 : i32
    %16 = arith.sitofp %15 : i32 to f32
    %17 = tpu.iota {dimensions = array<i32: 1>} : vector<1x32xi32>
    %18 = arith.sitofp %17 : vector<1x32xi32> to vector<1x32xf32>
    %19 = vector.broadcast %16 : f32 to vector<1x32xf32>
    %20 = arith.addf %18, %19 : vector<1x32xf32>
    %cst_4 = arith.constant 5.000000e-01 : f32
    %21 = vector.broadcast %cst_4 : f32 to vector<1x32xf32>
    %22 = arith.addf %20, %21 : vector<1x32xf32>
    %cst_5 = arith.constant 3.125000e-02 : f32
    %23 = vector.broadcast %cst_5 : f32 to vector<1x32xf32>
    %24 = arith.mulf %22, %23 : vector<1x32xf32>
    %cst_6 = arith.constant 1.000000e+00 : f32
    %25 = vector.broadcast %cst_6 : f32 to vector<1x32xf32>
    %26 = arith.subf %24, %25 : vector<1x32xf32>
    %27 = vector.broadcast %1 : vector<64x1xf32> to vector<64x32xf32>
    %28 = vector.broadcast %26 : vector<1x32xf32> to vector<64x32xf32>
    %29 = arith.mulf %27, %28 : vector<64x32xf32>
    %30 = math.sin %29 : vector<64x32xf32>
    %31 = math.cos %29 : vector<64x32xf32>
    %32 = vector.extract_strided_slice %30 {offsets = [0, 0], sizes = [64, 1], strides = [1, 1]} : vector<64x32xf32> to vector<64x1xf32>
    %33 = vector.extract_strided_slice %31 {offsets = [0, 0], sizes = [64, 1], strides = [1, 1]} : vector<64x32xf32> to vector<64x1xf32>
    %34 = vector.broadcast %33 : vector<64x1xf32> to vector<64x64xf32>
    %35 = arith.mulf %13, %34 : vector<64x64xf32>
    %36 = vector.broadcast %32 : vector<64x1xf32> to vector<64x64xf32>
    %37 = arith.mulf %14, %36 : vector<64x64xf32>
    %38 = arith.addf %35, %37 : vector<64x64xf32>
    %39 = vector.broadcast %33 : vector<64x1xf32> to vector<64x64xf32>
    %40 = arith.mulf %14, %39 : vector<64x64xf32>
    %41 = vector.broadcast %32 : vector<64x1xf32> to vector<64x64xf32>
    %42 = arith.mulf %13, %41 : vector<64x64xf32>
    %43 = arith.subf %40, %42 : vector<64x64xf32>
    %44 = vector.extract_strided_slice %30 {offsets = [0, 1], sizes = [64, 1], strides = [1, 1]} : vector<64x32xf32> to vector<64x1xf32>
    %45 = vector.extract_strided_slice %31 {offsets = [0, 1], sizes = [64, 1], strides = [1, 1]} : vector<64x32xf32> to vector<64x1xf32>
    %46 = vector.broadcast %45 : vector<64x1xf32> to vector<64x64xf32>
    %47 = arith.mulf %13, %46 : vector<64x64xf32>
    %48 = vector.broadcast %44 : vector<64x1xf32> to vector<64x64xf32>
    %49 = arith.mulf %14, %48 : vector<64x64xf32>
    %50 = arith.addf %47, %49 : vector<64x64xf32>
    %51 = vector.broadcast %45 : vector<64x1xf32> to vector<64x64xf32>
    %52 = arith.mulf %14, %51 : vector<64x64xf32>
    %53 = vector.broadcast %44 : vector<64x1xf32> to vector<64x64xf32>
    %54 = arith.mulf %13, %53 : vector<64x64xf32>
    %55 = arith.subf %52, %54 : vector<64x64xf32>
    %56 = tpu.concatenate %38, %50 in 1 : vector<64x64xf32>, vector<64x64xf32> -> vector<64x128xf32>
    %57 = tpu.concatenate %43, %55 in 1 : vector<64x64xf32>, vector<64x64xf32> -> vector<64x128xf32>
    %c0_7 = arith.constant 0 : index
    %c0_8 = arith.constant 0 : index
    %58 = vector.load %arg2[%c0_7, %c0_8] : memref<128x2048xf32, #tpu.memory_space<vmem>>, vector<64x128xf32>
    tpu.vector_store %arg2[%c0_7, %c0_8], %56 {strides = array<i32>} : memref<128x2048xf32, #tpu.memory_space<vmem>>, vector<64x128xf32>,
    %c64 = arith.constant 64 : index
    %c0_9 = arith.constant 0 : index
    %59 = vector.load %arg2[%c64, %c0_9] : memref<128x2048xf32, #tpu.memory_space<vmem>>, vector<64x128xf32>
    tpu.vector_store %arg2[%c64, %c0_9], %57 {strides = array<i32>} : memref<128x2048xf32, #tpu.memory_space<vmem>>, vector<64x128xf32>,
    %60 = vector.extract_strided_slice %30 {offsets = [0, 2], sizes = [64, 1], strides = [1, 1]} : vector<64x32xf32> to vector<64x1xf32>
    %61 = vector.extract_strided_slice %31 {offsets = [0, 2], sizes = [64, 1], strides = [1, 1]} : vector<64x32xf32> to vector<64x1xf32>
    %62 = vector.broadcast %61 : vector<64x1xf32> to vector<64x64xf32>
    %63 = arith.mulf %13, %62 : vector<64x64xf32>
    %64 = vector.broadcast %60 : vector<64x1xf32> to vector<64x64xf32>
    %65 = arith.mulf %14, %64 : vector<64x64xf32>
    %66 = arith.addf %63, %65 : vector<64x64xf32>
    %67 = vector.broadcast %61 : vector<64x1xf32> to vector<64x64xf32>
    %68 = arith.mulf %14, %67 : vector<64x64xf32>
    %69 = vector.broadcast %60 : vector<64x1xf32> to vector<64x64xf32>
    %70 = arith.mulf %13, %69 : vector<64x64xf32>
    %71 = arith.subf %68, %70 : vector<64x64xf32>
    %72 = vector.extract_strided_slice %30 {offsets = [0, 3], sizes = [64, 1], strides = [1, 1]} : vector<64x32xf32> to vector<64x1xf32>
    %73 = vector.extract_strided_slice %31 {offsets = [0, 3], sizes = [64, 1], strides = [1, 1]} : vector<64x32xf32> to vector<64x1xf32>
    %74 = vector.broadcast %73 : vector<64x1xf32> to vector<64x64xf32>
    %75 = arith.mulf %13, %74 : vector<64x64xf32>
    %76 = vector.broadcast %72 : vector<64x1xf32> to vector<64x64xf32>
    %77 = arith.mulf %14, %76 : vector<64x64xf32>
    %78 = arith.addf %75, %77 : vector<64x64xf32>
    %79 = vector.broadcast %73 : vector<64x1xf32> to vector<64x64xf32>
    %80 = arith.mulf %14, %79 : vector<64x64xf32>
    %81 = vector.broadcast %72 : vector<64x1xf32> to vector<64x64xf32>
    %82 = arith.mulf %13, %81 : vector<64x64xf32>
    %83 = arith.subf %80, %82 : vector<64x64xf32>
    %84 = tpu.concatenate %66, %78 in 1 : vector<64x64xf32>, vector<64x64xf32> -> vector<64x128xf32>
    %85 = tpu.concatenate %71, %83 in 1 : vector<64x64xf32>, vector<64x64xf32> -> vector<64x128xf32>
    %c0_10 = arith.constant 0 : index
    %c128 = arith.constant 128 : index
    %86 = vector.load %arg2[%c0_10, %c128] : memref<128x2048xf32, #tpu.memory_space<vmem>>, vector<64x128xf32>
    tpu.vector_store %arg2[%c0_10, %c128], %84 {strides = array<i32>} : memref<128x2048xf32, #tpu.memory_space<vmem>>, vector<64x128xf32>,
    %c64_11 = arith.constant 64 : index
    %c128_12 = arith.constant 128 : index
    %87 = vector.load %arg2[%c64_11, %c128_12] : memref<128x2048xf32, #tpu.memory_space<vmem>>, vector<64x128xf32>
    tpu.vector_store %arg2[%c64_11, %c128_12], %85 {strides = array<i32>} : memref<128x2048xf32, #tpu.memory_space<vmem>>, vector<64x128xf32>,
    %88 = vector.extract_strided_slice %30 {offsets = [0, 4], sizes = [64, 1], strides = [1, 1]} : vector<64x32xf32> to vector<64x1xf32>
    %89 = vector.extract_strided_slice %31 {offsets = [0, 4], sizes = [64, 1], strides = [1, 1]} : vector<64x32xf32> to vector<64x1xf32>
    %90 = vector.broadcast %89 : vector<64x1xf32> to vector<64x64xf32>
    %91 = arith.mulf %13, %90 : vector<64x64xf32>
    %92 = vector.broadcast %88 : vector<64x1xf32> to vector<64x64xf32>
    %93 = arith.mulf %14, %92 : vector<64x64xf32>
    %94 = arith.addf %91, %93 : vector<64x64xf32>
    %95 = vector.broadcast %89 : vector<64x1xf32> to vector<64x64xf32>
    %96 = arith.mulf %14, %95 : vector<64x64xf32>
    %97 = vector.broadcast %88 : vector<64x1xf32> to vector<64x64xf32>
    %98 = arith.mulf %13, %97 : vector<64x64xf32>
    %99 = arith.subf %96, %98 : vector<64x64xf32>
    %100 = vector.extract_strided_slice %30 {offsets = [0, 5], sizes = [64, 1], strides = [1, 1]} : vector<64x32xf32> to vector<64x1xf32>
    %101 = vector.extract_strided_slice %31 {offsets = [0, 5], sizes = [64, 1], strides = [1, 1]} : vector<64x32xf32> to vector<64x1xf32>
    %102 = vector.broadcast %101 : vector<64x1xf32> to vector<64x64xf32>
    %103 = arith.mulf %13, %102 : vector<64x64xf32>
    %104 = vector.broadcast %100 : vector<64x1xf32> to vector<64x64xf32>
    %105 = arith.mulf %14, %104 : vector<64x64xf32>
    %106 = arith.addf %103, %105 : vector<64x64xf32>
    %107 = vector.broadcast %101 : vector<64x1xf32> to vector<64x64xf32>
    %108 = arith.mulf %14, %107 : vector<64x64xf32>
    %109 = vector.broadcast %100 : vector<64x1xf32> to vector<64x64xf32>
    %110 = arith.mulf %13, %109 : vector<64x64xf32>
    %111 = arith.subf %108, %110 : vector<64x64xf32>
    %112 = tpu.concatenate %94, %106 in 1 : vector<64x64xf32>, vector<64x64xf32> -> vector<64x128xf32>
    %113 = tpu.concatenate %99, %111 in 1 : vector<64x64xf32>, vector<64x64xf32> -> vector<64x128xf32>
    %c0_13 = arith.constant 0 : index
    %c256 = arith.constant 256 : index
    %114 = vector.load %arg2[%c0_13, %c256] : memref<128x2048xf32, #tpu.memory_space<vmem>>, vector<64x128xf32>
    tpu.vector_store %arg2[%c0_13, %c256], %112 {strides = array<i32>} : memref<128x2048xf32, #tpu.memory_space<vmem>>, vector<64x128xf32>,
    %c64_14 = arith.constant 64 : index
    %c256_15 = arith.constant 256 : index
    %115 = vector.load %arg2[%c64_14, %c256_15] : memref<128x2048xf32, #tpu.memory_space<vmem>>, vector<64x128xf32>
    tpu.vector_store %arg2[%c64_14, %c256_15], %113 {strides = array<i32>} : memref<128x2048xf32, #tpu.memory_space<vmem>>, vector<64x128xf32>,
    %116 = vector.extract_strided_slice %30 {offsets = [0, 6], sizes = [64, 1], strides = [1, 1]} : vector<64x32xf32> to vector<64x1xf32>
    %117 = vector.extract_strided_slice %31 {offsets = [0, 6], sizes = [64, 1], strides = [1, 1]} : vector<64x32xf32> to vector<64x1xf32>
    %118 = vector.broadcast %117 : vector<64x1xf32> to vector<64x64xf32>
    %119 = arith.mulf %13, %118 : vector<64x64xf32>
    %120 = vector.broadcast %116 : vector<64x1xf32> to vector<64x64xf32>
    %121 = arith.mulf %14, %120 : vector<64x64xf32>
    %122 = arith.addf %119, %121 : vector<64x64xf32>
    %123 = vector.broadcast %117 : vector<64x1xf32> to vector<64x64xf32>
    %124 = arith.mulf %14, %123 : vector<64x64xf32>
    %125 = vector.broadcast %116 : vector<64x1xf32> to vector<64x64xf32>
    %126 = arith.mulf %13, %125 : vector<64x64xf32>
    %127 = arith.subf %124, %126 : vector<64x64xf32>
    %128 = vector.extract_strided_slice %30 {offsets = [0, 7], sizes = [64, 1], strides = [1, 1]} : vector<64x32xf32> to vector<64x1xf32>
    %129 = vector.extract_strided_slice %31 {offsets = [0, 7], sizes = [64, 1], strides = [1, 1]} : vector<64x32xf32> to vector<64x1xf32>
    %130 = vector.broadcast %129 : vector<64x1xf32> to vector<64x64xf32>
    %131 = arith.mulf %13, %130 : vector<64x64xf32>
    %132 = vector.broadcast %128 : vector<64x1xf32> to vector<64x64xf32>
    %133 = arith.mulf %14, %132 : vector<64x64xf32>
    %134 = arith.addf %131, %133 : vector<64x64xf32>
    %135 = vector.broadcast %129 : vector<64x1xf32> to vector<64x64xf32>
    %136 = arith.mulf %14, %135 : vector<64x64xf32>
    %137 = vector.broadcast %128 : vector<64x1xf32> to vector<64x64xf32>
    %138 = arith.mulf %13, %137 : vector<64x64xf32>
    %139 = arith.subf %136, %138 : vector<64x64xf32>
    %140 = tpu.concatenate %122, %134 in 1 : vector<64x64xf32>, vector<64x64xf32> -> vector<64x128xf32>
    %141 = tpu.concatenate %127, %139 in 1 : vector<64x64xf32>, vector<64x64xf32> -> vector<64x128xf32>
    %c0_16 = arith.constant 0 : index
    %c384 = arith.constant 384 : index
    %142 = vector.load %arg2[%c0_16, %c384] : memref<128x2048xf32, #tpu.memory_space<vmem>>, vector<64x128xf32>
    tpu.vector_store %arg2[%c0_16, %c384], %140 {strides = array<i32>} : memref<128x2048xf32, #tpu.memory_space<vmem>>, vector<64x128xf32>,
    %c64_17 = arith.constant 64 : index
    %c384_18 = arith.constant 384 : index
    %143 = vector.load %arg2[%c64_17, %c384_18] : memref<128x2048xf32, #tpu.memory_space<vmem>>, vector<64x128xf32>
    tpu.vector_store %arg2[%c64_17, %c384_18], %141 {strides = array<i32>} : memref<128x2048xf32, #tpu.memory_space<vmem>>, vector<64x128xf32>,
    %144 = vector.extract_strided_slice %30 {offsets = [0, 8], sizes = [64, 1], strides = [1, 1]} : vector<64x32xf32> to vector<64x1xf32>
    %145 = vector.extract_strided_slice %31 {offsets = [0, 8], sizes = [64, 1], strides = [1, 1]} : vector<64x32xf32> to vector<64x1xf32>
    %146 = vector.broadcast %145 : vector<64x1xf32> to vector<64x64xf32>
    %147 = arith.mulf %13, %146 : vector<64x64xf32>
    %148 = vector.broadcast %144 : vector<64x1xf32> to vector<64x64xf32>
    %149 = arith.mulf %14, %148 : vector<64x64xf32>
    %150 = arith.addf %147, %149 : vector<64x64xf32>
    %151 = vector.broadcast %145 : vector<64x1xf32> to vector<64x64xf32>
    %152 = arith.mulf %14, %151 : vector<64x64xf32>
    %153 = vector.broadcast %144 : vector<64x1xf32> to vector<64x64xf32>
    %154 = arith.mulf %13, %153 : vector<64x64xf32>
    %155 = arith.subf %152, %154 : vector<64x64xf32>
    %156 = vector.extract_strided_slice %30 {offsets = [0, 9], sizes = [64, 1], strides = [1, 1]} : vector<64x32xf32> to vector<64x1xf32>
    %157 = vector.extract_strided_slice %31 {offsets = [0, 9], sizes = [64, 1], strides = [1, 1]} : vector<64x32xf32> to vector<64x1xf32>
    %158 = vector.broadcast %157 : vector<64x1xf32> to vector<64x64xf32>
    %159 = arith.mulf %13, %158 : vector<64x64xf32>
    %160 = vector.broadcast %156 : vector<64x1xf32> to vector<64x64xf32>
    %161 = arith.mulf %14, %160 : vector<64x64xf32>
    %162 = arith.addf %159, %161 : vector<64x64xf32>
    %163 = vector.broadcast %157 : vector<64x1xf32> to vector<64x64xf32>
    %164 = arith.mulf %14, %163 : vector<64x64xf32>
    %165 = vector.broadcast %156 : vector<64x1xf32> to vector<64x64xf32>
    %166 = arith.mulf %13, %165 : vector<64x64xf32>
    %167 = arith.subf %164, %166 : vector<64x64xf32>
    %168 = tpu.concatenate %150, %162 in 1 : vector<64x64xf32>, vector<64x64xf32> -> vector<64x128xf32>
    %169 = tpu.concatenate %155, %167 in 1 : vector<64x64xf32>, vector<64x64xf32> -> vector<64x128xf32>
    %c0_19 = arith.constant 0 : index
    %c512 = arith.constant 512 : index
    %170 = vector.load %arg2[%c0_19, %c512] : memref<128x2048xf32, #tpu.memory_space<vmem>>, vector<64x128xf32>
    tpu.vector_store %arg2[%c0_19, %c512], %168 {strides = array<i32>} : memref<128x2048xf32, #tpu.memory_space<vmem>>, vector<64x128xf32>,
    %c64_20 = arith.constant 64 : index
    %c512_21 = arith.constant 512 : index
    %171 = vector.load %arg2[%c64_20, %c512_21] : memref<128x2048xf32, #tpu.memory_space<vmem>>, vector<64x128xf32>
    tpu.vector_store %arg2[%c64_20, %c512_21], %169 {strides = array<i32>} : memref<128x2048xf32, #tpu.memory_space<vmem>>, vector<64x128xf32>,
    %172 = vector.extract_strided_slice %30 {offsets = [0, 10], sizes = [64, 1], strides = [1, 1]} : vector<64x32xf32> to vector<64x1xf32>
    %173 = vector.extract_strided_slice %31 {offsets = [0, 10], sizes = [64, 1], strides = [1, 1]} : vector<64x32xf32> to vector<64x1xf32>
    %174 = vector.broadcast %173 : vector<64x1xf32> to vector<64x64xf32>
    %175 = arith.mulf %13, %174 : vector<64x64xf32>
    %176 = vector.broadcast %172 : vector<64x1xf32> to vector<64x64xf32>
    %177 = arith.mulf %14, %176 : vector<64x64xf32>
    %178 = arith.addf %175, %177 : vector<64x64xf32>
    %179 = vector.broadcast %173 : vector<64x1xf32> to vector<64x64xf32>
    %180 = arith.mulf %14, %179 : vector<64x64xf32>
    %181 = vector.broadcast %172 : vector<64x1xf32> to vector<64x64xf32>
    %182 = arith.mulf %13, %181 : vector<64x64xf32>
    %183 = arith.subf %180, %182 : vector<64x64xf32>
    %184 = vector.extract_strided_slice %30 {offsets = [0, 11], sizes = [64, 1], strides = [1, 1]} : vector<64x32xf32> to vector<64x1xf32>
    %185 = vector.extract_strided_slice %31 {offsets = [0, 11], sizes = [64, 1], strides = [1, 1]} : vector<64x32xf32> to vector<64x1xf32>
    %186 = vector.broadcast %185 : vector<64x1xf32> to vector<64x64xf32>
    %187 = arith.mulf %13, %186 : vector<64x64xf32>
    %188 = vector.broadcast %184 : vector<64x1xf32> to vector<64x64xf32>
    %189 = arith.mulf %14, %188 : vector<64x64xf32>
    %190 = arith.addf %187, %189 : vector<64x64xf32>
    %191 = vector.broadcast %185 : vector<64x1xf32> to vector<64x64xf32>
    %192 = arith.mulf %14, %191 : vector<64x64xf32>
    %193 = vector.broadcast %184 : vector<64x1xf32> to vector<64x64xf32>
    %194 = arith.mulf %13, %193 : vector<64x64xf32>
    %195 = arith.subf %192, %194 : vector<64x64xf32>
    %196 = tpu.concatenate %178, %190 in 1 : vector<64x64xf32>, vector<64x64xf32> -> vector<64x128xf32>
    %197 = tpu.concatenate %183, %195 in 1 : vector<64x64xf32>, vector<64x64xf32> -> vector<64x128xf32>
    %c0_22 = arith.constant 0 : index
    %c640 = arith.constant 640 : index
    %198 = vector.load %arg2[%c0_22, %c640] : memref<128x2048xf32, #tpu.memory_space<vmem>>, vector<64x128xf32>
    tpu.vector_store %arg2[%c0_22, %c640], %196 {strides = array<i32>} : memref<128x2048xf32, #tpu.memory_space<vmem>>, vector<64x128xf32>,
    %c64_23 = arith.constant 64 : index
    %c640_24 = arith.constant 640 : index
    %199 = vector.load %arg2[%c64_23, %c640_24] : memref<128x2048xf32, #tpu.memory_space<vmem>>, vector<64x128xf32>
    tpu.vector_store %arg2[%c64_23, %c640_24], %197 {strides = array<i32>} : memref<128x2048xf32, #tpu.memory_space<vmem>>, vector<64x128xf32>,
    %200 = vector.extract_strided_slice %30 {offsets = [0, 12], sizes = [64, 1], strides = [1, 1]} : vector<64x32xf32> to vector<64x1xf32>
    %201 = vector.extract_strided_slice %31 {offsets = [0, 12], sizes = [64, 1], strides = [1, 1]} : vector<64x32xf32> to vector<64x1xf32>
    %202 = vector.broadcast %201 : vector<64x1xf32> to vector<64x64xf32>
    %203 = arith.mulf %13, %202 : vector<64x64xf32>
    %204 = vector.broadcast %200 : vector<64x1xf32> to vector<64x64xf32>
    %205 = arith.mulf %14, %204 : vector<64x64xf32>
    %206 = arith.addf %203, %205 : vector<64x64xf32>
    %207 = vector.broadcast %201 : vector<64x1xf32> to vector<64x64xf32>
    %208 = arith.mulf %14, %207 : vector<64x64xf32>
    %209 = vector.broadcast %200 : vector<64x1xf32> to vector<64x64xf32>
    %210 = arith.mulf %13, %209 : vector<64x64xf32>
    %211 = arith.subf %208, %210 : vector<64x64xf32>
    %212 = vector.extract_strided_slice %30 {offsets = [0, 13], sizes = [64, 1], strides = [1, 1]} : vector<64x32xf32> to vector<64x1xf32>
    %213 = vector.extract_strided_slice %31 {offsets = [0, 13], sizes = [64, 1], strides = [1, 1]} : vector<64x32xf32> to vector<64x1xf32>
    %214 = vector.broadcast %213 : vector<64x1xf32> to vector<64x64xf32>
    %215 = arith.mulf %13, %214 : vector<64x64xf32>
    %216 = vector.broadcast %212 : vector<64x1xf32> to vector<64x64xf32>
    %217 = arith.mulf %14, %216 : vector<64x64xf32>
    %218 = arith.addf %215, %217 : vector<64x64xf32>
    %219 = vector.broadcast %213 : vector<64x1xf32> to vector<64x64xf32>
    %220 = arith.mulf %14, %219 : vector<64x64xf32>
    %221 = vector.broadcast %212 : vector<64x1xf32> to vector<64x64xf32>
    %222 = arith.mulf %13, %221 : vector<64x64xf32>
    %223 = arith.subf %220, %222 : vector<64x64xf32>
    %224 = tpu.concatenate %206, %218 in 1 : vector<64x64xf32>, vector<64x64xf32> -> vector<64x128xf32>
    %225 = tpu.concatenate %211, %223 in 1 : vector<64x64xf32>, vector<64x64xf32> -> vector<64x128xf32>
    %c0_25 = arith.constant 0 : index
    %c768 = arith.constant 768 : index
    %226 = vector.load %arg2[%c0_25, %c768] : memref<128x2048xf32, #tpu.memory_space<vmem>>, vector<64x128xf32>
    tpu.vector_store %arg2[%c0_25, %c768], %224 {strides = array<i32>} : memref<128x2048xf32, #tpu.memory_space<vmem>>, vector<64x128xf32>,
    %c64_26 = arith.constant 64 : index
    %c768_27 = arith.constant 768 : index
    %227 = vector.load %arg2[%c64_26, %c768_27] : memref<128x2048xf32, #tpu.memory_space<vmem>>, vector<64x128xf32>
    tpu.vector_store %arg2[%c64_26, %c768_27], %225 {strides = array<i32>} : memref<128x2048xf32, #tpu.memory_space<vmem>>, vector<64x128xf32>,
    %228 = vector.extract_strided_slice %30 {offsets = [0, 14], sizes = [64, 1], strides = [1, 1]} : vector<64x32xf32> to vector<64x1xf32>
    %229 = vector.extract_strided_slice %31 {offsets = [0, 14], sizes = [64, 1], strides = [1, 1]} : vector<64x32xf32> to vector<64x1xf32>
    %230 = vector.broadcast %229 : vector<64x1xf32> to vector<64x64xf32>
    %231 = arith.mulf %13, %230 : vector<64x64xf32>
    %232 = vector.broadcast %228 : vector<64x1xf32> to vector<64x64xf32>
    %233 = arith.mulf %14, %232 : vector<64x64xf32>
    %234 = arith.addf %231, %233 : vector<64x64xf32>
    %235 = vector.broadcast %229 : vector<64x1xf32> to vector<64x64xf32>
    %236 = arith.mulf %14, %235 : vector<64x64xf32>
    %237 = vector.broadcast %228 : vector<64x1xf32> to vector<64x64xf32>
    %238 = arith.mulf %13, %237 : vector<64x64xf32>
    %239 = arith.subf %236, %238 : vector<64x64xf32>
    %240 = vector.extract_strided_slice %30 {offsets = [0, 15], sizes = [64, 1], strides = [1, 1]} : vector<64x32xf32> to vector<64x1xf32>
    %241 = vector.extract_strided_slice %31 {offsets = [0, 15], sizes = [64, 1], strides = [1, 1]} : vector<64x32xf32> to vector<64x1xf32>
    %242 = vector.broadcast %241 : vector<64x1xf32> to vector<64x64xf32>
    %243 = arith.mulf %13, %242 : vector<64x64xf32>
    %244 = vector.broadcast %240 : vector<64x1xf32> to vector<64x64xf32>
    %245 = arith.mulf %14, %244 : vector<64x64xf32>
    %246 = arith.addf %243, %245 : vector<64x64xf32>
    %247 = vector.broadcast %241 : vector<64x1xf32> to vector<64x64xf32>
    %248 = arith.mulf %14, %247 : vector<64x64xf32>
    %249 = vector.broadcast %240 : vector<64x1xf32> to vector<64x64xf32>
    %250 = arith.mulf %13, %249 : vector<64x64xf32>
    %251 = arith.subf %248, %250 : vector<64x64xf32>
    %252 = tpu.concatenate %234, %246 in 1 : vector<64x64xf32>, vector<64x64xf32> -> vector<64x128xf32>
    %253 = tpu.concatenate %239, %251 in 1 : vector<64x64xf32>, vector<64x64xf32> -> vector<64x128xf32>
    %c0_28 = arith.constant 0 : index
    %c896 = arith.constant 896 : index
    %254 = vector.load %arg2[%c0_28, %c896] : memref<128x2048xf32, #tpu.memory_space<vmem>>, vector<64x128xf32>
    tpu.vector_store %arg2[%c0_28, %c896], %252 {strides = array<i32>} : memref<128x2048xf32, #tpu.memory_space<vmem>>, vector<64x128xf32>,
    %c64_29 = arith.constant 64 : index
    %c896_30 = arith.constant 896 : index
    %255 = vector.load %arg2[%c64_29, %c896_30] : memref<128x2048xf32, #tpu.memory_space<vmem>>, vector<64x128xf32>
    tpu.vector_store %arg2[%c64_29, %c896_30], %253 {strides = array<i32>} : memref<128x2048xf32, #tpu.memory_space<vmem>>, vector<64x128xf32>,
    %256 = vector.extract_strided_slice %30 {offsets = [0, 16], sizes = [64, 1], strides = [1, 1]} : vector<64x32xf32> to vector<64x1xf32>
    %257 = vector.extract_strided_slice %31 {offsets = [0, 16], sizes = [64, 1], strides = [1, 1]} : vector<64x32xf32> to vector<64x1xf32>
    %258 = vector.broadcast %257 : vector<64x1xf32> to vector<64x64xf32>
    %259 = arith.mulf %13, %258 : vector<64x64xf32>
    %260 = vector.broadcast %256 : vector<64x1xf32> to vector<64x64xf32>
    %261 = arith.mulf %14, %260 : vector<64x64xf32>
    %262 = arith.addf %259, %261 : vector<64x64xf32>
    %263 = vector.broadcast %257 : vector<64x1xf32> to vector<64x64xf32>
    %264 = arith.mulf %14, %263 : vector<64x64xf32>
    %265 = vector.broadcast %256 : vector<64x1xf32> to vector<64x64xf32>
    %266 = arith.mulf %13, %265 : vector<64x64xf32>
    %267 = arith.subf %264, %266 : vector<64x64xf32>
    %268 = vector.extract_strided_slice %30 {offsets = [0, 17], sizes = [64, 1], strides = [1, 1]} : vector<64x32xf32> to vector<64x1xf32>
    %269 = vector.extract_strided_slice %31 {offsets = [0, 17], sizes = [64, 1], strides = [1, 1]} : vector<64x32xf32> to vector<64x1xf32>
    %270 = vector.broadcast %269 : vector<64x1xf32> to vector<64x64xf32>
    %271 = arith.mulf %13, %270 : vector<64x64xf32>
    %272 = vector.broadcast %268 : vector<64x1xf32> to vector<64x64xf32>
    %273 = arith.mulf %14, %272 : vector<64x64xf32>
    %274 = arith.addf %271, %273 : vector<64x64xf32>
    %275 = vector.broadcast %269 : vector<64x1xf32> to vector<64x64xf32>
    %276 = arith.mulf %14, %275 : vector<64x64xf32>
    %277 = vector.broadcast %268 : vector<64x1xf32> to vector<64x64xf32>
    %278 = arith.mulf %13, %277 : vector<64x64xf32>
    %279 = arith.subf %276, %278 : vector<64x64xf32>
    %280 = tpu.concatenate %262, %274 in 1 : vector<64x64xf32>, vector<64x64xf32> -> vector<64x128xf32>
    %281 = tpu.concatenate %267, %279 in 1 : vector<64x64xf32>, vector<64x64xf32> -> vector<64x128xf32>
    %c0_31 = arith.constant 0 : index
    %c1024 = arith.constant 1024 : index
    %282 = vector.load %arg2[%c0_31, %c1024] : memref<128x2048xf32, #tpu.memory_space<vmem>>, vector<64x128xf32>
    tpu.vector_store %arg2[%c0_31, %c1024], %280 {strides = array<i32>} : memref<128x2048xf32, #tpu.memory_space<vmem>>, vector<64x128xf32>,
    %c64_32 = arith.constant 64 : index
    %c1024_33 = arith.constant 1024 : index
    %283 = vector.load %arg2[%c64_32, %c1024_33] : memref<128x2048xf32, #tpu.memory_space<vmem>>, vector<64x128xf32>
    tpu.vector_store %arg2[%c64_32, %c1024_33], %281 {strides = array<i32>} : memref<128x2048xf32, #tpu.memory_space<vmem>>, vector<64x128xf32>,
    %284 = vector.extract_strided_slice %30 {offsets = [0, 18], sizes = [64, 1], strides = [1, 1]} : vector<64x32xf32> to vector<64x1xf32>
    %285 = vector.extract_strided_slice %31 {offsets = [0, 18], sizes = [64, 1], strides = [1, 1]} : vector<64x32xf32> to vector<64x1xf32>
    %286 = vector.broadcast %285 : vector<64x1xf32> to vector<64x64xf32>
    %287 = arith.mulf %13, %286 : vector<64x64xf32>
    %288 = vector.broadcast %284 : vector<64x1xf32> to vector<64x64xf32>
    %289 = arith.mulf %14, %288 : vector<64x64xf32>
    %290 = arith.addf %287, %289 : vector<64x64xf32>
    %291 = vector.broadcast %285 : vector<64x1xf32> to vector<64x64xf32>
    %292 = arith.mulf %14, %291 : vector<64x64xf32>
    %293 = vector.broadcast %284 : vector<64x1xf32> to vector<64x64xf32>
    %294 = arith.mulf %13, %293 : vector<64x64xf32>
    %295 = arith.subf %292, %294 : vector<64x64xf32>
    %296 = vector.extract_strided_slice %30 {offsets = [0, 19], sizes = [64, 1], strides = [1, 1]} : vector<64x32xf32> to vector<64x1xf32>
    %297 = vector.extract_strided_slice %31 {offsets = [0, 19], sizes = [64, 1], strides = [1, 1]} : vector<64x32xf32> to vector<64x1xf32>
    %298 = vector.broadcast %297 : vector<64x1xf32> to vector<64x64xf32>
    %299 = arith.mulf %13, %298 : vector<64x64xf32>
    %300 = vector.broadcast %296 : vector<64x1xf32> to vector<64x64xf32>
    %301 = arith.mulf %14, %300 : vector<64x64xf32>
    %302 = arith.addf %299, %301 : vector<64x64xf32>
    %303 = vector.broadcast %297 : vector<64x1xf32> to vector<64x64xf32>
    %304 = arith.mulf %14, %303 : vector<64x64xf32>
    %305 = vector.broadcast %296 : vector<64x1xf32> to vector<64x64xf32>
    %306 = arith.mulf %13, %305 : vector<64x64xf32>
    %307 = arith.subf %304, %306 : vector<64x64xf32>
    %308 = tpu.concatenate %290, %302 in 1 : vector<64x64xf32>, vector<64x64xf32> -> vector<64x128xf32>
    %309 = tpu.concatenate %295, %307 in 1 : vector<64x64xf32>, vector<64x64xf32> -> vector<64x128xf32>
    %c0_34 = arith.constant 0 : index
    %c1152 = arith.constant 1152 : index
    %310 = vector.load %arg2[%c0_34, %c1152] : memref<128x2048xf32, #tpu.memory_space<vmem>>, vector<64x128xf32>
    tpu.vector_store %arg2[%c0_34, %c1152], %308 {strides = array<i32>} : memref<128x2048xf32, #tpu.memory_space<vmem>>, vector<64x128xf32>,
    %c64_35 = arith.constant 64 : index
    %c1152_36 = arith.constant 1152 : index
    %311 = vector.load %arg2[%c64_35, %c1152_36] : memref<128x2048xf32, #tpu.memory_space<vmem>>, vector<64x128xf32>
    tpu.vector_store %arg2[%c64_35, %c1152_36], %309 {strides = array<i32>} : memref<128x2048xf32, #tpu.memory_space<vmem>>, vector<64x128xf32>,
    %312 = vector.extract_strided_slice %30 {offsets = [0, 20], sizes = [64, 1], strides = [1, 1]} : vector<64x32xf32> to vector<64x1xf32>
    %313 = vector.extract_strided_slice %31 {offsets = [0, 20], sizes = [64, 1], strides = [1, 1]} : vector<64x32xf32> to vector<64x1xf32>
    %314 = vector.broadcast %313 : vector<64x1xf32> to vector<64x64xf32>
    %315 = arith.mulf %13, %314 : vector<64x64xf32>
    %316 = vector.broadcast %312 : vector<64x1xf32> to vector<64x64xf32>
    %317 = arith.mulf %14, %316 : vector<64x64xf32>
    %318 = arith.addf %315, %317 : vector<64x64xf32>
    %319 = vector.broadcast %313 : vector<64x1xf32> to vector<64x64xf32>
    %320 = arith.mulf %14, %319 : vector<64x64xf32>
    %321 = vector.broadcast %312 : vector<64x1xf32> to vector<64x64xf32>
    %322 = arith.mulf %13, %321 : vector<64x64xf32>
    %323 = arith.subf %320, %322 : vector<64x64xf32>
    %324 = vector.extract_strided_slice %30 {offsets = [0, 21], sizes = [64, 1], strides = [1, 1]} : vector<64x32xf32> to vector<64x1xf32>
    %325 = vector.extract_strided_slice %31 {offsets = [0, 21], sizes = [64, 1], strides = [1, 1]} : vector<64x32xf32> to vector<64x1xf32>
    %326 = vector.broadcast %325 : vector<64x1xf32> to vector<64x64xf32>
    %327 = arith.mulf %13, %326 : vector<64x64xf32>
    %328 = vector.broadcast %324 : vector<64x1xf32> to vector<64x64xf32>
    %329 = arith.mulf %14, %328 : vector<64x64xf32>
    %330 = arith.addf %327, %329 : vector<64x64xf32>
    %331 = vector.broadcast %325 : vector<64x1xf32> to vector<64x64xf32>
    %332 = arith.mulf %14, %331 : vector<64x64xf32>
    %333 = vector.broadcast %324 : vector<64x1xf32> to vector<64x64xf32>
    %334 = arith.mulf %13, %333 : vector<64x64xf32>
    %335 = arith.subf %332, %334 : vector<64x64xf32>
    %336 = tpu.concatenate %318, %330 in 1 : vector<64x64xf32>, vector<64x64xf32> -> vector<64x128xf32>
    %337 = tpu.concatenate %323, %335 in 1 : vector<64x64xf32>, vector<64x64xf32> -> vector<64x128xf32>
    %c0_37 = arith.constant 0 : index
    %c1280 = arith.constant 1280 : index
    %338 = vector.load %arg2[%c0_37, %c1280] : memref<128x2048xf32, #tpu.memory_space<vmem>>, vector<64x128xf32>
    tpu.vector_store %arg2[%c0_37, %c1280], %336 {strides = array<i32>} : memref<128x2048xf32, #tpu.memory_space<vmem>>, vector<64x128xf32>,
    %c64_38 = arith.constant 64 : index
    %c1280_39 = arith.constant 1280 : index
    %339 = vector.load %arg2[%c64_38, %c1280_39] : memref<128x2048xf32, #tpu.memory_space<vmem>>, vector<64x128xf32>
    tpu.vector_store %arg2[%c64_38, %c1280_39], %337 {strides = array<i32>} : memref<128x2048xf32, #tpu.memory_space<vmem>>, vector<64x128xf32>,
    %340 = vector.extract_strided_slice %30 {offsets = [0, 22], sizes = [64, 1], strides = [1, 1]} : vector<64x32xf32> to vector<64x1xf32>
    %341 = vector.extract_strided_slice %31 {offsets = [0, 22], sizes = [64, 1], strides = [1, 1]} : vector<64x32xf32> to vector<64x1xf32>
    %342 = vector.broadcast %341 : vector<64x1xf32> to vector<64x64xf32>
    %343 = arith.mulf %13, %342 : vector<64x64xf32>
    %344 = vector.broadcast %340 : vector<64x1xf32> to vector<64x64xf32>
    %345 = arith.mulf %14, %344 : vector<64x64xf32>
    %346 = arith.addf %343, %345 : vector<64x64xf32>
    %347 = vector.broadcast %341 : vector<64x1xf32> to vector<64x64xf32>
    %348 = arith.mulf %14, %347 : vector<64x64xf32>
    %349 = vector.broadcast %340 : vector<64x1xf32> to vector<64x64xf32>
    %350 = arith.mulf %13, %349 : vector<64x64xf32>
    %351 = arith.subf %348, %350 : vector<64x64xf32>
    %352 = vector.extract_strided_slice %30 {offsets = [0, 23], sizes = [64, 1], strides = [1, 1]} : vector<64x32xf32> to vector<64x1xf32>
    %353 = vector.extract_strided_slice %31 {offsets = [0, 23], sizes = [64, 1], strides = [1, 1]} : vector<64x32xf32> to vector<64x1xf32>
    %354 = vector.broadcast %353 : vector<64x1xf32> to vector<64x64xf32>
    %355 = arith.mulf %13, %354 : vector<64x64xf32>
    %356 = vector.broadcast %352 : vector<64x1xf32> to vector<64x64xf32>
    %357 = arith.mulf %14, %356 : vector<64x64xf32>
    %358 = arith.addf %355, %357 : vector<64x64xf32>
    %359 = vector.broadcast %353 : vector<64x1xf32> to vector<64x64xf32>
    %360 = arith.mulf %14, %359 : vector<64x64xf32>
    %361 = vector.broadcast %352 : vector<64x1xf32> to vector<64x64xf32>
    %362 = arith.mulf %13, %361 : vector<64x64xf32>
    %363 = arith.subf %360, %362 : vector<64x64xf32>
    %364 = tpu.concatenate %346, %358 in 1 : vector<64x64xf32>, vector<64x64xf32> -> vector<64x128xf32>
    %365 = tpu.concatenate %351, %363 in 1 : vector<64x64xf32>, vector<64x64xf32> -> vector<64x128xf32>
    %c0_40 = arith.constant 0 : index
    %c1408 = arith.constant 1408 : index
    %366 = vector.load %arg2[%c0_40, %c1408] : memref<128x2048xf32, #tpu.memory_space<vmem>>, vector<64x128xf32>
    tpu.vector_store %arg2[%c0_40, %c1408], %364 {strides = array<i32>} : memref<128x2048xf32, #tpu.memory_space<vmem>>, vector<64x128xf32>,
    %c64_41 = arith.constant 64 : index
    %c1408_42 = arith.constant 1408 : index
    %367 = vector.load %arg2[%c64_41, %c1408_42] : memref<128x2048xf32, #tpu.memory_space<vmem>>, vector<64x128xf32>
    tpu.vector_store %arg2[%c64_41, %c1408_42], %365 {strides = array<i32>} : memref<128x2048xf32, #tpu.memory_space<vmem>>, vector<64x128xf32>,
    %368 = vector.extract_strided_slice %30 {offsets = [0, 24], sizes = [64, 1], strides = [1, 1]} : vector<64x32xf32> to vector<64x1xf32>
    %369 = vector.extract_strided_slice %31 {offsets = [0, 24], sizes = [64, 1], strides = [1, 1]} : vector<64x32xf32> to vector<64x1xf32>
    %370 = vector.broadcast %369 : vector<64x1xf32> to vector<64x64xf32>
    %371 = arith.mulf %13, %370 : vector<64x64xf32>
    %372 = vector.broadcast %368 : vector<64x1xf32> to vector<64x64xf32>
    %373 = arith.mulf %14, %372 : vector<64x64xf32>
    %374 = arith.addf %371, %373 : vector<64x64xf32>
    %375 = vector.broadcast %369 : vector<64x1xf32> to vector<64x64xf32>
    %376 = arith.mulf %14, %375 : vector<64x64xf32>
    %377 = vector.broadcast %368 : vector<64x1xf32> to vector<64x64xf32>
    %378 = arith.mulf %13, %377 : vector<64x64xf32>
    %379 = arith.subf %376, %378 : vector<64x64xf32>
    %380 = vector.extract_strided_slice %30 {offsets = [0, 25], sizes = [64, 1], strides = [1, 1]} : vector<64x32xf32> to vector<64x1xf32>
    %381 = vector.extract_strided_slice %31 {offsets = [0, 25], sizes = [64, 1], strides = [1, 1]} : vector<64x32xf32> to vector<64x1xf32>
    %382 = vector.broadcast %381 : vector<64x1xf32> to vector<64x64xf32>
    %383 = arith.mulf %13, %382 : vector<64x64xf32>
    %384 = vector.broadcast %380 : vector<64x1xf32> to vector<64x64xf32>
    %385 = arith.mulf %14, %384 : vector<64x64xf32>
    %386 = arith.addf %383, %385 : vector<64x64xf32>
    %387 = vector.broadcast %381 : vector<64x1xf32> to vector<64x64xf32>
    %388 = arith.mulf %14, %387 : vector<64x64xf32>
    %389 = vector.broadcast %380 : vector<64x1xf32> to vector<64x64xf32>
    %390 = arith.mulf %13, %389 : vector<64x64xf32>
    %391 = arith.subf %388, %390 : vector<64x64xf32>
    %392 = tpu.concatenate %374, %386 in 1 : vector<64x64xf32>, vector<64x64xf32> -> vector<64x128xf32>
    %393 = tpu.concatenate %379, %391 in 1 : vector<64x64xf32>, vector<64x64xf32> -> vector<64x128xf32>
    %c0_43 = arith.constant 0 : index
    %c1536 = arith.constant 1536 : index
    %394 = vector.load %arg2[%c0_43, %c1536] : memref<128x2048xf32, #tpu.memory_space<vmem>>, vector<64x128xf32>
    tpu.vector_store %arg2[%c0_43, %c1536], %392 {strides = array<i32>} : memref<128x2048xf32, #tpu.memory_space<vmem>>, vector<64x128xf32>,
    %c64_44 = arith.constant 64 : index
    %c1536_45 = arith.constant 1536 : index
    %395 = vector.load %arg2[%c64_44, %c1536_45] : memref<128x2048xf32, #tpu.memory_space<vmem>>, vector<64x128xf32>
    tpu.vector_store %arg2[%c64_44, %c1536_45], %393 {strides = array<i32>} : memref<128x2048xf32, #tpu.memory_space<vmem>>, vector<64x128xf32>,
    %396 = vector.extract_strided_slice %30 {offsets = [0, 26], sizes = [64, 1], strides = [1, 1]} : vector<64x32xf32> to vector<64x1xf32>
    %397 = vector.extract_strided_slice %31 {offsets = [0, 26], sizes = [64, 1], strides = [1, 1]} : vector<64x32xf32> to vector<64x1xf32>
    %398 = vector.broadcast %397 : vector<64x1xf32> to vector<64x64xf32>
    %399 = arith.mulf %13, %398 : vector<64x64xf32>
    %400 = vector.broadcast %396 : vector<64x1xf32> to vector<64x64xf32>
    %401 = arith.mulf %14, %400 : vector<64x64xf32>
    %402 = arith.addf %399, %401 : vector<64x64xf32>
    %403 = vector.broadcast %397 : vector<64x1xf32> to vector<64x64xf32>
    %404 = arith.mulf %14, %403 : vector<64x64xf32>
    %405 = vector.broadcast %396 : vector<64x1xf32> to vector<64x64xf32>
    %406 = arith.mulf %13, %405 : vector<64x64xf32>
    %407 = arith.subf %404, %406 : vector<64x64xf32>
    %408 = vector.extract_strided_slice %30 {offsets = [0, 27], sizes = [64, 1], strides = [1, 1]} : vector<64x32xf32> to vector<64x1xf32>
    %409 = vector.extract_strided_slice %31 {offsets = [0, 27], sizes = [64, 1], strides = [1, 1]} : vector<64x32xf32> to vector<64x1xf32>
    %410 = vector.broadcast %409 : vector<64x1xf32> to vector<64x64xf32>
    %411 = arith.mulf %13, %410 : vector<64x64xf32>
    %412 = vector.broadcast %408 : vector<64x1xf32> to vector<64x64xf32>
    %413 = arith.mulf %14, %412 : vector<64x64xf32>
    %414 = arith.addf %411, %413 : vector<64x64xf32>
    %415 = vector.broadcast %409 : vector<64x1xf32> to vector<64x64xf32>
    %416 = arith.mulf %14, %415 : vector<64x64xf32>
    %417 = vector.broadcast %408 : vector<64x1xf32> to vector<64x64xf32>
    %418 = arith.mulf %13, %417 : vector<64x64xf32>
    %419 = arith.subf %416, %418 : vector<64x64xf32>
    %420 = tpu.concatenate %402, %414 in 1 : vector<64x64xf32>, vector<64x64xf32> -> vector<64x128xf32>
    %421 = tpu.concatenate %407, %419 in 1 : vector<64x64xf32>, vector<64x64xf32> -> vector<64x128xf32>
    %c0_46 = arith.constant 0 : index
    %c1664 = arith.constant 1664 : index
    %422 = vector.load %arg2[%c0_46, %c1664] : memref<128x2048xf32, #tpu.memory_space<vmem>>, vector<64x128xf32>
    tpu.vector_store %arg2[%c0_46, %c1664], %420 {strides = array<i32>} : memref<128x2048xf32, #tpu.memory_space<vmem>>, vector<64x128xf32>,
    %c64_47 = arith.constant 64 : index
    %c1664_48 = arith.constant 1664 : index
    %423 = vector.load %arg2[%c64_47, %c1664_48] : memref<128x2048xf32, #tpu.memory_space<vmem>>, vector<64x128xf32>
    tpu.vector_store %arg2[%c64_47, %c1664_48], %421 {strides = array<i32>} : memref<128x2048xf32, #tpu.memory_space<vmem>>, vector<64x128xf32>,
    %424 = vector.extract_strided_slice %30 {offsets = [0, 28], sizes = [64, 1], strides = [1, 1]} : vector<64x32xf32> to vector<64x1xf32>
    %425 = vector.extract_strided_slice %31 {offsets = [0, 28], sizes = [64, 1], strides = [1, 1]} : vector<64x32xf32> to vector<64x1xf32>
    %426 = vector.broadcast %425 : vector<64x1xf32> to vector<64x64xf32>
    %427 = arith.mulf %13, %426 : vector<64x64xf32>
    %428 = vector.broadcast %424 : vector<64x1xf32> to vector<64x64xf32>
    %429 = arith.mulf %14, %428 : vector<64x64xf32>
    %430 = arith.addf %427, %429 : vector<64x64xf32>
    %431 = vector.broadcast %425 : vector<64x1xf32> to vector<64x64xf32>
    %432 = arith.mulf %14, %431 : vector<64x64xf32>
    %433 = vector.broadcast %424 : vector<64x1xf32> to vector<64x64xf32>
    %434 = arith.mulf %13, %433 : vector<64x64xf32>
    %435 = arith.subf %432, %434 : vector<64x64xf32>
    %436 = vector.extract_strided_slice %30 {offsets = [0, 29], sizes = [64, 1], strides = [1, 1]} : vector<64x32xf32> to vector<64x1xf32>
    %437 = vector.extract_strided_slice %31 {offsets = [0, 29], sizes = [64, 1], strides = [1, 1]} : vector<64x32xf32> to vector<64x1xf32>
    %438 = vector.broadcast %437 : vector<64x1xf32> to vector<64x64xf32>
    %439 = arith.mulf %13, %438 : vector<64x64xf32>
    %440 = vector.broadcast %436 : vector<64x1xf32> to vector<64x64xf32>
    %441 = arith.mulf %14, %440 : vector<64x64xf32>
    %442 = arith.addf %439, %441 : vector<64x64xf32>
    %443 = vector.broadcast %437 : vector<64x1xf32> to vector<64x64xf32>
    %444 = arith.mulf %14, %443 : vector<64x64xf32>
    %445 = vector.broadcast %436 : vector<64x1xf32> to vector<64x64xf32>
    %446 = arith.mulf %13, %445 : vector<64x64xf32>
    %447 = arith.subf %444, %446 : vector<64x64xf32>
    %448 = tpu.concatenate %430, %442 in 1 : vector<64x64xf32>, vector<64x64xf32> -> vector<64x128xf32>
    %449 = tpu.concatenate %435, %447 in 1 : vector<64x64xf32>, vector<64x64xf32> -> vector<64x128xf32>
    %c0_49 = arith.constant 0 : index
    %c1792 = arith.constant 1792 : index
    %450 = vector.load %arg2[%c0_49, %c1792] : memref<128x2048xf32, #tpu.memory_space<vmem>>, vector<64x128xf32>
    tpu.vector_store %arg2[%c0_49, %c1792], %448 {strides = array<i32>} : memref<128x2048xf32, #tpu.memory_space<vmem>>, vector<64x128xf32>,
    %c64_50 = arith.constant 64 : index
    %c1792_51 = arith.constant 1792 : index
    %451 = vector.load %arg2[%c64_50, %c1792_51] : memref<128x2048xf32, #tpu.memory_space<vmem>>, vector<64x128xf32>
    tpu.vector_store %arg2[%c64_50, %c1792_51], %449 {strides = array<i32>} : memref<128x2048xf32, #tpu.memory_space<vmem>>, vector<64x128xf32>,
    %452 = vector.extract_strided_slice %30 {offsets = [0, 30], sizes = [64, 1], strides = [1, 1]} : vector<64x32xf32> to vector<64x1xf32>
    %453 = vector.extract_strided_slice %31 {offsets = [0, 30], sizes = [64, 1], strides = [1, 1]} : vector<64x32xf32> to vector<64x1xf32>
    %454 = vector.broadcast %453 : vector<64x1xf32> to vector<64x64xf32>
    %455 = arith.mulf %13, %454 : vector<64x64xf32>
    %456 = vector.broadcast %452 : vector<64x1xf32> to vector<64x64xf32>
    %457 = arith.mulf %14, %456 : vector<64x64xf32>
    %458 = arith.addf %455, %457 : vector<64x64xf32>
    %459 = vector.broadcast %453 : vector<64x1xf32> to vector<64x64xf32>
    %460 = arith.mulf %14, %459 : vector<64x64xf32>
    %461 = vector.broadcast %452 : vector<64x1xf32> to vector<64x64xf32>
    %462 = arith.mulf %13, %461 : vector<64x64xf32>
    %463 = arith.subf %460, %462 : vector<64x64xf32>
    %464 = vector.extract_strided_slice %30 {offsets = [0, 31], sizes = [64, 1], strides = [1, 1]} : vector<64x32xf32> to vector<64x1xf32>
    %465 = vector.extract_strided_slice %31 {offsets = [0, 31], sizes = [64, 1], strides = [1, 1]} : vector<64x32xf32> to vector<64x1xf32>
    %466 = vector.broadcast %465 : vector<64x1xf32> to vector<64x64xf32>
    %467 = arith.mulf %13, %466 : vector<64x64xf32>
    %468 = vector.broadcast %464 : vector<64x1xf32> to vector<64x64xf32>
    %469 = arith.mulf %14, %468 : vector<64x64xf32>
    %470 = arith.addf %467, %469 : vector<64x64xf32>
    %471 = vector.broadcast %465 : vector<64x1xf32> to vector<64x64xf32>
    %472 = arith.mulf %14, %471 : vector<64x64xf32>
    %473 = vector.broadcast %464 : vector<64x1xf32> to vector<64x64xf32>
    %474 = arith.mulf %13, %473 : vector<64x64xf32>
    %475 = arith.subf %472, %474 : vector<64x64xf32>
    %476 = tpu.concatenate %458, %470 in 1 : vector<64x64xf32>, vector<64x64xf32> -> vector<64x128xf32>
    %477 = tpu.concatenate %463, %475 in 1 : vector<64x64xf32>, vector<64x64xf32> -> vector<64x128xf32>
    %c0_52 = arith.constant 0 : index
    %c1920 = arith.constant 1920 : index
    %478 = vector.load %arg2[%c0_52, %c1920] : memref<128x2048xf32, #tpu.memory_space<vmem>>, vector<64x128xf32>
    tpu.vector_store %arg2[%c0_52, %c1920], %476 {strides = array<i32>} : memref<128x2048xf32, #tpu.memory_space<vmem>>, vector<64x128xf32>,
    %c64_53 = arith.constant 64 : index
    %c1920_54 = arith.constant 1920 : index
    %479 = vector.load %arg2[%c64_53, %c1920_54] : memref<128x2048xf32, #tpu.memory_space<vmem>>, vector<64x128xf32>
    tpu.vector_store %arg2[%c64_53, %c1920_54], %477 {strides = array<i32>} : memref<128x2048xf32, #tpu.memory_space<vmem>>, vector<64x128xf32>,
    return
  }
  func.func @transform_0(%arg0: i32) -> (i32, i32) {
    %c0_i32 = arith.constant 0 : i32
    %c0_i32_0 = arith.constant 0 : i32
    %c0_i32_1 = arith.constant 0 : i32
    return %c0_i32, %c0_i32_0 : i32, i32
  }
  func.func @transform_1(%arg0: i32) -> (i32, i32) {
    %c0_i32 = arith.constant 0 : i32
    %c0_i32_0 = arith.constant 0 : i32
    return %c0_i32, %arg0 : i32, i32
  }
}

</mosaic_0001>

<llo_original>
// kernel: tpu_custom_call.1
$region0: #{tpu_custom_call.1}
  #allocation0 [shape = 'u32[]', space=smem, size = 0x4, offset = 0x4, fixed_abs, tag = 'smem constant byte address 0x4 - core index']
  #allocation1 [shape = 'u32[72,128]{1,0:T(1,128)}', space=vmem, size = 0x9000, scoped, tag = 'internal scratch']
  %s0 = inlined_call_operand.vmem [shape: f32[64,2], index: 0, kind: input, shape index: {}]
  %s1 = inlined_call_operand.hbm [shape: f32[128,4096], index: 1, kind: output, shape index: {}]
  %s2 = sld [smem:[#allocation0]]
  $region37: #{tpu_custom_call.1} parent=0
    _
  %s4 = ssub.s32 1, %s2
  %s5 = scalar_select 0, %s4, %s2
  $region1: #{tpu_custom_call.1} parent=0
    #allocation2 [shape = 'u8[2097152]{0}', space=vmem, size = 0x200000, scoped, tag = 'output window, operand 0']
    #allocation3 [shape = 's32[2]{0}', space=sflag, size = 0x8, scoped, tag = 'scoped memory for tpu_custom_call.1']
    %6 = vsyncpa [#allocation3], 0
    %s7 = scalar_lea.sflag [#allocation3], 1
    %8 = vsyncpa %s7, 0
    loop: start=0, step=1, limit=4
    $region2: #{tpu_custom_call.1} parent=1 // loop_pre_header
      _
    $region3: #{tpu_custom_call.1} parent=1 // loop_header
      %s10 = sphi 0, %s14
      %p11 = scmp.ge.s32.totalorder %s10, 4
      %s18 = sphi 0, %s18
      %s20 = sphi 0, %s18
      %s21 = sphi 0, %s20
      %s35 = sphi 0, %s21
      %s41 = sphi 0, %s43
      %s44 = sphi 0, %s41
      %s45 = sphi 0, %s44
      %s61 = sphi 0, %s45
    $region4: #{tpu_custom_call.1} parent=1 // loop_header_branch
      %13 = sbr.rel (%p11) target = $region8
    $region5: #{tpu_custom_call.1} parent=1 // loop_body
      %s15 = ssub.s32 %s10, 1
      %s16 = ssub.s32 %s10, 2
      %s17 = sadd.s32 %s10, 1
      %s19 = sadd.s32 %s18, 1
      %p22 = scmp.eq.s32.totalorder %s10, 1
      %p23 = scmp.ne.s32.totalorder %s18, %s20
      %p24 = scmp.eq.s32.totalorder %s10, 0
      %p25 = por %p23, %p24
      %p26 = scmp.ne.s32.totalorder %s18, %s20
      %p27 = scmp.eq.s32.totalorder %s15, 1
      %p28 = por %p26, %p27
      %p29 = scmp.ne.s32.totalorder %s20, %s21
      %p30 = scmp.eq.s32.totalorder %s15, 0
      %p31 = por %p29, %p30
      %p32 = scmp.ne.s32.totalorder %s20, %s21
      %p33 = scmp.eq.s32.totalorder %s16, 1
      %p34 = por %p32, %p33
      %p36 = scmp.ne.s32.totalorder %s21, %s35
      %p37 = scmp.eq.s32.totalorder %s16, 0
      %p38 = por %p36, %p37
      %s39 = ssub.s32 %s10, %s17
      %p40 = scmp.eq.s32.totalorder %s39, 0
      %s42 = sadd.s32 %s41, 1
      %s43 = scalar_select %p40, %s41, %s42
      %p46 = pneg %p40
      %p47 = scmp.eq.s32.totalorder %s10, 1
      %p48 = por %p46, %p47
      %p49 = scmp.ne.s32.totalorder %s41, %s44
      %p50 = scmp.eq.s32.totalorder %s10, 0
      %p51 = por %p49, %p50
      %p52 = scmp.ne.s32.totalorder %s41, %s44
      %p53 = scmp.eq.s32.totalorder %s15, 1
      %p54 = por %p52, %p53
      %p55 = scmp.ne.s32.totalorder %s44, %s45
      %p56 = scmp.eq.s32.totalorder %s15, 0
      %p57 = por %p55, %p56
      %p58 = scmp.ne.s32.totalorder %s44, %s45
      %p59 = scmp.eq.s32.totalorder %s16, 1
      %p60 = por %p58, %p59
      %p62 = scmp.ne.s32.totalorder %s45, %s61
      %p63 = scmp.eq.s32.totalorder %s16, 0
      %p64 = por %p62, %p63
      %p65 = scmp.le.s32.totalorder 1, %s10
      %p66 = scmp.lt.s32.totalorder %s10, 3
      %p67 = pnand %p65, %p66
      %p68 = pneg %p67
      // Predicated region
      $region9: #{tpu_custom_call.1} parent=5 // pred_check
        _
      $region10: #{tpu_custom_call.1} parent=5 // pred_check_branch
        %70 = sbr.rel (%p67) target = $region12
      $region11: #{tpu_custom_call.1} parent=5 // pred_region
        %s71 = ssub.s32 %s10, 1
        // Predicated region
        $region13: #{tpu_custom_call.1} parent=11 // pred_check
          %p72 = pneg %p31
        $region14: #{tpu_custom_call.1} parent=11 // pred_check_branch
          %74 = sbr.rel (%p72) target = $region16
        $region15: #{tpu_custom_call.1} parent=11 // pred_region
          _
        $region16: #{tpu_custom_call.1} parent=11 // pred_fallthru
          _
      $region12: #{tpu_custom_call.1} parent=5 // pred_fallthru
        _
      %p75 = scmp.lt.s32.totalorder %s10, 2
      // Predicated region
      $region17: #{tpu_custom_call.1} parent=5 // pred_check
        %p76 = pneg %p75
      $region18: #{tpu_custom_call.1} parent=5 // pred_check_branch
        %78 = sbr.rel (%p76) target = $region20
      $region19: #{tpu_custom_call.1} parent=5 // pred_region
        _
      $region20: #{tpu_custom_call.1} parent=5 // pred_fallthru
        _
      %p79 = scmp.le.s32.totalorder 1, %s10
      %p80 = scmp.lt.s32.totalorder %s10, 3
      %p81 = pnand %p79, %p80
      %p82 = pneg %p81
      // Predicated region
      $region21: #{tpu_custom_call.1} parent=5 // pred_check
        _
      $region22: #{tpu_custom_call.1} parent=5 // pred_check_branch
        %84 = sbr.rel (%p81) target = $region24
      $region23: #{tpu_custom_call.1} parent=5 // pred_region
        %s85 = ssub.s32 %s10, 1
        %p86 = pneg %p31
        %p87 = pneg %p28
        %p88 = pneg %p57
        %p89 = pneg %p54
        %s90 = sand.u32 %s44, 1
        %s91 = scalar_lea.sflag [#allocation3], %s90
        %s92 = sand.u32 %s44, 1
        %s93 = smul.addr %s92, 2048
        %s94 = scalar_lea.vmem [#allocation2], %s93
        %s95 = smul.u32 16, %s15
        %v96 = vld [vmem:[%s0] sm:$0xff]
        %v97 = vld [vmem:[%s0 + $0x8] sm:$0xff]
        %v98 = vld [vmem:[%s0 + $0x10] sm:$0xff]
        %v99 = vld [vmem:[%s0 + $0x18] sm:$0xff]
        %v100 = vld [vmem:[%s0 + $0x20] sm:$0xff]
        %v101 = vld [vmem:[%s0 + $0x28] sm:$0xff]
        %v102 = vld [vmem:[%s0 + $0x30] sm:$0xff]
        %v103 = vld [vmem:[%s0 + $0x38] sm:$0xff]
        %v104 = vlaneseq
        %v105 = vand.u32 %v104, 127
        %v106 = vcvt.s32.f32 %v105
        %v107 = vadd.f32 %v106, 0.5
        %v108 = vmul.f32 %v107, 0.03125
        %v109 = vsub.f32 %v108, 1.0
        %111 = vset.pattern.permute.xlu0 0
        %112 = vperm.xlu0 %111, %v96
        %v113 = vpop.permute.xlu0 %112
        %116 = vset.pattern.permute.xlu0 0
        %117 = vperm.xlu0 %116, %v97
        %v118 = vpop.permute.xlu0 %117
        %121 = vset.pattern.permute.xlu0 0
        %122 = vperm.xlu0 %121, %v98
        %v123 = vpop.permute.xlu0 %122
        %126 = vset.pattern.permute.xlu0 0
        %127 = vperm.xlu0 %126, %v99
        %v128 = vpop.permute.xlu0 %127
        %131 = vset.pattern.permute.xlu0 0
        %132 = vperm.xlu0 %131, %v100
        %v133 = vpop.permute.xlu0 %132
        %136 = vset.pattern.permute.xlu0 0
        %137 = vperm.xlu0 %136, %v101
        %v138 = vpop.permute.xlu0 %137
        %141 = vset.pattern.permute.xlu0 0
        %142 = vperm.xlu0 %141, %v102
        %v143 = vpop.permute.xlu0 %142
        %146 = vset.pattern.permute.xlu0 0
        %147 = vperm.xlu0 %146, %v103
        %v148 = vpop.permute.xlu0 %147
        %v150 = vmul.f32 %v113, %v109
        %v151 = vmul.f32 %v118, %v109
        %v152 = vmul.f32 %v123, %v109
        %v153 = vmul.f32 %v128, %v109
        %v154 = vmul.f32 %v133, %v109
        %v155 = vmul.f32 %v138, %v109
        %v156 = vmul.f32 %v143, %v109
        %v157 = vmul.f32 %v148, %v109
        %v158 = vand.u32 2147483647, %v150
        %vm159 = vcmp.le.f32.partialorder %v158, 0.7853982
        %vm160 = vcmp.lt.s32.totalorder %v150, 0
        %v161 = vand.u32 %v150, 2139095040
        %v162 = vshrl.u32 %v161, 23
        %v163 = vsub.s32 %v162, 127
        %v164 = vand.u32 2147483647, %v150
        %v165 = vand.u32 %v164, 8388607
        %v166 = vor.u32 %v165, 8388608
        %v167 = vsub.s32 0, %v166
        %v168 = vadd.s32 %v163, 1
        %vm169 = vcmp.gt.s32.totalorder %v168, 0
        %v170 = vsel %vm169, %v168, 0
        %v171 = vshrl.u32 %v170, 5
        %v172 = vand.u32 %v170, 31
        %v173 = vsub.s32 32, %v172
        %v174 = vshrl.u32 683565275, %v173
        %v175 = vshll.u32 683565275, %v172
        %v176 = vshrl.u32 2475754826, %v173
        %v177 = vor.u32 %v175, %v176
        %v178 = vshll.u32 2475754826, %v172
        %v179 = vshrl.u32 2131351028, %v173
        %v180 = vor.u32 %v178, %v179
        %v181 = vshll.u32 2131351028, %v172
        %v182 = vshrl.u32 2102212464, %v173
        %v183 = vor.u32 %v181, %v182
        %v184 = vshll.u32 2102212464, %v172
        %v185 = vshrl.u32 920167782, %v173
        %v186 = vor.u32 %v184, %v185
        %v187 = vshll.u32 920167782, %v172
        %v188 = vshrl.u32 1326507024, %v173
        %v189 = vor.u32 %v187, %v188
        %vm190 = vcmp.lt.s32.totalorder %v171, 1
        %vm191 = vcmp.lt.s32.totalorder %v171, 2
        %vm192 = vcmp.lt.s32.totalorder %v171, 3
        %vm193 = vcmp.lt.s32.totalorder %v171, 4
        %v194 = vsel %vm190, %v174, %v177
        %v195 = vsel %vm193, %v183, 2102212464
        %v196 = vsel %vm192, %v180, %v195
        %v197 = vsel %vm191, %v194, %v196
        %v198 = vsel %vm190, %v177, %v180
        %v199 = vsel %vm193, %v186, 920167782
        %v200 = vsel %vm192, %v183, %v199
        %v201 = vsel %vm191, %v198, %v200
        %v202 = vsel %vm190, %v180, %v183
        %v203 = vsel %vm193, %v189, 1326507024
        %v204 = vsel %vm192, %v186, %v203
        %v205 = vsel %vm191, %v202, %v204
        %v206 = vshll.u32 %v166, 8
        %v207 = vand.u32 %v206, 65535
        %v208 = vshrl.u32 %v206, 16
        %v209 = vand.u32 %v205, 65535
        %v210 = vshrl.u32 %v205, 16
        %v211 = vmul.u32 %v207, %v209
        %v212 = vmul.u32 %v207, %v210
        %v213 = vmul.u32 %v208, %v209
        %v214 = vmul.u32 %v208, %v210
        %v215 = vshll.u32 %v212, 16
        %v216 = vshrl.u32 %v212, 16
        %v217 = vshll.u32 %v213, 16
        %v218 = vshrl.u32 %v213, 16
        %vm219 = vc.u32 %v211, %v215
        %v220 = vsel %vm219, 1, 0
        %v221 = vadd.s32 %v211, %v215
        %v222 = vadd.s32 %v214, %v220
        %vm223 = vc.u32 %v221, %v217
        %v224 = vsel %vm223, 1, 0
        %v225 = vadd.s32 %v221, %v217
        %v226 = vadd.s32 %v222, %v224
        %v227 = vadd.s32 %v226, %v216
        %v228 = vadd.s32 %v227, %v218
        %v229 = vand.u32 %v206, 65535
        %v230 = vshrl.u32 %v206, 16
        %v231 = vand.u32 %v201, 65535
        %v232 = vshrl.u32 %v201, 16
        %v233 = vmul.u32 %v229, %v231
        %v234 = vmul.u32 %v229, %v232
        %v235 = vmul.u32 %v230, %v231
        %v236 = vmul.u32 %v230, %v232
        %v237 = vshll.u32 %v234, 16
        %v238 = vshrl.u32 %v234, 16
        %v239 = vshll.u32 %v235, 16
        %v240 = vshrl.u32 %v235, 16
        %vm241 = vc.u32 %v233, %v237
        %v242 = vsel %vm241, 1, 0
        %v243 = vadd.s32 %v233, %v237
        %v244 = vadd.s32 %v236, %v242
        %vm245 = vc.u32 %v243, %v239
        %v246 = vsel %vm245, 1, 0
        %v247 = vadd.s32 %v243, %v239
        %v248 = vadd.s32 %v244, %v246
        %v249 = vadd.s32 %v248, %v238
        %v250 = vadd.s32 %v249, %v240
        %v251 = vmul.u32 %v206, %v197
        %v252 = vadd.s32 %v228, %v247
        %vm253 = vc.u32 %v228, %v247
        %v254 = vadd.s32 %v250, 1
        %v255 = vsel %vm253, %v254, %v250
        %v256 = vadd.s32 %v251, %v255
        %v257 = vadd.s32 %v256, 536870912
        %v258 = vshrl.u32 %v257, 30
        %v259 = vshll.u32 %v258, 30
        %v260 = vsub.s32 %v256, %v259
        %vm261 = vcmp.lt.s32.totalorder %v260, 0
        %v262 = vsub.s32 0, %v260
        %v263 = vsel %vm261, %v262, %v260
        %v264 = vclz %v263
        %v265 = vsub.s32 %v264, 2
        %vm266 = vcmp.gt.s32.totalorder 0, %v265
        %v267 = vsel %vm266, 0, %v265
        %v268 = vsub.s32 32, %v267
        %v269 = vshll.u32 %v260, %v267
        %v270 = vshrl.u32 %v252, %v268
        %v271 = vor.u32 %v269, %v270
        %v272 = vsub.s32 4294967266, %v267
        %v273 = vadd.s32 %v272, 127
        %v274 = vshll.u32 %v273, 23
        %v275 = vor.u32 4788187, %v274
        %v276 = vand.u32 2147483647, %v275
        %v278 = vcvt.s32.f32 %v271
        %v279 = vmul.f32 %v278, %v276
        %v280 = vxor.u32 %v279, 2147483648
        %v281 = vsel %vm160, %v280, %v279
        %v282 = vsub.s32 4, %v258
        %v283 = vsel %vm160, %v282, %v258
        %v284 = vsel %vm159, %v150, %v281
        %v285 = vsel %vm159, 0, %v283
        %v286 = vmul.f32 %v284, %v284
        %v287 = vmul.f32 %v286, -0.001358992
        %v288 = vadd.f32 %v287, 0.041655596
        %v289 = vmul.f32 %v286, %v288
        %v290 = vadd.f32 %v289, -0.4999988
        %v291 = vmul.f32 %v286, %v290
        %v292 = vadd.f32 1.0, %v291
        %v293 = vmul.f32 %v284, %v284
        %v294 = vmul.f32 %v293, -0.00019511016
        %v295 = vadd.f32 %v294, 0.008332121
        %v296 = vmul.f32 %v293, %v295
        %v297 = vadd.f32 %v296, -0.16666654
        %v298 = vmul.f32 %v293, %v297
        %v299 = vadd.f32 %v298, 1.0
        %v300 = vmul.f32 %v299, %v284
        %vm301 = vweird.f32 %v150
        %v302 = vadd.s32 %v285, 3
        %v303 = vand.u32 %v302, 3
        %vm304 = vcmp.lt.s32.totalorder %v303, 2
        %vm305 = vcmp.eq.s32.totalorder %v303, 0
        %v306 = vxor.u32 %v300, 2147483648
        %v307 = vsel %vm305, %v292, %v306
        %vm308 = vcmp.eq.s32.totalorder %v303, 2
        %v309 = vxor.u32 %v292, 2147483648
        %v310 = vsel %vm308, %v309, %v300
        %v311 = vsel %vm304, %v307, %v310
        %v312 = vsel %vm301, nan, %v311
        %v313 = vand.u32 2147483647, %v151
        %vm314 = vcmp.le.f32.partialorder %v313, 0.7853982
        %vm315 = vcmp.lt.s32.totalorder %v151, 0
        %v316 = vand.u32 %v151, 2139095040
        %v317 = vshrl.u32 %v316, 23
        %v318 = vsub.s32 %v317, 127
        %v319 = vand.u32 2147483647, %v151
        %v320 = vand.u32 %v319, 8388607
        %v321 = vor.u32 %v320, 8388608
        %v322 = vsub.s32 0, %v321
        %v323 = vadd.s32 %v318, 1
        %vm324 = vcmp.gt.s32.totalorder %v323, 0
        %v325 = vsel %vm324, %v323, 0
        %v326 = vshrl.u32 %v325, 5
        %v327 = vand.u32 %v325, 31
        %v328 = vsub.s32 32, %v327
        %v329 = vshrl.u32 683565275, %v328
        %v330 = vshll.u32 683565275, %v327
        %v331 = vshrl.u32 2475754826, %v328
        %v332 = vor.u32 %v330, %v331
        %v333 = vshll.u32 2475754826, %v327
        %v334 = vshrl.u32 2131351028, %v328
        %v335 = vor.u32 %v333, %v334
        %v336 = vshll.u32 2131351028, %v327
        %v337 = vshrl.u32 2102212464, %v328
        %v338 = vor.u32 %v336, %v337
        %v339 = vshll.u32 2102212464, %v327
        %v340 = vshrl.u32 920167782, %v328
        %v341 = vor.u32 %v339, %v340
        %v342 = vshll.u32 920167782, %v327
        %v343 = vshrl.u32 1326507024, %v328
        %v344 = vor.u32 %v342, %v343
        %vm345 = vcmp.lt.s32.totalorder %v326, 1
        %vm346 = vcmp.lt.s32.totalorder %v326, 2
        %vm347 = vcmp.lt.s32.totalorder %v326, 3
        %vm348 = vcmp.lt.s32.totalorder %v326, 4
        %v349 = vsel %vm345, %v329, %v332
        %v350 = vsel %vm348, %v338, 2102212464
        %v351 = vsel %vm347, %v335, %v350
        %v352 = vsel %vm346, %v349, %v351
        %v353 = vsel %vm345, %v332, %v335
        %v354 = vsel %vm348, %v341, 920167782
        %v355 = vsel %vm347, %v338, %v354
        %v356 = vsel %vm346, %v353, %v355
        %v357 = vsel %vm345, %v335, %v338
        %v358 = vsel %vm348, %v344, 1326507024
        %v359 = vsel %vm347, %v341, %v358
        %v360 = vsel %vm346, %v357, %v359
        %v361 = vshll.u32 %v321, 8
        %v362 = vand.u32 %v361, 65535
        %v363 = vshrl.u32 %v361, 16
        %v364 = vand.u32 %v360, 65535
        %v365 = vshrl.u32 %v360, 16
        %v366 = vmul.u32 %v362, %v364
        %v367 = vmul.u32 %v362, %v365
        %v368 = vmul.u32 %v363, %v364
        %v369 = vmul.u32 %v363, %v365
        %v370 = vshll.u32 %v367, 16
        %v371 = vshrl.u32 %v367, 16
        %v372 = vshll.u32 %v368, 16
        %v373 = vshrl.u32 %v368, 16
        %vm374 = vc.u32 %v366, %v370
        %v375 = vsel %vm374, 1, 0
        %v376 = vadd.s32 %v366, %v370
        %v377 = vadd.s32 %v369, %v375
        %vm378 = vc.u32 %v376, %v372
        %v379 = vsel %vm378, 1, 0
        %v380 = vadd.s32 %v376, %v372
        %v381 = vadd.s32 %v377, %v379
        %v382 = vadd.s32 %v381, %v371
        %v383 = vadd.s32 %v382, %v373
        %v384 = vand.u32 %v361, 65535
        %v385 = vshrl.u32 %v361, 16
        %v386 = vand.u32 %v356, 65535
        %v387 = vshrl.u32 %v356, 16
        %v388 = vmul.u32 %v384, %v386
        %v389 = vmul.u32 %v384, %v387
        %v390 = vmul.u32 %v385, %v386
        %v391 = vmul.u32 %v385, %v387
        %v392 = vshll.u32 %v389, 16
        %v393 = vshrl.u32 %v389, 16
        %v394 = vshll.u32 %v390, 16
        %v395 = vshrl.u32 %v390, 16
        %vm396 = vc.u32 %v388, %v392
        %v397 = vsel %vm396, 1, 0
        %v398 = vadd.s32 %v388, %v392
        %v399 = vadd.s32 %v391, %v397
        %vm400 = vc.u32 %v398, %v394
        %v401 = vsel %vm400, 1, 0
        %v402 = vadd.s32 %v398, %v394
        %v403 = vadd.s32 %v399, %v401
        %v404 = vadd.s32 %v403, %v393
        %v405 = vadd.s32 %v404, %v395
        %v406 = vmul.u32 %v361, %v352
        %v407 = vadd.s32 %v383, %v402
        %vm408 = vc.u32 %v383, %v402
        %v409 = vadd.s32 %v405, 1
        %v410 = vsel %vm408, %v409, %v405
        %v411 = vadd.s32 %v406, %v410
        %v412 = vadd.s32 %v411, 536870912
        %v413 = vshrl.u32 %v412, 30
        %v414 = vshll.u32 %v413, 30
        %v415 = vsub.s32 %v411, %v414
        %vm416 = vcmp.lt.s32.totalorder %v415, 0
        %v417 = vsub.s32 0, %v415
        %v418 = vsel %vm416, %v417, %v415
        %v419 = vclz %v418
        %v420 = vsub.s32 %v419, 2
        %vm421 = vcmp.gt.s32.totalorder 0, %v420
        %v422 = vsel %vm421, 0, %v420
        %v423 = vsub.s32 32, %v422
        %v424 = vshll.u32 %v415, %v422
        %v425 = vshrl.u32 %v407, %v423
        %v426 = vor.u32 %v424, %v425
        %v427 = vsub.s32 4294967266, %v422
        %v428 = vadd.s32 %v427, 127
        %v429 = vshll.u32 %v428, 23
        %v430 = vor.u32 4788187, %v429
        %v431 = vand.u32 2147483647, %v430
        %v433 = vcvt.s32.f32 %v426
        %v434 = vmul.f32 %v433, %v431
        %v435 = vxor.u32 %v434, 2147483648
        %v436 = vsel %vm315, %v435, %v434
        %v437 = vsub.s32 4, %v413
        %v438 = vsel %vm315, %v437, %v413
        %v439 = vsel %vm314, %v151, %v436
        %v440 = vsel %vm314, 0, %v438
        %v441 = vmul.f32 %v439, %v439
        %v442 = vmul.f32 %v441, -0.001358992
        %v443 = vadd.f32 %v442, 0.041655596
        %v444 = vmul.f32 %v441, %v443
        %v445 = vadd.f32 %v444, -0.4999988
        %v446 = vmul.f32 %v441, %v445
        %v447 = vadd.f32 1.0, %v446
        %v448 = vmul.f32 %v439, %v439
        %v449 = vmul.f32 %v448, -0.00019511016
        %v450 = vadd.f32 %v449, 0.008332121
        %v451 = vmul.f32 %v448, %v450
        %v452 = vadd.f32 %v451, -0.16666654
        %v453 = vmul.f32 %v448, %v452
        %v454 = vadd.f32 %v453, 1.0
        %v455 = vmul.f32 %v454, %v439
        %vm456 = vweird.f32 %v151
        %v457 = vadd.s32 %v440, 3
        %v458 = vand.u32 %v457, 3
        %vm459 = vcmp.lt.s32.totalorder %v458, 2
        %vm460 = vcmp.eq.s32.totalorder %v458, 0
        %v461 = vxor.u32 %v455, 2147483648
        %v462 = vsel %vm460, %v447, %v461
        %vm463 = vcmp.eq.s32.totalorder %v458, 2
        %v464 = vxor.u32 %v447, 2147483648
        %v465 = vsel %vm463, %v464, %v455
        %v466 = vsel %vm459, %v462, %v465
        %v467 = vsel %vm456, nan, %v466
        %v468 = vand.u32 2147483647, %v152
        %vm469 = vcmp.le.f32.partialorder %v468, 0.7853982
        %vm470 = vcmp.lt.s32.totalorder %v152, 0
        %v471 = vand.u32 %v152, 2139095040
        %v472 = vshrl.u32 %v471, 23
        %v473 = vsub.s32 %v472, 127
        %v474 = vand.u32 2147483647, %v152
        %v475 = vand.u32 %v474, 8388607
        %v476 = vor.u32 %v475, 8388608
        %v477 = vsub.s32 0, %v476
        %v478 = vadd.s32 %v473, 1
        %vm479 = vcmp.gt.s32.totalorder %v478, 0
        %v480 = vsel %vm479, %v478, 0
        %v481 = vshrl.u32 %v480, 5
        %v482 = vand.u32 %v480, 31
        %v483 = vsub.s32 32, %v482
        %v484 = vshrl.u32 683565275, %v483
        %v485 = vshll.u32 683565275, %v482
        %v486 = vshrl.u32 2475754826, %v483
        %v487 = vor.u32 %v485, %v486
        %v488 = vshll.u32 2475754826, %v482
        %v489 = vshrl.u32 2131351028, %v483
        %v490 = vor.u32 %v488, %v489
        %v491 = vshll.u32 2131351028, %v482
        %v492 = vshrl.u32 2102212464, %v483
        %v493 = vor.u32 %v491, %v492
        %v494 = vshll.u32 2102212464, %v482
        %v495 = vshrl.u32 920167782, %v483
        %v496 = vor.u32 %v494, %v495
        %v497 = vshll.u32 920167782, %v482
        %v498 = vshrl.u32 1326507024, %v483
        %v499 = vor.u32 %v497, %v498
        %vm500 = vcmp.lt.s32.totalorder %v481, 1
        %vm501 = vcmp.lt.s32.totalorder %v481, 2
        %vm502 = vcmp.lt.s32.totalorder %v481, 3
        %vm503 = vcmp.lt.s32.totalorder %v481, 4
        %v504 = vsel %vm500, %v484, %v487
        %v505 = vsel %vm503, %v493, 2102212464
        %v506 = vsel %vm502, %v490, %v505
        %v507 = vsel %vm501, %v504, %v506
        %v508 = vsel %vm500, %v487, %v490
        %v509 = vsel %vm503, %v496, 920167782
        %v510 = vsel %vm502, %v493, %v509
        %v511 = vsel %vm501, %v508, %v510
        %v512 = vsel %vm500, %v490, %v493
        %v513 = vsel %vm503, %v499, 1326507024
        %v514 = vsel %vm502, %v496, %v513
        %v515 = vsel %vm501, %v512, %v514
        %v516 = vshll.u32 %v476, 8
        %v517 = vand.u32 %v516, 65535
        %v518 = vshrl.u32 %v516, 16
        %v519 = vand.u32 %v515, 65535
        %v520 = vshrl.u32 %v515, 16
        %v521 = vmul.u32 %v517, %v519
        %v522 = vmul.u32 %v517, %v520
        %v523 = vmul.u32 %v518, %v519
        %v524 = vmul.u32 %v518, %v520
        %v525 = vshll.u32 %v522, 16
        %v526 = vshrl.u32 %v522, 16
        %v527 = vshll.u32 %v523, 16
        %v528 = vshrl.u32 %v523, 16
        %vm529 = vc.u32 %v521, %v525
        %v530 = vsel %vm529, 1, 0
        %v531 = vadd.s32 %v521, %v525
        %v532 = vadd.s32 %v524, %v530
        %vm533 = vc.u32 %v531, %v527
        %v534 = vsel %vm533, 1, 0
        %v535 = vadd.s32 %v531, %v527
        %v536 = vadd.s32 %v532, %v534
        %v537 = vadd.s32 %v536, %v526
        %v538 = vadd.s32 %v537, %v528
        %v539 = vand.u32 %v516, 65535
        %v540 = vshrl.u32 %v516, 16
        %v541 = vand.u32 %v511, 65535
        %v542 = vshrl.u32 %v511, 16
        %v543 = vmul.u32 %v539, %v541
        %v544 = vmul.u32 %v539, %v542
        %v545 = vmul.u32 %v540, %v541
        %v546 = vmul.u32 %v540, %v542
        %v547 = vshll.u32 %v544, 16
        %v548 = vshrl.u32 %v544, 16
        %v549 = vshll.u32 %v545, 16
        %v550 = vshrl.u32 %v545, 16
        %vm551 = vc.u32 %v543, %v547
        %v552 = vsel %vm551, 1, 0
        %v553 = vadd.s32 %v543, %v547
        %v554 = vadd.s32 %v546, %v552
        %vm555 = vc.u32 %v553, %v549
        %v556 = vsel %vm555, 1, 0
        %v557 = vadd.s32 %v553, %v549
        %v558 = vadd.s32 %v554, %v556
        %v559 = vadd.s32 %v558, %v548
        %v560 = vadd.s32 %v559, %v550
        %v561 = vmul.u32 %v516, %v507
        %v562 = vadd.s32 %v538, %v557
        %vm563 = vc.u32 %v538, %v557
        %v564 = vadd.s32 %v560, 1
        %v565 = vsel %vm563, %v564, %v560
        %v566 = vadd.s32 %v561, %v565
        %v567 = vadd.s32 %v566, 536870912
        %v568 = vshrl.u32 %v567, 30
        %v569 = vshll.u32 %v568, 30
        %v570 = vsub.s32 %v566, %v569
        %vm571 = vcmp.lt.s32.totalorder %v570, 0
        %v572 = vsub.s32 0, %v570
        %v573 = vsel %vm571, %v572, %v570
        %v574 = vclz %v573
        %v575 = vsub.s32 %v574, 2
        %vm576 = vcmp.gt.s32.totalorder 0, %v575
        %v577 = vsel %vm576, 0, %v575
        %v578 = vsub.s32 32, %v577
        %v579 = vshll.u32 %v570, %v577
        %v580 = vshrl.u32 %v562, %v578
        %v581 = vor.u32 %v579, %v580
        %v582 = vsub.s32 4294967266, %v577
        %v583 = vadd.s32 %v582, 127
        %v584 = vshll.u32 %v583, 23
        %v585 = vor.u32 4788187, %v584
        %v586 = vand.u32 2147483647, %v585
        %v588 = vcvt.s32.f32 %v581
        %v589 = vmul.f32 %v588, %v586
        %v590 = vxor.u32 %v589, 2147483648
        %v591 = vsel %vm470, %v590, %v589
        %v592 = vsub.s32 4, %v568
        %v593 = vsel %vm470, %v592, %v568
        %v594 = vsel %vm469, %v152, %v591
        %v595 = vsel %vm469, 0, %v593
        %v596 = vmul.f32 %v594, %v594
        %v597 = vmul.f32 %v596, -0.001358992
        %v598 = vadd.f32 %v597, 0.041655596
        %v599 = vmul.f32 %v596, %v598
        %v600 = vadd.f32 %v599, -0.4999988
        %v601 = vmul.f32 %v596, %v600
        %v602 = vadd.f32 1.0, %v601
        %v603 = vmul.f32 %v594, %v594
        %v604 = vmul.f32 %v603, -0.00019511016
        %v605 = vadd.f32 %v604, 0.008332121
        %v606 = vmul.f32 %v603, %v605
        %v607 = vadd.f32 %v606, -0.16666654
        %v608 = vmul.f32 %v603, %v607
        %v609 = vadd.f32 %v608, 1.0
        %v610 = vmul.f32 %v609, %v594
        %vm611 = vweird.f32 %v152
        %v612 = vadd.s32 %v595, 3
        %v613 = vand.u32 %v612, 3
        %vm614 = vcmp.lt.s32.totalorder %v613, 2
        %vm615 = vcmp.eq.s32.totalorder %v613, 0
        %v616 = vxor.u32 %v610, 2147483648
        %v617 = vsel %vm615, %v602, %v616
        %vm618 = vcmp.eq.s32.totalorder %v613, 2
        %v619 = vxor.u32 %v602, 2147483648
        %v620 = vsel %vm618, %v619, %v610
        %v621 = vsel %vm614, %v617, %v620
        %v622 = vsel %vm611, nan, %v621
        %v623 = vand.u32 2147483647, %v153
        %vm624 = vcmp.le.f32.partialorder %v623, 0.7853982
        %vm625 = vcmp.lt.s32.totalorder %v153, 0
        %v626 = vand.u32 %v153, 2139095040
        %v627 = vshrl.u32 %v626, 23
        %v628 = vsub.s32 %v627, 127
        %v629 = vand.u32 2147483647, %v153
        %v630 = vand.u32 %v629, 8388607
        %v631 = vor.u32 %v630, 8388608
        %v632 = vsub.s32 0, %v631
        %v633 = vadd.s32 %v628, 1
        %vm634 = vcmp.gt.s32.totalorder %v633, 0
        %v635 = vsel %vm634, %v633, 0
        %v636 = vshrl.u32 %v635, 5
        %v637 = vand.u32 %v635, 31
        %v638 = vsub.s32 32, %v637
        %v639 = vshrl.u32 683565275, %v638
        %v640 = vshll.u32 683565275, %v637
        %v641 = vshrl.u32 2475754826, %v638
        %v642 = vor.u32 %v640, %v641
        %v643 = vshll.u32 2475754826, %v637
        %v644 = vshrl.u32 2131351028, %v638
        %v645 = vor.u32 %v643, %v644
        %v646 = vshll.u32 2131351028, %v637
        %v647 = vshrl.u32 2102212464, %v638
        %v648 = vor.u32 %v646, %v647
        %v649 = vshll.u32 2102212464, %v637
        %v650 = vshrl.u32 920167782, %v638
        %v651 = vor.u32 %v649, %v650
        %v652 = vshll.u32 920167782, %v637
        %v653 = vshrl.u32 1326507024, %v638
        %v654 = vor.u32 %v652, %v653
        %vm655 = vcmp.lt.s32.totalorder %v636, 1
        %vm656 = vcmp.lt.s32.totalorder %v636, 2
        %vm657 = vcmp.lt.s32.totalorder %v636, 3
        %vm658 = vcmp.lt.s32.totalorder %v636, 4
        %v659 = vsel %vm655, %v639, %v642
        %v660 = vsel %vm658, %v648, 2102212464
        %v661 = vsel %vm657, %v645, %v660
        %v662 = vsel %vm656, %v659, %v661
        %v663 = vsel %vm655, %v642, %v645
        %v664 = vsel %vm658, %v651, 920167782
        %v665 = vsel %vm657, %v648, %v664
        %v666 = vsel %vm656, %v663, %v665
        %v667 = vsel %vm655, %v645, %v648
        %v668 = vsel %vm658, %v654, 1326507024
        %v669 = vsel %vm657, %v651, %v668
        %v670 = vsel %vm656, %v667, %v669
        %v671 = vshll.u32 %v631, 8
        %v672 = vand.u32 %v671, 65535
        %v673 = vshrl.u32 %v671, 16
        %v674 = vand.u32 %v670, 65535
        %v675 = vshrl.u32 %v670, 16
        %v676 = vmul.u32 %v672, %v674
        %v677 = vmul.u32 %v672, %v675
        %v678 = vmul.u32 %v673, %v674
        %v679 = vmul.u32 %v673, %v675
        %v680 = vshll.u32 %v677, 16
        %v681 = vshrl.u32 %v677, 16
        %v682 = vshll.u32 %v678, 16
        %v683 = vshrl.u32 %v678, 16
        %vm684 = vc.u32 %v676, %v680
        %v685 = vsel %vm684, 1, 0
        %v686 = vadd.s32 %v676, %v680
        %v687 = vadd.s32 %v679, %v685
        %vm688 = vc.u32 %v686, %v682
        %v689 = vsel %vm688, 1, 0
        %v690 = vadd.s32 %v686, %v682
        %v691 = vadd.s32 %v687, %v689
        %v692 = vadd.s32 %v691, %v681
        %v693 = vadd.s32 %v692, %v683
        %v694 = vand.u32 %v671, 65535
        %v695 = vshrl.u32 %v671, 16
        %v696 = vand.u32 %v666, 65535
        %v697 = vshrl.u32 %v666, 16
        %v698 = vmul.u32 %v694, %v696
        %v699 = vmul.u32 %v694, %v697
        %v700 = vmul.u32 %v695, %v696
        %v701 = vmul.u32 %v695, %v697
        %v702 = vshll.u32 %v699, 16
        %v703 = vshrl.u32 %v699, 16
        %v704 = vshll.u32 %v700, 16
        %v705 = vshrl.u32 %v700, 16
        %vm706 = vc.u32 %v698, %v702
        %v707 = vsel %vm706, 1, 0
        %v708 = vadd.s32 %v698, %v702
        %v709 = vadd.s32 %v701, %v707
        %vm710 = vc.u32 %v708, %v704
        %v711 = vsel %vm710, 1, 0
        %v712 = vadd.s32 %v708, %v704
        %v713 = vadd.s32 %v709, %v711
        %v714 = vadd.s32 %v713, %v703
        %v715 = vadd.s32 %v714, %v705
        %v716 = vmul.u32 %v671, %v662
        %v717 = vadd.s32 %v693, %v712
        %vm718 = vc.u32 %v693, %v712
        %v719 = vadd.s32 %v715, 1
        %v720 = vsel %vm718, %v719, %v715
        %v721 = vadd.s32 %v716, %v720
        %v722 = vadd.s32 %v721, 536870912
        %v723 = vshrl.u32 %v722, 30
        %v724 = vshll.u32 %v723, 30
        %v725 = vsub.s32 %v721, %v724
        %vm726 = vcmp.lt.s32.totalorder %v725, 0
        %v727 = vsub.s32 0, %v725
        %v728 = vsel %vm726, %v727, %v725
        %v729 = vclz %v728
        %v730 = vsub.s32 %v729, 2
        %vm731 = vcmp.gt.s32.totalorder 0, %v730
        %v732 = vsel %vm731, 0, %v730
        %v733 = vsub.s32 32, %v732
        %v734 = vshll.u32 %v725, %v732
        %v735 = vshrl.u32 %v717, %v733
        %v736 = vor.u32 %v734, %v735
        %v737 = vsub.s32 4294967266, %v732
        %v738 = vadd.s32 %v737, 127
        %v739 = vshll.u32 %v738, 23
        %v740 = vor.u32 4788187, %v739
        %v741 = vand.u32 2147483647, %v740
        %v743 = vcvt.s32.f32 %v736
        %v744 = vmul.f32 %v743, %v741
        %v745 = vxor.u32 %v744, 2147483648
        %v746 = vsel %vm625, %v745, %v744
        %v747 = vsub.s32 4, %v723
        %v748 = vsel %vm625, %v747, %v723
        %v749 = vsel %vm624, %v153, %v746
        %v750 = vsel %vm624, 0, %v748
        %v751 = vmul.f32 %v749, %v749
        %v752 = vmul.f32 %v751, -0.001358992
        %v753 = vadd.f32 %v752, 0.041655596
        %v754 = vmul.f32 %v751, %v753
        %v755 = vadd.f32 %v754, -0.4999988
        %v756 = vmul.f32 %v751, %v755
        %v757 = vadd.f32 1.0, %v756
        %v758 = vmul.f32 %v749, %v749
        %v759 = vmul.f32 %v758, -0.00019511016
        %v760 = vadd.f32 %v759, 0.008332121
        %v761 = vmul.f32 %v758, %v760
        %v762 = vadd.f32 %v761, -0.16666654
        %v763 = vmul.f32 %v758, %v762
        %v764 = vadd.f32 %v763, 1.0
        %v765 = vmul.f32 %v764, %v749
        %vm766 = vweird.f32 %v153
        %v767 = vadd.s32 %v750, 3
        %v768 = vand.u32 %v767, 3
        %vm769 = vcmp.lt.s32.totalorder %v768, 2
        %vm770 = vcmp.eq.s32.totalorder %v768, 0
        %v771 = vxor.u32 %v765, 2147483648
        %v772 = vsel %vm770, %v757, %v771
        %vm773 = vcmp.eq.s32.totalorder %v768, 2
        %v774 = vxor.u32 %v757, 2147483648
        %v775 = vsel %vm773, %v774, %v765
        %v776 = vsel %vm769, %v772, %v775
        %v777 = vsel %vm766, nan, %v776
        %v778 = vand.u32 2147483647, %v154
        %vm779 = vcmp.le.f32.partialorder %v778, 0.7853982
        %vm780 = vcmp.lt.s32.totalorder %v154, 0
        %v781 = vand.u32 %v154, 2139095040
        %v782 = vshrl.u32 %v781, 23
        %v783 = vsub.s32 %v782, 127
        %v784 = vand.u32 2147483647, %v154
        %v785 = vand.u32 %v784, 8388607
        %v786 = vor.u32 %v785, 8388608
        %v787 = vsub.s32 0, %v786
        %v788 = vadd.s32 %v783, 1
        %vm789 = vcmp.gt.s32.totalorder %v788, 0
        %v790 = vsel %vm789, %v788, 0
        %v791 = vshrl.u32 %v790, 5
        %v792 = vand.u32 %v790, 31
        %v793 = vsub.s32 32, %v792
        %v794 = vshrl.u32 683565275, %v793
        %v795 = vshll.u32 683565275, %v792
        %v796 = vshrl.u32 2475754826, %v793
        %v797 = vor.u32 %v795, %v796
        %v798 = vshll.u32 2475754826, %v792
        %v799 = vshrl.u32 2131351028, %v793
        %v800 = vor.u32 %v798, %v799
        %v801 = vshll.u32 2131351028, %v792
        %v802 = vshrl.u32 2102212464, %v793
        %v803 = vor.u32 %v801, %v802
        %v804 = vshll.u32 2102212464, %v792
        %v805 = vshrl.u32 920167782, %v793
        %v806 = vor.u32 %v804, %v805
        %v807 = vshll.u32 920167782, %v792
        %v808 = vshrl.u32 1326507024, %v793
        %v809 = vor.u32 %v807, %v808
        %vm810 = vcmp.lt.s32.totalorder %v791, 1
        %vm811 = vcmp.lt.s32.totalorder %v791, 2
        %vm812 = vcmp.lt.s32.totalorder %v791, 3
        %vm813 = vcmp.lt.s32.totalorder %v791, 4
        %v814 = vsel %vm810, %v794, %v797
        %v815 = vsel %vm813, %v803, 2102212464
        %v816 = vsel %vm812, %v800, %v815
        %v817 = vsel %vm811, %v814, %v816
        %v818 = vsel %vm810, %v797, %v800
        %v819 = vsel %vm813, %v806, 920167782
        %v820 = vsel %vm812, %v803, %v819
        %v821 = vsel %vm811, %v818, %v820
        %v822 = vsel %vm810, %v800, %v803
        %v823 = vsel %vm813, %v809, 1326507024
        %v824 = vsel %vm812, %v806, %v823
        %v825 = vsel %vm811, %v822, %v824
        %v826 = vshll.u32 %v786, 8
        %v827 = vand.u32 %v826, 65535
        %v828 = vshrl.u32 %v826, 16
        %v829 = vand.u32 %v825, 65535
        %v830 = vshrl.u32 %v825, 16
        %v831 = vmul.u32 %v827, %v829
        %v832 = vmul.u32 %v827, %v830
        %v833 = vmul.u32 %v828, %v829
        %v834 = vmul.u32 %v828, %v830
        %v835 = vshll.u32 %v832, 16
        %v836 = vshrl.u32 %v832, 16
        %v837 = vshll.u32 %v833, 16
        %v838 = vshrl.u32 %v833, 16
        %vm839 = vc.u32 %v831, %v835
        %v840 = vsel %vm839, 1, 0
        %v841 = vadd.s32 %v831, %v835
        %v842 = vadd.s32 %v834, %v840
        %vm843 = vc.u32 %v841, %v837
        %v844 = vsel %vm843, 1, 0
        %v845 = vadd.s32 %v841, %v837
        %v846 = vadd.s32 %v842, %v844
        %v847 = vadd.s32 %v846, %v836
        %v848 = vadd.s32 %v847, %v838
        %v849 = vand.u32 %v826, 65535
        %v850 = vshrl.u32 %v826, 16
        %v851 = vand.u32 %v821, 65535
        %v852 = vshrl.u32 %v821, 16
        %v853 = vmul.u32 %v849, %v851
        %v854 = vmul.u32 %v849, %v852
        %v855 = vmul.u32 %v850, %v851
        %v856 = vmul.u32 %v850, %v852
        %v857 = vshll.u32 %v854, 16
        %v858 = vshrl.u32 %v854, 16
        %v859 = vshll.u32 %v855, 16
        %v860 = vshrl.u32 %v855, 16
        %vm861 = vc.u32 %v853, %v857
        %v862 = vsel %vm861, 1, 0
        %v863 = vadd.s32 %v853, %v857
        %v864 = vadd.s32 %v856, %v862
        %vm865 = vc.u32 %v863, %v859
        %v866 = vsel %vm865, 1, 0
        %v867 = vadd.s32 %v863, %v859
        %v868 = vadd.s32 %v864, %v866
        %v869 = vadd.s32 %v868, %v858
        %v870 = vadd.s32 %v869, %v860
        %v871 = vmul.u32 %v826, %v817
        %v872 = vadd.s32 %v848, %v867
        %vm873 = vc.u32 %v848, %v867
        %v874 = vadd.s32 %v870, 1
        %v875 = vsel %vm873, %v874, %v870
        %v876 = vadd.s32 %v871, %v875
        %v877 = vadd.s32 %v876, 536870912
        %v878 = vshrl.u32 %v877, 30
        %v879 = vshll.u32 %v878, 30
        %v880 = vsub.s32 %v876, %v879
        %vm881 = vcmp.lt.s32.totalorder %v880, 0
        %v882 = vsub.s32 0, %v880
        %v883 = vsel %vm881, %v882, %v880
        %v884 = vclz %v883
        %v885 = vsub.s32 %v884, 2
        %vm886 = vcmp.gt.s32.totalorder 0, %v885
        %v887 = vsel %vm886, 0, %v885
        %v888 = vsub.s32 32, %v887
        %v889 = vshll.u32 %v880, %v887
        %v890 = vshrl.u32 %v872, %v888
        %v891 = vor.u32 %v889, %v890
        %v892 = vsub.s32 4294967266, %v887
        %v893 = vadd.s32 %v892, 127
        %v894 = vshll.u32 %v893, 23
        %v895 = vor.u32 4788187, %v894
        %v896 = vand.u32 2147483647, %v895
        %v898 = vcvt.s32.f32 %v891
        %v899 = vmul.f32 %v898, %v896
        %v900 = vxor.u32 %v899, 2147483648
        %v901 = vsel %vm780, %v900, %v899
        %v902 = vsub.s32 4, %v878
        %v903 = vsel %vm780, %v902, %v878
        %v904 = vsel %vm779, %v154, %v901
        %v905 = vsel %vm779, 0, %v903
        %v906 = vmul.f32 %v904, %v904
        %v907 = vmul.f32 %v906, -0.001358992
        %v908 = vadd.f32 %v907, 0.041655596
        %v909 = vmul.f32 %v906, %v908
        %v910 = vadd.f32 %v909, -0.4999988
        %v911 = vmul.f32 %v906, %v910
        %v912 = vadd.f32 1.0, %v911
        %v913 = vmul.f32 %v904, %v904
        %v914 = vmul.f32 %v913, -0.00019511016
        %v915 = vadd.f32 %v914, 0.008332121
        %v916 = vmul.f32 %v913, %v915
        %v917 = vadd.f32 %v916, -0.16666654
        %v918 = vmul.f32 %v913, %v917
        %v919 = vadd.f32 %v918, 1.0
        %v920 = vmul.f32 %v919, %v904
        %vm921 = vweird.f32 %v154
        %v922 = vadd.s32 %v905, 3
        %v923 = vand.u32 %v922, 3
        %vm924 = vcmp.lt.s32.totalorder %v923, 2
        %vm925 = vcmp.eq.s32.totalorder %v923, 0
        %v926 = vxor.u32 %v920, 2147483648
        %v927 = vsel %vm925, %v912, %v926
        %vm928 = vcmp.eq.s32.totalorder %v923, 2
        %v929 = vxor.u32 %v912, 2147483648
        %v930 = vsel %vm928, %v929, %v920
        %v931 = vsel %vm924, %v927, %v930
        %v932 = vsel %vm921, nan, %v931
        %v933 = vand.u32 2147483647, %v155
        %vm934 = vcmp.le.f32.partialorder %v933, 0.7853982
        %vm935 = vcmp.lt.s32.totalorder %v155, 0
        %v936 = vand.u32 %v155, 2139095040
        %v937 = vshrl.u32 %v936, 23
        %v938 = vsub.s32 %v937, 127
        %v939 = vand.u32 2147483647, %v155
        %v940 = vand.u32 %v939, 8388607
        %v941 = vor.u32 %v940, 8388608
        %v942 = vsub.s32 0, %v941
        %v943 = vadd.s32 %v938, 1
        %vm944 = vcmp.gt.s32.totalorder %v943, 0
        %v945 = vsel %vm944, %v943, 0
        %v946 = vshrl.u32 %v945, 5
        %v947 = vand.u32 %v945, 31
        %v948 = vsub.s32 32, %v947
        %v949 = vshrl.u32 683565275, %v948
        %v950 = vshll.u32 683565275, %v947
        %v951 = vshrl.u32 2475754826, %v948
        %v952 = vor.u32 %v950, %v951
        %v953 = vshll.u32 2475754826, %v947
        %v954 = vshrl.u32 2131351028, %v948
        %v955 = vor.u32 %v953, %v954
        %v956 = vshll.u32 2131351028, %v947
        %v957 = vshrl.u32 2102212464, %v948
        %v958 = vor.u32 %v956, %v957
        %v959 = vshll.u32 2102212464, %v947
        %v960 = vshrl.u32 920167782, %v948
        %v961 = vor.u32 %v959, %v960
        %v962 = vshll.u32 920167782, %v947
        %v963 = vshrl.u32 1326507024, %v948
        %v964 = vor.u32 %v962, %v963
        %vm965 = vcmp.lt.s32.totalorder %v946, 1
        %vm966 = vcmp.lt.s32.totalorder %v946, 2
        %vm967 = vcmp.lt.s32.totalorder %v946, 3
        %vm968 = vcmp.lt.s32.totalorder %v946, 4
        %v969 = vsel %vm965, %v949, %v952
        %v970 = vsel %vm968, %v958, 2102212464
        %v971 = vsel %vm967, %v955, %v970
        %v972 = vsel %vm966, %v969, %v971
        %v973 = vsel %vm965, %v952, %v955
        %v974 = vsel %vm968, %v961, 920167782
        %v975 = vsel %vm967, %v958, %v974
        %v976 = vsel %vm966, %v973, %v975
        %v977 = vsel %vm965, %v955, %v958
        %v978 = vsel %vm968, %v964, 1326507024
        %v979 = vsel %vm967, %v961, %v978
        %v980 = vsel %vm966, %v977, %v979
        %v981 = vshll.u32 %v941, 8
        %v982 = vand.u32 %v981, 65535
        %v983 = vshrl.u32 %v981, 16
        %v984 = vand.u32 %v980, 65535
        %v985 = vshrl.u32 %v980, 16
        %v986 = vmul.u32 %v982, %v984
        %v987 = vmul.u32 %v982, %v985
        %v988 = vmul.u32 %v983, %v984
        %v989 = vmul.u32 %v983, %v985
        %v990 = vshll.u32 %v987, 16
        %v991 = vshrl.u32 %v987, 16
        %v992 = vshll.u32 %v988, 16
        %v993 = vshrl.u32 %v988, 16
        %vm994 = vc.u32 %v986, %v990
        %v995 = vsel %vm994, 1, 0
        %v996 = vadd.s32 %v986, %v990
        %v997 = vadd.s32 %v989, %v995
        %vm998 = vc.u32 %v996, %v992
        %v999 = vsel %vm998, 1, 0
        %v1000 = vadd.s32 %v996, %v992
        %v1001 = vadd.s32 %v997, %v999
        %v1002 = vadd.s32 %v1001, %v991
        %v1003 = vadd.s32 %v1002, %v993
        %v1004 = vand.u32 %v981, 65535
        %v1005 = vshrl.u32 %v981, 16
        %v1006 = vand.u32 %v976, 65535
        %v1007 = vshrl.u32 %v976, 16
        %v1008 = vmul.u32 %v1004, %v1006
        %v1009 = vmul.u32 %v1004, %v1007
        %v1010 = vmul.u32 %v1005, %v1006
        %v1011 = vmul.u32 %v1005, %v1007
        %v1012 = vshll.u32 %v1009, 16
        %v1013 = vshrl.u32 %v1009, 16
        %v1014 = vshll.u32 %v1010, 16
        %v1015 = vshrl.u32 %v1010, 16
        %vm1016 = vc.u32 %v1008, %v1012
        %v1017 = vsel %vm1016, 1, 0
        %v1018 = vadd.s32 %v1008, %v1012
        %v1019 = vadd.s32 %v1011, %v1017
        %vm1020 = vc.u32 %v1018, %v1014
        %v1021 = vsel %vm1020, 1, 0
        %v1022 = vadd.s32 %v1018, %v1014
        %v1023 = vadd.s32 %v1019, %v1021
        %v1024 = vadd.s32 %v1023, %v1013
        %v1025 = vadd.s32 %v1024, %v1015
        %v1026 = vmul.u32 %v981, %v972
        %v1027 = vadd.s32 %v1003, %v1022
        %vm1028 = vc.u32 %v1003, %v1022
        %v1029 = vadd.s32 %v1025, 1
        %v1030 = vsel %vm1028, %v1029, %v1025
        %v1031 = vadd.s32 %v1026, %v1030
        %v1032 = vadd.s32 %v1031, 536870912
        %v1033 = vshrl.u32 %v1032, 30
        %v1034 = vshll.u32 %v1033, 30
        %v1035 = vsub.s32 %v1031, %v1034
        %vm1036 = vcmp.lt.s32.totalorder %v1035, 0
        %v1037 = vsub.s32 0, %v1035
        %v1038 = vsel %vm1036, %v1037, %v1035
        %v1039 = vclz %v1038
        %v1040 = vsub.s32 %v1039, 2
        %vm1041 = vcmp.gt.s32.totalorder 0, %v1040
        %v1042 = vsel %vm1041, 0, %v1040
        %v1043 = vsub.s32 32, %v1042
        %v1044 = vshll.u32 %v1035, %v1042
        %v1045 = vshrl.u32 %v1027, %v1043
        %v1046 = vor.u32 %v1044, %v1045
        %v1047 = vsub.s32 4294967266, %v1042
        %v1048 = vadd.s32 %v1047, 127
        %v1049 = vshll.u32 %v1048, 23
        %v1050 = vor.u32 4788187, %v1049
        %v1051 = vand.u32 2147483647, %v1050
        %v1053 = vcvt.s32.f32 %v1046
        %v1054 = vmul.f32 %v1053, %v1051
        %v1055 = vxor.u32 %v1054, 2147483648
        %v1056 = vsel %vm935, %v1055, %v1054
        %v1057 = vsub.s32 4, %v1033
        %v1058 = vsel %vm935, %v1057, %v1033
        %v1059 = vsel %vm934, %v155, %v1056
        %v1060 = vsel %vm934, 0, %v1058
        %v1061 = vmul.f32 %v1059, %v1059
        %v1062 = vmul.f32 %v1061, -0.001358992
        %v1063 = vadd.f32 %v1062, 0.041655596
        %v1064 = vmul.f32 %v1061, %v1063
        %v1065 = vadd.f32 %v1064, -0.4999988
        %v1066 = vmul.f32 %v1061, %v1065
        %v1067 = vadd.f32 1.0, %v1066
        %v1068 = vmul.f32 %v1059, %v1059
        %v1069 = vmul.f32 %v1068, -0.00019511016
        %v1070 = vadd.f32 %v1069, 0.008332121
        %v1071 = vmul.f32 %v1068, %v1070
        %v1072 = vadd.f32 %v1071, -0.16666654
        %v1073 = vmul.f32 %v1068, %v1072
        %v1074 = vadd.f32 %v1073, 1.0
        %v1075 = vmul.f32 %v1074, %v1059
        %vm1076 = vweird.f32 %v155
        %v1077 = vadd.s32 %v1060, 3
        %v1078 = vand.u32 %v1077, 3
        %vm1079 = vcmp.lt.s32.totalorder %v1078, 2
        %vm1080 = vcmp.eq.s32.totalorder %v1078, 0
        %v1081 = vxor.u32 %v1075, 2147483648
        %v1082 = vsel %vm1080, %v1067, %v1081
        %vm1083 = vcmp.eq.s32.totalorder %v1078, 2
        %v1084 = vxor.u32 %v1067, 2147483648
        %v1085 = vsel %vm1083, %v1084, %v1075
        %v1086 = vsel %vm1079, %v1082, %v1085
        %v1087 = vsel %vm1076, nan, %v1086
        %v1088 = vand.u32 2147483647, %v156
        %vm1089 = vcmp.le.f32.partialorder %v1088, 0.7853982
        %vm1090 = vcmp.lt.s32.totalorder %v156, 0
        %v1091 = vand.u32 %v156, 2139095040
        %v1092 = vshrl.u32 %v1091, 23
        %v1093 = vsub.s32 %v1092, 127
        %v1094 = vand.u32 2147483647, %v156
        %v1095 = vand.u32 %v1094, 8388607
        %v1096 = vor.u32 %v1095, 8388608
        %v1097 = vsub.s32 0, %v1096
        %v1098 = vadd.s32 %v1093, 1
        %vm1099 = vcmp.gt.s32.totalorder %v1098, 0
        %v1100 = vsel %vm1099, %v1098, 0
        %v1101 = vshrl.u32 %v1100, 5
        %v1102 = vand.u32 %v1100, 31
        %v1103 = vsub.s32 32, %v1102
        %v1104 = vshrl.u32 683565275, %v1103
        %v1105 = vshll.u32 683565275, %v1102
        %v1106 = vshrl.u32 2475754826, %v1103
        %v1107 = vor.u32 %v1105, %v1106
        %v1108 = vshll.u32 2475754826, %v1102
        %v1109 = vshrl.u32 2131351028, %v1103
        %v1110 = vor.u32 %v1108, %v1109
        %v1111 = vshll.u32 2131351028, %v1102
        %v1112 = vshrl.u32 2102212464, %v1103
        %v1113 = vor.u32 %v1111, %v1112
        %v1114 = vshll.u32 2102212464, %v1102
        %v1115 = vshrl.u32 920167782, %v1103
        %v1116 = vor.u32 %v1114, %v1115
        %v1117 = vshll.u32 920167782, %v1102
        %v1118 = vshrl.u32 1326507024, %v1103
        %v1119 = vor.u32 %v1117, %v1118
        %vm1120 = vcmp.lt.s32.totalorder %v1101, 1
        %vm1121 = vcmp.lt.s32.totalorder %v1101, 2
        %vm1122 = vcmp.lt.s32.totalorder %v1101, 3
        %vm1123 = vcmp.lt.s32.totalorder %v1101, 4
        %v1124 = vsel %vm1120, %v1104, %v1107
        %v1125 = vsel %vm1123, %v1113, 2102212464
        %v1126 = vsel %vm1122, %v1110, %v1125
        %v1127 = vsel %vm1121, %v1124, %v1126
        %v1128 = vsel %vm1120, %v1107, %v1110
        %v1129 = vsel %vm1123, %v1116, 920167782
        %v1130 = vsel %vm1122, %v1113, %v1129
        %v1131 = vsel %vm1121, %v1128, %v1130
        %v1132 = vsel %vm1120, %v1110, %v1113
        %v1133 = vsel %vm1123, %v1119, 1326507024
        %v1134 = vsel %vm1122, %v1116, %v1133
        %v1135 = vsel %vm1121, %v1132, %v1134
        %v1136 = vshll.u32 %v1096, 8
        %v1137 = vand.u32 %v1136, 65535
        %v1138 = vshrl.u32 %v1136, 16
        %v1139 = vand.u32 %v1135, 65535
        %v1140 = vshrl.u32 %v1135, 16
        %v1141 = vmul.u32 %v1137, %v1139
        %v1142 = vmul.u32 %v1137, %v1140
        %v1143 = vmul.u32 %v1138, %v1139
        %v1144 = vmul.u32 %v1138, %v1140
        %v1145 = vshll.u32 %v1142, 16
        %v1146 = vshrl.u32 %v1142, 16
        %v1147 = vshll.u32 %v1143, 16
        %v1148 = vshrl.u32 %v1143, 16
        %vm1149 = vc.u32 %v1141, %v1145
        %v1150 = vsel %vm1149, 1, 0
        %v1151 = vadd.s32 %v1141, %v1145
        %v1152 = vadd.s32 %v1144, %v1150
        %vm1153 = vc.u32 %v1151, %v1147
        %v1154 = vsel %vm1153, 1, 0
        %v1155 = vadd.s32 %v1151, %v1147
        %v1156 = vadd.s32 %v1152, %v1154
        %v1157 = vadd.s32 %v1156, %v1146
        %v1158 = vadd.s32 %v1157, %v1148
        %v1159 = vand.u32 %v1136, 65535
        %v1160 = vshrl.u32 %v1136, 16
        %v1161 = vand.u32 %v1131, 65535
        %v1162 = vshrl.u32 %v1131, 16
        %v1163 = vmul.u32 %v1159, %v1161
        %v1164 = vmul.u32 %v1159, %v1162
        %v1165 = vmul.u32 %v1160, %v1161
        %v1166 = vmul.u32 %v1160, %v1162
        %v1167 = vshll.u32 %v1164, 16
        %v1168 = vshrl.u32 %v1164, 16
        %v1169 = vshll.u32 %v1165, 16
        %v1170 = vshrl.u32 %v1165, 16
        %vm1171 = vc.u32 %v1163, %v1167
        %v1172 = vsel %vm1171, 1, 0
        %v1173 = vadd.s32 %v1163, %v1167
        %v1174 = vadd.s32 %v1166, %v1172
        %vm1175 = vc.u32 %v1173, %v1169
        %v1176 = vsel %vm1175, 1, 0
        %v1177 = vadd.s32 %v1173, %v1169
        %v1178 = vadd.s32 %v1174, %v1176
        %v1179 = vadd.s32 %v1178, %v1168
        %v1180 = vadd.s32 %v1179, %v1170
        %v1181 = vmul.u32 %v1136, %v1127
        %v1182 = vadd.s32 %v1158, %v1177
        %vm1183 = vc.u32 %v1158, %v1177
        %v1184 = vadd.s32 %v1180, 1
        %v1185 = vsel %vm1183, %v1184, %v1180
        %v1186 = vadd.s32 %v1181, %v1185
        %v1187 = vadd.s32 %v1186, 536870912
        %v1188 = vshrl.u32 %v1187, 30
        %v1189 = vshll.u32 %v1188, 30
        %v1190 = vsub.s32 %v1186, %v1189
        %vm1191 = vcmp.lt.s32.totalorder %v1190, 0
        %v1192 = vsub.s32 0, %v1190
        %v1193 = vsel %vm1191, %v1192, %v1190
        %v1194 = vclz %v1193
        %v1195 = vsub.s32 %v1194, 2
        %vm1196 = vcmp.gt.s32.totalorder 0, %v1195
        %v1197 = vsel %vm1196, 0, %v1195
        %v1198 = vsub.s32 32, %v1197
        %v1199 = vshll.u32 %v1190, %v1197
        %v1200 = vshrl.u32 %v1182, %v1198
        %v1201 = vor.u32 %v1199, %v1200
        %v1202 = vsub.s32 4294967266, %v1197
        %v1203 = vadd.s32 %v1202, 127
        %v1204 = vshll.u32 %v1203, 23
        %v1205 = vor.u32 4788187, %v1204
        %v1206 = vand.u32 2147483647, %v1205
        %v1208 = vcvt.s32.f32 %v1201
        %v1209 = vmul.f32 %v1208, %v1206
        %v1210 = vxor.u32 %v1209, 2147483648
        %v1211 = vsel %vm1090, %v1210, %v1209
        %v1212 = vsub.s32 4, %v1188
        %v1213 = vsel %vm1090, %v1212, %v1188
        %v1214 = vsel %vm1089, %v156, %v1211
        %v1215 = vsel %vm1089, 0, %v1213
        %v1216 = vmul.f32 %v1214, %v1214
        %v1217 = vmul.f32 %v1216, -0.001358992
        %v1218 = vadd.f32 %v1217, 0.041655596
        %v1219 = vmul.f32 %v1216, %v1218
        %v1220 = vadd.f32 %v1219, -0.4999988
        %v1221 = vmul.f32 %v1216, %v1220
        %v1222 = vadd.f32 1.0, %v1221
        %v1223 = vmul.f32 %v1214, %v1214
        %v1224 = vmul.f32 %v1223, -0.00019511016
        %v1225 = vadd.f32 %v1224, 0.008332121
        %v1226 = vmul.f32 %v1223, %v1225
        %v1227 = vadd.f32 %v1226, -0.16666654
        %v1228 = vmul.f32 %v1223, %v1227
        %v1229 = vadd.f32 %v1228, 1.0
        %v1230 = vmul.f32 %v1229, %v1214
        %vm1231 = vweird.f32 %v156
        %v1232 = vadd.s32 %v1215, 3
        %v1233 = vand.u32 %v1232, 3
        %vm1234 = vcmp.lt.s32.totalorder %v1233, 2
        %vm1235 = vcmp.eq.s32.totalorder %v1233, 0
        %v1236 = vxor.u32 %v1230, 2147483648
        %v1237 = vsel %vm1235, %v1222, %v1236
        %vm1238 = vcmp.eq.s32.totalorder %v1233, 2
        %v1239 = vxor.u32 %v1222, 2147483648
        %v1240 = vsel %vm1238, %v1239, %v1230
        %v1241 = vsel %vm1234, %v1237, %v1240
        %v1242 = vsel %vm1231, nan, %v1241
        %v1243 = vand.u32 2147483647, %v157
        %vm1244 = vcmp.le.f32.partialorder %v1243, 0.7853982
        %vm1245 = vcmp.lt.s32.totalorder %v157, 0
        %v1246 = vand.u32 %v157, 2139095040
        %v1247 = vshrl.u32 %v1246, 23
        %v1248 = vsub.s32 %v1247, 127
        %v1249 = vand.u32 2147483647, %v157
        %v1250 = vand.u32 %v1249, 8388607
        %v1251 = vor.u32 %v1250, 8388608
        %v1252 = vsub.s32 0, %v1251
        %v1253 = vadd.s32 %v1248, 1
        %vm1254 = vcmp.gt.s32.totalorder %v1253, 0
        %v1255 = vsel %vm1254, %v1253, 0
        %v1256 = vshrl.u32 %v1255, 5
        %v1257 = vand.u32 %v1255, 31
        %v1258 = vsub.s32 32, %v1257
        %v1259 = vshrl.u32 683565275, %v1258
        %v1260 = vshll.u32 683565275, %v1257
        %v1261 = vshrl.u32 2475754826, %v1258
        %v1262 = vor.u32 %v1260, %v1261
        %v1263 = vshll.u32 2475754826, %v1257
        %v1264 = vshrl.u32 2131351028, %v1258
        %v1265 = vor.u32 %v1263, %v1264
        %v1266 = vshll.u32 2131351028, %v1257
        %v1267 = vshrl.u32 2102212464, %v1258
        %v1268 = vor.u32 %v1266, %v1267
        %v1269 = vshll.u32 2102212464, %v1257
        %v1270 = vshrl.u32 920167782, %v1258
        %v1271 = vor.u32 %v1269, %v1270
        %v1272 = vshll.u32 920167782, %v1257
        %v1273 = vshrl.u32 1326507024, %v1258
        %v1274 = vor.u32 %v1272, %v1273
        %vm1275 = vcmp.lt.s32.totalorder %v1256, 1
        %vm1276 = vcmp.lt.s32.totalorder %v1256, 2
        %vm1277 = vcmp.lt.s32.totalorder %v1256, 3
        %vm1278 = vcmp.lt.s32.totalorder %v1256, 4
        %v1279 = vsel %vm1275, %v1259, %v1262
        %v1280 = vsel %vm1278, %v1268, 2102212464
        %v1281 = vsel %vm1277, %v1265, %v1280
        %v1282 = vsel %vm1276, %v1279, %v1281
        %v1283 = vsel %vm1275, %v1262, %v1265
        %v1284 = vsel %vm1278, %v1271, 920167782
        %v1285 = vsel %vm1277, %v1268, %v1284
        %v1286 = vsel %vm1276, %v1283, %v1285
        %v1287 = vsel %vm1275, %v1265, %v1268
        %v1288 = vsel %vm1278, %v1274, 1326507024
        %v1289 = vsel %vm1277, %v1271, %v1288
        %v1290 = vsel %vm1276, %v1287, %v1289
        %v1291 = vshll.u32 %v1251, 8
        %v1292 = vand.u32 %v1291, 65535
        %v1293 = vshrl.u32 %v1291, 16
        %v1294 = vand.u32 %v1290, 65535
        %v1295 = vshrl.u32 %v1290, 16
        %v1296 = vmul.u32 %v1292, %v1294
        %v1297 = vmul.u32 %v1292, %v1295
        %v1298 = vmul.u32 %v1293, %v1294
        %v1299 = vmul.u32 %v1293, %v1295
        %v1300 = vshll.u32 %v1297, 16
        %v1301 = vshrl.u32 %v1297, 16
        %v1302 = vshll.u32 %v1298, 16
        %v1303 = vshrl.u32 %v1298, 16
        %vm1304 = vc.u32 %v1296, %v1300
        %v1305 = vsel %vm1304, 1, 0
        %v1306 = vadd.s32 %v1296, %v1300
        %v1307 = vadd.s32 %v1299, %v1305
        %vm1308 = vc.u32 %v1306, %v1302
        %v1309 = vsel %vm1308, 1, 0
        %v1310 = vadd.s32 %v1306, %v1302
        %v1311 = vadd.s32 %v1307, %v1309
        %v1312 = vadd.s32 %v1311, %v1301
        %v1313 = vadd.s32 %v1312, %v1303
        %v1314 = vand.u32 %v1291, 65535
        %v1315 = vshrl.u32 %v1291, 16
        %v1316 = vand.u32 %v1286, 65535
        %v1317 = vshrl.u32 %v1286, 16
        %v1318 = vmul.u32 %v1314, %v1316
        %v1319 = vmul.u32 %v1314, %v1317
        %v1320 = vmul.u32 %v1315, %v1316
        %v1321 = vmul.u32 %v1315, %v1317
        %v1322 = vshll.u32 %v1319, 16
        %v1323 = vshrl.u32 %v1319, 16
        %v1324 = vshll.u32 %v1320, 16
        %v1325 = vshrl.u32 %v1320, 16
        %vm1326 = vc.u32 %v1318, %v1322
        %v1327 = vsel %vm1326, 1, 0
        %v1328 = vadd.s32 %v1318, %v1322
        %v1329 = vadd.s32 %v1321, %v1327
        %vm1330 = vc.u32 %v1328, %v1324
        %v1331 = vsel %vm1330, 1, 0
        %v1332 = vadd.s32 %v1328, %v1324
        %v1333 = vadd.s32 %v1329, %v1331
        %v1334 = vadd.s32 %v1333, %v1323
        %v1335 = vadd.s32 %v1334, %v1325
        %v1336 = vmul.u32 %v1291, %v1282
        %v1337 = vadd.s32 %v1313, %v1332
        %vm1338 = vc.u32 %v1313, %v1332
        %v1339 = vadd.s32 %v1335, 1
        %v1340 = vsel %vm1338, %v1339, %v1335
        %v1341 = vadd.s32 %v1336, %v1340
        %v1342 = vadd.s32 %v1341, 536870912
        %v1343 = vshrl.u32 %v1342, 30
        %v1344 = vshll.u32 %v1343, 30
        %v1345 = vsub.s32 %v1341, %v1344
        %vm1346 = vcmp.lt.s32.totalorder %v1345, 0
        %v1347 = vsub.s32 0, %v1345
        %v1348 = vsel %vm1346, %v1347, %v1345
        %v1349 = vclz %v1348
        %v1350 = vsub.s32 %v1349, 2
        %vm1351 = vcmp.gt.s32.totalorder 0, %v1350
        %v1352 = vsel %vm1351, 0, %v1350
        %v1353 = vsub.s32 32, %v1352
        %v1354 = vshll.u32 %v1345, %v1352
        %v1355 = vshrl.u32 %v1337, %v1353
        %v1356 = vor.u32 %v1354, %v1355
        %v1357 = vsub.s32 4294967266, %v1352
        %v1358 = vadd.s32 %v1357, 127
        %v1359 = vshll.u32 %v1358, 23
        %v1360 = vor.u32 4788187, %v1359
        %v1361 = vand.u32 2147483647, %v1360
        %v1363 = vcvt.s32.f32 %v1356
        %v1364 = vmul.f32 %v1363, %v1361
        %v1365 = vxor.u32 %v1364, 2147483648
        %v1366 = vsel %vm1245, %v1365, %v1364
        %v1367 = vsub.s32 4, %v1343
        %v1368 = vsel %vm1245, %v1367, %v1343
        %v1369 = vsel %vm1244, %v157, %v1366
        %v1370 = vsel %vm1244, 0, %v1368
        %v1371 = vmul.f32 %v1369, %v1369
        %v1372 = vmul.f32 %v1371, -0.001358992
        %v1373 = vadd.f32 %v1372, 0.041655596
        %v1374 = vmul.f32 %v1371, %v1373
        %v1375 = vadd.f32 %v1374, -0.4999988
        %v1376 = vmul.f32 %v1371, %v1375
        %v1377 = vadd.f32 1.0, %v1376
        %v1378 = vmul.f32 %v1369, %v1369
        %v1379 = vmul.f32 %v1378, -0.00019511016
        %v1380 = vadd.f32 %v1379, 0.008332121
        %v1381 = vmul.f32 %v1378, %v1380
        %v1382 = vadd.f32 %v1381, -0.16666654
        %v1383 = vmul.f32 %v1378, %v1382
        %v1384 = vadd.f32 %v1383, 1.0
        %v1385 = vmul.f32 %v1384, %v1369
        %vm1386 = vweird.f32 %v157
        %v1387 = vadd.s32 %v1370, 3
        %v1388 = vand.u32 %v1387, 3
        %vm1389 = vcmp.lt.s32.totalorder %v1388, 2
        %vm1390 = vcmp.eq.s32.totalorder %v1388, 0
        %v1391 = vxor.u32 %v1385, 2147483648
        %v1392 = vsel %vm1390, %v1377, %v1391
        %vm1393 = vcmp.eq.s32.totalorder %v1388, 2
        %v1394 = vxor.u32 %v1377, 2147483648
        %v1395 = vsel %vm1393, %v1394, %v1385
        %v1396 = vsel %vm1389, %v1392, %v1395
        %v1397 = vsel %vm1386, nan, %v1396
        %v1398 = vand.u32 2147483647, %v150
        %vm1399 = vcmp.le.f32.partialorder %v1398, 0.7853982
        %vm1400 = vcmp.lt.s32.totalorder %v150, 0
        %v1401 = vand.u32 %v150, 2139095040
        %v1402 = vshrl.u32 %v1401, 23
        %v1403 = vsub.s32 %v1402, 127
        %v1404 = vand.u32 2147483647, %v150
        %v1405 = vand.u32 %v1404, 8388607
        %v1406 = vor.u32 %v1405, 8388608
        %v1407 = vsub.s32 0, %v1406
        %v1408 = vadd.s32 %v1403, 1
        %vm1409 = vcmp.gt.s32.totalorder %v1408, 0
        %v1410 = vsel %vm1409, %v1408, 0
        %v1411 = vshrl.u32 %v1410, 5
        %v1412 = vand.u32 %v1410, 31
        %v1413 = vsub.s32 32, %v1412
        %v1414 = vshrl.u32 683565275, %v1413
        %v1415 = vshll.u32 683565275, %v1412
        %v1416 = vshrl.u32 2475754826, %v1413
        %v1417 = vor.u32 %v1415, %v1416
        %v1418 = vshll.u32 2475754826, %v1412
        %v1419 = vshrl.u32 2131351028, %v1413
        %v1420 = vor.u32 %v1418, %v1419
        %v1421 = vshll.u32 2131351028, %v1412
        %v1422 = vshrl.u32 2102212464, %v1413
        %v1423 = vor.u32 %v1421, %v1422
        %v1424 = vshll.u32 2102212464, %v1412
        %v1425 = vshrl.u32 920167782, %v1413
        %v1426 = vor.u32 %v1424, %v1425
        %v1427 = vshll.u32 920167782, %v1412
        %v1428 = vshrl.u32 1326507024, %v1413
        %v1429 = vor.u32 %v1427, %v1428
        %vm1430 = vcmp.lt.s32.totalorder %v1411, 1
        %vm1431 = vcmp.lt.s32.totalorder %v1411, 2
        %vm1432 = vcmp.lt.s32.totalorder %v1411, 3
        %vm1433 = vcmp.lt.s32.totalorder %v1411, 4
        %v1434 = vsel %vm1430, %v1414, %v1417
        %v1435 = vsel %vm1433, %v1423, 2102212464
        %v1436 = vsel %vm1432, %v1420, %v1435
        %v1437 = vsel %vm1431, %v1434, %v1436
        %v1438 = vsel %vm1430, %v1417, %v1420
        %v1439 = vsel %vm1433, %v1426, 920167782
        %v1440 = vsel %vm1432, %v1423, %v1439
        %v1441 = vsel %vm1431, %v1438, %v1440
        %v1442 = vsel %vm1430, %v1420, %v1423
        %v1443 = vsel %vm1433, %v1429, 1326507024
        %v1444 = vsel %vm1432, %v1426, %v1443
        %v1445 = vsel %vm1431, %v1442, %v1444
        %v1446 = vshll.u32 %v1406, 8
        %v1447 = vand.u32 %v1446, 65535
        %v1448 = vshrl.u32 %v1446, 16
        %v1449 = vand.u32 %v1445, 65535
        %v1450 = vshrl.u32 %v1445, 16
        %v1451 = vmul.u32 %v1447, %v1449
        %v1452 = vmul.u32 %v1447, %v1450
        %v1453 = vmul.u32 %v1448, %v1449
        %v1454 = vmul.u32 %v1448, %v1450
        %v1455 = vshll.u32 %v1452, 16
        %v1456 = vshrl.u32 %v1452, 16
        %v1457 = vshll.u32 %v1453, 16
        %v1458 = vshrl.u32 %v1453, 16
        %vm1459 = vc.u32 %v1451, %v1455
        %v1460 = vsel %vm1459, 1, 0
        %v1461 = vadd.s32 %v1451, %v1455
        %v1462 = vadd.s32 %v1454, %v1460
        %vm1463 = vc.u32 %v1461, %v1457
        %v1464 = vsel %vm1463, 1, 0
        %v1465 = vadd.s32 %v1461, %v1457
        %v1466 = vadd.s32 %v1462, %v1464
        %v1467 = vadd.s32 %v1466, %v1456
        %v1468 = vadd.s32 %v1467, %v1458
        %v1469 = vand.u32 %v1446, 65535
        %v1470 = vshrl.u32 %v1446, 16
        %v1471 = vand.u32 %v1441, 65535
        %v1472 = vshrl.u32 %v1441, 16
        %v1473 = vmul.u32 %v1469, %v1471
        %v1474 = vmul.u32 %v1469, %v1472
        %v1475 = vmul.u32 %v1470, %v1471
        %v1476 = vmul.u32 %v1470, %v1472
        %v1477 = vshll.u32 %v1474, 16
        %v1478 = vshrl.u32 %v1474, 16
        %v1479 = vshll.u32 %v1475, 16
        %v1480 = vshrl.u32 %v1475, 16
        %vm1481 = vc.u32 %v1473, %v1477
        %v1482 = vsel %vm1481, 1, 0
        %v1483 = vadd.s32 %v1473, %v1477
        %v1484 = vadd.s32 %v1476, %v1482
        %vm1485 = vc.u32 %v1483, %v1479
        %v1486 = vsel %vm1485, 1, 0
        %v1487 = vadd.s32 %v1483, %v1479
        %v1488 = vadd.s32 %v1484, %v1486
        %v1489 = vadd.s32 %v1488, %v1478
        %v1490 = vadd.s32 %v1489, %v1480
        %v1491 = vmul.u32 %v1446, %v1437
        %v1492 = vadd.s32 %v1468, %v1487
        %vm1493 = vc.u32 %v1468, %v1487
        %v1494 = vadd.s32 %v1490, 1
        %v1495 = vsel %vm1493, %v1494, %v1490
        %v1496 = vadd.s32 %v1491, %v1495
        %v1497 = vadd.s32 %v1496, 536870912
        %v1498 = vshrl.u32 %v1497, 30
        %v1499 = vshll.u32 %v1498, 30
        %v1500 = vsub.s32 %v1496, %v1499
        %vm1501 = vcmp.lt.s32.totalorder %v1500, 0
        %v1502 = vsub.s32 0, %v1500
        %v1503 = vsel %vm1501, %v1502, %v1500
        %v1504 = vclz %v1503
        %v1505 = vsub.s32 %v1504, 2
        %vm1506 = vcmp.gt.s32.totalorder 0, %v1505
        %v1507 = vsel %vm1506, 0, %v1505
        %v1508 = vsub.s32 32, %v1507
        %v1509 = vshll.u32 %v1500, %v1507
        %v1510 = vshrl.u32 %v1492, %v1508
        %v1511 = vor.u32 %v1509, %v1510
        %v1512 = vsub.s32 4294967266, %v1507
        %v1513 = vadd.s32 %v1512, 127
        %v1514 = vshll.u32 %v1513, 23
        %v1515 = vor.u32 4788187, %v1514
        %v1516 = vand.u32 2147483647, %v1515
        %v1518 = vcvt.s32.f32 %v1511
        %v1519 = vmul.f32 %v1518, %v1516
        %v1520 = vxor.u32 %v1519, 2147483648
        %v1521 = vsel %vm1400, %v1520, %v1519
        %v1522 = vsub.s32 4, %v1498
        %v1523 = vsel %vm1400, %v1522, %v1498
        %v1524 = vsel %vm1399, %v150, %v1521
        %v1525 = vsel %vm1399, 0, %v1523
        %v1526 = vmul.f32 %v1524, %v1524
        %v1527 = vmul.f32 %v1526, -0.001358992
        %v1528 = vadd.f32 %v1527, 0.041655596
        %v1529 = vmul.f32 %v1526, %v1528
        %v1530 = vadd.f32 %v1529, -0.4999988
        %v1531 = vmul.f32 %v1526, %v1530
        %v1532 = vadd.f32 1.0, %v1531
        %v1533 = vmul.f32 %v1524, %v1524
        %v1534 = vmul.f32 %v1533, -0.00019511016
        %v1535 = vadd.f32 %v1534, 0.008332121
        %v1536 = vmul.f32 %v1533, %v1535
        %v1537 = vadd.f32 %v1536, -0.16666654
        %v1538 = vmul.f32 %v1533, %v1537
        %v1539 = vadd.f32 %v1538, 1.0
        %v1540 = vmul.f32 %v1539, %v1524
        %vm1541 = vweird.f32 %v150
        %v1542 = vand.u32 %v1525, 3
        %vm1543 = vcmp.lt.s32.totalorder %v1542, 2
        %vm1544 = vcmp.eq.s32.totalorder %v1542, 0
        %v1545 = vxor.u32 %v1540, 2147483648
        %v1546 = vsel %vm1544, %v1532, %v1545
        %vm1547 = vcmp.eq.s32.totalorder %v1542, 2
        %v1548 = vxor.u32 %v1532, 2147483648
        %v1549 = vsel %vm1547, %v1548, %v1540
        %v1550 = vsel %vm1543, %v1546, %v1549
        %v1551 = vsel %vm1541, nan, %v1550
        %v1552 = vand.u32 2147483647, %v151
        %vm1553 = vcmp.le.f32.partialorder %v1552, 0.7853982
        %vm1554 = vcmp.lt.s32.totalorder %v151, 0
        %v1555 = vand.u32 %v151, 2139095040
        %v1556 = vshrl.u32 %v1555, 23
        %v1557 = vsub.s32 %v1556, 127
        %v1558 = vand.u32 2147483647, %v151
        %v1559 = vand.u32 %v1558, 8388607
        %v1560 = vor.u32 %v1559, 8388608
        %v1561 = vsub.s32 0, %v1560
        %v1562 = vadd.s32 %v1557, 1
        %vm1563 = vcmp.gt.s32.totalorder %v1562, 0
        %v1564 = vsel %vm1563, %v1562, 0
        %v1565 = vshrl.u32 %v1564, 5
        %v1566 = vand.u32 %v1564, 31
        %v1567 = vsub.s32 32, %v1566
        %v1568 = vshrl.u32 683565275, %v1567
        %v1569 = vshll.u32 683565275, %v1566
        %v1570 = vshrl.u32 2475754826, %v1567
        %v1571 = vor.u32 %v1569, %v1570
        %v1572 = vshll.u32 2475754826, %v1566
        %v1573 = vshrl.u32 2131351028, %v1567
        %v1574 = vor.u32 %v1572, %v1573
        %v1575 = vshll.u32 2131351028, %v1566
        %v1576 = vshrl.u32 2102212464, %v1567
        %v1577 = vor.u32 %v1575, %v1576
        %v1578 = vshll.u32 2102212464, %v1566
        %v1579 = vshrl.u32 920167782, %v1567
        %v1580 = vor.u32 %v1578, %v1579
        %v1581 = vshll.u32 920167782, %v1566
        %v1582 = vshrl.u32 1326507024, %v1567
        %v1583 = vor.u32 %v1581, %v1582
        %vm1584 = vcmp.lt.s32.totalorder %v1565, 1
        %vm1585 = vcmp.lt.s32.totalorder %v1565, 2
        %vm1586 = vcmp.lt.s32.totalorder %v1565, 3
        %vm1587 = vcmp.lt.s32.totalorder %v1565, 4
        %v1588 = vsel %vm1584, %v1568, %v1571
        %v1589 = vsel %vm1587, %v1577, 2102212464
        %v1590 = vsel %vm1586, %v1574, %v1589
        %v1591 = vsel %vm1585, %v1588, %v1590
        %v1592 = vsel %vm1584, %v1571, %v1574
        %v1593 = vsel %vm1587, %v1580, 920167782
        %v1594 = vsel %vm1586, %v1577, %v1593
        %v1595 = vsel %vm1585, %v1592, %v1594
        %v1596 = vsel %vm1584, %v1574, %v1577
        %v1597 = vsel %vm1587, %v1583, 1326507024
        %v1598 = vsel %vm1586, %v1580, %v1597
        %v1599 = vsel %vm1585, %v1596, %v1598
        %v1600 = vshll.u32 %v1560, 8
        %v1601 = vand.u32 %v1600, 65535
        %v1602 = vshrl.u32 %v1600, 16
        %v1603 = vand.u32 %v1599, 65535
        %v1604 = vshrl.u32 %v1599, 16
        %v1605 = vmul.u32 %v1601, %v1603
        %v1606 = vmul.u32 %v1601, %v1604
        %v1607 = vmul.u32 %v1602, %v1603
        %v1608 = vmul.u32 %v1602, %v1604
        %v1609 = vshll.u32 %v1606, 16
        %v1610 = vshrl.u32 %v1606, 16
        %v1611 = vshll.u32 %v1607, 16
        %v1612 = vshrl.u32 %v1607, 16
        %vm1613 = vc.u32 %v1605, %v1609
        %v1614 = vsel %vm1613, 1, 0
        %v1615 = vadd.s32 %v1605, %v1609
        %v1616 = vadd.s32 %v1608, %v1614
        %vm1617 = vc.u32 %v1615, %v1611
        %v1618 = vsel %vm1617, 1, 0
        %v1619 = vadd.s32 %v1615, %v1611
        %v1620 = vadd.s32 %v1616, %v1618
        %v1621 = vadd.s32 %v1620, %v1610
        %v1622 = vadd.s32 %v1621, %v1612
        %v1623 = vand.u32 %v1600, 65535
        %v1624 = vshrl.u32 %v1600, 16
        %v1625 = vand.u32 %v1595, 65535
        %v1626 = vshrl.u32 %v1595, 16
        %v1627 = vmul.u32 %v1623, %v1625
        %v1628 = vmul.u32 %v1623, %v1626
        %v1629 = vmul.u32 %v1624, %v1625
        %v1630 = vmul.u32 %v1624, %v1626
        %v1631 = vshll.u32 %v1628, 16
        %v1632 = vshrl.u32 %v1628, 16
        %v1633 = vshll.u32 %v1629, 16
        %v1634 = vshrl.u32 %v1629, 16
        %vm1635 = vc.u32 %v1627, %v1631
        %v1636 = vsel %vm1635, 1, 0
        %v1637 = vadd.s32 %v1627, %v1631
        %v1638 = vadd.s32 %v1630, %v1636
        %vm1639 = vc.u32 %v1637, %v1633
        %v1640 = vsel %vm1639, 1, 0
        %v1641 = vadd.s32 %v1637, %v1633
        %v1642 = vadd.s32 %v1638, %v1640
        %v1643 = vadd.s32 %v1642, %v1632
        %v1644 = vadd.s32 %v1643, %v1634
        %v1645 = vmul.u32 %v1600, %v1591
        %v1646 = vadd.s32 %v1622, %v1641
        %vm1647 = vc.u32 %v1622, %v1641
        %v1648 = vadd.s32 %v1644, 1
        %v1649 = vsel %vm1647, %v1648, %v1644
        %v1650 = vadd.s32 %v1645, %v1649
        %v1651 = vadd.s32 %v1650, 536870912
        %v1652 = vshrl.u32 %v1651, 30
        %v1653 = vshll.u32 %v1652, 30
        %v1654 = vsub.s32 %v1650, %v1653
        %vm1655 = vcmp.lt.s32.totalorder %v1654, 0
        %v1656 = vsub.s32 0, %v1654
        %v1657 = vsel %vm1655, %v1656, %v1654
        %v1658 = vclz %v1657
        %v1659 = vsub.s32 %v1658, 2
        %vm1660 = vcmp.gt.s32.totalorder 0, %v1659
        %v1661 = vsel %vm1660, 0, %v1659
        %v1662 = vsub.s32 32, %v1661
        %v1663 = vshll.u32 %v1654, %v1661
        %v1664 = vshrl.u32 %v1646, %v1662
        %v1665 = vor.u32 %v1663, %v1664
        %v1666 = vsub.s32 4294967266, %v1661
        %v1667 = vadd.s32 %v1666, 127
        %v1668 = vshll.u32 %v1667, 23
        %v1669 = vor.u32 4788187, %v1668
        %v1670 = vand.u32 2147483647, %v1669
        %v1672 = vcvt.s32.f32 %v1665
        %v1673 = vmul.f32 %v1672, %v1670
        %v1674 = vxor.u32 %v1673, 2147483648
        %v1675 = vsel %vm1554, %v1674, %v1673
        %v1676 = vsub.s32 4, %v1652
        %v1677 = vsel %vm1554, %v1676, %v1652
        %v1678 = vsel %vm1553, %v151, %v1675
        %v1679 = vsel %vm1553, 0, %v1677
        %v1680 = vmul.f32 %v1678, %v1678
        %v1681 = vmul.f32 %v1680, -0.001358992
        %v1682 = vadd.f32 %v1681, 0.041655596
        %v1683 = vmul.f32 %v1680, %v1682
        %v1684 = vadd.f32 %v1683, -0.4999988
        %v1685 = vmul.f32 %v1680, %v1684
        %v1686 = vadd.f32 1.0, %v1685
        %v1687 = vmul.f32 %v1678, %v1678
        %v1688 = vmul.f32 %v1687, -0.00019511016
        %v1689 = vadd.f32 %v1688, 0.008332121
        %v1690 = vmul.f32 %v1687, %v1689
        %v1691 = vadd.f32 %v1690, -0.16666654
        %v1692 = vmul.f32 %v1687, %v1691
        %v1693 = vadd.f32 %v1692, 1.0
        %v1694 = vmul.f32 %v1693, %v1678
        %vm1695 = vweird.f32 %v151
        %v1696 = vand.u32 %v1679, 3
        %vm1697 = vcmp.lt.s32.totalorder %v1696, 2
        %vm1698 = vcmp.eq.s32.totalorder %v1696, 0
        %v1699 = vxor.u32 %v1694, 2147483648
        %v1700 = vsel %vm1698, %v1686, %v1699
        %vm1701 = vcmp.eq.s32.totalorder %v1696, 2
        %v1702 = vxor.u32 %v1686, 2147483648
        %v1703 = vsel %vm1701, %v1702, %v1694
        %v1704 = vsel %vm1697, %v1700, %v1703
        %v1705 = vsel %vm1695, nan, %v1704
        %v1706 = vand.u32 2147483647, %v152
        %vm1707 = vcmp.le.f32.partialorder %v1706, 0.7853982
        %vm1708 = vcmp.lt.s32.totalorder %v152, 0
        %v1709 = vand.u32 %v152, 2139095040
        %v1710 = vshrl.u32 %v1709, 23
        %v1711 = vsub.s32 %v1710, 127
        %v1712 = vand.u32 2147483647, %v152
        %v1713 = vand.u32 %v1712, 8388607
        %v1714 = vor.u32 %v1713, 8388608
        %v1715 = vsub.s32 0, %v1714
        %v1716 = vadd.s32 %v1711, 1
        %vm1717 = vcmp.gt.s32.totalorder %v1716, 0
        %v1718 = vsel %vm1717, %v1716, 0
        %v1719 = vshrl.u32 %v1718, 5
        %v1720 = vand.u32 %v1718, 31
        %v1721 = vsub.s32 32, %v1720
        %v1722 = vshrl.u32 683565275, %v1721
        %v1723 = vshll.u32 683565275, %v1720
        %v1724 = vshrl.u32 2475754826, %v1721
        %v1725 = vor.u32 %v1723, %v1724
        %v1726 = vshll.u32 2475754826, %v1720
        %v1727 = vshrl.u32 2131351028, %v1721
        %v1728 = vor.u32 %v1726, %v1727
        %v1729 = vshll.u32 2131351028, %v1720
        %v1730 = vshrl.u32 2102212464, %v1721
        %v1731 = vor.u32 %v1729, %v1730
        %v1732 = vshll.u32 2102212464, %v1720
        %v1733 = vshrl.u32 920167782, %v1721
        %v1734 = vor.u32 %v1732, %v1733
        %v1735 = vshll.u32 920167782, %v1720
        %v1736 = vshrl.u32 1326507024, %v1721
        %v1737 = vor.u32 %v1735, %v1736
        %vm1738 = vcmp.lt.s32.totalorder %v1719, 1
        %vm1739 = vcmp.lt.s32.totalorder %v1719, 2
        %vm1740 = vcmp.lt.s32.totalorder %v1719, 3
        %vm1741 = vcmp.lt.s32.totalorder %v1719, 4
        %v1742 = vsel %vm1738, %v1722, %v1725
        %v1743 = vsel %vm1741, %v1731, 2102212464
        %v1744 = vsel %vm1740, %v1728, %v1743
        %v1745 = vsel %vm1739, %v1742, %v1744
        %v1746 = vsel %vm1738, %v1725, %v1728
        %v1747 = vsel %vm1741, %v1734, 920167782
        %v1748 = vsel %vm1740, %v1731, %v1747
        %v1749 = vsel %vm1739, %v1746, %v1748
        %v1750 = vsel %vm1738, %v1728, %v1731
        %v1751 = vsel %vm1741, %v1737, 1326507024
        %v1752 = vsel %vm1740, %v1734, %v1751
        %v1753 = vsel %vm1739, %v1750, %v1752
        %v1754 = vshll.u32 %v1714, 8
        %v1755 = vand.u32 %v1754, 65535
        %v1756 = vshrl.u32 %v1754, 16
        %v1757 = vand.u32 %v1753, 65535
        %v1758 = vshrl.u32 %v1753, 16
        %v1759 = vmul.u32 %v1755, %v1757
        %v1760 = vmul.u32 %v1755, %v1758
        %v1761 = vmul.u32 %v1756, %v1757
        %v1762 = vmul.u32 %v1756, %v1758
        %v1763 = vshll.u32 %v1760, 16
        %v1764 = vshrl.u32 %v1760, 16
        %v1765 = vshll.u32 %v1761, 16
        %v1766 = vshrl.u32 %v1761, 16
        %vm1767 = vc.u32 %v1759, %v1763
        %v1768 = vsel %vm1767, 1, 0
        %v1769 = vadd.s32 %v1759, %v1763
        %v1770 = vadd.s32 %v1762, %v1768
        %vm1771 = vc.u32 %v1769, %v1765
        %v1772 = vsel %vm1771, 1, 0
        %v1773 = vadd.s32 %v1769, %v1765
        %v1774 = vadd.s32 %v1770, %v1772
        %v1775 = vadd.s32 %v1774, %v1764
        %v1776 = vadd.s32 %v1775, %v1766
        %v1777 = vand.u32 %v1754, 65535
        %v1778 = vshrl.u32 %v1754, 16
        %v1779 = vand.u32 %v1749, 65535
        %v1780 = vshrl.u32 %v1749, 16
        %v1781 = vmul.u32 %v1777, %v1779
        %v1782 = vmul.u32 %v1777, %v1780
        %v1783 = vmul.u32 %v1778, %v1779
        %v1784 = vmul.u32 %v1778, %v1780
        %v1785 = vshll.u32 %v1782, 16
        %v1786 = vshrl.u32 %v1782, 16
        %v1787 = vshll.u32 %v1783, 16
        %v1788 = vshrl.u32 %v1783, 16
        %vm1789 = vc.u32 %v1781, %v1785
        %v1790 = vsel %vm1789, 1, 0
        %v1791 = vadd.s32 %v1781, %v1785
        %v1792 = vadd.s32 %v1784, %v1790
        %vm1793 = vc.u32 %v1791, %v1787
        %v1794 = vsel %vm1793, 1, 0
        %v1795 = vadd.s32 %v1791, %v1787
        %v1796 = vadd.s32 %v1792, %v1794
        %v1797 = vadd.s32 %v1796, %v1786
        %v1798 = vadd.s32 %v1797, %v1788
        %v1799 = vmul.u32 %v1754, %v1745
        %v1800 = vadd.s32 %v1776, %v1795
        %vm1801 = vc.u32 %v1776, %v1795
        %v1802 = vadd.s32 %v1798, 1
        %v1803 = vsel %vm1801, %v1802, %v1798
        %v1804 = vadd.s32 %v1799, %v1803
        %v1805 = vadd.s32 %v1804, 536870912
        %v1806 = vshrl.u32 %v1805, 30
        %v1807 = vshll.u32 %v1806, 30
        %v1808 = vsub.s32 %v1804, %v1807
        %vm1809 = vcmp.lt.s32.totalorder %v1808, 0
        %v1810 = vsub.s32 0, %v1808
        %v1811 = vsel %vm1809, %v1810, %v1808
        %v1812 = vclz %v1811
        %v1813 = vsub.s32 %v1812, 2
        %vm1814 = vcmp.gt.s32.totalorder 0, %v1813
        %v1815 = vsel %vm1814, 0, %v1813
        %v1816 = vsub.s32 32, %v1815
        %v1817 = vshll.u32 %v1808, %v1815
        %v1818 = vshrl.u32 %v1800, %v1816
        %v1819 = vor.u32 %v1817, %v1818
        %v1820 = vsub.s32 4294967266, %v1815
        %v1821 = vadd.s32 %v1820, 127
        %v1822 = vshll.u32 %v1821, 23
        %v1823 = vor.u32 4788187, %v1822
        %v1824 = vand.u32 2147483647, %v1823
        %v1826 = vcvt.s32.f32 %v1819
        %v1827 = vmul.f32 %v1826, %v1824
        %v1828 = vxor.u32 %v1827, 2147483648
        %v1829 = vsel %vm1708, %v1828, %v1827
        %v1830 = vsub.s32 4, %v1806
        %v1831 = vsel %vm1708, %v1830, %v1806
        %v1832 = vsel %vm1707, %v152, %v1829
        %v1833 = vsel %vm1707, 0, %v1831
        %v1834 = vmul.f32 %v1832, %v1832
        %v1835 = vmul.f32 %v1834, -0.001358992
        %v1836 = vadd.f32 %v1835, 0.041655596
        %v1837 = vmul.f32 %v1834, %v1836
        %v1838 = vadd.f32 %v1837, -0.4999988
        %v1839 = vmul.f32 %v1834, %v1838
        %v1840 = vadd.f32 1.0, %v1839
        %v1841 = vmul.f32 %v1832, %v1832
        %v1842 = vmul.f32 %v1841, -0.00019511016
        %v1843 = vadd.f32 %v1842, 0.008332121
        %v1844 = vmul.f32 %v1841, %v1843
        %v1845 = vadd.f32 %v1844, -0.16666654
        %v1846 = vmul.f32 %v1841, %v1845
        %v1847 = vadd.f32 %v1846, 1.0
        %v1848 = vmul.f32 %v1847, %v1832
        %vm1849 = vweird.f32 %v152
        %v1850 = vand.u32 %v1833, 3
        %vm1851 = vcmp.lt.s32.totalorder %v1850, 2
        %vm1852 = vcmp.eq.s32.totalorder %v1850, 0
        %v1853 = vxor.u32 %v1848, 2147483648
        %v1854 = vsel %vm1852, %v1840, %v1853
        %vm1855 = vcmp.eq.s32.totalorder %v1850, 2
        %v1856 = vxor.u32 %v1840, 2147483648
        %v1857 = vsel %vm1855, %v1856, %v1848
        %v1858 = vsel %vm1851, %v1854, %v1857
        %v1859 = vsel %vm1849, nan, %v1858
        %v1860 = vand.u32 2147483647, %v153
        %vm1861 = vcmp.le.f32.partialorder %v1860, 0.7853982
        %vm1862 = vcmp.lt.s32.totalorder %v153, 0
        %v1863 = vand.u32 %v153, 2139095040
        %v1864 = vshrl.u32 %v1863, 23
        %v1865 = vsub.s32 %v1864, 127
        %v1866 = vand.u32 2147483647, %v153
        %v1867 = vand.u32 %v1866, 8388607
        %v1868 = vor.u32 %v1867, 8388608
        %v1869 = vsub.s32 0, %v1868
        %v1870 = vadd.s32 %v1865, 1
        %vm1871 = vcmp.gt.s32.totalorder %v1870, 0
        %v1872 = vsel %vm1871, %v1870, 0
        %v1873 = vshrl.u32 %v1872, 5
        %v1874 = vand.u32 %v1872, 31
        %v1875 = vsub.s32 32, %v1874
        %v1876 = vshrl.u32 683565275, %v1875
        %v1877 = vshll.u32 683565275, %v1874
        %v1878 = vshrl.u32 2475754826, %v1875
        %v1879 = vor.u32 %v1877, %v1878
        %v1880 = vshll.u32 2475754826, %v1874
        %v1881 = vshrl.u32 2131351028, %v1875
        %v1882 = vor.u32 %v1880, %v1881
        %v1883 = vshll.u32 2131351028, %v1874
        %v1884 = vshrl.u32 2102212464, %v1875
        %v1885 = vor.u32 %v1883, %v1884
        %v1886 = vshll.u32 2102212464, %v1874
        %v1887 = vshrl.u32 920167782, %v1875
        %v1888 = vor.u32 %v1886, %v1887
        %v1889 = vshll.u32 920167782, %v1874
        %v1890 = vshrl.u32 1326507024, %v1875
        %v1891 = vor.u32 %v1889, %v1890
        %vm1892 = vcmp.lt.s32.totalorder %v1873, 1
        %vm1893 = vcmp.lt.s32.totalorder %v1873, 2
        %vm1894 = vcmp.lt.s32.totalorder %v1873, 3
        %vm1895 = vcmp.lt.s32.totalorder %v1873, 4
        %v1896 = vsel %vm1892, %v1876, %v1879
        %v1897 = vsel %vm1895, %v1885, 2102212464
        %v1898 = vsel %vm1894, %v1882, %v1897
        %v1899 = vsel %vm1893, %v1896, %v1898
        %v1900 = vsel %vm1892, %v1879, %v1882
        %v1901 = vsel %vm1895, %v1888, 920167782
        %v1902 = vsel %vm1894, %v1885, %v1901
        %v1903 = vsel %vm1893, %v1900, %v1902
        %v1904 = vsel %vm1892, %v1882, %v1885
        %v1905 = vsel %vm1895, %v1891, 1326507024
        %v1906 = vsel %vm1894, %v1888, %v1905
        %v1907 = vsel %vm1893, %v1904, %v1906
        %v1908 = vshll.u32 %v1868, 8
        %v1909 = vand.u32 %v1908, 65535
        %v1910 = vshrl.u32 %v1908, 16
        %v1911 = vand.u32 %v1907, 65535
        %v1912 = vshrl.u32 %v1907, 16
        %v1913 = vmul.u32 %v1909, %v1911
        %v1914 = vmul.u32 %v1909, %v1912
        %v1915 = vmul.u32 %v1910, %v1911
        %v1916 = vmul.u32 %v1910, %v1912
        %v1917 = vshll.u32 %v1914, 16
        %v1918 = vshrl.u32 %v1914, 16
        %v1919 = vshll.u32 %v1915, 16
        %v1920 = vshrl.u32 %v1915, 16
        %vm1921 = vc.u32 %v1913, %v1917
        %v1922 = vsel %vm1921, 1, 0
        %v1923 = vadd.s32 %v1913, %v1917
        %v1924 = vadd.s32 %v1916, %v1922
        %vm1925 = vc.u32 %v1923, %v1919
        %v1926 = vsel %vm1925, 1, 0
        %v1927 = vadd.s32 %v1923, %v1919
        %v1928 = vadd.s32 %v1924, %v1926
        %v1929 = vadd.s32 %v1928, %v1918
        %v1930 = vadd.s32 %v1929, %v1920
        %v1931 = vand.u32 %v1908, 65535
        %v1932 = vshrl.u32 %v1908, 16
        %v1933 = vand.u32 %v1903, 65535
        %v1934 = vshrl.u32 %v1903, 16
        %v1935 = vmul.u32 %v1931, %v1933
        %v1936 = vmul.u32 %v1931, %v1934
        %v1937 = vmul.u32 %v1932, %v1933
        %v1938 = vmul.u32 %v1932, %v1934
        %v1939 = vshll.u32 %v1936, 16
        %v1940 = vshrl.u32 %v1936, 16
        %v1941 = vshll.u32 %v1937, 16
        %v1942 = vshrl.u32 %v1937, 16
        %vm1943 = vc.u32 %v1935, %v1939
        %v1944 = vsel %vm1943, 1, 0
        %v1945 = vadd.s32 %v1935, %v1939
        %v1946 = vadd.s32 %v1938, %v1944
        %vm1947 = vc.u32 %v1945, %v1941
        %v1948 = vsel %vm1947, 1, 0
        %v1949 = vadd.s32 %v1945, %v1941
        %v1950 = vadd.s32 %v1946, %v1948
        %v1951 = vadd.s32 %v1950, %v1940
        %v1952 = vadd.s32 %v1951, %v1942
        %v1953 = vmul.u32 %v1908, %v1899
        %v1954 = vadd.s32 %v1930, %v1949
        %vm1955 = vc.u32 %v1930, %v1949
        %v1956 = vadd.s32 %v1952, 1
        %v1957 = vsel %vm1955, %v1956, %v1952
        %v1958 = vadd.s32 %v1953, %v1957
        %v1959 = vadd.s32 %v1958, 536870912
        %v1960 = vshrl.u32 %v1959, 30
        %v1961 = vshll.u32 %v1960, 30
        %v1962 = vsub.s32 %v1958, %v1961
        %vm1963 = vcmp.lt.s32.totalorder %v1962, 0
        %v1964 = vsub.s32 0, %v1962
        %v1965 = vsel %vm1963, %v1964, %v1962
        %v1966 = vclz %v1965
        %v1967 = vsub.s32 %v1966, 2
        %vm1968 = vcmp.gt.s32.totalorder 0, %v1967
        %v1969 = vsel %vm1968, 0, %v1967
        %v1970 = vsub.s32 32, %v1969
        %v1971 = vshll.u32 %v1962, %v1969
        %v1972 = vshrl.u32 %v1954, %v1970
        %v1973 = vor.u32 %v1971, %v1972
        %v1974 = vsub.s32 4294967266, %v1969
        %v1975 = vadd.s32 %v1974, 127
        %v1976 = vshll.u32 %v1975, 23
        %v1977 = vor.u32 4788187, %v1976
        %v1978 = vand.u32 2147483647, %v1977
        %v1980 = vcvt.s32.f32 %v1973
        %v1981 = vmul.f32 %v1980, %v1978
        %v1982 = vxor.u32 %v1981, 2147483648
        %v1983 = vsel %vm1862, %v1982, %v1981
        %v1984 = vsub.s32 4, %v1960
        %v1985 = vsel %vm1862, %v1984, %v1960
        %v1986 = vsel %vm1861, %v153, %v1983
        %v1987 = vsel %vm1861, 0, %v1985
        %v1988 = vmul.f32 %v1986, %v1986
        %v1989 = vmul.f32 %v1988, -0.001358992
        %v1990 = vadd.f32 %v1989, 0.041655596
        %v1991 = vmul.f32 %v1988, %v1990
        %v1992 = vadd.f32 %v1991, -0.4999988
        %v1993 = vmul.f32 %v1988, %v1992
        %v1994 = vadd.f32 1.0, %v1993
        %v1995 = vmul.f32 %v1986, %v1986
        %v1996 = vmul.f32 %v1995, -0.00019511016
        %v1997 = vadd.f32 %v1996, 0.008332121
        %v1998 = vmul.f32 %v1995, %v1997
        %v1999 = vadd.f32 %v1998, -0.16666654
        %v2000 = vmul.f32 %v1995, %v1999
        %v2001 = vadd.f32 %v2000, 1.0
        %v2002 = vmul.f32 %v2001, %v1986
        %vm2003 = vweird.f32 %v153
        %v2004 = vand.u32 %v1987, 3
        %vm2005 = vcmp.lt.s32.totalorder %v2004, 2
        %vm2006 = vcmp.eq.s32.totalorder %v2004, 0
        %v2007 = vxor.u32 %v2002, 2147483648
        %v2008 = vsel %vm2006, %v1994, %v2007
        %vm2009 = vcmp.eq.s32.totalorder %v2004, 2
        %v2010 = vxor.u32 %v1994, 2147483648
        %v2011 = vsel %vm2009, %v2010, %v2002
        %v2012 = vsel %vm2005, %v2008, %v2011
        %v2013 = vsel %vm2003, nan, %v2012
        %v2014 = vand.u32 2147483647, %v154
        %vm2015 = vcmp.le.f32.partialorder %v2014, 0.7853982
        %vm2016 = vcmp.lt.s32.totalorder %v154, 0
        %v2017 = vand.u32 %v154, 2139095040
        %v2018 = vshrl.u32 %v2017, 23
        %v2019 = vsub.s32 %v2018, 127
        %v2020 = vand.u32 2147483647, %v154
        %v2021 = vand.u32 %v2020, 8388607
        %v2022 = vor.u32 %v2021, 8388608
        %v2023 = vsub.s32 0, %v2022
        %v2024 = vadd.s32 %v2019, 1
        %vm2025 = vcmp.gt.s32.totalorder %v2024, 0
        %v2026 = vsel %vm2025, %v2024, 0
        %v2027 = vshrl.u32 %v2026, 5
        %v2028 = vand.u32 %v2026, 31
        %v2029 = vsub.s32 32, %v2028
        %v2030 = vshrl.u32 683565275, %v2029
        %v2031 = vshll.u32 683565275, %v2028
        %v2032 = vshrl.u32 2475754826, %v2029
        %v2033 = vor.u32 %v2031, %v2032
        %v2034 = vshll.u32 2475754826, %v2028
        %v2035 = vshrl.u32 2131351028, %v2029
        %v2036 = vor.u32 %v2034, %v2035
        %v2037 = vshll.u32 2131351028, %v2028
        %v2038 = vshrl.u32 2102212464, %v2029
        %v2039 = vor.u32 %v2037, %v2038
        %v2040 = vshll.u32 2102212464, %v2028
        %v2041 = vshrl.u32 920167782, %v2029
        %v2042 = vor.u32 %v2040, %v2041
        %v2043 = vshll.u32 920167782, %v2028
        %v2044 = vshrl.u32 1326507024, %v2029
        %v2045 = vor.u32 %v2043, %v2044
        %vm2046 = vcmp.lt.s32.totalorder %v2027, 1
        %vm2047 = vcmp.lt.s32.totalorder %v2027, 2
        %vm2048 = vcmp.lt.s32.totalorder %v2027, 3
        %vm2049 = vcmp.lt.s32.totalorder %v2027, 4
        %v2050 = vsel %vm2046, %v2030, %v2033
        %v2051 = vsel %vm2049, %v2039, 2102212464
        %v2052 = vsel %vm2048, %v2036, %v2051
        %v2053 = vsel %vm2047, %v2050, %v2052
        %v2054 = vsel %vm2046, %v2033, %v2036
        %v2055 = vsel %vm2049, %v2042, 920167782
        %v2056 = vsel %vm2048, %v2039, %v2055
        %v2057 = vsel %vm2047, %v2054, %v2056
        %v2058 = vsel %vm2046, %v2036, %v2039
        %v2059 = vsel %vm2049, %v2045, 1326507024
        %v2060 = vsel %vm2048, %v2042, %v2059
        %v2061 = vsel %vm2047, %v2058, %v2060
        %v2062 = vshll.u32 %v2022, 8
        %v2063 = vand.u32 %v2062, 65535
        %v2064 = vshrl.u32 %v2062, 16
        %v2065 = vand.u32 %v2061, 65535
        %v2066 = vshrl.u32 %v2061, 16
        %v2067 = vmul.u32 %v2063, %v2065
        %v2068 = vmul.u32 %v2063, %v2066
        %v2069 = vmul.u32 %v2064, %v2065
        %v2070 = vmul.u32 %v2064, %v2066
        %v2071 = vshll.u32 %v2068, 16
        %v2072 = vshrl.u32 %v2068, 16
        %v2073 = vshll.u32 %v2069, 16
        %v2074 = vshrl.u32 %v2069, 16
        %vm2075 = vc.u32 %v2067, %v2071
        %v2076 = vsel %vm2075, 1, 0
        %v2077 = vadd.s32 %v2067, %v2071
        %v2078 = vadd.s32 %v2070, %v2076
        %vm2079 = vc.u32 %v2077, %v2073
        %v2080 = vsel %vm2079, 1, 0
        %v2081 = vadd.s32 %v2077, %v2073
        %v2082 = vadd.s32 %v2078, %v2080
        %v2083 = vadd.s32 %v2082, %v2072
        %v2084 = vadd.s32 %v2083, %v2074
        %v2085 = vand.u32 %v2062, 65535
        %v2086 = vshrl.u32 %v2062, 16
        %v2087 = vand.u32 %v2057, 65535
        %v2088 = vshrl.u32 %v2057, 16
        %v2089 = vmul.u32 %v2085, %v2087
        %v2090 = vmul.u32 %v2085, %v2088
        %v2091 = vmul.u32 %v2086, %v2087
        %v2092 = vmul.u32 %v2086, %v2088
        %v2093 = vshll.u32 %v2090, 16
        %v2094 = vshrl.u32 %v2090, 16
        %v2095 = vshll.u32 %v2091, 16
        %v2096 = vshrl.u32 %v2091, 16
        %vm2097 = vc.u32 %v2089, %v2093
        %v2098 = vsel %vm2097, 1, 0
        %v2099 = vadd.s32 %v2089, %v2093
        %v2100 = vadd.s32 %v2092, %v2098
        %vm2101 = vc.u32 %v2099, %v2095
        %v2102 = vsel %vm2101, 1, 0
        %v2103 = vadd.s32 %v2099, %v2095
        %v2104 = vadd.s32 %v2100, %v2102
        %v2105 = vadd.s32 %v2104, %v2094
        %v2106 = vadd.s32 %v2105, %v2096
        %v2107 = vmul.u32 %v2062, %v2053
        %v2108 = vadd.s32 %v2084, %v2103
        %vm2109 = vc.u32 %v2084, %v2103
        %v2110 = vadd.s32 %v2106, 1
        %v2111 = vsel %vm2109, %v2110, %v2106
        %v2112 = vadd.s32 %v2107, %v2111
        %v2113 = vadd.s32 %v2112, 536870912
        %v2114 = vshrl.u32 %v2113, 30
        %v2115 = vshll.u32 %v2114, 30
        %v2116 = vsub.s32 %v2112, %v2115
        %vm2117 = vcmp.lt.s32.totalorder %v2116, 0
        %v2118 = vsub.s32 0, %v2116
        %v2119 = vsel %vm2117, %v2118, %v2116
        %v2120 = vclz %v2119
        %v2121 = vsub.s32 %v2120, 2
        %vm2122 = vcmp.gt.s32.totalorder 0, %v2121
        %v2123 = vsel %vm2122, 0, %v2121
        %v2124 = vsub.s32 32, %v2123
        %v2125 = vshll.u32 %v2116, %v2123
        %v2126 = vshrl.u32 %v2108, %v2124
        %v2127 = vor.u32 %v2125, %v2126
        %v2128 = vsub.s32 4294967266, %v2123
        %v2129 = vadd.s32 %v2128, 127
        %v2130 = vshll.u32 %v2129, 23
        %v2131 = vor.u32 4788187, %v2130
        %v2132 = vand.u32 2147483647, %v2131
        %v2134 = vcvt.s32.f32 %v2127
        %v2135 = vmul.f32 %v2134, %v2132
        %v2136 = vxor.u32 %v2135, 2147483648
        %v2137 = vsel %vm2016, %v2136, %v2135
        %v2138 = vsub.s32 4, %v2114
        %v2139 = vsel %vm2016, %v2138, %v2114
        %v2140 = vsel %vm2015, %v154, %v2137
        %v2141 = vsel %vm2015, 0, %v2139
        %v2142 = vmul.f32 %v2140, %v2140
        %v2143 = vmul.f32 %v2142, -0.001358992
        %v2144 = vadd.f32 %v2143, 0.041655596
        %v2145 = vmul.f32 %v2142, %v2144
        %v2146 = vadd.f32 %v2145, -0.4999988
        %v2147 = vmul.f32 %v2142, %v2146
        %v2148 = vadd.f32 1.0, %v2147
        %v2149 = vmul.f32 %v2140, %v2140
        %v2150 = vmul.f32 %v2149, -0.00019511016
        %v2151 = vadd.f32 %v2150, 0.008332121
        %v2152 = vmul.f32 %v2149, %v2151
        %v2153 = vadd.f32 %v2152, -0.16666654
        %v2154 = vmul.f32 %v2149, %v2153
        %v2155 = vadd.f32 %v2154, 1.0
        %v2156 = vmul.f32 %v2155, %v2140
        %vm2157 = vweird.f32 %v154
        %v2158 = vand.u32 %v2141, 3
        %vm2159 = vcmp.lt.s32.totalorder %v2158, 2
        %vm2160 = vcmp.eq.s32.totalorder %v2158, 0
        %v2161 = vxor.u32 %v2156, 2147483648
        %v2162 = vsel %vm2160, %v2148, %v2161
        %vm2163 = vcmp.eq.s32.totalorder %v2158, 2
        %v2164 = vxor.u32 %v2148, 2147483648
        %v2165 = vsel %vm2163, %v2164, %v2156
        %v2166 = vsel %vm2159, %v2162, %v2165
        %v2167 = vsel %vm2157, nan, %v2166
        %v2168 = vand.u32 2147483647, %v155
        %vm2169 = vcmp.le.f32.partialorder %v2168, 0.7853982
        %vm2170 = vcmp.lt.s32.totalorder %v155, 0
        %v2171 = vand.u32 %v155, 2139095040
        %v2172 = vshrl.u32 %v2171, 23
        %v2173 = vsub.s32 %v2172, 127
        %v2174 = vand.u32 2147483647, %v155
        %v2175 = vand.u32 %v2174, 8388607
        %v2176 = vor.u32 %v2175, 8388608
        %v2177 = vsub.s32 0, %v2176
        %v2178 = vadd.s32 %v2173, 1
        %vm2179 = vcmp.gt.s32.totalorder %v2178, 0
        %v2180 = vsel %vm2179, %v2178, 0
        %v2181 = vshrl.u32 %v2180, 5
        %v2182 = vand.u32 %v2180, 31
        %v2183 = vsub.s32 32, %v2182
        %v2184 = vshrl.u32 683565275, %v2183
        %v2185 = vshll.u32 683565275, %v2182
        %v2186 = vshrl.u32 2475754826, %v2183
        %v2187 = vor.u32 %v2185, %v2186
        %v2188 = vshll.u32 2475754826, %v2182
        %v2189 = vshrl.u32 2131351028, %v2183
        %v2190 = vor.u32 %v2188, %v2189
        %v2191 = vshll.u32 2131351028, %v2182
        %v2192 = vshrl.u32 2102212464, %v2183
        %v2193 = vor.u32 %v2191, %v2192
        %v2194 = vshll.u32 2102212464, %v2182
        %v2195 = vshrl.u32 920167782, %v2183
        %v2196 = vor.u32 %v2194, %v2195
        %v2197 = vshll.u32 920167782, %v2182
        %v2198 = vshrl.u32 1326507024, %v2183
        %v2199 = vor.u32 %v2197, %v2198
        %vm2200 = vcmp.lt.s32.totalorder %v2181, 1
        %vm2201 = vcmp.lt.s32.totalorder %v2181, 2
        %vm2202 = vcmp.lt.s32.totalorder %v2181, 3
        %vm2203 = vcmp.lt.s32.totalorder %v2181, 4
        %v2204 = vsel %vm2200, %v2184, %v2187
        %v2205 = vsel %vm2203, %v2193, 2102212464
        %v2206 = vsel %vm2202, %v2190, %v2205
        %v2207 = vsel %vm2201, %v2204, %v2206
        %v2208 = vsel %vm2200, %v2187, %v2190
        %v2209 = vsel %vm2203, %v2196, 920167782
        %v2210 = vsel %vm2202, %v2193, %v2209
        %v2211 = vsel %vm2201, %v2208, %v2210
        %v2212 = vsel %vm2200, %v2190, %v2193
        %v2213 = vsel %vm2203, %v2199, 1326507024
        %v2214 = vsel %vm2202, %v2196, %v2213
        %v2215 = vsel %vm2201, %v2212, %v2214
        %v2216 = vshll.u32 %v2176, 8
        %v2217 = vand.u32 %v2216, 65535
        %v2218 = vshrl.u32 %v2216, 16
        %v2219 = vand.u32 %v2215, 65535
        %v2220 = vshrl.u32 %v2215, 16
        %v2221 = vmul.u32 %v2217, %v2219
        %v2222 = vmul.u32 %v2217, %v2220
        %v2223 = vmul.u32 %v2218, %v2219
        %v2224 = vmul.u32 %v2218, %v2220
        %v2225 = vshll.u32 %v2222, 16
        %v2226 = vshrl.u32 %v2222, 16
        %v2227 = vshll.u32 %v2223, 16
        %v2228 = vshrl.u32 %v2223, 16
        %vm2229 = vc.u32 %v2221, %v2225
        %v2230 = vsel %vm2229, 1, 0
        %v2231 = vadd.s32 %v2221, %v2225
        %v2232 = vadd.s32 %v2224, %v2230
        %vm2233 = vc.u32 %v2231, %v2227
        %v2234 = vsel %vm2233, 1, 0
        %v2235 = vadd.s32 %v2231, %v2227
        %v2236 = vadd.s32 %v2232, %v2234
        %v2237 = vadd.s32 %v2236, %v2226
        %v2238 = vadd.s32 %v2237, %v2228
        %v2239 = vand.u32 %v2216, 65535
        %v2240 = vshrl.u32 %v2216, 16
        %v2241 = vand.u32 %v2211, 65535
        %v2242 = vshrl.u32 %v2211, 16
        %v2243 = vmul.u32 %v2239, %v2241
        %v2244 = vmul.u32 %v2239, %v2242
        %v2245 = vmul.u32 %v2240, %v2241
        %v2246 = vmul.u32 %v2240, %v2242
        %v2247 = vshll.u32 %v2244, 16
        %v2248 = vshrl.u32 %v2244, 16
        %v2249 = vshll.u32 %v2245, 16
        %v2250 = vshrl.u32 %v2245, 16
        %vm2251 = vc.u32 %v2243, %v2247
        %v2252 = vsel %vm2251, 1, 0
        %v2253 = vadd.s32 %v2243, %v2247
        %v2254 = vadd.s32 %v2246, %v2252
        %vm2255 = vc.u32 %v2253, %v2249
        %v2256 = vsel %vm2255, 1, 0
        %v2257 = vadd.s32 %v2253, %v2249
        %v2258 = vadd.s32 %v2254, %v2256
        %v2259 = vadd.s32 %v2258, %v2248
        %v2260 = vadd.s32 %v2259, %v2250
        %v2261 = vmul.u32 %v2216, %v2207
        %v2262 = vadd.s32 %v2238, %v2257
        %vm2263 = vc.u32 %v2238, %v2257
        %v2264 = vadd.s32 %v2260, 1
        %v2265 = vsel %vm2263, %v2264, %v2260
        %v2266 = vadd.s32 %v2261, %v2265
        %v2267 = vadd.s32 %v2266, 536870912
        %v2268 = vshrl.u32 %v2267, 30
        %v2269 = vshll.u32 %v2268, 30
        %v2270 = vsub.s32 %v2266, %v2269
        %vm2271 = vcmp.lt.s32.totalorder %v2270, 0
        %v2272 = vsub.s32 0, %v2270
        %v2273 = vsel %vm2271, %v2272, %v2270
        %v2274 = vclz %v2273
        %v2275 = vsub.s32 %v2274, 2
        %vm2276 = vcmp.gt.s32.totalorder 0, %v2275
        %v2277 = vsel %vm2276, 0, %v2275
        %v2278 = vsub.s32 32, %v2277
        %v2279 = vshll.u32 %v2270, %v2277
        %v2280 = vshrl.u32 %v2262, %v2278
        %v2281 = vor.u32 %v2279, %v2280
        %v2282 = vsub.s32 4294967266, %v2277
        %v2283 = vadd.s32 %v2282, 127
        %v2284 = vshll.u32 %v2283, 23
        %v2285 = vor.u32 4788187, %v2284
        %v2286 = vand.u32 2147483647, %v2285
        %v2288 = vcvt.s32.f32 %v2281
        %v2289 = vmul.f32 %v2288, %v2286
        %v2290 = vxor.u32 %v2289, 2147483648
        %v2291 = vsel %vm2170, %v2290, %v2289
        %v2292 = vsub.s32 4, %v2268
        %v2293 = vsel %vm2170, %v2292, %v2268
        %v2294 = vsel %vm2169, %v155, %v2291
        %v2295 = vsel %vm2169, 0, %v2293
        %v2296 = vmul.f32 %v2294, %v2294
        %v2297 = vmul.f32 %v2296, -0.001358992
        %v2298 = vadd.f32 %v2297, 0.041655596
        %v2299 = vmul.f32 %v2296, %v2298
        %v2300 = vadd.f32 %v2299, -0.4999988
        %v2301 = vmul.f32 %v2296, %v2300
        %v2302 = vadd.f32 1.0, %v2301
        %v2303 = vmul.f32 %v2294, %v2294
        %v2304 = vmul.f32 %v2303, -0.00019511016
        %v2305 = vadd.f32 %v2304, 0.008332121
        %v2306 = vmul.f32 %v2303, %v2305
        %v2307 = vadd.f32 %v2306, -0.16666654
        %v2308 = vmul.f32 %v2303, %v2307
        %v2309 = vadd.f32 %v2308, 1.0
        %v2310 = vmul.f32 %v2309, %v2294
        %vm2311 = vweird.f32 %v155
        %v2312 = vand.u32 %v2295, 3
        %vm2313 = vcmp.lt.s32.totalorder %v2312, 2
        %vm2314 = vcmp.eq.s32.totalorder %v2312, 0
        %v2315 = vxor.u32 %v2310, 2147483648
        %v2316 = vsel %vm2314, %v2302, %v2315
        %vm2317 = vcmp.eq.s32.totalorder %v2312, 2
        %v2318 = vxor.u32 %v2302, 2147483648
        %v2319 = vsel %vm2317, %v2318, %v2310
        %v2320 = vsel %vm2313, %v2316, %v2319
        %v2321 = vsel %vm2311, nan, %v2320
        %v2322 = vand.u32 2147483647, %v156
        %vm2323 = vcmp.le.f32.partialorder %v2322, 0.7853982
        %vm2324 = vcmp.lt.s32.totalorder %v156, 0
        %v2325 = vand.u32 %v156, 2139095040
        %v2326 = vshrl.u32 %v2325, 23
        %v2327 = vsub.s32 %v2326, 127
        %v2328 = vand.u32 2147483647, %v156
        %v2329 = vand.u32 %v2328, 8388607
        %v2330 = vor.u32 %v2329, 8388608
        %v2331 = vsub.s32 0, %v2330
        %v2332 = vadd.s32 %v2327, 1
        %vm2333 = vcmp.gt.s32.totalorder %v2332, 0
        %v2334 = vsel %vm2333, %v2332, 0
        %v2335 = vshrl.u32 %v2334, 5
        %v2336 = vand.u32 %v2334, 31
        %v2337 = vsub.s32 32, %v2336
        %v2338 = vshrl.u32 683565275, %v2337
        %v2339 = vshll.u32 683565275, %v2336
        %v2340 = vshrl.u32 2475754826, %v2337
        %v2341 = vor.u32 %v2339, %v2340
        %v2342 = vshll.u32 2475754826, %v2336
        %v2343 = vshrl.u32 2131351028, %v2337
        %v2344 = vor.u32 %v2342, %v2343
        %v2345 = vshll.u32 2131351028, %v2336
        %v2346 = vshrl.u32 2102212464, %v2337
        %v2347 = vor.u32 %v2345, %v2346
        %v2348 = vshll.u32 2102212464, %v2336
        %v2349 = vshrl.u32 920167782, %v2337
        %v2350 = vor.u32 %v2348, %v2349
        %v2351 = vshll.u32 920167782, %v2336
        %v2352 = vshrl.u32 1326507024, %v2337
        %v2353 = vor.u32 %v2351, %v2352
        %vm2354 = vcmp.lt.s32.totalorder %v2335, 1
        %vm2355 = vcmp.lt.s32.totalorder %v2335, 2
        %vm2356 = vcmp.lt.s32.totalorder %v2335, 3
        %vm2357 = vcmp.lt.s32.totalorder %v2335, 4
        %v2358 = vsel %vm2354, %v2338, %v2341
        %v2359 = vsel %vm2357, %v2347, 2102212464
        %v2360 = vsel %vm2356, %v2344, %v2359
        %v2361 = vsel %vm2355, %v2358, %v2360
        %v2362 = vsel %vm2354, %v2341, %v2344
        %v2363 = vsel %vm2357, %v2350, 920167782
        %v2364 = vsel %vm2356, %v2347, %v2363
        %v2365 = vsel %vm2355, %v2362, %v2364
        %v2366 = vsel %vm2354, %v2344, %v2347
        %v2367 = vsel %vm2357, %v2353, 1326507024
        %v2368 = vsel %vm2356, %v2350, %v2367
        %v2369 = vsel %vm2355, %v2366, %v2368
        %v2370 = vshll.u32 %v2330, 8
        %v2371 = vand.u32 %v2370, 65535
        %v2372 = vshrl.u32 %v2370, 16
        %v2373 = vand.u32 %v2369, 65535
        %v2374 = vshrl.u32 %v2369, 16
        %v2375 = vmul.u32 %v2371, %v2373
        %v2376 = vmul.u32 %v2371, %v2374
        %v2377 = vmul.u32 %v2372, %v2373
        %v2378 = vmul.u32 %v2372, %v2374
        %v2379 = vshll.u32 %v2376, 16
        %v2380 = vshrl.u32 %v2376, 16
        %v2381 = vshll.u32 %v2377, 16
        %v2382 = vshrl.u32 %v2377, 16
        %vm2383 = vc.u32 %v2375, %v2379
        %v2384 = vsel %vm2383, 1, 0
        %v2385 = vadd.s32 %v2375, %v2379
        %v2386 = vadd.s32 %v2378, %v2384
        %vm2387 = vc.u32 %v2385, %v2381
        %v2388 = vsel %vm2387, 1, 0
        %v2389 = vadd.s32 %v2385, %v2381
        %v2390 = vadd.s32 %v2386, %v2388
        %v2391 = vadd.s32 %v2390, %v2380
        %v2392 = vadd.s32 %v2391, %v2382
        %v2393 = vand.u32 %v2370, 65535
        %v2394 = vshrl.u32 %v2370, 16
        %v2395 = vand.u32 %v2365, 65535
        %v2396 = vshrl.u32 %v2365, 16
        %v2397 = vmul.u32 %v2393, %v2395
        %v2398 = vmul.u32 %v2393, %v2396
        %v2399 = vmul.u32 %v2394, %v2395
        %v2400 = vmul.u32 %v2394, %v2396
        %v2401 = vshll.u32 %v2398, 16
        %v2402 = vshrl.u32 %v2398, 16
        %v2403 = vshll.u32 %v2399, 16
        %v2404 = vshrl.u32 %v2399, 16
        %vm2405 = vc.u32 %v2397, %v2401
        %v2406 = vsel %vm2405, 1, 0
        %v2407 = vadd.s32 %v2397, %v2401
        %v2408 = vadd.s32 %v2400, %v2406
        %vm2409 = vc.u32 %v2407, %v2403
        %v2410 = vsel %vm2409, 1, 0
        %v2411 = vadd.s32 %v2407, %v2403
        %v2412 = vadd.s32 %v2408, %v2410
        %v2413 = vadd.s32 %v2412, %v2402
        %v2414 = vadd.s32 %v2413, %v2404
        %v2415 = vmul.u32 %v2370, %v2361
        %v2416 = vadd.s32 %v2392, %v2411
        %vm2417 = vc.u32 %v2392, %v2411
        %v2418 = vadd.s32 %v2414, 1
        %v2419 = vsel %vm2417, %v2418, %v2414
        %v2420 = vadd.s32 %v2415, %v2419
        %v2421 = vadd.s32 %v2420, 536870912
        %v2422 = vshrl.u32 %v2421, 30
        %v2423 = vshll.u32 %v2422, 30
        %v2424 = vsub.s32 %v2420, %v2423
        %vm2425 = vcmp.lt.s32.totalorder %v2424, 0
        %v2426 = vsub.s32 0, %v2424
        %v2427 = vsel %vm2425, %v2426, %v2424
        %v2428 = vclz %v2427
        %v2429 = vsub.s32 %v2428, 2
        %vm2430 = vcmp.gt.s32.totalorder 0, %v2429
        %v2431 = vsel %vm2430, 0, %v2429
        %v2432 = vsub.s32 32, %v2431
        %v2433 = vshll.u32 %v2424, %v2431
        %v2434 = vshrl.u32 %v2416, %v2432
        %v2435 = vor.u32 %v2433, %v2434
        %v2436 = vsub.s32 4294967266, %v2431
        %v2437 = vadd.s32 %v2436, 127
        %v2438 = vshll.u32 %v2437, 23
        %v2439 = vor.u32 4788187, %v2438
        %v2440 = vand.u32 2147483647, %v2439
        %v2442 = vcvt.s32.f32 %v2435
        %v2443 = vmul.f32 %v2442, %v2440
        %v2444 = vxor.u32 %v2443, 2147483648
        %v2445 = vsel %vm2324, %v2444, %v2443
        %v2446 = vsub.s32 4, %v2422
        %v2447 = vsel %vm2324, %v2446, %v2422
        %v2448 = vsel %vm2323, %v156, %v2445
        %v2449 = vsel %vm2323, 0, %v2447
        %v2450 = vmul.f32 %v2448, %v2448
        %v2451 = vmul.f32 %v2450, -0.001358992
        %v2452 = vadd.f32 %v2451, 0.041655596
        %v2453 = vmul.f32 %v2450, %v2452
        %v2454 = vadd.f32 %v2453, -0.4999988
        %v2455 = vmul.f32 %v2450, %v2454
        %v2456 = vadd.f32 1.0, %v2455
        %v2457 = vmul.f32 %v2448, %v2448
        %v2458 = vmul.f32 %v2457, -0.00019511016
        %v2459 = vadd.f32 %v2458, 0.008332121
        %v2460 = vmul.f32 %v2457, %v2459
        %v2461 = vadd.f32 %v2460, -0.16666654
        %v2462 = vmul.f32 %v2457, %v2461
        %v2463 = vadd.f32 %v2462, 1.0
        %v2464 = vmul.f32 %v2463, %v2448
        %vm2465 = vweird.f32 %v156
        %v2466 = vand.u32 %v2449, 3
        %vm2467 = vcmp.lt.s32.totalorder %v2466, 2
        %vm2468 = vcmp.eq.s32.totalorder %v2466, 0
        %v2469 = vxor.u32 %v2464, 2147483648
        %v2470 = vsel %vm2468, %v2456, %v2469
        %vm2471 = vcmp.eq.s32.totalorder %v2466, 2
        %v2472 = vxor.u32 %v2456, 2147483648
        %v2473 = vsel %vm2471, %v2472, %v2464
        %v2474 = vsel %vm2467, %v2470, %v2473
        %v2475 = vsel %vm2465, nan, %v2474
        %v2476 = vand.u32 2147483647, %v157
        %vm2477 = vcmp.le.f32.partialorder %v2476, 0.7853982
        %vm2478 = vcmp.lt.s32.totalorder %v157, 0
        %v2479 = vand.u32 %v157, 2139095040
        %v2480 = vshrl.u32 %v2479, 23
        %v2481 = vsub.s32 %v2480, 127
        %v2482 = vand.u32 2147483647, %v157
        %v2483 = vand.u32 %v2482, 8388607
        %v2484 = vor.u32 %v2483, 8388608
        %v2485 = vsub.s32 0, %v2484
        %v2486 = vadd.s32 %v2481, 1
        %vm2487 = vcmp.gt.s32.totalorder %v2486, 0
        %v2488 = vsel %vm2487, %v2486, 0
        %v2489 = vshrl.u32 %v2488, 5
        %v2490 = vand.u32 %v2488, 31
        %v2491 = vsub.s32 32, %v2490
        %v2492 = vshrl.u32 683565275, %v2491
        %v2493 = vshll.u32 683565275, %v2490
        %v2494 = vshrl.u32 2475754826, %v2491
        %v2495 = vor.u32 %v2493, %v2494
        %v2496 = vshll.u32 2475754826, %v2490
        %v2497 = vshrl.u32 2131351028, %v2491
        %v2498 = vor.u32 %v2496, %v2497
        %v2499 = vshll.u32 2131351028, %v2490
        %v2500 = vshrl.u32 2102212464, %v2491
        %v2501 = vor.u32 %v2499, %v2500
        %v2502 = vshll.u32 2102212464, %v2490
        %v2503 = vshrl.u32 920167782, %v2491
        %v2504 = vor.u32 %v2502, %v2503
        %v2505 = vshll.u32 920167782, %v2490
        %v2506 = vshrl.u32 1326507024, %v2491
        %v2507 = vor.u32 %v2505, %v2506
        %vm2508 = vcmp.lt.s32.totalorder %v2489, 1
        %vm2509 = vcmp.lt.s32.totalorder %v2489, 2
        %vm2510 = vcmp.lt.s32.totalorder %v2489, 3
        %vm2511 = vcmp.lt.s32.totalorder %v2489, 4
        %v2512 = vsel %vm2508, %v2492, %v2495
        %v2513 = vsel %vm2511, %v2501, 2102212464
        %v2514 = vsel %vm2510, %v2498, %v2513
        %v2515 = vsel %vm2509, %v2512, %v2514
        %v2516 = vsel %vm2508, %v2495, %v2498
        %v2517 = vsel %vm2511, %v2504, 920167782
        %v2518 = vsel %vm2510, %v2501, %v2517
        %v2519 = vsel %vm2509, %v2516, %v2518
        %v2520 = vsel %vm2508, %v2498, %v2501
        %v2521 = vsel %vm2511, %v2507, 1326507024
        %v2522 = vsel %vm2510, %v2504, %v2521
        %v2523 = vsel %vm2509, %v2520, %v2522
        %v2524 = vshll.u32 %v2484, 8
        %v2525 = vand.u32 %v2524, 65535
        %v2526 = vshrl.u32 %v2524, 16
        %v2527 = vand.u32 %v2523, 65535
        %v2528 = vshrl.u32 %v2523, 16
        %v2529 = vmul.u32 %v2525, %v2527
        %v2530 = vmul.u32 %v2525, %v2528
        %v2531 = vmul.u32 %v2526, %v2527
        %v2532 = vmul.u32 %v2526, %v2528
        %v2533 = vshll.u32 %v2530, 16
        %v2534 = vshrl.u32 %v2530, 16
        %v2535 = vshll.u32 %v2531, 16
        %v2536 = vshrl.u32 %v2531, 16
        %vm2537 = vc.u32 %v2529, %v2533
        %v2538 = vsel %vm2537, 1, 0
        %v2539 = vadd.s32 %v2529, %v2533
        %v2540 = vadd.s32 %v2532, %v2538
        %vm2541 = vc.u32 %v2539, %v2535
        %v2542 = vsel %vm2541, 1, 0
        %v2543 = vadd.s32 %v2539, %v2535
        %v2544 = vadd.s32 %v2540, %v2542
        %v2545 = vadd.s32 %v2544, %v2534
        %v2546 = vadd.s32 %v2545, %v2536
        %v2547 = vand.u32 %v2524, 65535
        %v2548 = vshrl.u32 %v2524, 16
        %v2549 = vand.u32 %v2519, 65535
        %v2550 = vshrl.u32 %v2519, 16
        %v2551 = vmul.u32 %v2547, %v2549
        %v2552 = vmul.u32 %v2547, %v2550
        %v2553 = vmul.u32 %v2548, %v2549
        %v2554 = vmul.u32 %v2548, %v2550
        %v2555 = vshll.u32 %v2552, 16
        %v2556 = vshrl.u32 %v2552, 16
        %v2557 = vshll.u32 %v2553, 16
        %v2558 = vshrl.u32 %v2553, 16
        %vm2559 = vc.u32 %v2551, %v2555
        %v2560 = vsel %vm2559, 1, 0
        %v2561 = vadd.s32 %v2551, %v2555
        %v2562 = vadd.s32 %v2554, %v2560
        %vm2563 = vc.u32 %v2561, %v2557
        %v2564 = vsel %vm2563, 1, 0
        %v2565 = vadd.s32 %v2561, %v2557
        %v2566 = vadd.s32 %v2562, %v2564
        %v2567 = vadd.s32 %v2566, %v2556
        %v2568 = vadd.s32 %v2567, %v2558
        %v2569 = vmul.u32 %v2524, %v2515
        %v2570 = vadd.s32 %v2546, %v2565
        %vm2571 = vc.u32 %v2546, %v2565
        %v2572 = vadd.s32 %v2568, 1
        %v2573 = vsel %vm2571, %v2572, %v2568
        %v2574 = vadd.s32 %v2569, %v2573
        %v2575 = vadd.s32 %v2574, 536870912
        %v2576 = vshrl.u32 %v2575, 30
        %v2577 = vshll.u32 %v2576, 30
        %v2578 = vsub.s32 %v2574, %v2577
        %vm2579 = vcmp.lt.s32.totalorder %v2578, 0
        %v2580 = vsub.s32 0, %v2578
        %v2581 = vsel %vm2579, %v2580, %v2578
        %v2582 = vclz %v2581
        %v2583 = vsub.s32 %v2582, 2
        %vm2584 = vcmp.gt.s32.totalorder 0, %v2583
        %v2585 = vsel %vm2584, 0, %v2583
        %v2586 = vsub.s32 32, %v2585
        %v2587 = vshll.u32 %v2578, %v2585
        %v2588 = vshrl.u32 %v2570, %v2586
        %v2589 = vor.u32 %v2587, %v2588
        %v2590 = vsub.s32 4294967266, %v2585
        %v2591 = vadd.s32 %v2590, 127
        %v2592 = vshll.u32 %v2591, 23
        %v2593 = vor.u32 4788187, %v2592
        %v2594 = vand.u32 2147483647, %v2593
        %v2596 = vcvt.s32.f32 %v2589
        %v2597 = vmul.f32 %v2596, %v2594
        %v2598 = vxor.u32 %v2597, 2147483648
        %v2599 = vsel %vm2478, %v2598, %v2597
        %v2600 = vsub.s32 4, %v2576
        %v2601 = vsel %vm2478, %v2600, %v2576
        %v2602 = vsel %vm2477, %v157, %v2599
        %v2603 = vsel %vm2477, 0, %v2601
        %v2604 = vmul.f32 %v2602, %v2602
        %v2605 = vmul.f32 %v2604, -0.001358992
        %v2606 = vadd.f32 %v2605, 0.041655596
        %v2607 = vmul.f32 %v2604, %v2606
        %v2608 = vadd.f32 %v2607, -0.4999988
        %v2609 = vmul.f32 %v2604, %v2608
        %v2610 = vadd.f32 1.0, %v2609
        %v2611 = vmul.f32 %v2602, %v2602
        %v2612 = vmul.f32 %v2611, -0.00019511016
        %v2613 = vadd.f32 %v2612, 0.008332121
        %v2614 = vmul.f32 %v2611, %v2613
        %v2615 = vadd.f32 %v2614, -0.16666654
        %v2616 = vmul.f32 %v2611, %v2615
        %v2617 = vadd.f32 %v2616, 1.0
        %v2618 = vmul.f32 %v2617, %v2602
        %vm2619 = vweird.f32 %v157
        %v2620 = vand.u32 %v2603, 3
        %vm2621 = vcmp.lt.s32.totalorder %v2620, 2
        %vm2622 = vcmp.eq.s32.totalorder %v2620, 0
        %v2623 = vxor.u32 %v2618, 2147483648
        %v2624 = vsel %vm2622, %v2610, %v2623
        %vm2625 = vcmp.eq.s32.totalorder %v2620, 2
        %v2626 = vxor.u32 %v2610, 2147483648
        %v2627 = vsel %vm2625, %v2626, %v2618
        %v2628 = vsel %vm2621, %v2624, %v2627
        %v2629 = vsel %vm2619, nan, %v2628
        %s2630 = smul.u32 %s15, 32
        %s2631 = scvt.s32.f32 %s2630
        %v2632 = vstv %s2631
        %v2633 = vadd.f32 %v106, %v2632
        %v2634 = vadd.f32 %v2633, 0.5
        %v2635 = vmul.f32 %v2634, 0.03125
        %v2636 = vsub.f32 %v2635, 1.0
        %2637 = vset.pattern.permute.xlu0 1
        %2638 = vperm.xlu0 %2637, %v96
        %v2639 = vpop.permute.xlu0 %2638
        %2641 = vset.pattern.permute.xlu0 1
        %2642 = vperm.xlu0 %2641, %v97
        %v2643 = vpop.permute.xlu0 %2642
        %2645 = vset.pattern.permute.xlu0 1
        %2646 = vperm.xlu0 %2645, %v98
        %v2647 = vpop.permute.xlu0 %2646
        %2649 = vset.pattern.permute.xlu0 1
        %2650 = vperm.xlu0 %2649, %v99
        %v2651 = vpop.permute.xlu0 %2650
        %2653 = vset.pattern.permute.xlu0 1
        %2654 = vperm.xlu0 %2653, %v100
        %v2655 = vpop.permute.xlu0 %2654
        %2657 = vset.pattern.permute.xlu0 1
        %2658 = vperm.xlu0 %2657, %v101
        %v2659 = vpop.permute.xlu0 %2658
        %2661 = vset.pattern.permute.xlu0 1
        %2662 = vperm.xlu0 %2661, %v102
        %v2663 = vpop.permute.xlu0 %2662
        %2665 = vset.pattern.permute.xlu0 1
        %2666 = vperm.xlu0 %2665, %v103
        %v2667 = vpop.permute.xlu0 %2666
        %v2669 = vmul.f32 %v2639, %v2636
        %v2670 = vmul.f32 %v2643, %v2636
        %v2671 = vmul.f32 %v2647, %v2636
        %v2672 = vmul.f32 %v2651, %v2636
        %v2673 = vmul.f32 %v2655, %v2636
        %v2674 = vmul.f32 %v2659, %v2636
        %v2675 = vmul.f32 %v2663, %v2636
        %v2676 = vmul.f32 %v2667, %v2636
        %v2677 = vand.u32 2147483647, %v2669
        %vm2678 = vcmp.le.f32.partialorder %v2677, 0.7853982
        %vm2679 = vcmp.lt.s32.totalorder %v2669, 0
        %v2680 = vand.u32 %v2669, 2139095040
        %v2681 = vshrl.u32 %v2680, 23
        %v2682 = vsub.s32 %v2681, 127
        %v2683 = vand.u32 2147483647, %v2669
        %v2684 = vand.u32 %v2683, 8388607
        %v2685 = vor.u32 %v2684, 8388608
        %v2686 = vsub.s32 0, %v2685
        %v2687 = vadd.s32 %v2682, 1
        %vm2688 = vcmp.gt.s32.totalorder %v2687, 0
        %v2689 = vsel %vm2688, %v2687, 0
        %v2690 = vshrl.u32 %v2689, 5
        %v2691 = vand.u32 %v2689, 31
        %v2692 = vsub.s32 32, %v2691
        %v2693 = vshrl.u32 683565275, %v2692
        %v2694 = vshll.u32 683565275, %v2691
        %v2695 = vshrl.u32 2475754826, %v2692
        %v2696 = vor.u32 %v2694, %v2695
        %v2697 = vshll.u32 2475754826, %v2691
        %v2698 = vshrl.u32 2131351028, %v2692
        %v2699 = vor.u32 %v2697, %v2698
        %v2700 = vshll.u32 2131351028, %v2691
        %v2701 = vshrl.u32 2102212464, %v2692
        %v2702 = vor.u32 %v2700, %v2701
        %v2703 = vshll.u32 2102212464, %v2691
        %v2704 = vshrl.u32 920167782, %v2692
        %v2705 = vor.u32 %v2703, %v2704
        %v2706 = vshll.u32 920167782, %v2691
        %v2707 = vshrl.u32 1326507024, %v2692
        %v2708 = vor.u32 %v2706, %v2707
        %vm2709 = vcmp.lt.s32.totalorder %v2690, 1
        %vm2710 = vcmp.lt.s32.totalorder %v2690, 2
        %vm2711 = vcmp.lt.s32.totalorder %v2690, 3
        %vm2712 = vcmp.lt.s32.totalorder %v2690, 4
        %v2713 = vsel %vm2709, %v2693, %v2696
        %v2714 = vsel %vm2712, %v2702, 2102212464
        %v2715 = vsel %vm2711, %v2699, %v2714
        %v2716 = vsel %vm2710, %v2713, %v2715
        %v2717 = vsel %vm2709, %v2696, %v2699
        %v2718 = vsel %vm2712, %v2705, 920167782
        %v2719 = vsel %vm2711, %v2702, %v2718
        %v2720 = vsel %vm2710, %v2717, %v2719
        %v2721 = vsel %vm2709, %v2699, %v2702
        %v2722 = vsel %vm2712, %v2708, 1326507024
        %v2723 = vsel %vm2711, %v2705, %v2722
        %v2724 = vsel %vm2710, %v2721, %v2723
        %v2725 = vshll.u32 %v2685, 8
        %v2726 = vand.u32 %v2725, 65535
        %v2727 = vshrl.u32 %v2725, 16
        %v2728 = vand.u32 %v2724, 65535
        %v2729 = vshrl.u32 %v2724, 16
        %v2730 = vmul.u32 %v2726, %v2728
        %v2731 = vmul.u32 %v2726, %v2729
        %v2732 = vmul.u32 %v2727, %v2728
        %v2733 = vmul.u32 %v2727, %v2729
        %v2734 = vshll.u32 %v2731, 16
        %v2735 = vshrl.u32 %v2731, 16
        %v2736 = vshll.u32 %v2732, 16
        %v2737 = vshrl.u32 %v2732, 16
        %vm2738 = vc.u32 %v2730, %v2734
        %v2739 = vsel %vm2738, 1, 0
        %v2740 = vadd.s32 %v2730, %v2734
        %v2741 = vadd.s32 %v2733, %v2739
        %vm2742 = vc.u32 %v2740, %v2736
        %v2743 = vsel %vm2742, 1, 0
        %v2744 = vadd.s32 %v2740, %v2736
        %v2745 = vadd.s32 %v2741, %v2743
        %v2746 = vadd.s32 %v2745, %v2735
        %v2747 = vadd.s32 %v2746, %v2737
        %v2748 = vand.u32 %v2725, 65535
        %v2749 = vshrl.u32 %v2725, 16
        %v2750 = vand.u32 %v2720, 65535
        %v2751 = vshrl.u32 %v2720, 16
        %v2752 = vmul.u32 %v2748, %v2750
        %v2753 = vmul.u32 %v2748, %v2751
        %v2754 = vmul.u32 %v2749, %v2750
        %v2755 = vmul.u32 %v2749, %v2751
        %v2756 = vshll.u32 %v2753, 16
        %v2757 = vshrl.u32 %v2753, 16
        %v2758 = vshll.u32 %v2754, 16
        %v2759 = vshrl.u32 %v2754, 16
        %vm2760 = vc.u32 %v2752, %v2756
        %v2761 = vsel %vm2760, 1, 0
        %v2762 = vadd.s32 %v2752, %v2756
        %v2763 = vadd.s32 %v2755, %v2761
        %vm2764 = vc.u32 %v2762, %v2758
        %v2765 = vsel %vm2764, 1, 0
        %v2766 = vadd.s32 %v2762, %v2758
        %v2767 = vadd.s32 %v2763, %v2765
        %v2768 = vadd.s32 %v2767, %v2757
        %v2769 = vadd.s32 %v2768, %v2759
        %v2770 = vmul.u32 %v2725, %v2716
        %v2771 = vadd.s32 %v2747, %v2766
        %vm2772 = vc.u32 %v2747, %v2766
        %v2773 = vadd.s32 %v2769, 1
        %v2774 = vsel %vm2772, %v2773, %v2769
        %v2775 = vadd.s32 %v2770, %v2774
        %v2776 = vadd.s32 %v2775, 536870912
        %v2777 = vshrl.u32 %v2776, 30
        %v2778 = vshll.u32 %v2777, 30
        %v2779 = vsub.s32 %v2775, %v2778
        %vm2780 = vcmp.lt.s32.totalorder %v2779, 0
        %v2781 = vsub.s32 0, %v2779
        %v2782 = vsel %vm2780, %v2781, %v2779
        %v2783 = vclz %v2782
        %v2784 = vsub.s32 %v2783, 2
        %vm2785 = vcmp.gt.s32.totalorder 0, %v2784
        %v2786 = vsel %vm2785, 0, %v2784
        %v2787 = vsub.s32 32, %v2786
        %v2788 = vshll.u32 %v2779, %v2786
        %v2789 = vshrl.u32 %v2771, %v2787
        %v2790 = vor.u32 %v2788, %v2789
        %v2791 = vsub.s32 4294967266, %v2786
        %v2792 = vadd.s32 %v2791, 127
        %v2793 = vshll.u32 %v2792, 23
        %v2794 = vor.u32 4788187, %v2793
        %v2795 = vand.u32 2147483647, %v2794
        %v2797 = vcvt.s32.f32 %v2790
        %v2798 = vmul.f32 %v2797, %v2795
        %v2799 = vxor.u32 %v2798, 2147483648
        %v2800 = vsel %vm2679, %v2799, %v2798
        %v2801 = vsub.s32 4, %v2777
        %v2802 = vsel %vm2679, %v2801, %v2777
        %v2803 = vsel %vm2678, %v2669, %v2800
        %v2804 = vsel %vm2678, 0, %v2802
        %v2805 = vmul.f32 %v2803, %v2803
        %v2806 = vmul.f32 %v2805, -0.001358992
        %v2807 = vadd.f32 %v2806, 0.041655596
        %v2808 = vmul.f32 %v2805, %v2807
        %v2809 = vadd.f32 %v2808, -0.4999988
        %v2810 = vmul.f32 %v2805, %v2809
        %v2811 = vadd.f32 1.0, %v2810
        %v2812 = vmul.f32 %v2803, %v2803
        %v2813 = vmul.f32 %v2812, -0.00019511016
        %v2814 = vadd.f32 %v2813, 0.008332121
        %v2815 = vmul.f32 %v2812, %v2814
        %v2816 = vadd.f32 %v2815, -0.16666654
        %v2817 = vmul.f32 %v2812, %v2816
        %v2818 = vadd.f32 %v2817, 1.0
        %v2819 = vmul.f32 %v2818, %v2803
        %vm2820 = vweird.f32 %v2669
        %v2821 = vadd.s32 %v2804, 3
        %v2822 = vand.u32 %v2821, 3
        %vm2823 = vcmp.lt.s32.totalorder %v2822, 2
        %vm2824 = vcmp.eq.s32.totalorder %v2822, 0
        %v2825 = vxor.u32 %v2819, 2147483648
        %v2826 = vsel %vm2824, %v2811, %v2825
        %vm2827 = vcmp.eq.s32.totalorder %v2822, 2
        %v2828 = vxor.u32 %v2811, 2147483648
        %v2829 = vsel %vm2827, %v2828, %v2819
        %v2830 = vsel %vm2823, %v2826, %v2829
        %v2831 = vsel %vm2820, nan, %v2830
        %v2832 = vand.u32 2147483647, %v2670
        %vm2833 = vcmp.le.f32.partialorder %v2832, 0.7853982
        %vm2834 = vcmp.lt.s32.totalorder %v2670, 0
        %v2835 = vand.u32 %v2670, 2139095040
        %v2836 = vshrl.u32 %v2835, 23
        %v2837 = vsub.s32 %v2836, 127
        %v2838 = vand.u32 2147483647, %v2670
        %v2839 = vand.u32 %v2838, 8388607
        %v2840 = vor.u32 %v2839, 8388608
        %v2841 = vsub.s32 0, %v2840
        %v2842 = vadd.s32 %v2837, 1
        %vm2843 = vcmp.gt.s32.totalorder %v2842, 0
        %v2844 = vsel %vm2843, %v2842, 0
        %v2845 = vshrl.u32 %v2844, 5
        %v2846 = vand.u32 %v2844, 31
        %v2847 = vsub.s32 32, %v2846
        %v2848 = vshrl.u32 683565275, %v2847
        %v2849 = vshll.u32 683565275, %v2846
        %v2850 = vshrl.u32 2475754826, %v2847
        %v2851 = vor.u32 %v2849, %v2850
        %v2852 = vshll.u32 2475754826, %v2846
        %v2853 = vshrl.u32 2131351028, %v2847
        %v2854 = vor.u32 %v2852, %v2853
        %v2855 = vshll.u32 2131351028, %v2846
        %v2856 = vshrl.u32 2102212464, %v2847
        %v2857 = vor.u32 %v2855, %v2856
        %v2858 = vshll.u32 2102212464, %v2846
        %v2859 = vshrl.u32 920167782, %v2847
        %v2860 = vor.u32 %v2858, %v2859
        %v2861 = vshll.u32 920167782, %v2846
        %v2862 = vshrl.u32 1326507024, %v2847
        %v2863 = vor.u32 %v2861, %v2862
        %vm2864 = vcmp.lt.s32.totalorder %v2845, 1
        %vm2865 = vcmp.lt.s32.totalorder %v2845, 2
        %vm2866 = vcmp.lt.s32.totalorder %v2845, 3
        %vm2867 = vcmp.lt.s32.totalorder %v2845, 4
        %v2868 = vsel %vm2864, %v2848, %v2851
        %v2869 = vsel %vm2867, %v2857, 2102212464
        %v2870 = vsel %vm2866, %v2854, %v2869
        %v2871 = vsel %vm2865, %v2868, %v2870
        %v2872 = vsel %vm2864, %v2851, %v2854
        %v2873 = vsel %vm2867, %v2860, 920167782
        %v2874 = vsel %vm2866, %v2857, %v2873
        %v2875 = vsel %vm2865, %v2872, %v2874
        %v2876 = vsel %vm2864, %v2854, %v2857
        %v2877 = vsel %vm2867, %v2863, 1326507024
        %v2878 = vsel %vm2866, %v2860, %v2877
        %v2879 = vsel %vm2865, %v2876, %v2878
        %v2880 = vshll.u32 %v2840, 8
        %v2881 = vand.u32 %v2880, 65535
        %v2882 = vshrl.u32 %v2880, 16
        %v2883 = vand.u32 %v2879, 65535
        %v2884 = vshrl.u32 %v2879, 16
        %v2885 = vmul.u32 %v2881, %v2883
        %v2886 = vmul.u32 %v2881, %v2884
        %v2887 = vmul.u32 %v2882, %v2883
        %v2888 = vmul.u32 %v2882, %v2884
        %v2889 = vshll.u32 %v2886, 16
        %v2890 = vshrl.u32 %v2886, 16
        %v2891 = vshll.u32 %v2887, 16
        %v2892 = vshrl.u32 %v2887, 16
        %vm2893 = vc.u32 %v2885, %v2889
        %v2894 = vsel %vm2893, 1, 0
        %v2895 = vadd.s32 %v2885, %v2889
        %v2896 = vadd.s32 %v2888, %v2894
        %vm2897 = vc.u32 %v2895, %v2891
        %v2898 = vsel %vm2897, 1, 0
        %v2899 = vadd.s32 %v2895, %v2891
        %v2900 = vadd.s32 %v2896, %v2898
        %v2901 = vadd.s32 %v2900, %v2890
        %v2902 = vadd.s32 %v2901, %v2892
        %v2903 = vand.u32 %v2880, 65535
        %v2904 = vshrl.u32 %v2880, 16
        %v2905 = vand.u32 %v2875, 65535
        %v2906 = vshrl.u32 %v2875, 16
        %v2907 = vmul.u32 %v2903, %v2905
        %v2908 = vmul.u32 %v2903, %v2906
        %v2909 = vmul.u32 %v2904, %v2905
        %v2910 = vmul.u32 %v2904, %v2906
        %v2911 = vshll.u32 %v2908, 16
        %v2912 = vshrl.u32 %v2908, 16
        %v2913 = vshll.u32 %v2909, 16
        %v2914 = vshrl.u32 %v2909, 16
        %vm2915 = vc.u32 %v2907, %v2911
        %v2916 = vsel %vm2915, 1, 0
        %v2917 = vadd.s32 %v2907, %v2911
        %v2918 = vadd.s32 %v2910, %v2916
        %vm2919 = vc.u32 %v2917, %v2913
        %v2920 = vsel %vm2919, 1, 0
        %v2921 = vadd.s32 %v2917, %v2913
        %v2922 = vadd.s32 %v2918, %v2920
        %v2923 = vadd.s32 %v2922, %v2912
        %v2924 = vadd.s32 %v2923, %v2914
        %v2925 = vmul.u32 %v2880, %v2871
        %v2926 = vadd.s32 %v2902, %v2921
        %vm2927 = vc.u32 %v2902, %v2921
        %v2928 = vadd.s32 %v2924, 1
        %v2929 = vsel %vm2927, %v2928, %v2924
        %v2930 = vadd.s32 %v2925, %v2929
        %v2931 = vadd.s32 %v2930, 536870912
        %v2932 = vshrl.u32 %v2931, 30
        %v2933 = vshll.u32 %v2932, 30
        %v2934 = vsub.s32 %v2930, %v2933
        %vm2935 = vcmp.lt.s32.totalorder %v2934, 0
        %v2936 = vsub.s32 0, %v2934
        %v2937 = vsel %vm2935, %v2936, %v2934
        %v2938 = vclz %v2937
        %v2939 = vsub.s32 %v2938, 2
        %vm2940 = vcmp.gt.s32.totalorder 0, %v2939
        %v2941 = vsel %vm2940, 0, %v2939
        %v2942 = vsub.s32 32, %v2941
        %v2943 = vshll.u32 %v2934, %v2941
        %v2944 = vshrl.u32 %v2926, %v2942
        %v2945 = vor.u32 %v2943, %v2944
        %v2946 = vsub.s32 4294967266, %v2941
        %v2947 = vadd.s32 %v2946, 127
        %v2948 = vshll.u32 %v2947, 23
        %v2949 = vor.u32 4788187, %v2948
        %v2950 = vand.u32 2147483647, %v2949
        %v2952 = vcvt.s32.f32 %v2945
        %v2953 = vmul.f32 %v2952, %v2950
        %v2954 = vxor.u32 %v2953, 2147483648
        %v2955 = vsel %vm2834, %v2954, %v2953
        %v2956 = vsub.s32 4, %v2932
        %v2957 = vsel %vm2834, %v2956, %v2932
        %v2958 = vsel %vm2833, %v2670, %v2955
        %v2959 = vsel %vm2833, 0, %v2957
        %v2960 = vmul.f32 %v2958, %v2958
        %v2961 = vmul.f32 %v2960, -0.001358992
        %v2962 = vadd.f32 %v2961, 0.041655596
        %v2963 = vmul.f32 %v2960, %v2962
        %v2964 = vadd.f32 %v2963, -0.4999988
        %v2965 = vmul.f32 %v2960, %v2964
        %v2966 = vadd.f32 1.0, %v2965
        %v2967 = vmul.f32 %v2958, %v2958
        %v2968 = vmul.f32 %v2967, -0.00019511016
        %v2969 = vadd.f32 %v2968, 0.008332121
        %v2970 = vmul.f32 %v2967, %v2969
        %v2971 = vadd.f32 %v2970, -0.16666654
        %v2972 = vmul.f32 %v2967, %v2971
        %v2973 = vadd.f32 %v2972, 1.0
        %v2974 = vmul.f32 %v2973, %v2958
        %vm2975 = vweird.f32 %v2670
        %v2976 = vadd.s32 %v2959, 3
        %v2977 = vand.u32 %v2976, 3
        %vm2978 = vcmp.lt.s32.totalorder %v2977, 2
        %vm2979 = vcmp.eq.s32.totalorder %v2977, 0
        %v2980 = vxor.u32 %v2974, 2147483648
        %v2981 = vsel %vm2979, %v2966, %v2980
        %vm2982 = vcmp.eq.s32.totalorder %v2977, 2
        %v2983 = vxor.u32 %v2966, 2147483648
        %v2984 = vsel %vm2982, %v2983, %v2974
        %v2985 = vsel %vm2978, %v2981, %v2984
        %v2986 = vsel %vm2975, nan, %v2985
        %v2987 = vand.u32 2147483647, %v2671
        %vm2988 = vcmp.le.f32.partialorder %v2987, 0.7853982
        %vm2989 = vcmp.lt.s32.totalorder %v2671, 0
        %v2990 = vand.u32 %v2671, 2139095040
        %v2991 = vshrl.u32 %v2990, 23
        %v2992 = vsub.s32 %v2991, 127
        %v2993 = vand.u32 2147483647, %v2671
        %v2994 = vand.u32 %v2993, 8388607
        %v2995 = vor.u32 %v2994, 8388608
        %v2996 = vsub.s32 0, %v2995
        %v2997 = vadd.s32 %v2992, 1
        %vm2998 = vcmp.gt.s32.totalorder %v2997, 0
        %v2999 = vsel %vm2998, %v2997, 0
        %v3000 = vshrl.u32 %v2999, 5
        %v3001 = vand.u32 %v2999, 31
        %v3002 = vsub.s32 32, %v3001
        %v3003 = vshrl.u32 683565275, %v3002
        %v3004 = vshll.u32 683565275, %v3001
        %v3005 = vshrl.u32 2475754826, %v3002
        %v3006 = vor.u32 %v3004, %v3005
        %v3007 = vshll.u32 2475754826, %v3001
        %v3008 = vshrl.u32 2131351028, %v3002
        %v3009 = vor.u32 %v3007, %v3008
        %v3010 = vshll.u32 2131351028, %v3001
        %v3011 = vshrl.u32 2102212464, %v3002
        %v3012 = vor.u32 %v3010, %v3011
        %v3013 = vshll.u32 2102212464, %v3001
        %v3014 = vshrl.u32 920167782, %v3002
        %v3015 = vor.u32 %v3013, %v3014
        %v3016 = vshll.u32 920167782, %v3001
        %v3017 = vshrl.u32 1326507024, %v3002
        %v3018 = vor.u32 %v3016, %v3017
        %vm3019 = vcmp.lt.s32.totalorder %v3000, 1
        %vm3020 = vcmp.lt.s32.totalorder %v3000, 2
        %vm3021 = vcmp.lt.s32.totalorder %v3000, 3
        %vm3022 = vcmp.lt.s32.totalorder %v3000, 4
        %v3023 = vsel %vm3019, %v3003, %v3006
        %v3024 = vsel %vm3022, %v3012, 2102212464
        %v3025 = vsel %vm3021, %v3009, %v3024
        %v3026 = vsel %vm3020, %v3023, %v3025
        %v3027 = vsel %vm3019, %v3006, %v3009
        %v3028 = vsel %vm3022, %v3015, 920167782
        %v3029 = vsel %vm3021, %v3012, %v3028
        %v3030 = vsel %vm3020, %v3027, %v3029
        %v3031 = vsel %vm3019, %v3009, %v3012
        %v3032 = vsel %vm3022, %v3018, 1326507024
        %v3033 = vsel %vm3021, %v3015, %v3032
        %v3034 = vsel %vm3020, %v3031, %v3033
        %v3035 = vshll.u32 %v2995, 8
        %v3036 = vand.u32 %v3035, 65535
        %v3037 = vshrl.u32 %v3035, 16
        %v3038 = vand.u32 %v3034, 65535
        %v3039 = vshrl.u32 %v3034, 16
        %v3040 = vmul.u32 %v3036, %v3038
        %v3041 = vmul.u32 %v3036, %v3039
        %v3042 = vmul.u32 %v3037, %v3038
        %v3043 = vmul.u32 %v3037, %v3039
        %v3044 = vshll.u32 %v3041, 16
        %v3045 = vshrl.u32 %v3041, 16
        %v3046 = vshll.u32 %v3042, 16
        %v3047 = vshrl.u32 %v3042, 16
        %vm3048 = vc.u32 %v3040, %v3044
        %v3049 = vsel %vm3048, 1, 0
        %v3050 = vadd.s32 %v3040, %v3044
        %v3051 = vadd.s32 %v3043, %v3049
        %vm3052 = vc.u32 %v3050, %v3046
        %v3053 = vsel %vm3052, 1, 0
        %v3054 = vadd.s32 %v3050, %v3046
        %v3055 = vadd.s32 %v3051, %v3053
        %v3056 = vadd.s32 %v3055, %v3045
        %v3057 = vadd.s32 %v3056, %v3047
        %v3058 = vand.u32 %v3035, 65535
        %v3059 = vshrl.u32 %v3035, 16
        %v3060 = vand.u32 %v3030, 65535
        %v3061 = vshrl.u32 %v3030, 16
        %v3062 = vmul.u32 %v3058, %v3060
        %v3063 = vmul.u32 %v3058, %v3061
        %v3064 = vmul.u32 %v3059, %v3060
        %v3065 = vmul.u32 %v3059, %v3061
        %v3066 = vshll.u32 %v3063, 16
        %v3067 = vshrl.u32 %v3063, 16
        %v3068 = vshll.u32 %v3064, 16
        %v3069 = vshrl.u32 %v3064, 16
        %vm3070 = vc.u32 %v3062, %v3066
        %v3071 = vsel %vm3070, 1, 0
        %v3072 = vadd.s32 %v3062, %v3066
        %v3073 = vadd.s32 %v3065, %v3071
        %vm3074 = vc.u32 %v3072, %v3068
        %v3075 = vsel %vm3074, 1, 0
        %v3076 = vadd.s32 %v3072, %v3068
        %v3077 = vadd.s32 %v3073, %v3075
        %v3078 = vadd.s32 %v3077, %v3067
        %v3079 = vadd.s32 %v3078, %v3069
        %v3080 = vmul.u32 %v3035, %v3026
        %v3081 = vadd.s32 %v3057, %v3076
        %vm3082 = vc.u32 %v3057, %v3076
        %v3083 = vadd.s32 %v3079, 1
        %v3084 = vsel %vm3082, %v3083, %v3079
        %v3085 = vadd.s32 %v3080, %v3084
        %v3086 = vadd.s32 %v3085, 536870912
        %v3087 = vshrl.u32 %v3086, 30
        %v3088 = vshll.u32 %v3087, 30
        %v3089 = vsub.s32 %v3085, %v3088
        %vm3090 = vcmp.lt.s32.totalorder %v3089, 0
        %v3091 = vsub.s32 0, %v3089
        %v3092 = vsel %vm3090, %v3091, %v3089
        %v3093 = vclz %v3092
        %v3094 = vsub.s32 %v3093, 2
        %vm3095 = vcmp.gt.s32.totalorder 0, %v3094
        %v3096 = vsel %vm3095, 0, %v3094
        %v3097 = vsub.s32 32, %v3096
        %v3098 = vshll.u32 %v3089, %v3096
        %v3099 = vshrl.u32 %v3081, %v3097
        %v3100 = vor.u32 %v3098, %v3099
        %v3101 = vsub.s32 4294967266, %v3096
        %v3102 = vadd.s32 %v3101, 127
        %v3103 = vshll.u32 %v3102, 23
        %v3104 = vor.u32 4788187, %v3103
        %v3105 = vand.u32 2147483647, %v3104
        %v3107 = vcvt.s32.f32 %v3100
        %v3108 = vmul.f32 %v3107, %v3105
        %v3109 = vxor.u32 %v3108, 2147483648
        %v3110 = vsel %vm2989, %v3109, %v3108
        %v3111 = vsub.s32 4, %v3087
        %v3112 = vsel %vm2989, %v3111, %v3087
        %v3113 = vsel %vm2988, %v2671, %v3110
        %v3114 = vsel %vm2988, 0, %v3112
        %v3115 = vmul.f32 %v3113, %v3113
        %v3116 = vmul.f32 %v3115, -0.001358992
        %v3117 = vadd.f32 %v3116, 0.041655596
        %v3118 = vmul.f32 %v3115, %v3117
        %v3119 = vadd.f32 %v3118, -0.4999988
        %v3120 = vmul.f32 %v3115, %v3119
        %v3121 = vadd.f32 1.0, %v3120
        %v3122 = vmul.f32 %v3113, %v3113
        %v3123 = vmul.f32 %v3122, -0.00019511016
        %v3124 = vadd.f32 %v3123, 0.008332121
        %v3125 = vmul.f32 %v3122, %v3124
        %v3126 = vadd.f32 %v3125, -0.16666654
        %v3127 = vmul.f32 %v3122, %v3126
        %v3128 = vadd.f32 %v3127, 1.0
        %v3129 = vmul.f32 %v3128, %v3113
        %vm3130 = vweird.f32 %v2671
        %v3131 = vadd.s32 %v3114, 3
        %v3132 = vand.u32 %v3131, 3
        %vm3133 = vcmp.lt.s32.totalorder %v3132, 2
        %vm3134 = vcmp.eq.s32.totalorder %v3132, 0
        %v3135 = vxor.u32 %v3129, 2147483648
        %v3136 = vsel %vm3134, %v3121, %v3135
        %vm3137 = vcmp.eq.s32.totalorder %v3132, 2
        %v3138 = vxor.u32 %v3121, 2147483648
        %v3139 = vsel %vm3137, %v3138, %v3129
        %v3140 = vsel %vm3133, %v3136, %v3139
        %v3141 = vsel %vm3130, nan, %v3140
        %v3142 = vand.u32 2147483647, %v2672
        %vm3143 = vcmp.le.f32.partialorder %v3142, 0.7853982
        %vm3144 = vcmp.lt.s32.totalorder %v2672, 0
        %v3145 = vand.u32 %v2672, 2139095040
        %v3146 = vshrl.u32 %v3145, 23
        %v3147 = vsub.s32 %v3146, 127
        %v3148 = vand.u32 2147483647, %v2672
        %v3149 = vand.u32 %v3148, 8388607
        %v3150 = vor.u32 %v3149, 8388608
        %v3151 = vsub.s32 0, %v3150
        %v3152 = vadd.s32 %v3147, 1
        %vm3153 = vcmp.gt.s32.totalorder %v3152, 0
        %v3154 = vsel %vm3153, %v3152, 0
        %v3155 = vshrl.u32 %v3154, 5
        %v3156 = vand.u32 %v3154, 31
        %v3157 = vsub.s32 32, %v3156
        %v3158 = vshrl.u32 683565275, %v3157
        %v3159 = vshll.u32 683565275, %v3156
        %v3160 = vshrl.u32 2475754826, %v3157
        %v3161 = vor.u32 %v3159, %v3160
        %v3162 = vshll.u32 2475754826, %v3156
        %v3163 = vshrl.u32 2131351028, %v3157
        %v3164 = vor.u32 %v3162, %v3163
        %v3165 = vshll.u32 2131351028, %v3156
        %v3166 = vshrl.u32 2102212464, %v3157
        %v3167 = vor.u32 %v3165, %v3166
        %v3168 = vshll.u32 2102212464, %v3156
        %v3169 = vshrl.u32 920167782, %v3157
        %v3170 = vor.u32 %v3168, %v3169
        %v3171 = vshll.u32 920167782, %v3156
        %v3172 = vshrl.u32 1326507024, %v3157
        %v3173 = vor.u32 %v3171, %v3172
        %vm3174 = vcmp.lt.s32.totalorder %v3155, 1
        %vm3175 = vcmp.lt.s32.totalorder %v3155, 2
        %vm3176 = vcmp.lt.s32.totalorder %v3155, 3
        %vm3177 = vcmp.lt.s32.totalorder %v3155, 4
        %v3178 = vsel %vm3174, %v3158, %v3161
        %v3179 = vsel %vm3177, %v3167, 2102212464
        %v3180 = vsel %vm3176, %v3164, %v3179
        %v3181 = vsel %vm3175, %v3178, %v3180
        %v3182 = vsel %vm3174, %v3161, %v3164
        %v3183 = vsel %vm3177, %v3170, 920167782
        %v3184 = vsel %vm3176, %v3167, %v3183
        %v3185 = vsel %vm3175, %v3182, %v3184
        %v3186 = vsel %vm3174, %v3164, %v3167
        %v3187 = vsel %vm3177, %v3173, 1326507024
        %v3188 = vsel %vm3176, %v3170, %v3187
        %v3189 = vsel %vm3175, %v3186, %v3188
        %v3190 = vshll.u32 %v3150, 8
        %v3191 = vand.u32 %v3190, 65535
        %v3192 = vshrl.u32 %v3190, 16
        %v3193 = vand.u32 %v3189, 65535
        %v3194 = vshrl.u32 %v3189, 16
        %v3195 = vmul.u32 %v3191, %v3193
        %v3196 = vmul.u32 %v3191, %v3194
        %v3197 = vmul.u32 %v3192, %v3193
        %v3198 = vmul.u32 %v3192, %v3194
        %v3199 = vshll.u32 %v3196, 16
        %v3200 = vshrl.u32 %v3196, 16
        %v3201 = vshll.u32 %v3197, 16
        %v3202 = vshrl.u32 %v3197, 16
        %vm3203 = vc.u32 %v3195, %v3199
        %v3204 = vsel %vm3203, 1, 0
        %v3205 = vadd.s32 %v3195, %v3199
        %v3206 = vadd.s32 %v3198, %v3204
        %vm3207 = vc.u32 %v3205, %v3201
        %v3208 = vsel %vm3207, 1, 0
        %v3209 = vadd.s32 %v3205, %v3201
        %v3210 = vadd.s32 %v3206, %v3208
        %v3211 = vadd.s32 %v3210, %v3200
        %v3212 = vadd.s32 %v3211, %v3202
        %v3213 = vand.u32 %v3190, 65535
        %v3214 = vshrl.u32 %v3190, 16
        %v3215 = vand.u32 %v3185, 65535
        %v3216 = vshrl.u32 %v3185, 16
        %v3217 = vmul.u32 %v3213, %v3215
        %v3218 = vmul.u32 %v3213, %v3216
        %v3219 = vmul.u32 %v3214, %v3215
        %v3220 = vmul.u32 %v3214, %v3216
        %v3221 = vshll.u32 %v3218, 16
        %v3222 = vshrl.u32 %v3218, 16
        %v3223 = vshll.u32 %v3219, 16
        %v3224 = vshrl.u32 %v3219, 16
        %vm3225 = vc.u32 %v3217, %v3221
        %v3226 = vsel %vm3225, 1, 0
        %v3227 = vadd.s32 %v3217, %v3221
        %v3228 = vadd.s32 %v3220, %v3226
        %vm3229 = vc.u32 %v3227, %v3223
        %v3230 = vsel %vm3229, 1, 0
        %v3231 = vadd.s32 %v3227, %v3223
        %v3232 = vadd.s32 %v3228, %v3230
        %v3233 = vadd.s32 %v3232, %v3222
        %v3234 = vadd.s32 %v3233, %v3224
        %v3235 = vmul.u32 %v3190, %v3181
        %v3236 = vadd.s32 %v3212, %v3231
        %vm3237 = vc.u32 %v3212, %v3231
        %v3238 = vadd.s32 %v3234, 1
        %v3239 = vsel %vm3237, %v3238, %v3234
        %v3240 = vadd.s32 %v3235, %v3239
        %v3241 = vadd.s32 %v3240, 536870912
        %v3242 = vshrl.u32 %v3241, 30
        %v3243 = vshll.u32 %v3242, 30
        %v3244 = vsub.s32 %v3240, %v3243
        %vm3245 = vcmp.lt.s32.totalorder %v3244, 0
        %v3246 = vsub.s32 0, %v3244
        %v3247 = vsel %vm3245, %v3246, %v3244
        %v3248 = vclz %v3247
        %v3249 = vsub.s32 %v3248, 2
        %vm3250 = vcmp.gt.s32.totalorder 0, %v3249
        %v3251 = vsel %vm3250, 0, %v3249
        %v3252 = vsub.s32 32, %v3251
        %v3253 = vshll.u32 %v3244, %v3251
        %v3254 = vshrl.u32 %v3236, %v3252
        %v3255 = vor.u32 %v3253, %v3254
        %v3256 = vsub.s32 4294967266, %v3251
        %v3257 = vadd.s32 %v3256, 127
        %v3258 = vshll.u32 %v3257, 23
        %v3259 = vor.u32 4788187, %v3258
        %v3260 = vand.u32 2147483647, %v3259
        %v3262 = vcvt.s32.f32 %v3255
        %v3263 = vmul.f32 %v3262, %v3260
        %v3264 = vxor.u32 %v3263, 2147483648
        %v3265 = vsel %vm3144, %v3264, %v3263
        %v3266 = vsub.s32 4, %v3242
        %v3267 = vsel %vm3144, %v3266, %v3242
        %v3268 = vsel %vm3143, %v2672, %v3265
        %v3269 = vsel %vm3143, 0, %v3267
        %v3270 = vmul.f32 %v3268, %v3268
        %v3271 = vmul.f32 %v3270, -0.001358992
        %v3272 = vadd.f32 %v3271, 0.041655596
        %v3273 = vmul.f32 %v3270, %v3272
        %v3274 = vadd.f32 %v3273, -0.4999988
        %v3275 = vmul.f32 %v3270, %v3274
        %v3276 = vadd.f32 1.0, %v3275
        %v3277 = vmul.f32 %v3268, %v3268
        %v3278 = vmul.f32 %v3277, -0.00019511016
        %v3279 = vadd.f32 %v3278, 0.008332121
        %v3280 = vmul.f32 %v3277, %v3279
        %v3281 = vadd.f32 %v3280, -0.16666654
        %v3282 = vmul.f32 %v3277, %v3281
        %v3283 = vadd.f32 %v3282, 1.0
        %v3284 = vmul.f32 %v3283, %v3268
        %vm3285 = vweird.f32 %v2672
        %v3286 = vadd.s32 %v3269, 3
        %v3287 = vand.u32 %v3286, 3
        %vm3288 = vcmp.lt.s32.totalorder %v3287, 2
        %vm3289 = vcmp.eq.s32.totalorder %v3287, 0
        %v3290 = vxor.u32 %v3284, 2147483648
        %v3291 = vsel %vm3289, %v3276, %v3290
        %vm3292 = vcmp.eq.s32.totalorder %v3287, 2
        %v3293 = vxor.u32 %v3276, 2147483648
        %v3294 = vsel %vm3292, %v3293, %v3284
        %v3295 = vsel %vm3288, %v3291, %v3294
        %v3296 = vsel %vm3285, nan, %v3295
        %v3297 = vand.u32 2147483647, %v2673
        %vm3298 = vcmp.le.f32.partialorder %v3297, 0.7853982
        %vm3299 = vcmp.lt.s32.totalorder %v2673, 0
        %v3300 = vand.u32 %v2673, 2139095040
        %v3301 = vshrl.u32 %v3300, 23
        %v3302 = vsub.s32 %v3301, 127
        %v3303 = vand.u32 2147483647, %v2673
        %v3304 = vand.u32 %v3303, 8388607
        %v3305 = vor.u32 %v3304, 8388608
        %v3306 = vsub.s32 0, %v3305
        %v3307 = vadd.s32 %v3302, 1
        %vm3308 = vcmp.gt.s32.totalorder %v3307, 0
        %v3309 = vsel %vm3308, %v3307, 0
        %v3310 = vshrl.u32 %v3309, 5
        %v3311 = vand.u32 %v3309, 31
        %v3312 = vsub.s32 32, %v3311
        %v3313 = vshrl.u32 683565275, %v3312
        %v3314 = vshll.u32 683565275, %v3311
        %v3315 = vshrl.u32 2475754826, %v3312
        %v3316 = vor.u32 %v3314, %v3315
        %v3317 = vshll.u32 2475754826, %v3311
        %v3318 = vshrl.u32 2131351028, %v3312
        %v3319 = vor.u32 %v3317, %v3318
        %v3320 = vshll.u32 2131351028, %v3311
        %v3321 = vshrl.u32 2102212464, %v3312
        %v3322 = vor.u32 %v3320, %v3321
        %v3323 = vshll.u32 2102212464, %v3311
        %v3324 = vshrl.u32 920167782, %v3312
        %v3325 = vor.u32 %v3323, %v3324
        %v3326 = vshll.u32 920167782, %v3311
        %v3327 = vshrl.u32 1326507024, %v3312
        %v3328 = vor.u32 %v3326, %v3327
        %vm3329 = vcmp.lt.s32.totalorder %v3310, 1
        %vm3330 = vcmp.lt.s32.totalorder %v3310, 2
        %vm3331 = vcmp.lt.s32.totalorder %v3310, 3
        %vm3332 = vcmp.lt.s32.totalorder %v3310, 4
        %v3333 = vsel %vm3329, %v3313, %v3316
        %v3334 = vsel %vm3332, %v3322, 2102212464
        %v3335 = vsel %vm3331, %v3319, %v3334
        %v3336 = vsel %vm3330, %v3333, %v3335
        %v3337 = vsel %vm3329, %v3316, %v3319
        %v3338 = vsel %vm3332, %v3325, 920167782
        %v3339 = vsel %vm3331, %v3322, %v3338
        %v3340 = vsel %vm3330, %v3337, %v3339
        %v3341 = vsel %vm3329, %v3319, %v3322
        %v3342 = vsel %vm3332, %v3328, 1326507024
        %v3343 = vsel %vm3331, %v3325, %v3342
        %v3344 = vsel %vm3330, %v3341, %v3343
        %v3345 = vshll.u32 %v3305, 8
        %v3346 = vand.u32 %v3345, 65535
        %v3347 = vshrl.u32 %v3345, 16
        %v3348 = vand.u32 %v3344, 65535
        %v3349 = vshrl.u32 %v3344, 16
        %v3350 = vmul.u32 %v3346, %v3348
        %v3351 = vmul.u32 %v3346, %v3349
        %v3352 = vmul.u32 %v3347, %v3348
        %v3353 = vmul.u32 %v3347, %v3349
        %v3354 = vshll.u32 %v3351, 16
        %v3355 = vshrl.u32 %v3351, 16
        %v3356 = vshll.u32 %v3352, 16
        %v3357 = vshrl.u32 %v3352, 16
        %vm3358 = vc.u32 %v3350, %v3354
        %v3359 = vsel %vm3358, 1, 0
        %v3360 = vadd.s32 %v3350, %v3354
        %v3361 = vadd.s32 %v3353, %v3359
        %vm3362 = vc.u32 %v3360, %v3356
        %v3363 = vsel %vm3362, 1, 0
        %v3364 = vadd.s32 %v3360, %v3356
        %v3365 = vadd.s32 %v3361, %v3363
        %v3366 = vadd.s32 %v3365, %v3355
        %v3367 = vadd.s32 %v3366, %v3357
        %v3368 = vand.u32 %v3345, 65535
        %v3369 = vshrl.u32 %v3345, 16
        %v3370 = vand.u32 %v3340, 65535
        %v3371 = vshrl.u32 %v3340, 16
        %v3372 = vmul.u32 %v3368, %v3370
        %v3373 = vmul.u32 %v3368, %v3371
        %v3374 = vmul.u32 %v3369, %v3370
        %v3375 = vmul.u32 %v3369, %v3371
        %v3376 = vshll.u32 %v3373, 16
        %v3377 = vshrl.u32 %v3373, 16
        %v3378 = vshll.u32 %v3374, 16
        %v3379 = vshrl.u32 %v3374, 16
        %vm3380 = vc.u32 %v3372, %v3376
        %v3381 = vsel %vm3380, 1, 0
        %v3382 = vadd.s32 %v3372, %v3376
        %v3383 = vadd.s32 %v3375, %v3381
        %vm3384 = vc.u32 %v3382, %v3378
        %v3385 = vsel %vm3384, 1, 0
        %v3386 = vadd.s32 %v3382, %v3378
        %v3387 = vadd.s32 %v3383, %v3385
        %v3388 = vadd.s32 %v3387, %v3377
        %v3389 = vadd.s32 %v3388, %v3379
        %v3390 = vmul.u32 %v3345, %v3336
        %v3391 = vadd.s32 %v3367, %v3386
        %vm3392 = vc.u32 %v3367, %v3386
        %v3393 = vadd.s32 %v3389, 1
        %v3394 = vsel %vm3392, %v3393, %v3389
        %v3395 = vadd.s32 %v3390, %v3394
        %v3396 = vadd.s32 %v3395, 536870912
        %v3397 = vshrl.u32 %v3396, 30
        %v3398 = vshll.u32 %v3397, 30
        %v3399 = vsub.s32 %v3395, %v3398
        %vm3400 = vcmp.lt.s32.totalorder %v3399, 0
        %v3401 = vsub.s32 0, %v3399
        %v3402 = vsel %vm3400, %v3401, %v3399
        %v3403 = vclz %v3402
        %v3404 = vsub.s32 %v3403, 2
        %vm3405 = vcmp.gt.s32.totalorder 0, %v3404
        %v3406 = vsel %vm3405, 0, %v3404
        %v3407 = vsub.s32 32, %v3406
        %v3408 = vshll.u32 %v3399, %v3406
        %v3409 = vshrl.u32 %v3391, %v3407
        %v3410 = vor.u32 %v3408, %v3409
        %v3411 = vsub.s32 4294967266, %v3406
        %v3412 = vadd.s32 %v3411, 127
        %v3413 = vshll.u32 %v3412, 23
        %v3414 = vor.u32 4788187, %v3413
        %v3415 = vand.u32 2147483647, %v3414
        %v3417 = vcvt.s32.f32 %v3410
        %v3418 = vmul.f32 %v3417, %v3415
        %v3419 = vxor.u32 %v3418, 2147483648
        %v3420 = vsel %vm3299, %v3419, %v3418
        %v3421 = vsub.s32 4, %v3397
        %v3422 = vsel %vm3299, %v3421, %v3397
        %v3423 = vsel %vm3298, %v2673, %v3420
        %v3424 = vsel %vm3298, 0, %v3422
        %v3425 = vmul.f32 %v3423, %v3423
        %v3426 = vmul.f32 %v3425, -0.001358992
        %v3427 = vadd.f32 %v3426, 0.041655596
        %v3428 = vmul.f32 %v3425, %v3427
        %v3429 = vadd.f32 %v3428, -0.4999988
        %v3430 = vmul.f32 %v3425, %v3429
        %v3431 = vadd.f32 1.0, %v3430
        %v3432 = vmul.f32 %v3423, %v3423
        %v3433 = vmul.f32 %v3432, -0.00019511016
        %v3434 = vadd.f32 %v3433, 0.008332121
        %v3435 = vmul.f32 %v3432, %v3434
        %v3436 = vadd.f32 %v3435, -0.16666654
        %v3437 = vmul.f32 %v3432, %v3436
        %v3438 = vadd.f32 %v3437, 1.0
        %v3439 = vmul.f32 %v3438, %v3423
        %vm3440 = vweird.f32 %v2673
        %v3441 = vadd.s32 %v3424, 3
        %v3442 = vand.u32 %v3441, 3
        %vm3443 = vcmp.lt.s32.totalorder %v3442, 2
        %vm3444 = vcmp.eq.s32.totalorder %v3442, 0
        %v3445 = vxor.u32 %v3439, 2147483648
        %v3446 = vsel %vm3444, %v3431, %v3445
        %vm3447 = vcmp.eq.s32.totalorder %v3442, 2
        %v3448 = vxor.u32 %v3431, 2147483648
        %v3449 = vsel %vm3447, %v3448, %v3439
        %v3450 = vsel %vm3443, %v3446, %v3449
        %v3451 = vsel %vm3440, nan, %v3450
        %v3452 = vand.u32 2147483647, %v2674
        %vm3453 = vcmp.le.f32.partialorder %v3452, 0.7853982
        %vm3454 = vcmp.lt.s32.totalorder %v2674, 0
        %v3455 = vand.u32 %v2674, 2139095040
        %v3456 = vshrl.u32 %v3455, 23
        %v3457 = vsub.s32 %v3456, 127
        %v3458 = vand.u32 2147483647, %v2674
        %v3459 = vand.u32 %v3458, 8388607
        %v3460 = vor.u32 %v3459, 8388608
        %v3461 = vsub.s32 0, %v3460
        %v3462 = vadd.s32 %v3457, 1
        %vm3463 = vcmp.gt.s32.totalorder %v3462, 0
        %v3464 = vsel %vm3463, %v3462, 0
        %v3465 = vshrl.u32 %v3464, 5
        %v3466 = vand.u32 %v3464, 31
        %v3467 = vsub.s32 32, %v3466
        %v3468 = vshrl.u32 683565275, %v3467
        %v3469 = vshll.u32 683565275, %v3466
        %v3470 = vshrl.u32 2475754826, %v3467
        %v3471 = vor.u32 %v3469, %v3470
        %v3472 = vshll.u32 2475754826, %v3466
        %v3473 = vshrl.u32 2131351028, %v3467
        %v3474 = vor.u32 %v3472, %v3473
        %v3475 = vshll.u32 2131351028, %v3466
        %v3476 = vshrl.u32 2102212464, %v3467
        %v3477 = vor.u32 %v3475, %v3476
        %v3478 = vshll.u32 2102212464, %v3466
        %v3479 = vshrl.u32 920167782, %v3467
        %v3480 = vor.u32 %v3478, %v3479
        %v3481 = vshll.u32 920167782, %v3466
        %v3482 = vshrl.u32 1326507024, %v3467
        %v3483 = vor.u32 %v3481, %v3482
        %vm3484 = vcmp.lt.s32.totalorder %v3465, 1
        %vm3485 = vcmp.lt.s32.totalorder %v3465, 2
        %vm3486 = vcmp.lt.s32.totalorder %v3465, 3
        %vm3487 = vcmp.lt.s32.totalorder %v3465, 4
        %v3488 = vsel %vm3484, %v3468, %v3471
        %v3489 = vsel %vm3487, %v3477, 2102212464
        %v3490 = vsel %vm3486, %v3474, %v3489
        %v3491 = vsel %vm3485, %v3488, %v3490
        %v3492 = vsel %vm3484, %v3471, %v3474
        %v3493 = vsel %vm3487, %v3480, 920167782
        %v3494 = vsel %vm3486, %v3477, %v3493
        %v3495 = vsel %vm3485, %v3492, %v3494
        %v3496 = vsel %vm3484, %v3474, %v3477
        %v3497 = vsel %vm3487, %v3483, 1326507024
        %v3498 = vsel %vm3486, %v3480, %v3497
        %v3499 = vsel %vm3485, %v3496, %v3498
        %v3500 = vshll.u32 %v3460, 8
        %v3501 = vand.u32 %v3500, 65535
        %v3502 = vshrl.u32 %v3500, 16
        %v3503 = vand.u32 %v3499, 65535
        %v3504 = vshrl.u32 %v3499, 16
        %v3505 = vmul.u32 %v3501, %v3503
        %v3506 = vmul.u32 %v3501, %v3504
        %v3507 = vmul.u32 %v3502, %v3503
        %v3508 = vmul.u32 %v3502, %v3504
        %v3509 = vshll.u32 %v3506, 16
        %v3510 = vshrl.u32 %v3506, 16
        %v3511 = vshll.u32 %v3507, 16
        %v3512 = vshrl.u32 %v3507, 16
        %vm3513 = vc.u32 %v3505, %v3509
        %v3514 = vsel %vm3513, 1, 0
        %v3515 = vadd.s32 %v3505, %v3509
        %v3516 = vadd.s32 %v3508, %v3514
        %vm3517 = vc.u32 %v3515, %v3511
        %v3518 = vsel %vm3517, 1, 0
        %v3519 = vadd.s32 %v3515, %v3511
        %v3520 = vadd.s32 %v3516, %v3518
        %v3521 = vadd.s32 %v3520, %v3510
        %v3522 = vadd.s32 %v3521, %v3512
        %v3523 = vand.u32 %v3500, 65535
        %v3524 = vshrl.u32 %v3500, 16
        %v3525 = vand.u32 %v3495, 65535
        %v3526 = vshrl.u32 %v3495, 16
        %v3527 = vmul.u32 %v3523, %v3525
        %v3528 = vmul.u32 %v3523, %v3526
        %v3529 = vmul.u32 %v3524, %v3525
        %v3530 = vmul.u32 %v3524, %v3526
        %v3531 = vshll.u32 %v3528, 16
        %v3532 = vshrl.u32 %v3528, 16
        %v3533 = vshll.u32 %v3529, 16
        %v3534 = vshrl.u32 %v3529, 16
        %vm3535 = vc.u32 %v3527, %v3531
        %v3536 = vsel %vm3535, 1, 0
        %v3537 = vadd.s32 %v3527, %v3531
        %v3538 = vadd.s32 %v3530, %v3536
        %vm3539 = vc.u32 %v3537, %v3533
        %v3540 = vsel %vm3539, 1, 0
        %v3541 = vadd.s32 %v3537, %v3533
        %v3542 = vadd.s32 %v3538, %v3540
        %v3543 = vadd.s32 %v3542, %v3532
        %v3544 = vadd.s32 %v3543, %v3534
        %v3545 = vmul.u32 %v3500, %v3491
        %v3546 = vadd.s32 %v3522, %v3541
        %vm3547 = vc.u32 %v3522, %v3541
        %v3548 = vadd.s32 %v3544, 1
        %v3549 = vsel %vm3547, %v3548, %v3544
        %v3550 = vadd.s32 %v3545, %v3549
        %v3551 = vadd.s32 %v3550, 536870912
        %v3552 = vshrl.u32 %v3551, 30
        %v3553 = vshll.u32 %v3552, 30
        %v3554 = vsub.s32 %v3550, %v3553
        %vm3555 = vcmp.lt.s32.totalorder %v3554, 0
        %v3556 = vsub.s32 0, %v3554
        %v3557 = vsel %vm3555, %v3556, %v3554
        %v3558 = vclz %v3557
        %v3559 = vsub.s32 %v3558, 2
        %vm3560 = vcmp.gt.s32.totalorder 0, %v3559
        %v3561 = vsel %vm3560, 0, %v3559
        %v3562 = vsub.s32 32, %v3561
        %v3563 = vshll.u32 %v3554, %v3561
        %v3564 = vshrl.u32 %v3546, %v3562
        %v3565 = vor.u32 %v3563, %v3564
        %v3566 = vsub.s32 4294967266, %v3561
        %v3567 = vadd.s32 %v3566, 127
        %v3568 = vshll.u32 %v3567, 23
        %v3569 = vor.u32 4788187, %v3568
        %v3570 = vand.u32 2147483647, %v3569
        %v3572 = vcvt.s32.f32 %v3565
        %v3573 = vmul.f32 %v3572, %v3570
        %v3574 = vxor.u32 %v3573, 2147483648
        %v3575 = vsel %vm3454, %v3574, %v3573
        %v3576 = vsub.s32 4, %v3552
        %v3577 = vsel %vm3454, %v3576, %v3552
        %v3578 = vsel %vm3453, %v2674, %v3575
        %v3579 = vsel %vm3453, 0, %v3577
        %v3580 = vmul.f32 %v3578, %v3578
        %v3581 = vmul.f32 %v3580, -0.001358992
        %v3582 = vadd.f32 %v3581, 0.041655596
        %v3583 = vmul.f32 %v3580, %v3582
        %v3584 = vadd.f32 %v3583, -0.4999988
        %v3585 = vmul.f32 %v3580, %v3584
        %v3586 = vadd.f32 1.0, %v3585
        %v3587 = vmul.f32 %v3578, %v3578
        %v3588 = vmul.f32 %v3587, -0.00019511016
        %v3589 = vadd.f32 %v3588, 0.008332121
        %v3590 = vmul.f32 %v3587, %v3589
        %v3591 = vadd.f32 %v3590, -0.16666654
        %v3592 = vmul.f32 %v3587, %v3591
        %v3593 = vadd.f32 %v3592, 1.0
        %v3594 = vmul.f32 %v3593, %v3578
        %vm3595 = vweird.f32 %v2674
        %v3596 = vadd.s32 %v3579, 3
        %v3597 = vand.u32 %v3596, 3
        %vm3598 = vcmp.lt.s32.totalorder %v3597, 2
        %vm3599 = vcmp.eq.s32.totalorder %v3597, 0
        %v3600 = vxor.u32 %v3594, 2147483648
        %v3601 = vsel %vm3599, %v3586, %v3600
        %vm3602 = vcmp.eq.s32.totalorder %v3597, 2
        %v3603 = vxor.u32 %v3586, 2147483648
        %v3604 = vsel %vm3602, %v3603, %v3594
        %v3605 = vsel %vm3598, %v3601, %v3604
        %v3606 = vsel %vm3595, nan, %v3605
        %v3607 = vand.u32 2147483647, %v2675
        %vm3608 = vcmp.le.f32.partialorder %v3607, 0.7853982
        %vm3609 = vcmp.lt.s32.totalorder %v2675, 0
        %v3610 = vand.u32 %v2675, 2139095040
        %v3611 = vshrl.u32 %v3610, 23
        %v3612 = vsub.s32 %v3611, 127
        %v3613 = vand.u32 2147483647, %v2675
        %v3614 = vand.u32 %v3613, 8388607
        %v3615 = vor.u32 %v3614, 8388608
        %v3616 = vsub.s32 0, %v3615
        %v3617 = vadd.s32 %v3612, 1
        %vm3618 = vcmp.gt.s32.totalorder %v3617, 0
        %v3619 = vsel %vm3618, %v3617, 0
        %v3620 = vshrl.u32 %v3619, 5
        %v3621 = vand.u32 %v3619, 31
        %v3622 = vsub.s32 32, %v3621
        %v3623 = vshrl.u32 683565275, %v3622
        %v3624 = vshll.u32 683565275, %v3621
        %v3625 = vshrl.u32 2475754826, %v3622
        %v3626 = vor.u32 %v3624, %v3625
        %v3627 = vshll.u32 2475754826, %v3621
        %v3628 = vshrl.u32 2131351028, %v3622
        %v3629 = vor.u32 %v3627, %v3628
        %v3630 = vshll.u32 2131351028, %v3621
        %v3631 = vshrl.u32 2102212464, %v3622
        %v3632 = vor.u32 %v3630, %v3631
        %v3633 = vshll.u32 2102212464, %v3621
        %v3634 = vshrl.u32 920167782, %v3622
        %v3635 = vor.u32 %v3633, %v3634
        %v3636 = vshll.u32 920167782, %v3621
        %v3637 = vshrl.u32 1326507024, %v3622
        %v3638 = vor.u32 %v3636, %v3637
        %vm3639 = vcmp.lt.s32.totalorder %v3620, 1
        %vm3640 = vcmp.lt.s32.totalorder %v3620, 2
        %vm3641 = vcmp.lt.s32.totalorder %v3620, 3
        %vm3642 = vcmp.lt.s32.totalorder %v3620, 4
        %v3643 = vsel %vm3639, %v3623, %v3626
        %v3644 = vsel %vm3642, %v3632, 2102212464
        %v3645 = vsel %vm3641, %v3629, %v3644
        %v3646 = vsel %vm3640, %v3643, %v3645
        %v3647 = vsel %vm3639, %v3626, %v3629
        %v3648 = vsel %vm3642, %v3635, 920167782
        %v3649 = vsel %vm3641, %v3632, %v3648
        %v3650 = vsel %vm3640, %v3647, %v3649
        %v3651 = vsel %vm3639, %v3629, %v3632
        %v3652 = vsel %vm3642, %v3638, 1326507024
        %v3653 = vsel %vm3641, %v3635, %v3652
        %v3654 = vsel %vm3640, %v3651, %v3653
        %v3655 = vshll.u32 %v3615, 8
        %v3656 = vand.u32 %v3655, 65535
        %v3657 = vshrl.u32 %v3655, 16
        %v3658 = vand.u32 %v3654, 65535
        %v3659 = vshrl.u32 %v3654, 16
        %v3660 = vmul.u32 %v3656, %v3658
        %v3661 = vmul.u32 %v3656, %v3659
        %v3662 = vmul.u32 %v3657, %v3658
        %v3663 = vmul.u32 %v3657, %v3659
        %v3664 = vshll.u32 %v3661, 16
        %v3665 = vshrl.u32 %v3661, 16
        %v3666 = vshll.u32 %v3662, 16
        %v3667 = vshrl.u32 %v3662, 16
        %vm3668 = vc.u32 %v3660, %v3664
        %v3669 = vsel %vm3668, 1, 0
        %v3670 = vadd.s32 %v3660, %v3664
        %v3671 = vadd.s32 %v3663, %v3669
        %vm3672 = vc.u32 %v3670, %v3666
        %v3673 = vsel %vm3672, 1, 0
        %v3674 = vadd.s32 %v3670, %v3666
        %v3675 = vadd.s32 %v3671, %v3673
        %v3676 = vadd.s32 %v3675, %v3665
        %v3677 = vadd.s32 %v3676, %v3667
        %v3678 = vand.u32 %v3655, 65535
        %v3679 = vshrl.u32 %v3655, 16
        %v3680 = vand.u32 %v3650, 65535
        %v3681 = vshrl.u32 %v3650, 16
        %v3682 = vmul.u32 %v3678, %v3680
        %v3683 = vmul.u32 %v3678, %v3681
        %v3684 = vmul.u32 %v3679, %v3680
        %v3685 = vmul.u32 %v3679, %v3681
        %v3686 = vshll.u32 %v3683, 16
        %v3687 = vshrl.u32 %v3683, 16
        %v3688 = vshll.u32 %v3684, 16
        %v3689 = vshrl.u32 %v3684, 16
        %vm3690 = vc.u32 %v3682, %v3686
        %v3691 = vsel %vm3690, 1, 0
        %v3692 = vadd.s32 %v3682, %v3686
        %v3693 = vadd.s32 %v3685, %v3691
        %vm3694 = vc.u32 %v3692, %v3688
        %v3695 = vsel %vm3694, 1, 0
        %v3696 = vadd.s32 %v3692, %v3688
        %v3697 = vadd.s32 %v3693, %v3695
        %v3698 = vadd.s32 %v3697, %v3687
        %v3699 = vadd.s32 %v3698, %v3689
        %v3700 = vmul.u32 %v3655, %v3646
        %v3701 = vadd.s32 %v3677, %v3696
        %vm3702 = vc.u32 %v3677, %v3696
        %v3703 = vadd.s32 %v3699, 1
        %v3704 = vsel %vm3702, %v3703, %v3699
        %v3705 = vadd.s32 %v3700, %v3704
        %v3706 = vadd.s32 %v3705, 536870912
        %v3707 = vshrl.u32 %v3706, 30
        %v3708 = vshll.u32 %v3707, 30
        %v3709 = vsub.s32 %v3705, %v3708
        %vm3710 = vcmp.lt.s32.totalorder %v3709, 0
        %v3711 = vsub.s32 0, %v3709
        %v3712 = vsel %vm3710, %v3711, %v3709
        %v3713 = vclz %v3712
        %v3714 = vsub.s32 %v3713, 2
        %vm3715 = vcmp.gt.s32.totalorder 0, %v3714
        %v3716 = vsel %vm3715, 0, %v3714
        %v3717 = vsub.s32 32, %v3716
        %v3718 = vshll.u32 %v3709, %v3716
        %v3719 = vshrl.u32 %v3701, %v3717
        %v3720 = vor.u32 %v3718, %v3719
        %v3721 = vsub.s32 4294967266, %v3716
        %v3722 = vadd.s32 %v3721, 127
        %v3723 = vshll.u32 %v3722, 23
        %v3724 = vor.u32 4788187, %v3723
        %v3725 = vand.u32 2147483647, %v3724
        %v3727 = vcvt.s32.f32 %v3720
        %v3728 = vmul.f32 %v3727, %v3725
        %v3729 = vxor.u32 %v3728, 2147483648
        %v3730 = vsel %vm3609, %v3729, %v3728
        %v3731 = vsub.s32 4, %v3707
        %v3732 = vsel %vm3609, %v3731, %v3707
        %v3733 = vsel %vm3608, %v2675, %v3730
        %v3734 = vsel %vm3608, 0, %v3732
        %v3735 = vmul.f32 %v3733, %v3733
        %v3736 = vmul.f32 %v3735, -0.001358992
        %v3737 = vadd.f32 %v3736, 0.041655596
        %v3738 = vmul.f32 %v3735, %v3737
        %v3739 = vadd.f32 %v3738, -0.4999988
        %v3740 = vmul.f32 %v3735, %v3739
        %v3741 = vadd.f32 1.0, %v3740
        %v3742 = vmul.f32 %v3733, %v3733
        %v3743 = vmul.f32 %v3742, -0.00019511016
        %v3744 = vadd.f32 %v3743, 0.008332121
        %v3745 = vmul.f32 %v3742, %v3744
        %v3746 = vadd.f32 %v3745, -0.16666654
        %v3747 = vmul.f32 %v3742, %v3746
        %v3748 = vadd.f32 %v3747, 1.0
        %v3749 = vmul.f32 %v3748, %v3733
        %vm3750 = vweird.f32 %v2675
        %v3751 = vadd.s32 %v3734, 3
        %v3752 = vand.u32 %v3751, 3
        %vm3753 = vcmp.lt.s32.totalorder %v3752, 2
        %vm3754 = vcmp.eq.s32.totalorder %v3752, 0
        %v3755 = vxor.u32 %v3749, 2147483648
        %v3756 = vsel %vm3754, %v3741, %v3755
        %vm3757 = vcmp.eq.s32.totalorder %v3752, 2
        %v3758 = vxor.u32 %v3741, 2147483648
        %v3759 = vsel %vm3757, %v3758, %v3749
        %v3760 = vsel %vm3753, %v3756, %v3759
        %v3761 = vsel %vm3750, nan, %v3760
        %v3762 = vand.u32 2147483647, %v2676
        %vm3763 = vcmp.le.f32.partialorder %v3762, 0.7853982
        %vm3764 = vcmp.lt.s32.totalorder %v2676, 0
        %v3765 = vand.u32 %v2676, 2139095040
        %v3766 = vshrl.u32 %v3765, 23
        %v3767 = vsub.s32 %v3766, 127
        %v3768 = vand.u32 2147483647, %v2676
        %v3769 = vand.u32 %v3768, 8388607
        %v3770 = vor.u32 %v3769, 8388608
        %v3771 = vsub.s32 0, %v3770
        %v3772 = vadd.s32 %v3767, 1
        %vm3773 = vcmp.gt.s32.totalorder %v3772, 0
        %v3774 = vsel %vm3773, %v3772, 0
        %v3775 = vshrl.u32 %v3774, 5
        %v3776 = vand.u32 %v3774, 31
        %v3777 = vsub.s32 32, %v3776
        %v3778 = vshrl.u32 683565275, %v3777
        %v3779 = vshll.u32 683565275, %v3776
        %v3780 = vshrl.u32 2475754826, %v3777
        %v3781 = vor.u32 %v3779, %v3780
        %v3782 = vshll.u32 2475754826, %v3776
        %v3783 = vshrl.u32 2131351028, %v3777
        %v3784 = vor.u32 %v3782, %v3783
        %v3785 = vshll.u32 2131351028, %v3776
        %v3786 = vshrl.u32 2102212464, %v3777
        %v3787 = vor.u32 %v3785, %v3786
        %v3788 = vshll.u32 2102212464, %v3776
        %v3789 = vshrl.u32 920167782, %v3777
        %v3790 = vor.u32 %v3788, %v3789
        %v3791 = vshll.u32 920167782, %v3776
        %v3792 = vshrl.u32 1326507024, %v3777
        %v3793 = vor.u32 %v3791, %v3792
        %vm3794 = vcmp.lt.s32.totalorder %v3775, 1
        %vm3795 = vcmp.lt.s32.totalorder %v3775, 2
        %vm3796 = vcmp.lt.s32.totalorder %v3775, 3
        %vm3797 = vcmp.lt.s32.totalorder %v3775, 4
        %v3798 = vsel %vm3794, %v3778, %v3781
        %v3799 = vsel %vm3797, %v3787, 2102212464
        %v3800 = vsel %vm3796, %v3784, %v3799
        %v3801 = vsel %vm3795, %v3798, %v3800
        %v3802 = vsel %vm3794, %v3781, %v3784
        %v3803 = vsel %vm3797, %v3790, 920167782
        %v3804 = vsel %vm3796, %v3787, %v3803
        %v3805 = vsel %vm3795, %v3802, %v3804
        %v3806 = vsel %vm3794, %v3784, %v3787
        %v3807 = vsel %vm3797, %v3793, 1326507024
        %v3808 = vsel %vm3796, %v3790, %v3807
        %v3809 = vsel %vm3795, %v3806, %v3808
        %v3810 = vshll.u32 %v3770, 8
        %v3811 = vand.u32 %v3810, 65535
        %v3812 = vshrl.u32 %v3810, 16
        %v3813 = vand.u32 %v3809, 65535
        %v3814 = vshrl.u32 %v3809, 16
        %v3815 = vmul.u32 %v3811, %v3813
        %v3816 = vmul.u32 %v3811, %v3814
        %v3817 = vmul.u32 %v3812, %v3813
        %v3818 = vmul.u32 %v3812, %v3814
        %v3819 = vshll.u32 %v3816, 16
        %v3820 = vshrl.u32 %v3816, 16
        %v3821 = vshll.u32 %v3817, 16
        %v3822 = vshrl.u32 %v3817, 16
        %vm3823 = vc.u32 %v3815, %v3819
        %v3824 = vsel %vm3823, 1, 0
        %v3825 = vadd.s32 %v3815, %v3819
        %v3826 = vadd.s32 %v3818, %v3824
        %vm3827 = vc.u32 %v3825, %v3821
        %v3828 = vsel %vm3827, 1, 0
        %v3829 = vadd.s32 %v3825, %v3821
        %v3830 = vadd.s32 %v3826, %v3828
        %v3831 = vadd.s32 %v3830, %v3820
        %v3832 = vadd.s32 %v3831, %v3822
        %v3833 = vand.u32 %v3810, 65535
        %v3834 = vshrl.u32 %v3810, 16
        %v3835 = vand.u32 %v3805, 65535
        %v3836 = vshrl.u32 %v3805, 16
        %v3837 = vmul.u32 %v3833, %v3835
        %v3838 = vmul.u32 %v3833, %v3836
        %v3839 = vmul.u32 %v3834, %v3835
        %v3840 = vmul.u32 %v3834, %v3836
        %v3841 = vshll.u32 %v3838, 16
        %v3842 = vshrl.u32 %v3838, 16
        %v3843 = vshll.u32 %v3839, 16
        %v3844 = vshrl.u32 %v3839, 16
        %vm3845 = vc.u32 %v3837, %v3841
        %v3846 = vsel %vm3845, 1, 0
        %v3847 = vadd.s32 %v3837, %v3841
        %v3848 = vadd.s32 %v3840, %v3846
        %vm3849 = vc.u32 %v3847, %v3843
        %v3850 = vsel %vm3849, 1, 0
        %v3851 = vadd.s32 %v3847, %v3843
        %v3852 = vadd.s32 %v3848, %v3850
        %v3853 = vadd.s32 %v3852, %v3842
        %v3854 = vadd.s32 %v3853, %v3844
        %v3855 = vmul.u32 %v3810, %v3801
        %v3856 = vadd.s32 %v3832, %v3851
        %vm3857 = vc.u32 %v3832, %v3851
        %v3858 = vadd.s32 %v3854, 1
        %v3859 = vsel %vm3857, %v3858, %v3854
        %v3860 = vadd.s32 %v3855, %v3859
        %v3861 = vadd.s32 %v3860, 536870912
        %v3862 = vshrl.u32 %v3861, 30
        %v3863 = vshll.u32 %v3862, 30
        %v3864 = vsub.s32 %v3860, %v3863
        %vm3865 = vcmp.lt.s32.totalorder %v3864, 0
        %v3866 = vsub.s32 0, %v3864
        %v3867 = vsel %vm3865, %v3866, %v3864
        %v3868 = vclz %v3867
        %v3869 = vsub.s32 %v3868, 2
        %vm3870 = vcmp.gt.s32.totalorder 0, %v3869
        %v3871 = vsel %vm3870, 0, %v3869
        %v3872 = vsub.s32 32, %v3871
        %v3873 = vshll.u32 %v3864, %v3871
        %v3874 = vshrl.u32 %v3856, %v3872
        %v3875 = vor.u32 %v3873, %v3874
        %v3876 = vsub.s32 4294967266, %v3871
        %v3877 = vadd.s32 %v3876, 127
        %v3878 = vshll.u32 %v3877, 23
        %v3879 = vor.u32 4788187, %v3878
        %v3880 = vand.u32 2147483647, %v3879
        %v3882 = vcvt.s32.f32 %v3875
        %v3883 = vmul.f32 %v3882, %v3880
        %v3884 = vxor.u32 %v3883, 2147483648
        %v3885 = vsel %vm3764, %v3884, %v3883
        %v3886 = vsub.s32 4, %v3862
        %v3887 = vsel %vm3764, %v3886, %v3862
        %v3888 = vsel %vm3763, %v2676, %v3885
        %v3889 = vsel %vm3763, 0, %v3887
        %v3890 = vmul.f32 %v3888, %v3888
        %v3891 = vmul.f32 %v3890, -0.001358992
        %v3892 = vadd.f32 %v3891, 0.041655596
        %v3893 = vmul.f32 %v3890, %v3892
        %v3894 = vadd.f32 %v3893, -0.4999988
        %v3895 = vmul.f32 %v3890, %v3894
        %v3896 = vadd.f32 1.0, %v3895
        %v3897 = vmul.f32 %v3888, %v3888
        %v3898 = vmul.f32 %v3897, -0.00019511016
        %v3899 = vadd.f32 %v3898, 0.008332121
        %v3900 = vmul.f32 %v3897, %v3899
        %v3901 = vadd.f32 %v3900, -0.16666654
        %v3902 = vmul.f32 %v3897, %v3901
        %v3903 = vadd.f32 %v3902, 1.0
        %v3904 = vmul.f32 %v3903, %v3888
        %vm3905 = vweird.f32 %v2676
        %v3906 = vadd.s32 %v3889, 3
        %v3907 = vand.u32 %v3906, 3
        %vm3908 = vcmp.lt.s32.totalorder %v3907, 2
        %vm3909 = vcmp.eq.s32.totalorder %v3907, 0
        %v3910 = vxor.u32 %v3904, 2147483648
        %v3911 = vsel %vm3909, %v3896, %v3910
        %vm3912 = vcmp.eq.s32.totalorder %v3907, 2
        %v3913 = vxor.u32 %v3896, 2147483648
        %v3914 = vsel %vm3912, %v3913, %v3904
        %v3915 = vsel %vm3908, %v3911, %v3914
        %v3916 = vsel %vm3905, nan, %v3915
        %v3917 = vand.u32 2147483647, %v2669
        %vm3918 = vcmp.le.f32.partialorder %v3917, 0.7853982
        %vm3919 = vcmp.lt.s32.totalorder %v2669, 0
        %v3920 = vand.u32 %v2669, 2139095040
        %v3921 = vshrl.u32 %v3920, 23
        %v3922 = vsub.s32 %v3921, 127
        %v3923 = vand.u32 2147483647, %v2669
        %v3924 = vand.u32 %v3923, 8388607
        %v3925 = vor.u32 %v3924, 8388608
        %v3926 = vsub.s32 0, %v3925
        %v3927 = vadd.s32 %v3922, 1
        %vm3928 = vcmp.gt.s32.totalorder %v3927, 0
        %v3929 = vsel %vm3928, %v3927, 0
        %v3930 = vshrl.u32 %v3929, 5
        %v3931 = vand.u32 %v3929, 31
        %v3932 = vsub.s32 32, %v3931
        %v3933 = vshrl.u32 683565275, %v3932
        %v3934 = vshll.u32 683565275, %v3931
        %v3935 = vshrl.u32 2475754826, %v3932
        %v3936 = vor.u32 %v3934, %v3935
        %v3937 = vshll.u32 2475754826, %v3931
        %v3938 = vshrl.u32 2131351028, %v3932
        %v3939 = vor.u32 %v3937, %v3938
        %v3940 = vshll.u32 2131351028, %v3931
        %v3941 = vshrl.u32 2102212464, %v3932
        %v3942 = vor.u32 %v3940, %v3941
        %v3943 = vshll.u32 2102212464, %v3931
        %v3944 = vshrl.u32 920167782, %v3932
        %v3945 = vor.u32 %v3943, %v3944
        %v3946 = vshll.u32 920167782, %v3931
        %v3947 = vshrl.u32 1326507024, %v3932
        %v3948 = vor.u32 %v3946, %v3947
        %vm3949 = vcmp.lt.s32.totalorder %v3930, 1
        %vm3950 = vcmp.lt.s32.totalorder %v3930, 2
        %vm3951 = vcmp.lt.s32.totalorder %v3930, 3
        %vm3952 = vcmp.lt.s32.totalorder %v3930, 4
        %v3953 = vsel %vm3949, %v3933, %v3936
        %v3954 = vsel %vm3952, %v3942, 2102212464
        %v3955 = vsel %vm3951, %v3939, %v3954
        %v3956 = vsel %vm3950, %v3953, %v3955
        %v3957 = vsel %vm3949, %v3936, %v3939
        %v3958 = vsel %vm3952, %v3945, 920167782
        %v3959 = vsel %vm3951, %v3942, %v3958
        %v3960 = vsel %vm3950, %v3957, %v3959
        %v3961 = vsel %vm3949, %v3939, %v3942
        %v3962 = vsel %vm3952, %v3948, 1326507024
        %v3963 = vsel %vm3951, %v3945, %v3962
        %v3964 = vsel %vm3950, %v3961, %v3963
        %v3965 = vshll.u32 %v3925, 8
        %v3966 = vand.u32 %v3965, 65535
        %v3967 = vshrl.u32 %v3965, 16
        %v3968 = vand.u32 %v3964, 65535
        %v3969 = vshrl.u32 %v3964, 16
        %v3970 = vmul.u32 %v3966, %v3968
        %v3971 = vmul.u32 %v3966, %v3969
        %v3972 = vmul.u32 %v3967, %v3968
        %v3973 = vmul.u32 %v3967, %v3969
        %v3974 = vshll.u32 %v3971, 16
        %v3975 = vshrl.u32 %v3971, 16
        %v3976 = vshll.u32 %v3972, 16
        %v3977 = vshrl.u32 %v3972, 16
        %vm3978 = vc.u32 %v3970, %v3974
        %v3979 = vsel %vm3978, 1, 0
        %v3980 = vadd.s32 %v3970, %v3974
        %v3981 = vadd.s32 %v3973, %v3979
        %vm3982 = vc.u32 %v3980, %v3976
        %v3983 = vsel %vm3982, 1, 0
        %v3984 = vadd.s32 %v3980, %v3976
        %v3985 = vadd.s32 %v3981, %v3983
        %v3986 = vadd.s32 %v3985, %v3975
        %v3987 = vadd.s32 %v3986, %v3977
        %v3988 = vand.u32 %v3965, 65535
        %v3989 = vshrl.u32 %v3965, 16
        %v3990 = vand.u32 %v3960, 65535
        %v3991 = vshrl.u32 %v3960, 16
        %v3992 = vmul.u32 %v3988, %v3990
        %v3993 = vmul.u32 %v3988, %v3991
        %v3994 = vmul.u32 %v3989, %v3990
        %v3995 = vmul.u32 %v3989, %v3991
        %v3996 = vshll.u32 %v3993, 16
        %v3997 = vshrl.u32 %v3993, 16
        %v3998 = vshll.u32 %v3994, 16
        %v3999 = vshrl.u32 %v3994, 16
        %vm4000 = vc.u32 %v3992, %v3996
        %v4001 = vsel %vm4000, 1, 0
        %v4002 = vadd.s32 %v3992, %v3996
        %v4003 = vadd.s32 %v3995, %v4001
        %vm4004 = vc.u32 %v4002, %v3998
        %v4005 = vsel %vm4004, 1, 0
        %v4006 = vadd.s32 %v4002, %v3998
        %v4007 = vadd.s32 %v4003, %v4005
        %v4008 = vadd.s32 %v4007, %v3997
        %v4009 = vadd.s32 %v4008, %v3999
        %v4010 = vmul.u32 %v3965, %v3956
        %v4011 = vadd.s32 %v3987, %v4006
        %vm4012 = vc.u32 %v3987, %v4006
        %v4013 = vadd.s32 %v4009, 1
        %v4014 = vsel %vm4012, %v4013, %v4009
        %v4015 = vadd.s32 %v4010, %v4014
        %v4016 = vadd.s32 %v4015, 536870912
        %v4017 = vshrl.u32 %v4016, 30
        %v4018 = vshll.u32 %v4017, 30
        %v4019 = vsub.s32 %v4015, %v4018
        %vm4020 = vcmp.lt.s32.totalorder %v4019, 0
        %v4021 = vsub.s32 0, %v4019
        %v4022 = vsel %vm4020, %v4021, %v4019
        %v4023 = vclz %v4022
        %v4024 = vsub.s32 %v4023, 2
        %vm4025 = vcmp.gt.s32.totalorder 0, %v4024
        %v4026 = vsel %vm4025, 0, %v4024
        %v4027 = vsub.s32 32, %v4026
        %v4028 = vshll.u32 %v4019, %v4026
        %v4029 = vshrl.u32 %v4011, %v4027
        %v4030 = vor.u32 %v4028, %v4029
        %v4031 = vsub.s32 4294967266, %v4026
        %v4032 = vadd.s32 %v4031, 127
        %v4033 = vshll.u32 %v4032, 23
        %v4034 = vor.u32 4788187, %v4033
        %v4035 = vand.u32 2147483647, %v4034
        %v4037 = vcvt.s32.f32 %v4030
        %v4038 = vmul.f32 %v4037, %v4035
        %v4039 = vxor.u32 %v4038, 2147483648
        %v4040 = vsel %vm3919, %v4039, %v4038
        %v4041 = vsub.s32 4, %v4017
        %v4042 = vsel %vm3919, %v4041, %v4017
        %v4043 = vsel %vm3918, %v2669, %v4040
        %v4044 = vsel %vm3918, 0, %v4042
        %v4045 = vmul.f32 %v4043, %v4043
        %v4046 = vmul.f32 %v4045, -0.001358992
        %v4047 = vadd.f32 %v4046, 0.041655596
        %v4048 = vmul.f32 %v4045, %v4047
        %v4049 = vadd.f32 %v4048, -0.4999988
        %v4050 = vmul.f32 %v4045, %v4049
        %v4051 = vadd.f32 1.0, %v4050
        %v4052 = vmul.f32 %v4043, %v4043
        %v4053 = vmul.f32 %v4052, -0.00019511016
        %v4054 = vadd.f32 %v4053, 0.008332121
        %v4055 = vmul.f32 %v4052, %v4054
        %v4056 = vadd.f32 %v4055, -0.16666654
        %v4057 = vmul.f32 %v4052, %v4056
        %v4058 = vadd.f32 %v4057, 1.0
        %v4059 = vmul.f32 %v4058, %v4043
        %vm4060 = vweird.f32 %v2669
        %v4061 = vand.u32 %v4044, 3
        %vm4062 = vcmp.lt.s32.totalorder %v4061, 2
        %vm4063 = vcmp.eq.s32.totalorder %v4061, 0
        %v4064 = vxor.u32 %v4059, 2147483648
        %v4065 = vsel %vm4063, %v4051, %v4064
        %vm4066 = vcmp.eq.s32.totalorder %v4061, 2
        %v4067 = vxor.u32 %v4051, 2147483648
        %v4068 = vsel %vm4066, %v4067, %v4059
        %v4069 = vsel %vm4062, %v4065, %v4068
        %v4070 = vsel %vm4060, nan, %v4069
        %v4071 = vand.u32 2147483647, %v2670
        %vm4072 = vcmp.le.f32.partialorder %v4071, 0.7853982
        %vm4073 = vcmp.lt.s32.totalorder %v2670, 0
        %v4074 = vand.u32 %v2670, 2139095040
        %v4075 = vshrl.u32 %v4074, 23
        %v4076 = vsub.s32 %v4075, 127
        %v4077 = vand.u32 2147483647, %v2670
        %v4078 = vand.u32 %v4077, 8388607
        %v4079 = vor.u32 %v4078, 8388608
        %v4080 = vsub.s32 0, %v4079
        %v4081 = vadd.s32 %v4076, 1
        %vm4082 = vcmp.gt.s32.totalorder %v4081, 0
        %v4083 = vsel %vm4082, %v4081, 0
        %v4084 = vshrl.u32 %v4083, 5
        %v4085 = vand.u32 %v4083, 31
        %v4086 = vsub.s32 32, %v4085
        %v4087 = vshrl.u32 683565275, %v4086
        %v4088 = vshll.u32 683565275, %v4085
        %v4089 = vshrl.u32 2475754826, %v4086
        %v4090 = vor.u32 %v4088, %v4089
        %v4091 = vshll.u32 2475754826, %v4085
        %v4092 = vshrl.u32 2131351028, %v4086
        %v4093 = vor.u32 %v4091, %v4092
        %v4094 = vshll.u32 2131351028, %v4085
        %v4095 = vshrl.u32 2102212464, %v4086
        %v4096 = vor.u32 %v4094, %v4095
        %v4097 = vshll.u32 2102212464, %v4085
        %v4098 = vshrl.u32 920167782, %v4086
        %v4099 = vor.u32 %v4097, %v4098
        %v4100 = vshll.u32 920167782, %v4085
        %v4101 = vshrl.u32 1326507024, %v4086
        %v4102 = vor.u32 %v4100, %v4101
        %vm4103 = vcmp.lt.s32.totalorder %v4084, 1
        %vm4104 = vcmp.lt.s32.totalorder %v4084, 2
        %vm4105 = vcmp.lt.s32.totalorder %v4084, 3
        %vm4106 = vcmp.lt.s32.totalorder %v4084, 4
        %v4107 = vsel %vm4103, %v4087, %v4090
        %v4108 = vsel %vm4106, %v4096, 2102212464
        %v4109 = vsel %vm4105, %v4093, %v4108
        %v4110 = vsel %vm4104, %v4107, %v4109
        %v4111 = vsel %vm4103, %v4090, %v4093
        %v4112 = vsel %vm4106, %v4099, 920167782
        %v4113 = vsel %vm4105, %v4096, %v4112
        %v4114 = vsel %vm4104, %v4111, %v4113
        %v4115 = vsel %vm4103, %v4093, %v4096
        %v4116 = vsel %vm4106, %v4102, 1326507024
        %v4117 = vsel %vm4105, %v4099, %v4116
        %v4118 = vsel %vm4104, %v4115, %v4117
        %v4119 = vshll.u32 %v4079, 8
        %v4120 = vand.u32 %v4119, 65535
        %v4121 = vshrl.u32 %v4119, 16
        %v4122 = vand.u32 %v4118, 65535
        %v4123 = vshrl.u32 %v4118, 16
        %v4124 = vmul.u32 %v4120, %v4122
        %v4125 = vmul.u32 %v4120, %v4123
        %v4126 = vmul.u32 %v4121, %v4122
        %v4127 = vmul.u32 %v4121, %v4123
        %v4128 = vshll.u32 %v4125, 16
        %v4129 = vshrl.u32 %v4125, 16
        %v4130 = vshll.u32 %v4126, 16
        %v4131 = vshrl.u32 %v4126, 16
        %vm4132 = vc.u32 %v4124, %v4128
        %v4133 = vsel %vm4132, 1, 0
        %v4134 = vadd.s32 %v4124, %v4128
        %v4135 = vadd.s32 %v4127, %v4133
        %vm4136 = vc.u32 %v4134, %v4130
        %v4137 = vsel %vm4136, 1, 0
        %v4138 = vadd.s32 %v4134, %v4130
        %v4139 = vadd.s32 %v4135, %v4137
        %v4140 = vadd.s32 %v4139, %v4129
        %v4141 = vadd.s32 %v4140, %v4131
        %v4142 = vand.u32 %v4119, 65535
        %v4143 = vshrl.u32 %v4119, 16
        %v4144 = vand.u32 %v4114, 65535
        %v4145 = vshrl.u32 %v4114, 16
        %v4146 = vmul.u32 %v4142, %v4144
        %v4147 = vmul.u32 %v4142, %v4145
        %v4148 = vmul.u32 %v4143, %v4144
        %v4149 = vmul.u32 %v4143, %v4145
        %v4150 = vshll.u32 %v4147, 16
        %v4151 = vshrl.u32 %v4147, 16
        %v4152 = vshll.u32 %v4148, 16
        %v4153 = vshrl.u32 %v4148, 16
        %vm4154 = vc.u32 %v4146, %v4150
        %v4155 = vsel %vm4154, 1, 0
        %v4156 = vadd.s32 %v4146, %v4150
        %v4157 = vadd.s32 %v4149, %v4155
        %vm4158 = vc.u32 %v4156, %v4152
        %v4159 = vsel %vm4158, 1, 0
        %v4160 = vadd.s32 %v4156, %v4152
        %v4161 = vadd.s32 %v4157, %v4159
        %v4162 = vadd.s32 %v4161, %v4151
        %v4163 = vadd.s32 %v4162, %v4153
        %v4164 = vmul.u32 %v4119, %v4110
        %v4165 = vadd.s32 %v4141, %v4160
        %vm4166 = vc.u32 %v4141, %v4160
        %v4167 = vadd.s32 %v4163, 1
        %v4168 = vsel %vm4166, %v4167, %v4163
        %v4169 = vadd.s32 %v4164, %v4168
        %v4170 = vadd.s32 %v4169, 536870912
        %v4171 = vshrl.u32 %v4170, 30
        %v4172 = vshll.u32 %v4171, 30
        %v4173 = vsub.s32 %v4169, %v4172
        %vm4174 = vcmp.lt.s32.totalorder %v4173, 0
        %v4175 = vsub.s32 0, %v4173
        %v4176 = vsel %vm4174, %v4175, %v4173
        %v4177 = vclz %v4176
        %v4178 = vsub.s32 %v4177, 2
        %vm4179 = vcmp.gt.s32.totalorder 0, %v4178
        %v4180 = vsel %vm4179, 0, %v4178
        %v4181 = vsub.s32 32, %v4180
        %v4182 = vshll.u32 %v4173, %v4180
        %v4183 = vshrl.u32 %v4165, %v4181
        %v4184 = vor.u32 %v4182, %v4183
        %v4185 = vsub.s32 4294967266, %v4180
        %v4186 = vadd.s32 %v4185, 127
        %v4187 = vshll.u32 %v4186, 23
        %v4188 = vor.u32 4788187, %v4187
        %v4189 = vand.u32 2147483647, %v4188
        %v4191 = vcvt.s32.f32 %v4184
        %v4192 = vmul.f32 %v4191, %v4189
        %v4193 = vxor.u32 %v4192, 2147483648
        %v4194 = vsel %vm4073, %v4193, %v4192
        %v4195 = vsub.s32 4, %v4171
        %v4196 = vsel %vm4073, %v4195, %v4171
        %v4197 = vsel %vm4072, %v2670, %v4194
        %v4198 = vsel %vm4072, 0, %v4196
        %v4199 = vmul.f32 %v4197, %v4197
        %v4200 = vmul.f32 %v4199, -0.001358992
        %v4201 = vadd.f32 %v4200, 0.041655596
        %v4202 = vmul.f32 %v4199, %v4201
        %v4203 = vadd.f32 %v4202, -0.4999988
        %v4204 = vmul.f32 %v4199, %v4203
        %v4205 = vadd.f32 1.0, %v4204
        %v4206 = vmul.f32 %v4197, %v4197
        %v4207 = vmul.f32 %v4206, -0.00019511016
        %v4208 = vadd.f32 %v4207, 0.008332121
        %v4209 = vmul.f32 %v4206, %v4208
        %v4210 = vadd.f32 %v4209, -0.16666654
        %v4211 = vmul.f32 %v4206, %v4210
        %v4212 = vadd.f32 %v4211, 1.0
        %v4213 = vmul.f32 %v4212, %v4197
        %vm4214 = vweird.f32 %v2670
        %v4215 = vand.u32 %v4198, 3
        %vm4216 = vcmp.lt.s32.totalorder %v4215, 2
        %vm4217 = vcmp.eq.s32.totalorder %v4215, 0
        %v4218 = vxor.u32 %v4213, 2147483648
        %v4219 = vsel %vm4217, %v4205, %v4218
        %vm4220 = vcmp.eq.s32.totalorder %v4215, 2
        %v4221 = vxor.u32 %v4205, 2147483648
        %v4222 = vsel %vm4220, %v4221, %v4213
        %v4223 = vsel %vm4216, %v4219, %v4222
        %v4224 = vsel %vm4214, nan, %v4223
        %v4225 = vand.u32 2147483647, %v2671
        %vm4226 = vcmp.le.f32.partialorder %v4225, 0.7853982
        %vm4227 = vcmp.lt.s32.totalorder %v2671, 0
        %v4228 = vand.u32 %v2671, 2139095040
        %v4229 = vshrl.u32 %v4228, 23
        %v4230 = vsub.s32 %v4229, 127
        %v4231 = vand.u32 2147483647, %v2671
        %v4232 = vand.u32 %v4231, 8388607
        %v4233 = vor.u32 %v4232, 8388608
        %v4234 = vsub.s32 0, %v4233
        %v4235 = vadd.s32 %v4230, 1
        %vm4236 = vcmp.gt.s32.totalorder %v4235, 0
        %v4237 = vsel %vm4236, %v4235, 0
        %v4238 = vshrl.u32 %v4237, 5
        %v4239 = vand.u32 %v4237, 31
        %v4240 = vsub.s32 32, %v4239
        %v4241 = vshrl.u32 683565275, %v4240
        %v4242 = vshll.u32 683565275, %v4239
        %v4243 = vshrl.u32 2475754826, %v4240
        %v4244 = vor.u32 %v4242, %v4243
        %v4245 = vshll.u32 2475754826, %v4239
        %v4246 = vshrl.u32 2131351028, %v4240
        %v4247 = vor.u32 %v4245, %v4246
        %v4248 = vshll.u32 2131351028, %v4239
        %v4249 = vshrl.u32 2102212464, %v4240
        %v4250 = vor.u32 %v4248, %v4249
        %v4251 = vshll.u32 2102212464, %v4239
        %v4252 = vshrl.u32 920167782, %v4240
        %v4253 = vor.u32 %v4251, %v4252
        %v4254 = vshll.u32 920167782, %v4239
        %v4255 = vshrl.u32 1326507024, %v4240
        %v4256 = vor.u32 %v4254, %v4255
        %vm4257 = vcmp.lt.s32.totalorder %v4238, 1
        %vm4258 = vcmp.lt.s32.totalorder %v4238, 2
        %vm4259 = vcmp.lt.s32.totalorder %v4238, 3
        %vm4260 = vcmp.lt.s32.totalorder %v4238, 4
        %v4261 = vsel %vm4257, %v4241, %v4244
        %v4262 = vsel %vm4260, %v4250, 2102212464
        %v4263 = vsel %vm4259, %v4247, %v4262
        %v4264 = vsel %vm4258, %v4261, %v4263
        %v4265 = vsel %vm4257, %v4244, %v4247
        %v4266 = vsel %vm4260, %v4253, 920167782
        %v4267 = vsel %vm4259, %v4250, %v4266
        %v4268 = vsel %vm4258, %v4265, %v4267
        %v4269 = vsel %vm4257, %v4247, %v4250
        %v4270 = vsel %vm4260, %v4256, 1326507024
        %v4271 = vsel %vm4259, %v4253, %v4270
        %v4272 = vsel %vm4258, %v4269, %v4271
        %v4273 = vshll.u32 %v4233, 8
        %v4274 = vand.u32 %v4273, 65535
        %v4275 = vshrl.u32 %v4273, 16
        %v4276 = vand.u32 %v4272, 65535
        %v4277 = vshrl.u32 %v4272, 16
        %v4278 = vmul.u32 %v4274, %v4276
        %v4279 = vmul.u32 %v4274, %v4277
        %v4280 = vmul.u32 %v4275, %v4276
        %v4281 = vmul.u32 %v4275, %v4277
        %v4282 = vshll.u32 %v4279, 16
        %v4283 = vshrl.u32 %v4279, 16
        %v4284 = vshll.u32 %v4280, 16
        %v4285 = vshrl.u32 %v4280, 16
        %vm4286 = vc.u32 %v4278, %v4282
        %v4287 = vsel %vm4286, 1, 0
        %v4288 = vadd.s32 %v4278, %v4282
        %v4289 = vadd.s32 %v4281, %v4287
        %vm4290 = vc.u32 %v4288, %v4284
        %v4291 = vsel %vm4290, 1, 0
        %v4292 = vadd.s32 %v4288, %v4284
        %v4293 = vadd.s32 %v4289, %v4291
        %v4294 = vadd.s32 %v4293, %v4283
        %v4295 = vadd.s32 %v4294, %v4285
        %v4296 = vand.u32 %v4273, 65535
        %v4297 = vshrl.u32 %v4273, 16
        %v4298 = vand.u32 %v4268, 65535
        %v4299 = vshrl.u32 %v4268, 16
        %v4300 = vmul.u32 %v4296, %v4298
        %v4301 = vmul.u32 %v4296, %v4299
        %v4302 = vmul.u32 %v4297, %v4298
        %v4303 = vmul.u32 %v4297, %v4299
        %v4304 = vshll.u32 %v4301, 16
        %v4305 = vshrl.u32 %v4301, 16
        %v4306 = vshll.u32 %v4302, 16
        %v4307 = vshrl.u32 %v4302, 16
        %vm4308 = vc.u32 %v4300, %v4304
        %v4309 = vsel %vm4308, 1, 0
        %v4310 = vadd.s32 %v4300, %v4304
        %v4311 = vadd.s32 %v4303, %v4309
        %vm4312 = vc.u32 %v4310, %v4306
        %v4313 = vsel %vm4312, 1, 0
        %v4314 = vadd.s32 %v4310, %v4306
        %v4315 = vadd.s32 %v4311, %v4313
        %v4316 = vadd.s32 %v4315, %v4305
        %v4317 = vadd.s32 %v4316, %v4307
        %v4318 = vmul.u32 %v4273, %v4264
        %v4319 = vadd.s32 %v4295, %v4314
        %vm4320 = vc.u32 %v4295, %v4314
        %v4321 = vadd.s32 %v4317, 1
        %v4322 = vsel %vm4320, %v4321, %v4317
        %v4323 = vadd.s32 %v4318, %v4322
        %v4324 = vadd.s32 %v4323, 536870912
        %v4325 = vshrl.u32 %v4324, 30
        %v4326 = vshll.u32 %v4325, 30
        %v4327 = vsub.s32 %v4323, %v4326
        %vm4328 = vcmp.lt.s32.totalorder %v4327, 0
        %v4329 = vsub.s32 0, %v4327
        %v4330 = vsel %vm4328, %v4329, %v4327
        %v4331 = vclz %v4330
        %v4332 = vsub.s32 %v4331, 2
        %vm4333 = vcmp.gt.s32.totalorder 0, %v4332
        %v4334 = vsel %vm4333, 0, %v4332
        %v4335 = vsub.s32 32, %v4334
        %v4336 = vshll.u32 %v4327, %v4334
        %v4337 = vshrl.u32 %v4319, %v4335
        %v4338 = vor.u32 %v4336, %v4337
        %v4339 = vsub.s32 4294967266, %v4334
        %v4340 = vadd.s32 %v4339, 127
        %v4341 = vshll.u32 %v4340, 23
        %v4342 = vor.u32 4788187, %v4341
        %v4343 = vand.u32 2147483647, %v4342
        %v4345 = vcvt.s32.f32 %v4338
        %v4346 = vmul.f32 %v4345, %v4343
        %v4347 = vxor.u32 %v4346, 2147483648
        %v4348 = vsel %vm4227, %v4347, %v4346
        %v4349 = vsub.s32 4, %v4325
        %v4350 = vsel %vm4227, %v4349, %v4325
        %v4351 = vsel %vm4226, %v2671, %v4348
        %v4352 = vsel %vm4226, 0, %v4350
        %v4353 = vmul.f32 %v4351, %v4351
        %v4354 = vmul.f32 %v4353, -0.001358992
        %v4355 = vadd.f32 %v4354, 0.041655596
        %v4356 = vmul.f32 %v4353, %v4355
        %v4357 = vadd.f32 %v4356, -0.4999988
        %v4358 = vmul.f32 %v4353, %v4357
        %v4359 = vadd.f32 1.0, %v4358
        %v4360 = vmul.f32 %v4351, %v4351
        %v4361 = vmul.f32 %v4360, -0.00019511016
        %v4362 = vadd.f32 %v4361, 0.008332121
        %v4363 = vmul.f32 %v4360, %v4362
        %v4364 = vadd.f32 %v4363, -0.16666654
        %v4365 = vmul.f32 %v4360, %v4364
        %v4366 = vadd.f32 %v4365, 1.0
        %v4367 = vmul.f32 %v4366, %v4351
        %vm4368 = vweird.f32 %v2671
        %v4369 = vand.u32 %v4352, 3
        %vm4370 = vcmp.lt.s32.totalorder %v4369, 2
        %vm4371 = vcmp.eq.s32.totalorder %v4369, 0
        %v4372 = vxor.u32 %v4367, 2147483648
        %v4373 = vsel %vm4371, %v4359, %v4372
        %vm4374 = vcmp.eq.s32.totalorder %v4369, 2
        %v4375 = vxor.u32 %v4359, 2147483648
        %v4376 = vsel %vm4374, %v4375, %v4367
        %v4377 = vsel %vm4370, %v4373, %v4376
        %v4378 = vsel %vm4368, nan, %v4377
        %v4379 = vand.u32 2147483647, %v2672
        %vm4380 = vcmp.le.f32.partialorder %v4379, 0.7853982
        %vm4381 = vcmp.lt.s32.totalorder %v2672, 0
        %v4382 = vand.u32 %v2672, 2139095040
        %v4383 = vshrl.u32 %v4382, 23
        %v4384 = vsub.s32 %v4383, 127
        %v4385 = vand.u32 2147483647, %v2672
        %v4386 = vand.u32 %v4385, 8388607
        %v4387 = vor.u32 %v4386, 8388608
        %v4388 = vsub.s32 0, %v4387
        %v4389 = vadd.s32 %v4384, 1
        %vm4390 = vcmp.gt.s32.totalorder %v4389, 0
        %v4391 = vsel %vm4390, %v4389, 0
        %v4392 = vshrl.u32 %v4391, 5
        %v4393 = vand.u32 %v4391, 31
        %v4394 = vsub.s32 32, %v4393
        %v4395 = vshrl.u32 683565275, %v4394
        %v4396 = vshll.u32 683565275, %v4393
        %v4397 = vshrl.u32 2475754826, %v4394
        %v4398 = vor.u32 %v4396, %v4397
        %v4399 = vshll.u32 2475754826, %v4393
        %v4400 = vshrl.u32 2131351028, %v4394
        %v4401 = vor.u32 %v4399, %v4400
        %v4402 = vshll.u32 2131351028, %v4393
        %v4403 = vshrl.u32 2102212464, %v4394
        %v4404 = vor.u32 %v4402, %v4403
        %v4405 = vshll.u32 2102212464, %v4393
        %v4406 = vshrl.u32 920167782, %v4394
        %v4407 = vor.u32 %v4405, %v4406
        %v4408 = vshll.u32 920167782, %v4393
        %v4409 = vshrl.u32 1326507024, %v4394
        %v4410 = vor.u32 %v4408, %v4409
        %vm4411 = vcmp.lt.s32.totalorder %v4392, 1
        %vm4412 = vcmp.lt.s32.totalorder %v4392, 2
        %vm4413 = vcmp.lt.s32.totalorder %v4392, 3
        %vm4414 = vcmp.lt.s32.totalorder %v4392, 4
        %v4415 = vsel %vm4411, %v4395, %v4398
        %v4416 = vsel %vm4414, %v4404, 2102212464
        %v4417 = vsel %vm4413, %v4401, %v4416
        %v4418 = vsel %vm4412, %v4415, %v4417
        %v4419 = vsel %vm4411, %v4398, %v4401
        %v4420 = vsel %vm4414, %v4407, 920167782
        %v4421 = vsel %vm4413, %v4404, %v4420
        %v4422 = vsel %vm4412, %v4419, %v4421
        %v4423 = vsel %vm4411, %v4401, %v4404
        %v4424 = vsel %vm4414, %v4410, 1326507024
        %v4425 = vsel %vm4413, %v4407, %v4424
        %v4426 = vsel %vm4412, %v4423, %v4425
        %v4427 = vshll.u32 %v4387, 8
        %v4428 = vand.u32 %v4427, 65535
        %v4429 = vshrl.u32 %v4427, 16
        %v4430 = vand.u32 %v4426, 65535
        %v4431 = vshrl.u32 %v4426, 16
        %v4432 = vmul.u32 %v4428, %v4430
        %v4433 = vmul.u32 %v4428, %v4431
        %v4434 = vmul.u32 %v4429, %v4430
        %v4435 = vmul.u32 %v4429, %v4431
        %v4436 = vshll.u32 %v4433, 16
        %v4437 = vshrl.u32 %v4433, 16
        %v4438 = vshll.u32 %v4434, 16
        %v4439 = vshrl.u32 %v4434, 16
        %vm4440 = vc.u32 %v4432, %v4436
        %v4441 = vsel %vm4440, 1, 0
        %v4442 = vadd.s32 %v4432, %v4436
        %v4443 = vadd.s32 %v4435, %v4441
        %vm4444 = vc.u32 %v4442, %v4438
        %v4445 = vsel %vm4444, 1, 0
        %v4446 = vadd.s32 %v4442, %v4438
        %v4447 = vadd.s32 %v4443, %v4445
        %v4448 = vadd.s32 %v4447, %v4437
        %v4449 = vadd.s32 %v4448, %v4439
        %v4450 = vand.u32 %v4427, 65535
        %v4451 = vshrl.u32 %v4427, 16
        %v4452 = vand.u32 %v4422, 65535
        %v4453 = vshrl.u32 %v4422, 16
        %v4454 = vmul.u32 %v4450, %v4452
        %v4455 = vmul.u32 %v4450, %v4453
        %v4456 = vmul.u32 %v4451, %v4452
        %v4457 = vmul.u32 %v4451, %v4453
        %v4458 = vshll.u32 %v4455, 16
        %v4459 = vshrl.u32 %v4455, 16
        %v4460 = vshll.u32 %v4456, 16
        %v4461 = vshrl.u32 %v4456, 16
        %vm4462 = vc.u32 %v4454, %v4458
        %v4463 = vsel %vm4462, 1, 0
        %v4464 = vadd.s32 %v4454, %v4458
        %v4465 = vadd.s32 %v4457, %v4463
        %vm4466 = vc.u32 %v4464, %v4460
        %v4467 = vsel %vm4466, 1, 0
        %v4468 = vadd.s32 %v4464, %v4460
        %v4469 = vadd.s32 %v4465, %v4467
        %v4470 = vadd.s32 %v4469, %v4459
        %v4471 = vadd.s32 %v4470, %v4461
        %v4472 = vmul.u32 %v4427, %v4418
        %v4473 = vadd.s32 %v4449, %v4468
        %vm4474 = vc.u32 %v4449, %v4468
        %v4475 = vadd.s32 %v4471, 1
        %v4476 = vsel %vm4474, %v4475, %v4471
        %v4477 = vadd.s32 %v4472, %v4476
        %v4478 = vadd.s32 %v4477, 536870912
        %v4479 = vshrl.u32 %v4478, 30
        %v4480 = vshll.u32 %v4479, 30
        %v4481 = vsub.s32 %v4477, %v4480
        %vm4482 = vcmp.lt.s32.totalorder %v4481, 0
        %v4483 = vsub.s32 0, %v4481
        %v4484 = vsel %vm4482, %v4483, %v4481
        %v4485 = vclz %v4484
        %v4486 = vsub.s32 %v4485, 2
        %vm4487 = vcmp.gt.s32.totalorder 0, %v4486
        %v4488 = vsel %vm4487, 0, %v4486
        %v4489 = vsub.s32 32, %v4488
        %v4490 = vshll.u32 %v4481, %v4488
        %v4491 = vshrl.u32 %v4473, %v4489
        %v4492 = vor.u32 %v4490, %v4491
        %v4493 = vsub.s32 4294967266, %v4488
        %v4494 = vadd.s32 %v4493, 127
        %v4495 = vshll.u32 %v4494, 23
        %v4496 = vor.u32 4788187, %v4495
        %v4497 = vand.u32 2147483647, %v4496
        %v4499 = vcvt.s32.f32 %v4492
        %v4500 = vmul.f32 %v4499, %v4497
        %v4501 = vxor.u32 %v4500, 2147483648
        %v4502 = vsel %vm4381, %v4501, %v4500
        %v4503 = vsub.s32 4, %v4479
        %v4504 = vsel %vm4381, %v4503, %v4479
        %v4505 = vsel %vm4380, %v2672, %v4502
        %v4506 = vsel %vm4380, 0, %v4504
        %v4507 = vmul.f32 %v4505, %v4505
        %v4508 = vmul.f32 %v4507, -0.001358992
        %v4509 = vadd.f32 %v4508, 0.041655596
        %v4510 = vmul.f32 %v4507, %v4509
        %v4511 = vadd.f32 %v4510, -0.4999988
        %v4512 = vmul.f32 %v4507, %v4511
        %v4513 = vadd.f32 1.0, %v4512
        %v4514 = vmul.f32 %v4505, %v4505
        %v4515 = vmul.f32 %v4514, -0.00019511016
        %v4516 = vadd.f32 %v4515, 0.008332121
        %v4517 = vmul.f32 %v4514, %v4516
        %v4518 = vadd.f32 %v4517, -0.16666654
        %v4519 = vmul.f32 %v4514, %v4518
        %v4520 = vadd.f32 %v4519, 1.0
        %v4521 = vmul.f32 %v4520, %v4505
        %vm4522 = vweird.f32 %v2672
        %v4523 = vand.u32 %v4506, 3
        %vm4524 = vcmp.lt.s32.totalorder %v4523, 2
        %vm4525 = vcmp.eq.s32.totalorder %v4523, 0
        %v4526 = vxor.u32 %v4521, 2147483648
        %v4527 = vsel %vm4525, %v4513, %v4526
        %vm4528 = vcmp.eq.s32.totalorder %v4523, 2
        %v4529 = vxor.u32 %v4513, 2147483648
        %v4530 = vsel %vm4528, %v4529, %v4521
        %v4531 = vsel %vm4524, %v4527, %v4530
        %v4532 = vsel %vm4522, nan, %v4531
        %v4533 = vand.u32 2147483647, %v2673
        %vm4534 = vcmp.le.f32.partialorder %v4533, 0.7853982
        %vm4535 = vcmp.lt.s32.totalorder %v2673, 0
        %v4536 = vand.u32 %v2673, 2139095040
        %v4537 = vshrl.u32 %v4536, 23
        %v4538 = vsub.s32 %v4537, 127
        %v4539 = vand.u32 2147483647, %v2673
        %v4540 = vand.u32 %v4539, 8388607
        %v4541 = vor.u32 %v4540, 8388608
        %v4542 = vsub.s32 0, %v4541
        %v4543 = vadd.s32 %v4538, 1
        %vm4544 = vcmp.gt.s32.totalorder %v4543, 0
        %v4545 = vsel %vm4544, %v4543, 0
        %v4546 = vshrl.u32 %v4545, 5
        %v4547 = vand.u32 %v4545, 31
        %v4548 = vsub.s32 32, %v4547
        %v4549 = vshrl.u32 683565275, %v4548
        %v4550 = vshll.u32 683565275, %v4547
        %v4551 = vshrl.u32 2475754826, %v4548
        %v4552 = vor.u32 %v4550, %v4551
        %v4553 = vshll.u32 2475754826, %v4547
        %v4554 = vshrl.u32 2131351028, %v4548
        %v4555 = vor.u32 %v4553, %v4554
        %v4556 = vshll.u32 2131351028, %v4547
        %v4557 = vshrl.u32 2102212464, %v4548
        %v4558 = vor.u32 %v4556, %v4557
        %v4559 = vshll.u32 2102212464, %v4547
        %v4560 = vshrl.u32 920167782, %v4548
        %v4561 = vor.u32 %v4559, %v4560
        %v4562 = vshll.u32 920167782, %v4547
        %v4563 = vshrl.u32 1326507024, %v4548
        %v4564 = vor.u32 %v4562, %v4563
        %vm4565 = vcmp.lt.s32.totalorder %v4546, 1
        %vm4566 = vcmp.lt.s32.totalorder %v4546, 2
        %vm4567 = vcmp.lt.s32.totalorder %v4546, 3
        %vm4568 = vcmp.lt.s32.totalorder %v4546, 4
        %v4569 = vsel %vm4565, %v4549, %v4552
        %v4570 = vsel %vm4568, %v4558, 2102212464
        %v4571 = vsel %vm4567, %v4555, %v4570
        %v4572 = vsel %vm4566, %v4569, %v4571
        %v4573 = vsel %vm4565, %v4552, %v4555
        %v4574 = vsel %vm4568, %v4561, 920167782
        %v4575 = vsel %vm4567, %v4558, %v4574
        %v4576 = vsel %vm4566, %v4573, %v4575
        %v4577 = vsel %vm4565, %v4555, %v4558
        %v4578 = vsel %vm4568, %v4564, 1326507024
        %v4579 = vsel %vm4567, %v4561, %v4578
        %v4580 = vsel %vm4566, %v4577, %v4579
        %v4581 = vshll.u32 %v4541, 8
        %v4582 = vand.u32 %v4581, 65535
        %v4583 = vshrl.u32 %v4581, 16
        %v4584 = vand.u32 %v4580, 65535
        %v4585 = vshrl.u32 %v4580, 16
        %v4586 = vmul.u32 %v4582, %v4584
        %v4587 = vmul.u32 %v4582, %v4585
        %v4588 = vmul.u32 %v4583, %v4584
        %v4589 = vmul.u32 %v4583, %v4585
        %v4590 = vshll.u32 %v4587, 16
        %v4591 = vshrl.u32 %v4587, 16
        %v4592 = vshll.u32 %v4588, 16
        %v4593 = vshrl.u32 %v4588, 16
        %vm4594 = vc.u32 %v4586, %v4590
        %v4595 = vsel %vm4594, 1, 0
        %v4596 = vadd.s32 %v4586, %v4590
        %v4597 = vadd.s32 %v4589, %v4595
        %vm4598 = vc.u32 %v4596, %v4592
        %v4599 = vsel %vm4598, 1, 0
        %v4600 = vadd.s32 %v4596, %v4592
        %v4601 = vadd.s32 %v4597, %v4599
        %v4602 = vadd.s32 %v4601, %v4591
        %v4603 = vadd.s32 %v4602, %v4593
        %v4604 = vand.u32 %v4581, 65535
        %v4605 = vshrl.u32 %v4581, 16
        %v4606 = vand.u32 %v4576, 65535
        %v4607 = vshrl.u32 %v4576, 16
        %v4608 = vmul.u32 %v4604, %v4606
        %v4609 = vmul.u32 %v4604, %v4607
        %v4610 = vmul.u32 %v4605, %v4606
        %v4611 = vmul.u32 %v4605, %v4607
        %v4612 = vshll.u32 %v4609, 16
        %v4613 = vshrl.u32 %v4609, 16
        %v4614 = vshll.u32 %v4610, 16
        %v4615 = vshrl.u32 %v4610, 16
        %vm4616 = vc.u32 %v4608, %v4612
        %v4617 = vsel %vm4616, 1, 0
        %v4618 = vadd.s32 %v4608, %v4612
        %v4619 = vadd.s32 %v4611, %v4617
        %vm4620 = vc.u32 %v4618, %v4614
        %v4621 = vsel %vm4620, 1, 0
        %v4622 = vadd.s32 %v4618, %v4614
        %v4623 = vadd.s32 %v4619, %v4621
        %v4624 = vadd.s32 %v4623, %v4613
        %v4625 = vadd.s32 %v4624, %v4615
        %v4626 = vmul.u32 %v4581, %v4572
        %v4627 = vadd.s32 %v4603, %v4622
        %vm4628 = vc.u32 %v4603, %v4622
        %v4629 = vadd.s32 %v4625, 1
        %v4630 = vsel %vm4628, %v4629, %v4625
        %v4631 = vadd.s32 %v4626, %v4630
        %v4632 = vadd.s32 %v4631, 536870912
        %v4633 = vshrl.u32 %v4632, 30
        %v4634 = vshll.u32 %v4633, 30
        %v4635 = vsub.s32 %v4631, %v4634
        %vm4636 = vcmp.lt.s32.totalorder %v4635, 0
        %v4637 = vsub.s32 0, %v4635
        %v4638 = vsel %vm4636, %v4637, %v4635
        %v4639 = vclz %v4638
        %v4640 = vsub.s32 %v4639, 2
        %vm4641 = vcmp.gt.s32.totalorder 0, %v4640
        %v4642 = vsel %vm4641, 0, %v4640
        %v4643 = vsub.s32 32, %v4642
        %v4644 = vshll.u32 %v4635, %v4642
        %v4645 = vshrl.u32 %v4627, %v4643
        %v4646 = vor.u32 %v4644, %v4645
        %v4647 = vsub.s32 4294967266, %v4642
        %v4648 = vadd.s32 %v4647, 127
        %v4649 = vshll.u32 %v4648, 23
        %v4650 = vor.u32 4788187, %v4649
        %v4651 = vand.u32 2147483647, %v4650
        %v4653 = vcvt.s32.f32 %v4646
        %v4654 = vmul.f32 %v4653, %v4651
        %v4655 = vxor.u32 %v4654, 2147483648
        %v4656 = vsel %vm4535, %v4655, %v4654
        %v4657 = vsub.s32 4, %v4633
        %v4658 = vsel %vm4535, %v4657, %v4633
        %v4659 = vsel %vm4534, %v2673, %v4656
        %v4660 = vsel %vm4534, 0, %v4658
        %v4661 = vmul.f32 %v4659, %v4659
        %v4662 = vmul.f32 %v4661, -0.001358992
        %v4663 = vadd.f32 %v4662, 0.041655596
        %v4664 = vmul.f32 %v4661, %v4663
        %v4665 = vadd.f32 %v4664, -0.4999988
        %v4666 = vmul.f32 %v4661, %v4665
        %v4667 = vadd.f32 1.0, %v4666
        %v4668 = vmul.f32 %v4659, %v4659
        %v4669 = vmul.f32 %v4668, -0.00019511016
        %v4670 = vadd.f32 %v4669, 0.008332121
        %v4671 = vmul.f32 %v4668, %v4670
        %v4672 = vadd.f32 %v4671, -0.16666654
        %v4673 = vmul.f32 %v4668, %v4672
        %v4674 = vadd.f32 %v4673, 1.0
        %v4675 = vmul.f32 %v4674, %v4659
        %vm4676 = vweird.f32 %v2673
        %v4677 = vand.u32 %v4660, 3
        %vm4678 = vcmp.lt.s32.totalorder %v4677, 2
        %vm4679 = vcmp.eq.s32.totalorder %v4677, 0
        %v4680 = vxor.u32 %v4675, 2147483648
        %v4681 = vsel %vm4679, %v4667, %v4680
        %vm4682 = vcmp.eq.s32.totalorder %v4677, 2
        %v4683 = vxor.u32 %v4667, 2147483648
        %v4684 = vsel %vm4682, %v4683, %v4675
        %v4685 = vsel %vm4678, %v4681, %v4684
        %v4686 = vsel %vm4676, nan, %v4685
        %v4687 = vand.u32 2147483647, %v2674
        %vm4688 = vcmp.le.f32.partialorder %v4687, 0.7853982
        %vm4689 = vcmp.lt.s32.totalorder %v2674, 0
        %v4690 = vand.u32 %v2674, 2139095040
        %v4691 = vshrl.u32 %v4690, 23
        %v4692 = vsub.s32 %v4691, 127
        %v4693 = vand.u32 2147483647, %v2674
        %v4694 = vand.u32 %v4693, 8388607
        %v4695 = vor.u32 %v4694, 8388608
        %v4696 = vsub.s32 0, %v4695
        %v4697 = vadd.s32 %v4692, 1
        %vm4698 = vcmp.gt.s32.totalorder %v4697, 0
        %v4699 = vsel %vm4698, %v4697, 0
        %v4700 = vshrl.u32 %v4699, 5
        %v4701 = vand.u32 %v4699, 31
        %v4702 = vsub.s32 32, %v4701
        %v4703 = vshrl.u32 683565275, %v4702
        %v4704 = vshll.u32 683565275, %v4701
        %v4705 = vshrl.u32 2475754826, %v4702
        %v4706 = vor.u32 %v4704, %v4705
        %v4707 = vshll.u32 2475754826, %v4701
        %v4708 = vshrl.u32 2131351028, %v4702
        %v4709 = vor.u32 %v4707, %v4708
        %v4710 = vshll.u32 2131351028, %v4701
        %v4711 = vshrl.u32 2102212464, %v4702
        %v4712 = vor.u32 %v4710, %v4711
        %v4713 = vshll.u32 2102212464, %v4701
        %v4714 = vshrl.u32 920167782, %v4702
        %v4715 = vor.u32 %v4713, %v4714
        %v4716 = vshll.u32 920167782, %v4701
        %v4717 = vshrl.u32 1326507024, %v4702
        %v4718 = vor.u32 %v4716, %v4717
        %vm4719 = vcmp.lt.s32.totalorder %v4700, 1
        %vm4720 = vcmp.lt.s32.totalorder %v4700, 2
        %vm4721 = vcmp.lt.s32.totalorder %v4700, 3
        %vm4722 = vcmp.lt.s32.totalorder %v4700, 4
        %v4723 = vsel %vm4719, %v4703, %v4706
        %v4724 = vsel %vm4722, %v4712, 2102212464
        %v4725 = vsel %vm4721, %v4709, %v4724
        %v4726 = vsel %vm4720, %v4723, %v4725
        %v4727 = vsel %vm4719, %v4706, %v4709
        %v4728 = vsel %vm4722, %v4715, 920167782
        %v4729 = vsel %vm4721, %v4712, %v4728
        %v4730 = vsel %vm4720, %v4727, %v4729
        %v4731 = vsel %vm4719, %v4709, %v4712
        %v4732 = vsel %vm4722, %v4718, 1326507024
        %v4733 = vsel %vm4721, %v4715, %v4732
        %v4734 = vsel %vm4720, %v4731, %v4733
        %v4735 = vshll.u32 %v4695, 8
        %v4736 = vand.u32 %v4735, 65535
        %v4737 = vshrl.u32 %v4735, 16
        %v4738 = vand.u32 %v4734, 65535
        %v4739 = vshrl.u32 %v4734, 16
        %v4740 = vmul.u32 %v4736, %v4738
        %v4741 = vmul.u32 %v4736, %v4739
        %v4742 = vmul.u32 %v4737, %v4738
        %v4743 = vmul.u32 %v4737, %v4739
        %v4744 = vshll.u32 %v4741, 16
        %v4745 = vshrl.u32 %v4741, 16
        %v4746 = vshll.u32 %v4742, 16
        %v4747 = vshrl.u32 %v4742, 16
        %vm4748 = vc.u32 %v4740, %v4744
        %v4749 = vsel %vm4748, 1, 0
        %v4750 = vadd.s32 %v4740, %v4744
        %v4751 = vadd.s32 %v4743, %v4749
        %vm4752 = vc.u32 %v4750, %v4746
        %v4753 = vsel %vm4752, 1, 0
        %v4754 = vadd.s32 %v4750, %v4746
        %v4755 = vadd.s32 %v4751, %v4753
        %v4756 = vadd.s32 %v4755, %v4745
        %v4757 = vadd.s32 %v4756, %v4747
        %v4758 = vand.u32 %v4735, 65535
        %v4759 = vshrl.u32 %v4735, 16
        %v4760 = vand.u32 %v4730, 65535
        %v4761 = vshrl.u32 %v4730, 16
        %v4762 = vmul.u32 %v4758, %v4760
        %v4763 = vmul.u32 %v4758, %v4761
        %v4764 = vmul.u32 %v4759, %v4760
        %v4765 = vmul.u32 %v4759, %v4761
        %v4766 = vshll.u32 %v4763, 16
        %v4767 = vshrl.u32 %v4763, 16
        %v4768 = vshll.u32 %v4764, 16
        %v4769 = vshrl.u32 %v4764, 16
        %vm4770 = vc.u32 %v4762, %v4766
        %v4771 = vsel %vm4770, 1, 0
        %v4772 = vadd.s32 %v4762, %v4766
        %v4773 = vadd.s32 %v4765, %v4771
        %vm4774 = vc.u32 %v4772, %v4768
        %v4775 = vsel %vm4774, 1, 0
        %v4776 = vadd.s32 %v4772, %v4768
        %v4777 = vadd.s32 %v4773, %v4775
        %v4778 = vadd.s32 %v4777, %v4767
        %v4779 = vadd.s32 %v4778, %v4769
        %v4780 = vmul.u32 %v4735, %v4726
        %v4781 = vadd.s32 %v4757, %v4776
        %vm4782 = vc.u32 %v4757, %v4776
        %v4783 = vadd.s32 %v4779, 1
        %v4784 = vsel %vm4782, %v4783, %v4779
        %v4785 = vadd.s32 %v4780, %v4784
        %v4786 = vadd.s32 %v4785, 536870912
        %v4787 = vshrl.u32 %v4786, 30
        %v4788 = vshll.u32 %v4787, 30
        %v4789 = vsub.s32 %v4785, %v4788
        %vm4790 = vcmp.lt.s32.totalorder %v4789, 0
        %v4791 = vsub.s32 0, %v4789
        %v4792 = vsel %vm4790, %v4791, %v4789
        %v4793 = vclz %v4792
        %v4794 = vsub.s32 %v4793, 2
        %vm4795 = vcmp.gt.s32.totalorder 0, %v4794
        %v4796 = vsel %vm4795, 0, %v4794
        %v4797 = vsub.s32 32, %v4796
        %v4798 = vshll.u32 %v4789, %v4796
        %v4799 = vshrl.u32 %v4781, %v4797
        %v4800 = vor.u32 %v4798, %v4799
        %v4801 = vsub.s32 4294967266, %v4796
        %v4802 = vadd.s32 %v4801, 127
        %v4803 = vshll.u32 %v4802, 23
        %v4804 = vor.u32 4788187, %v4803
        %v4805 = vand.u32 2147483647, %v4804
        %v4807 = vcvt.s32.f32 %v4800
        %v4808 = vmul.f32 %v4807, %v4805
        %v4809 = vxor.u32 %v4808, 2147483648
        %v4810 = vsel %vm4689, %v4809, %v4808
        %v4811 = vsub.s32 4, %v4787
        %v4812 = vsel %vm4689, %v4811, %v4787
        %v4813 = vsel %vm4688, %v2674, %v4810
        %v4814 = vsel %vm4688, 0, %v4812
        %v4815 = vmul.f32 %v4813, %v4813
        %v4816 = vmul.f32 %v4815, -0.001358992
        %v4817 = vadd.f32 %v4816, 0.041655596
        %v4818 = vmul.f32 %v4815, %v4817
        %v4819 = vadd.f32 %v4818, -0.4999988
        %v4820 = vmul.f32 %v4815, %v4819
        %v4821 = vadd.f32 1.0, %v4820
        %v4822 = vmul.f32 %v4813, %v4813
        %v4823 = vmul.f32 %v4822, -0.00019511016
        %v4824 = vadd.f32 %v4823, 0.008332121
        %v4825 = vmul.f32 %v4822, %v4824
        %v4826 = vadd.f32 %v4825, -0.16666654
        %v4827 = vmul.f32 %v4822, %v4826
        %v4828 = vadd.f32 %v4827, 1.0
        %v4829 = vmul.f32 %v4828, %v4813
        %vm4830 = vweird.f32 %v2674
        %v4831 = vand.u32 %v4814, 3
        %vm4832 = vcmp.lt.s32.totalorder %v4831, 2
        %vm4833 = vcmp.eq.s32.totalorder %v4831, 0
        %v4834 = vxor.u32 %v4829, 2147483648
        %v4835 = vsel %vm4833, %v4821, %v4834
        %vm4836 = vcmp.eq.s32.totalorder %v4831, 2
        %v4837 = vxor.u32 %v4821, 2147483648
        %v4838 = vsel %vm4836, %v4837, %v4829
        %v4839 = vsel %vm4832, %v4835, %v4838
        %v4840 = vsel %vm4830, nan, %v4839
        %v4841 = vand.u32 2147483647, %v2675
        %vm4842 = vcmp.le.f32.partialorder %v4841, 0.7853982
        %vm4843 = vcmp.lt.s32.totalorder %v2675, 0
        %v4844 = vand.u32 %v2675, 2139095040
        %v4845 = vshrl.u32 %v4844, 23
        %v4846 = vsub.s32 %v4845, 127
        %v4847 = vand.u32 2147483647, %v2675
        %v4848 = vand.u32 %v4847, 8388607
        %v4849 = vor.u32 %v4848, 8388608
        %v4850 = vsub.s32 0, %v4849
        %v4851 = vadd.s32 %v4846, 1
        %vm4852 = vcmp.gt.s32.totalorder %v4851, 0
        %v4853 = vsel %vm4852, %v4851, 0
        %v4854 = vshrl.u32 %v4853, 5
        %v4855 = vand.u32 %v4853, 31
        %v4856 = vsub.s32 32, %v4855
        %v4857 = vshrl.u32 683565275, %v4856
        %v4858 = vshll.u32 683565275, %v4855
        %v4859 = vshrl.u32 2475754826, %v4856
        %v4860 = vor.u32 %v4858, %v4859
        %v4861 = vshll.u32 2475754826, %v4855
        %v4862 = vshrl.u32 2131351028, %v4856
        %v4863 = vor.u32 %v4861, %v4862
        %v4864 = vshll.u32 2131351028, %v4855
        %v4865 = vshrl.u32 2102212464, %v4856
        %v4866 = vor.u32 %v4864, %v4865
        %v4867 = vshll.u32 2102212464, %v4855
        %v4868 = vshrl.u32 920167782, %v4856
        %v4869 = vor.u32 %v4867, %v4868
        %v4870 = vshll.u32 920167782, %v4855
        %v4871 = vshrl.u32 1326507024, %v4856
        %v4872 = vor.u32 %v4870, %v4871
        %vm4873 = vcmp.lt.s32.totalorder %v4854, 1
        %vm4874 = vcmp.lt.s32.totalorder %v4854, 2
        %vm4875 = vcmp.lt.s32.totalorder %v4854, 3
        %vm4876 = vcmp.lt.s32.totalorder %v4854, 4
        %v4877 = vsel %vm4873, %v4857, %v4860
        %v4878 = vsel %vm4876, %v4866, 2102212464
        %v4879 = vsel %vm4875, %v4863, %v4878
        %v4880 = vsel %vm4874, %v4877, %v4879
        %v4881 = vsel %vm4873, %v4860, %v4863
        %v4882 = vsel %vm4876, %v4869, 920167782
        %v4883 = vsel %vm4875, %v4866, %v4882
        %v4884 = vsel %vm4874, %v4881, %v4883
        %v4885 = vsel %vm4873, %v4863, %v4866
        %v4886 = vsel %vm4876, %v4872, 1326507024
        %v4887 = vsel %vm4875, %v4869, %v4886
        %v4888 = vsel %vm4874, %v4885, %v4887
        %v4889 = vshll.u32 %v4849, 8
        %v4890 = vand.u32 %v4889, 65535
        %v4891 = vshrl.u32 %v4889, 16
        %v4892 = vand.u32 %v4888, 65535
        %v4893 = vshrl.u32 %v4888, 16
        %v4894 = vmul.u32 %v4890, %v4892
        %v4895 = vmul.u32 %v4890, %v4893
        %v4896 = vmul.u32 %v4891, %v4892
        %v4897 = vmul.u32 %v4891, %v4893
        %v4898 = vshll.u32 %v4895, 16
        %v4899 = vshrl.u32 %v4895, 16
        %v4900 = vshll.u32 %v4896, 16
        %v4901 = vshrl.u32 %v4896, 16
        %vm4902 = vc.u32 %v4894, %v4898
        %v4903 = vsel %vm4902, 1, 0
        %v4904 = vadd.s32 %v4894, %v4898
        %v4905 = vadd.s32 %v4897, %v4903
        %vm4906 = vc.u32 %v4904, %v4900
        %v4907 = vsel %vm4906, 1, 0
        %v4908 = vadd.s32 %v4904, %v4900
        %v4909 = vadd.s32 %v4905, %v4907
        %v4910 = vadd.s32 %v4909, %v4899
        %v4911 = vadd.s32 %v4910, %v4901
        %v4912 = vand.u32 %v4889, 65535
        %v4913 = vshrl.u32 %v4889, 16
        %v4914 = vand.u32 %v4884, 65535
        %v4915 = vshrl.u32 %v4884, 16
        %v4916 = vmul.u32 %v4912, %v4914
        %v4917 = vmul.u32 %v4912, %v4915
        %v4918 = vmul.u32 %v4913, %v4914
        %v4919 = vmul.u32 %v4913, %v4915
        %v4920 = vshll.u32 %v4917, 16
        %v4921 = vshrl.u32 %v4917, 16
        %v4922 = vshll.u32 %v4918, 16
        %v4923 = vshrl.u32 %v4918, 16
        %vm4924 = vc.u32 %v4916, %v4920
        %v4925 = vsel %vm4924, 1, 0
        %v4926 = vadd.s32 %v4916, %v4920
        %v4927 = vadd.s32 %v4919, %v4925
        %vm4928 = vc.u32 %v4926, %v4922
        %v4929 = vsel %vm4928, 1, 0
        %v4930 = vadd.s32 %v4926, %v4922
        %v4931 = vadd.s32 %v4927, %v4929
        %v4932 = vadd.s32 %v4931, %v4921
        %v4933 = vadd.s32 %v4932, %v4923
        %v4934 = vmul.u32 %v4889, %v4880
        %v4935 = vadd.s32 %v4911, %v4930
        %vm4936 = vc.u32 %v4911, %v4930
        %v4937 = vadd.s32 %v4933, 1
        %v4938 = vsel %vm4936, %v4937, %v4933
        %v4939 = vadd.s32 %v4934, %v4938
        %v4940 = vadd.s32 %v4939, 536870912
        %v4941 = vshrl.u32 %v4940, 30
        %v4942 = vshll.u32 %v4941, 30
        %v4943 = vsub.s32 %v4939, %v4942
        %vm4944 = vcmp.lt.s32.totalorder %v4943, 0
        %v4945 = vsub.s32 0, %v4943
        %v4946 = vsel %vm4944, %v4945, %v4943
        %v4947 = vclz %v4946
        %v4948 = vsub.s32 %v4947, 2
        %vm4949 = vcmp.gt.s32.totalorder 0, %v4948
        %v4950 = vsel %vm4949, 0, %v4948
        %v4951 = vsub.s32 32, %v4950
        %v4952 = vshll.u32 %v4943, %v4950
        %v4953 = vshrl.u32 %v4935, %v4951
        %v4954 = vor.u32 %v4952, %v4953
        %v4955 = vsub.s32 4294967266, %v4950
        %v4956 = vadd.s32 %v4955, 127
        %v4957 = vshll.u32 %v4956, 23
        %v4958 = vor.u32 4788187, %v4957
        %v4959 = vand.u32 2147483647, %v4958
        %v4961 = vcvt.s32.f32 %v4954
        %v4962 = vmul.f32 %v4961, %v4959
        %v4963 = vxor.u32 %v4962, 2147483648
        %v4964 = vsel %vm4843, %v4963, %v4962
        %v4965 = vsub.s32 4, %v4941
        %v4966 = vsel %vm4843, %v4965, %v4941
        %v4967 = vsel %vm4842, %v2675, %v4964
        %v4968 = vsel %vm4842, 0, %v4966
        %v4969 = vmul.f32 %v4967, %v4967
        %v4970 = vmul.f32 %v4969, -0.001358992
        %v4971 = vadd.f32 %v4970, 0.041655596
        %v4972 = vmul.f32 %v4969, %v4971
        %v4973 = vadd.f32 %v4972, -0.4999988
        %v4974 = vmul.f32 %v4969, %v4973
        %v4975 = vadd.f32 1.0, %v4974
        %v4976 = vmul.f32 %v4967, %v4967
        %v4977 = vmul.f32 %v4976, -0.00019511016
        %v4978 = vadd.f32 %v4977, 0.008332121
        %v4979 = vmul.f32 %v4976, %v4978
        %v4980 = vadd.f32 %v4979, -0.16666654
        %v4981 = vmul.f32 %v4976, %v4980
        %v4982 = vadd.f32 %v4981, 1.0
        %v4983 = vmul.f32 %v4982, %v4967
        %vm4984 = vweird.f32 %v2675
        %v4985 = vand.u32 %v4968, 3
        %vm4986 = vcmp.lt.s32.totalorder %v4985, 2
        %vm4987 = vcmp.eq.s32.totalorder %v4985, 0
        %v4988 = vxor.u32 %v4983, 2147483648
        %v4989 = vsel %vm4987, %v4975, %v4988
        %vm4990 = vcmp.eq.s32.totalorder %v4985, 2
        %v4991 = vxor.u32 %v4975, 2147483648
        %v4992 = vsel %vm4990, %v4991, %v4983
        %v4993 = vsel %vm4986, %v4989, %v4992
        %v4994 = vsel %vm4984, nan, %v4993
        %v4995 = vand.u32 2147483647, %v2676
        %vm4996 = vcmp.le.f32.partialorder %v4995, 0.7853982
        %vm4997 = vcmp.lt.s32.totalorder %v2676, 0
        %v4998 = vand.u32 %v2676, 2139095040
        %v4999 = vshrl.u32 %v4998, 23
        %v5000 = vsub.s32 %v4999, 127
        %v5001 = vand.u32 2147483647, %v2676
        %v5002 = vand.u32 %v5001, 8388607
        %v5003 = vor.u32 %v5002, 8388608
        %v5004 = vsub.s32 0, %v5003
        %v5005 = vadd.s32 %v5000, 1
        %vm5006 = vcmp.gt.s32.totalorder %v5005, 0
        %v5007 = vsel %vm5006, %v5005, 0
        %v5008 = vshrl.u32 %v5007, 5
        %v5009 = vand.u32 %v5007, 31
        %v5010 = vsub.s32 32, %v5009
        %v5011 = vshrl.u32 683565275, %v5010
        %v5012 = vshll.u32 683565275, %v5009
        %v5013 = vshrl.u32 2475754826, %v5010
        %v5014 = vor.u32 %v5012, %v5013
        %v5015 = vshll.u32 2475754826, %v5009
        %v5016 = vshrl.u32 2131351028, %v5010
        %v5017 = vor.u32 %v5015, %v5016
        %v5018 = vshll.u32 2131351028, %v5009
        %v5019 = vshrl.u32 2102212464, %v5010
        %v5020 = vor.u32 %v5018, %v5019
        %v5021 = vshll.u32 2102212464, %v5009
        %v5022 = vshrl.u32 920167782, %v5010
        %v5023 = vor.u32 %v5021, %v5022
        %v5024 = vshll.u32 920167782, %v5009
        %v5025 = vshrl.u32 1326507024, %v5010
        %v5026 = vor.u32 %v5024, %v5025
        %vm5027 = vcmp.lt.s32.totalorder %v5008, 1
        %vm5028 = vcmp.lt.s32.totalorder %v5008, 2
        %vm5029 = vcmp.lt.s32.totalorder %v5008, 3
        %vm5030 = vcmp.lt.s32.totalorder %v5008, 4
        %v5031 = vsel %vm5027, %v5011, %v5014
        %v5032 = vsel %vm5030, %v5020, 2102212464
        %v5033 = vsel %vm5029, %v5017, %v5032
        %v5034 = vsel %vm5028, %v5031, %v5033
        %v5035 = vsel %vm5027, %v5014, %v5017
        %v5036 = vsel %vm5030, %v5023, 920167782
        %v5037 = vsel %vm5029, %v5020, %v5036
        %v5038 = vsel %vm5028, %v5035, %v5037
        %v5039 = vsel %vm5027, %v5017, %v5020
        %v5040 = vsel %vm5030, %v5026, 1326507024
        %v5041 = vsel %vm5029, %v5023, %v5040
        %v5042 = vsel %vm5028, %v5039, %v5041
        %v5043 = vshll.u32 %v5003, 8
        %v5044 = vand.u32 %v5043, 65535
        %v5045 = vshrl.u32 %v5043, 16
        %v5046 = vand.u32 %v5042, 65535
        %v5047 = vshrl.u32 %v5042, 16
        %v5048 = vmul.u32 %v5044, %v5046
        %v5049 = vmul.u32 %v5044, %v5047
        %v5050 = vmul.u32 %v5045, %v5046
        %v5051 = vmul.u32 %v5045, %v5047
        %v5052 = vshll.u32 %v5049, 16
        %v5053 = vshrl.u32 %v5049, 16
        %v5054 = vshll.u32 %v5050, 16
        %v5055 = vshrl.u32 %v5050, 16
        %vm5056 = vc.u32 %v5048, %v5052
        %v5057 = vsel %vm5056, 1, 0
        %v5058 = vadd.s32 %v5048, %v5052
        %v5059 = vadd.s32 %v5051, %v5057
        %vm5060 = vc.u32 %v5058, %v5054
        %v5061 = vsel %vm5060, 1, 0
        %v5062 = vadd.s32 %v5058, %v5054
        %v5063 = vadd.s32 %v5059, %v5061
        %v5064 = vadd.s32 %v5063, %v5053
        %v5065 = vadd.s32 %v5064, %v5055
        %v5066 = vand.u32 %v5043, 65535
        %v5067 = vshrl.u32 %v5043, 16
        %v5068 = vand.u32 %v5038, 65535
        %v5069 = vshrl.u32 %v5038, 16
        %v5070 = vmul.u32 %v5066, %v5068
        %v5071 = vmul.u32 %v5066, %v5069
        %v5072 = vmul.u32 %v5067, %v5068
        %v5073 = vmul.u32 %v5067, %v5069
        %v5074 = vshll.u32 %v5071, 16
        %v5075 = vshrl.u32 %v5071, 16
        %v5076 = vshll.u32 %v5072, 16
        %v5077 = vshrl.u32 %v5072, 16
        %vm5078 = vc.u32 %v5070, %v5074
        %v5079 = vsel %vm5078, 1, 0
        %v5080 = vadd.s32 %v5070, %v5074
        %v5081 = vadd.s32 %v5073, %v5079
        %vm5082 = vc.u32 %v5080, %v5076
        %v5083 = vsel %vm5082, 1, 0
        %v5084 = vadd.s32 %v5080, %v5076
        %v5085 = vadd.s32 %v5081, %v5083
        %v5086 = vadd.s32 %v5085, %v5075
        %v5087 = vadd.s32 %v5086, %v5077
        %v5088 = vmul.u32 %v5043, %v5034
        %v5089 = vadd.s32 %v5065, %v5084
        %vm5090 = vc.u32 %v5065, %v5084
        %v5091 = vadd.s32 %v5087, 1
        %v5092 = vsel %vm5090, %v5091, %v5087
        %v5093 = vadd.s32 %v5088, %v5092
        %v5094 = vadd.s32 %v5093, 536870912
        %v5095 = vshrl.u32 %v5094, 30
        %v5096 = vshll.u32 %v5095, 30
        %v5097 = vsub.s32 %v5093, %v5096
        %vm5098 = vcmp.lt.s32.totalorder %v5097, 0
        %v5099 = vsub.s32 0, %v5097
        %v5100 = vsel %vm5098, %v5099, %v5097
        %v5101 = vclz %v5100
        %v5102 = vsub.s32 %v5101, 2
        %vm5103 = vcmp.gt.s32.totalorder 0, %v5102
        %v5104 = vsel %vm5103, 0, %v5102
        %v5105 = vsub.s32 32, %v5104
        %v5106 = vshll.u32 %v5097, %v5104
        %v5107 = vshrl.u32 %v5089, %v5105
        %v5108 = vor.u32 %v5106, %v5107
        %v5109 = vsub.s32 4294967266, %v5104
        %v5110 = vadd.s32 %v5109, 127
        %v5111 = vshll.u32 %v5110, 23
        %v5112 = vor.u32 4788187, %v5111
        %v5113 = vand.u32 2147483647, %v5112
        %v5115 = vcvt.s32.f32 %v5108
        %v5116 = vmul.f32 %v5115, %v5113
        %v5117 = vxor.u32 %v5116, 2147483648
        %v5118 = vsel %vm4997, %v5117, %v5116
        %v5119 = vsub.s32 4, %v5095
        %v5120 = vsel %vm4997, %v5119, %v5095
        %v5121 = vsel %vm4996, %v2676, %v5118
        %v5122 = vsel %vm4996, 0, %v5120
        %v5123 = vmul.f32 %v5121, %v5121
        %v5124 = vmul.f32 %v5123, -0.001358992
        %v5125 = vadd.f32 %v5124, 0.041655596
        %v5126 = vmul.f32 %v5123, %v5125
        %v5127 = vadd.f32 %v5126, -0.4999988
        %v5128 = vmul.f32 %v5123, %v5127
        %v5129 = vadd.f32 1.0, %v5128
        %v5130 = vmul.f32 %v5121, %v5121
        %v5131 = vmul.f32 %v5130, -0.00019511016
        %v5132 = vadd.f32 %v5131, 0.008332121
        %v5133 = vmul.f32 %v5130, %v5132
        %v5134 = vadd.f32 %v5133, -0.16666654
        %v5135 = vmul.f32 %v5130, %v5134
        %v5136 = vadd.f32 %v5135, 1.0
        %v5137 = vmul.f32 %v5136, %v5121
        %vm5138 = vweird.f32 %v2676
        %v5139 = vand.u32 %v5122, 3
        %vm5140 = vcmp.lt.s32.totalorder %v5139, 2
        %vm5141 = vcmp.eq.s32.totalorder %v5139, 0
        %v5142 = vxor.u32 %v5137, 2147483648
        %v5143 = vsel %vm5141, %v5129, %v5142
        %vm5144 = vcmp.eq.s32.totalorder %v5139, 2
        %v5145 = vxor.u32 %v5129, 2147483648
        %v5146 = vsel %vm5144, %v5145, %v5137
        %v5147 = vsel %vm5140, %v5143, %v5146
        %v5148 = vsel %vm5138, nan, %v5147
        %5150 = vset.pattern.permute.xlu0 0
        %5151 = vperm.xlu0 %5150, %v4070
        %v5152 = vpop.permute.xlu0 %5151
        %5155 = vset.pattern.permute.xlu0 0
        %5156 = vperm.xlu0 %5155, %v4224
        %v5157 = vpop.permute.xlu0 %5156
        %5160 = vset.pattern.permute.xlu0 0
        %5161 = vperm.xlu0 %5160, %v4378
        %v5162 = vpop.permute.xlu0 %5161
        %5165 = vset.pattern.permute.xlu0 0
        %5166 = vperm.xlu0 %5165, %v4532
        %v5167 = vpop.permute.xlu0 %5166
        %5170 = vset.pattern.permute.xlu0 0
        %5171 = vperm.xlu0 %5170, %v4686
        %v5172 = vpop.permute.xlu0 %5171
        %5175 = vset.pattern.permute.xlu0 0
        %5176 = vperm.xlu0 %5175, %v4840
        %v5177 = vpop.permute.xlu0 %5176
        %5180 = vset.pattern.permute.xlu0 0
        %5181 = vperm.xlu0 %5180, %v4994
        %v5182 = vpop.permute.xlu0 %5181
        %5185 = vset.pattern.permute.xlu0 0
        %5186 = vperm.xlu0 %5185, %v5148
        %v5187 = vpop.permute.xlu0 %5186
        %v5189 = vmul.f32 %v312, %v5152
        %v5190 = vmul.f32 %v467, %v5157
        %v5191 = vmul.f32 %v622, %v5162
        %v5192 = vmul.f32 %v777, %v5167
        %v5193 = vmul.f32 %v932, %v5172
        %v5194 = vmul.f32 %v1087, %v5177
        %v5195 = vmul.f32 %v1242, %v5182
        %v5196 = vmul.f32 %v1397, %v5187
        %5198 = vset.pattern.permute.xlu0 0
        %5199 = vperm.xlu0 %5198, %v2831
        %v5200 = vpop.permute.xlu0 %5199
        %5203 = vset.pattern.permute.xlu0 0
        %5204 = vperm.xlu0 %5203, %v2986
        %v5205 = vpop.permute.xlu0 %5204
        %5208 = vset.pattern.permute.xlu0 0
        %5209 = vperm.xlu0 %5208, %v3141
        %v5210 = vpop.permute.xlu0 %5209
        %5213 = vset.pattern.permute.xlu0 0
        %5214 = vperm.xlu0 %5213, %v3296
        %v5215 = vpop.permute.xlu0 %5214
        %5218 = vset.pattern.permute.xlu0 0
        %5219 = vperm.xlu0 %5218, %v3451
        %v5220 = vpop.permute.xlu0 %5219
        %5223 = vset.pattern.permute.xlu0 0
        %5224 = vperm.xlu0 %5223, %v3606
        %v5225 = vpop.permute.xlu0 %5224
        %5228 = vset.pattern.permute.xlu0 0
        %5229 = vperm.xlu0 %5228, %v3761
        %v5230 = vpop.permute.xlu0 %5229
        %5233 = vset.pattern.permute.xlu0 0
        %5234 = vperm.xlu0 %5233, %v3916
        %v5235 = vpop.permute.xlu0 %5234
        %v5237 = vmul.f32 %v1551, %v5200
        %v5238 = vmul.f32 %v1705, %v5205
        %v5239 = vmul.f32 %v1859, %v5210
        %v5240 = vmul.f32 %v2013, %v5215
        %v5241 = vmul.f32 %v2167, %v5220
        %v5242 = vmul.f32 %v2321, %v5225
        %v5243 = vmul.f32 %v2475, %v5230
        %v5244 = vmul.f32 %v2629, %v5235
        %v5245 = vadd.f32 %v5189, %v5237
        %v5246 = vadd.f32 %v5190, %v5238
        %v5247 = vadd.f32 %v5191, %v5239
        %v5248 = vadd.f32 %v5192, %v5240
        %v5249 = vadd.f32 %v5193, %v5241
        %v5250 = vadd.f32 %v5194, %v5242
        %v5251 = vadd.f32 %v5195, %v5243
        %v5252 = vadd.f32 %v5196, %v5244
        %v5253 = vmul.f32 %v1551, %v5152
        %v5254 = vmul.f32 %v1705, %v5157
        %v5255 = vmul.f32 %v1859, %v5162
        %v5256 = vmul.f32 %v2013, %v5167
        %v5257 = vmul.f32 %v2167, %v5172
        %v5258 = vmul.f32 %v2321, %v5177
        %v5259 = vmul.f32 %v2475, %v5182
        %v5260 = vmul.f32 %v2629, %v5187
        %v5261 = vmul.f32 %v312, %v5200
        %v5262 = vmul.f32 %v467, %v5205
        %v5263 = vmul.f32 %v622, %v5210
        %v5264 = vmul.f32 %v777, %v5215
        %v5265 = vmul.f32 %v932, %v5220
        %v5266 = vmul.f32 %v1087, %v5225
        %v5267 = vmul.f32 %v1242, %v5230
        %v5268 = vmul.f32 %v1397, %v5235
        %v5269 = vsub.f32 %v5253, %v5261
        %v5270 = vsub.f32 %v5254, %v5262
        %v5271 = vsub.f32 %v5255, %v5263
        %v5272 = vsub.f32 %v5256, %v5264
        %v5273 = vsub.f32 %v5257, %v5265
        %v5274 = vsub.f32 %v5258, %v5266
        %v5275 = vsub.f32 %v5259, %v5267
        %v5276 = vsub.f32 %v5260, %v5268
        %5277 = vset.pattern.permute.xlu0 1
        %5278 = vperm.xlu0 %5277, %v4070
        %v5279 = vpop.permute.xlu0 %5278
        %5281 = vset.pattern.permute.xlu0 1
        %5282 = vperm.xlu0 %5281, %v4224
        %v5283 = vpop.permute.xlu0 %5282
        %5285 = vset.pattern.permute.xlu0 1
        %5286 = vperm.xlu0 %5285, %v4378
        %v5287 = vpop.permute.xlu0 %5286
        %5289 = vset.pattern.permute.xlu0 1
        %5290 = vperm.xlu0 %5289, %v4532
        %v5291 = vpop.permute.xlu0 %5290
        %5293 = vset.pattern.permute.xlu0 1
        %5294 = vperm.xlu0 %5293, %v4686
        %v5295 = vpop.permute.xlu0 %5294
        %5297 = vset.pattern.permute.xlu0 1
        %5298 = vperm.xlu0 %5297, %v4840
        %v5299 = vpop.permute.xlu0 %5298
        %5301 = vset.pattern.permute.xlu0 1
        %5302 = vperm.xlu0 %5301, %v4994
        %v5303 = vpop.permute.xlu0 %5302
        %5305 = vset.pattern.permute.xlu0 1
        %5306 = vperm.xlu0 %5305, %v5148
        %v5307 = vpop.permute.xlu0 %5306
        %v5309 = vmul.f32 %v312, %v5279
        %v5310 = vmul.f32 %v467, %v5283
        %v5311 = vmul.f32 %v622, %v5287
        %v5312 = vmul.f32 %v777, %v5291
        %v5313 = vmul.f32 %v932, %v5295
        %v5314 = vmul.f32 %v1087, %v5299
        %v5315 = vmul.f32 %v1242, %v5303
        %v5316 = vmul.f32 %v1397, %v5307
        %5317 = vset.pattern.permute.xlu0 1
        %5318 = vperm.xlu0 %5317, %v2831
        %v5319 = vpop.permute.xlu0 %5318
        %5321 = vset.pattern.permute.xlu0 1
        %5322 = vperm.xlu0 %5321, %v2986
        %v5323 = vpop.permute.xlu0 %5322
        %5325 = vset.pattern.permute.xlu0 1
        %5326 = vperm.xlu0 %5325, %v3141
        %v5327 = vpop.permute.xlu0 %5326
        %5329 = vset.pattern.permute.xlu0 1
        %5330 = vperm.xlu0 %5329, %v3296
        %v5331 = vpop.permute.xlu0 %5330
        %5333 = vset.pattern.permute.xlu0 1
        %5334 = vperm.xlu0 %5333, %v3451
        %v5335 = vpop.permute.xlu0 %5334
        %5337 = vset.pattern.permute.xlu0 1
        %5338 = vperm.xlu0 %5337, %v3606
        %v5339 = vpop.permute.xlu0 %5338
        %5341 = vset.pattern.permute.xlu0 1
        %5342 = vperm.xlu0 %5341, %v3761
        %v5343 = vpop.permute.xlu0 %5342
        %5345 = vset.pattern.permute.xlu0 1
        %5346 = vperm.xlu0 %5345, %v3916
        %v5347 = vpop.permute.xlu0 %5346
        %v5349 = vmul.f32 %v1551, %v5319
        %v5350 = vmul.f32 %v1705, %v5323
        %v5351 = vmul.f32 %v1859, %v5327
        %v5352 = vmul.f32 %v2013, %v5331
        %v5353 = vmul.f32 %v2167, %v5335
        %v5354 = vmul.f32 %v2321, %v5339
        %v5355 = vmul.f32 %v2475, %v5343
        %v5356 = vmul.f32 %v2629, %v5347
        %v5357 = vadd.f32 %v5309, %v5349
        %v5358 = vadd.f32 %v5310, %v5350
        %v5359 = vadd.f32 %v5311, %v5351
        %v5360 = vadd.f32 %v5312, %v5352
        %v5361 = vadd.f32 %v5313, %v5353
        %v5362 = vadd.f32 %v5314, %v5354
        %v5363 = vadd.f32 %v5315, %v5355
        %v5364 = vadd.f32 %v5316, %v5356
        %v5365 = vmul.f32 %v1551, %v5279
        %v5366 = vmul.f32 %v1705, %v5283
        %v5367 = vmul.f32 %v1859, %v5287
        %v5368 = vmul.f32 %v2013, %v5291
        %v5369 = vmul.f32 %v2167, %v5295
        %v5370 = vmul.f32 %v2321, %v5299
        %v5371 = vmul.f32 %v2475, %v5303
        %v5372 = vmul.f32 %v2629, %v5307
        %v5373 = vmul.f32 %v312, %v5319
        %v5374 = vmul.f32 %v467, %v5323
        %v5375 = vmul.f32 %v622, %v5327
        %v5376 = vmul.f32 %v777, %v5331
        %v5377 = vmul.f32 %v932, %v5335
        %v5378 = vmul.f32 %v1087, %v5339
        %v5379 = vmul.f32 %v1242, %v5343
        %v5380 = vmul.f32 %v1397, %v5347
        %v5381 = vsub.f32 %v5365, %v5373
        %v5382 = vsub.f32 %v5366, %v5374
        %v5383 = vsub.f32 %v5367, %v5375
        %v5384 = vsub.f32 %v5368, %v5376
        %v5385 = vsub.f32 %v5369, %v5377
        %v5386 = vsub.f32 %v5370, %v5378
        %v5387 = vsub.f32 %v5371, %v5379
        %v5388 = vsub.f32 %v5372, %v5380
        %5397 = vrot.lane.b32.xlu0 %v5357, 64
        %v5398 = vpop.permute.xlu0 %5397
        %5399 = vrot.lane.b32.xlu0 %v5358, 64
        %v5400 = vpop.permute.xlu0 %5399
        %5401 = vrot.lane.b32.xlu0 %v5359, 64
        %v5402 = vpop.permute.xlu0 %5401
        %5403 = vrot.lane.b32.xlu0 %v5360, 64
        %v5404 = vpop.permute.xlu0 %5403
        %5405 = vrot.lane.b32.xlu0 %v5361, 64
        %v5406 = vpop.permute.xlu0 %5405
        %5407 = vrot.lane.b32.xlu0 %v5362, 64
        %v5408 = vpop.permute.xlu0 %5407
        %5409 = vrot.lane.b32.xlu0 %v5363, 64
        %v5410 = vpop.permute.xlu0 %5409
        %5411 = vrot.lane.b32.xlu0 %v5364, 64
        %v5412 = vpop.permute.xlu0 %5411
        %vm5421 = vcmask 523264
        %v5422 = vsel %vm5421, %v5245, %v5398
        %v5423 = vsel %vm5421, %v5246, %v5400
        %v5424 = vsel %vm5421, %v5247, %v5402
        %v5425 = vsel %vm5421, %v5248, %v5404
        %v5426 = vsel %vm5421, %v5249, %v5406
        %v5427 = vsel %vm5421, %v5250, %v5408
        %v5428 = vsel %vm5421, %v5251, %v5410
        %v5429 = vsel %vm5421, %v5252, %v5412
        %5438 = vrot.lane.b32.xlu0 %v5381, 64
        %v5439 = vpop.permute.xlu0 %5438
        %5440 = vrot.lane.b32.xlu0 %v5382, 64
        %v5441 = vpop.permute.xlu0 %5440
        %5442 = vrot.lane.b32.xlu0 %v5383, 64
        %v5443 = vpop.permute.xlu0 %5442
        %5444 = vrot.lane.b32.xlu0 %v5384, 64
        %v5445 = vpop.permute.xlu0 %5444
        %5446 = vrot.lane.b32.xlu0 %v5385, 64
        %v5447 = vpop.permute.xlu0 %5446
        %5448 = vrot.lane.b32.xlu0 %v5386, 64
        %v5449 = vpop.permute.xlu0 %5448
        %5450 = vrot.lane.b32.xlu0 %v5387, 64
        %v5451 = vpop.permute.xlu0 %5450
        %5452 = vrot.lane.b32.xlu0 %v5388, 64
        %v5453 = vpop.permute.xlu0 %5452
        %v5462 = vsel %vm5421, %v5269, %v5439
        %v5463 = vsel %vm5421, %v5270, %v5441
        %v5464 = vsel %vm5421, %v5271, %v5443
        %v5465 = vsel %vm5421, %v5272, %v5445
        %v5466 = vsel %vm5421, %v5273, %v5447
        %v5467 = vsel %vm5421, %v5274, %v5449
        %v5468 = vsel %vm5421, %v5275, %v5451
        %v5469 = vsel %vm5421, %v5276, %v5453
        %5470 = vst [vmem:[%s94] sm:$0xff] %v5422
        %5471 = vst [vmem:[%s94 + $0x80] sm:$0xff] %v5423
        %5472 = vst [vmem:[%s94 + $0x100] sm:$0xff] %v5424
        %5473 = vst [vmem:[%s94 + $0x180] sm:$0xff] %v5425
        %5474 = vst [vmem:[%s94 + $0x200] sm:$0xff] %v5426
        %5475 = vst [vmem:[%s94 + $0x280] sm:$0xff] %v5427
        %5476 = vst [vmem:[%s94 + $0x300] sm:$0xff] %v5428
        %5477 = vst [vmem:[%s94 + $0x380] sm:$0xff] %v5429
        %5478 = vst [vmem:[%s94 + $0x400] sm:$0xff] %v5462
        %5479 = vst [vmem:[%s94 + $0x480] sm:$0xff] %v5463
        %5480 = vst [vmem:[%s94 + $0x500] sm:$0xff] %v5464
        %5481 = vst [vmem:[%s94 + $0x580] sm:$0xff] %v5465
        %5482 = vst [vmem:[%s94 + $0x600] sm:$0xff] %v5466
        %5483 = vst [vmem:[%s94 + $0x680] sm:$0xff] %v5467
        %5484 = vst [vmem:[%s94 + $0x700] sm:$0xff] %v5468
        %5485 = vst [vmem:[%s94 + $0x780] sm:$0xff] %v5469
        %5486 = vset.pattern.permute.xlu0 2
        %5487 = vperm.xlu0 %5486, %v4070
        %v5488 = vpop.permute.xlu0 %5487
        %5490 = vset.pattern.permute.xlu0 2
        %5491 = vperm.xlu0 %5490, %v4224
        %v5492 = vpop.permute.xlu0 %5491
        %5494 = vset.pattern.permute.xlu0 2
        %5495 = vperm.xlu0 %5494, %v4378
        %v5496 = vpop.permute.xlu0 %5495
        %5498 = vset.pattern.permute.xlu0 2
        %5499 = vperm.xlu0 %5498, %v4532
        %v5500 = vpop.permute.xlu0 %5499
        %5502 = vset.pattern.permute.xlu0 2
        %5503 = vperm.xlu0 %5502, %v4686
        %v5504 = vpop.permute.xlu0 %5503
        %5506 = vset.pattern.permute.xlu0 2
        %5507 = vperm.xlu0 %5506, %v4840
        %v5508 = vpop.permute.xlu0 %5507
        %5510 = vset.pattern.permute.xlu0 2
        %5511 = vperm.xlu0 %5510, %v4994
        %v5512 = vpop.permute.xlu0 %5511
        %5514 = vset.pattern.permute.xlu0 2
        %5515 = vperm.xlu0 %5514, %v5148
        %v5516 = vpop.permute.xlu0 %5515
        %v5518 = vmul.f32 %v312, %v5488
        %v5519 = vmul.f32 %v467, %v5492
        %v5520 = vmul.f32 %v622, %v5496
        %v5521 = vmul.f32 %v777, %v5500
        %v5522 = vmul.f32 %v932, %v5504
        %v5523 = vmul.f32 %v1087, %v5508
        %v5524 = vmul.f32 %v1242, %v5512
        %v5525 = vmul.f32 %v1397, %v5516
        %5526 = vset.pattern.permute.xlu0 2
        %5527 = vperm.xlu0 %5526, %v2831
        %v5528 = vpop.permute.xlu0 %5527
        %5530 = vset.pattern.permute.xlu0 2
        %5531 = vperm.xlu0 %5530, %v2986
        %v5532 = vpop.permute.xlu0 %5531
        %5534 = vset.pattern.permute.xlu0 2
        %5535 = vperm.xlu0 %5534, %v3141
        %v5536 = vpop.permute.xlu0 %5535
        %5538 = vset.pattern.permute.xlu0 2
        %5539 = vperm.xlu0 %5538, %v3296
        %v5540 = vpop.permute.xlu0 %5539
        %5542 = vset.pattern.permute.xlu0 2
        %5543 = vperm.xlu0 %5542, %v3451
        %v5544 = vpop.permute.xlu0 %5543
        %5546 = vset.pattern.permute.xlu0 2
        %5547 = vperm.xlu0 %5546, %v3606
        %v5548 = vpop.permute.xlu0 %5547
        %5550 = vset.pattern.permute.xlu0 2
        %5551 = vperm.xlu0 %5550, %v3761
        %v5552 = vpop.permute.xlu0 %5551
        %5554 = vset.pattern.permute.xlu0 2
        %5555 = vperm.xlu0 %5554, %v3916
        %v5556 = vpop.permute.xlu0 %5555
        %v5558 = vmul.f32 %v1551, %v5528
        %v5559 = vmul.f32 %v1705, %v5532
        %v5560 = vmul.f32 %v1859, %v5536
        %v5561 = vmul.f32 %v2013, %v5540
        %v5562 = vmul.f32 %v2167, %v5544
        %v5563 = vmul.f32 %v2321, %v5548
        %v5564 = vmul.f32 %v2475, %v5552
        %v5565 = vmul.f32 %v2629, %v5556
        %v5566 = vadd.f32 %v5518, %v5558
        %v5567 = vadd.f32 %v5519, %v5559
        %v5568 = vadd.f32 %v5520, %v5560
        %v5569 = vadd.f32 %v5521, %v5561
        %v5570 = vadd.f32 %v5522, %v5562
        %v5571 = vadd.f32 %v5523, %v5563
        %v5572 = vadd.f32 %v5524, %v5564
        %v5573 = vadd.f32 %v5525, %v5565
        %v5574 = vmul.f32 %v1551, %v5488
        %v5575 = vmul.f32 %v1705, %v5492
        %v5576 = vmul.f32 %v1859, %v5496
        %v5577 = vmul.f32 %v2013, %v5500
        %v5578 = vmul.f32 %v2167, %v5504
        %v5579 = vmul.f32 %v2321, %v5508
        %v5580 = vmul.f32 %v2475, %v5512
        %v5581 = vmul.f32 %v2629, %v5516
        %v5582 = vmul.f32 %v312, %v5528
        %v5583 = vmul.f32 %v467, %v5532
        %v5584 = vmul.f32 %v622, %v5536
        %v5585 = vmul.f32 %v777, %v5540
        %v5586 = vmul.f32 %v932, %v5544
        %v5587 = vmul.f32 %v1087, %v5548
        %v5588 = vmul.f32 %v1242, %v5552
        %v5589 = vmul.f32 %v1397, %v5556
        %v5590 = vsub.f32 %v5574, %v5582
        %v5591 = vsub.f32 %v5575, %v5583
        %v5592 = vsub.f32 %v5576, %v5584
        %v5593 = vsub.f32 %v5577, %v5585
        %v5594 = vsub.f32 %v5578, %v5586
        %v5595 = vsub.f32 %v5579, %v5587
        %v5596 = vsub.f32 %v5580, %v5588
        %v5597 = vsub.f32 %v5581, %v5589
        %5598 = vset.pattern.permute.xlu0 3
        %5599 = vperm.xlu0 %5598, %v4070
        %v5600 = vpop.permute.xlu0 %5599
        %5602 = vset.pattern.permute.xlu0 3
        %5603 = vperm.xlu0 %5602, %v4224
        %v5604 = vpop.permute.xlu0 %5603
        %5606 = vset.pattern.permute.xlu0 3
        %5607 = vperm.xlu0 %5606, %v4378
        %v5608 = vpop.permute.xlu0 %5607
        %5610 = vset.pattern.permute.xlu0 3
        %5611 = vperm.xlu0 %5610, %v4532
        %v5612 = vpop.permute.xlu0 %5611
        %5614 = vset.pattern.permute.xlu0 3
        %5615 = vperm.xlu0 %5614, %v4686
        %v5616 = vpop.permute.xlu0 %5615
        %5618 = vset.pattern.permute.xlu0 3
        %5619 = vperm.xlu0 %5618, %v4840
        %v5620 = vpop.permute.xlu0 %5619
        %5622 = vset.pattern.permute.xlu0 3
        %5623 = vperm.xlu0 %5622, %v4994
        %v5624 = vpop.permute.xlu0 %5623
        %5626 = vset.pattern.permute.xlu0 3
        %5627 = vperm.xlu0 %5626, %v5148
        %v5628 = vpop.permute.xlu0 %5627
        %v5630 = vmul.f32 %v312, %v5600
        %v5631 = vmul.f32 %v467, %v5604
        %v5632 = vmul.f32 %v622, %v5608
        %v5633 = vmul.f32 %v777, %v5612
        %v5634 = vmul.f32 %v932, %v5616
        %v5635 = vmul.f32 %v1087, %v5620
        %v5636 = vmul.f32 %v1242, %v5624
        %v5637 = vmul.f32 %v1397, %v5628
        %5638 = vset.pattern.permute.xlu0 3
        %5639 = vperm.xlu0 %5638, %v2831
        %v5640 = vpop.permute.xlu0 %5639
        %5642 = vset.pattern.permute.xlu0 3
        %5643 = vperm.xlu0 %5642, %v2986
        %v5644 = vpop.permute.xlu0 %5643
        %5646 = vset.pattern.permute.xlu0 3
        %5647 = vperm.xlu0 %5646, %v3141
        %v5648 = vpop.permute.xlu0 %5647
        %5650 = vset.pattern.permute.xlu0 3
        %5651 = vperm.xlu0 %5650, %v3296
        %v5652 = vpop.permute.xlu0 %5651
        %5654 = vset.pattern.permute.xlu0 3
        %5655 = vperm.xlu0 %5654, %v3451
        %v5656 = vpop.permute.xlu0 %5655
        %5658 = vset.pattern.permute.xlu0 3
        %5659 = vperm.xlu0 %5658, %v3606
        %v5660 = vpop.permute.xlu0 %5659
        %5662 = vset.pattern.permute.xlu0 3
        %5663 = vperm.xlu0 %5662, %v3761
        %v5664 = vpop.permute.xlu0 %5663
        %5666 = vset.pattern.permute.xlu0 3
        %5667 = vperm.xlu0 %5666, %v3916
        %v5668 = vpop.permute.xlu0 %5667
        %v5670 = vmul.f32 %v1551, %v5640
        %v5671 = vmul.f32 %v1705, %v5644
        %v5672 = vmul.f32 %v1859, %v5648
        %v5673 = vmul.f32 %v2013, %v5652
        %v5674 = vmul.f32 %v2167, %v5656
        %v5675 = vmul.f32 %v2321, %v5660
        %v5676 = vmul.f32 %v2475, %v5664
        %v5677 = vmul.f32 %v2629, %v5668
        %v5678 = vadd.f32 %v5630, %v5670
        %v5679 = vadd.f32 %v5631, %v5671
        %v5680 = vadd.f32 %v5632, %v5672
        %v5681 = vadd.f32 %v5633, %v5673
        %v5682 = vadd.f32 %v5634, %v5674
        %v5683 = vadd.f32 %v5635, %v5675
        %v5684 = vadd.f32 %v5636, %v5676
        %v5685 = vadd.f32 %v5637, %v5677
        %v5686 = vmul.f32 %v1551, %v5600
        %v5687 = vmul.f32 %v1705, %v5604
        %v5688 = vmul.f32 %v1859, %v5608
        %v5689 = vmul.f32 %v2013, %v5612
        %v5690 = vmul.f32 %v2167, %v5616
        %v5691 = vmul.f32 %v2321, %v5620
        %v5692 = vmul.f32 %v2475, %v5624
        %v5693 = vmul.f32 %v2629, %v5628
        %v5694 = vmul.f32 %v312, %v5640
        %v5695 = vmul.f32 %v467, %v5644
        %v5696 = vmul.f32 %v622, %v5648
        %v5697 = vmul.f32 %v777, %v5652
        %v5698 = vmul.f32 %v932, %v5656
        %v5699 = vmul.f32 %v1087, %v5660
        %v5700 = vmul.f32 %v1242, %v5664
        %v5701 = vmul.f32 %v1397, %v5668
        %v5702 = vsub.f32 %v5686, %v5694
        %v5703 = vsub.f32 %v5687, %v5695
        %v5704 = vsub.f32 %v5688, %v5696
        %v5705 = vsub.f32 %v5689, %v5697
        %v5706 = vsub.f32 %v5690, %v5698
        %v5707 = vsub.f32 %v5691, %v5699
        %v5708 = vsub.f32 %v5692, %v5700
        %v5709 = vsub.f32 %v5693, %v5701
        %5718 = vrot.lane.b32.xlu0 %v5678, 64
        %v5719 = vpop.permute.xlu0 %5718
        %5720 = vrot.lane.b32.xlu0 %v5679, 64
        %v5721 = vpop.permute.xlu0 %5720
        %5722 = vrot.lane.b32.xlu0 %v5680, 64
        %v5723 = vpop.permute.xlu0 %5722
        %5724 = vrot.lane.b32.xlu0 %v5681, 64
        %v5725 = vpop.permute.xlu0 %5724
        %5726 = vrot.lane.b32.xlu0 %v5682, 64
        %v5727 = vpop.permute.xlu0 %5726
        %5728 = vrot.lane.b32.xlu0 %v5683, 64
        %v5729 = vpop.permute.xlu0 %5728
        %5730 = vrot.lane.b32.xlu0 %v5684, 64
        %v5731 = vpop.permute.xlu0 %5730
        %5732 = vrot.lane.b32.xlu0 %v5685, 64
        %v5733 = vpop.permute.xlu0 %5732
        %v5742 = vsel %vm5421, %v5566, %v5719
        %v5743 = vsel %vm5421, %v5567, %v5721
        %v5744 = vsel %vm5421, %v5568, %v5723
        %v5745 = vsel %vm5421, %v5569, %v5725
        %v5746 = vsel %vm5421, %v5570, %v5727
        %v5747 = vsel %vm5421, %v5571, %v5729
        %v5748 = vsel %vm5421, %v5572, %v5731
        %v5749 = vsel %vm5421, %v5573, %v5733
        %5758 = vrot.lane.b32.xlu0 %v5702, 64
        %v5759 = vpop.permute.xlu0 %5758
        %5760 = vrot.lane.b32.xlu0 %v5703, 64
        %v5761 = vpop.permute.xlu0 %5760
        %5762 = vrot.lane.b32.xlu0 %v5704, 64
        %v5763 = vpop.permute.xlu0 %5762
        %5764 = vrot.lane.b32.xlu0 %v5705, 64
        %v5765 = vpop.permute.xlu0 %5764
        %5766 = vrot.lane.b32.xlu0 %v5706, 64
        %v5767 = vpop.permute.xlu0 %5766
        %5768 = vrot.lane.b32.xlu0 %v5707, 64
        %v5769 = vpop.permute.xlu0 %5768
        %5770 = vrot.lane.b32.xlu0 %v5708, 64
        %v5771 = vpop.permute.xlu0 %5770
        %5772 = vrot.lane.b32.xlu0 %v5709, 64
        %v5773 = vpop.permute.xlu0 %5772
        %v5782 = vsel %vm5421, %v5590, %v5759
        %v5783 = vsel %vm5421, %v5591, %v5761
        %v5784 = vsel %vm5421, %v5592, %v5763
        %v5785 = vsel %vm5421, %v5593, %v5765
        %v5786 = vsel %vm5421, %v5594, %v5767
        %v5787 = vsel %vm5421, %v5595, %v5769
        %v5788 = vsel %vm5421, %v5596, %v5771
        %v5789 = vsel %vm5421, %v5597, %v5773
        %5790 = vst [vmem:[%s94 + $0x8] sm:$0xff] %v5742
        %5791 = vst [vmem:[%s94 + $0x88] sm:$0xff] %v5743
        %5792 = vst [vmem:[%s94 + $0x108] sm:$0xff] %v5744
        %5793 = vst [vmem:[%s94 + $0x188] sm:$0xff] %v5745
        %5794 = vst [vmem:[%s94 + $0x208] sm:$0xff] %v5746
        %5795 = vst [vmem:[%s94 + $0x288] sm:$0xff] %v5747
        %5796 = vst [vmem:[%s94 + $0x308] sm:$0xff] %v5748
        %5797 = vst [vmem:[%s94 + $0x388] sm:$0xff] %v5749
        %5798 = vst [vmem:[%s94 + $0x408] sm:$0xff] %v5782
        %5799 = vst [vmem:[%s94 + $0x488] sm:$0xff] %v5783
        %5800 = vst [vmem:[%s94 + $0x508] sm:$0xff] %v5784
        %5801 = vst [vmem:[%s94 + $0x588] sm:$0xff] %v5785
        %5802 = vst [vmem:[%s94 + $0x608] sm:$0xff] %v5786
        %5803 = vst [vmem:[%s94 + $0x688] sm:$0xff] %v5787
        %5804 = vst [vmem:[%s94 + $0x708] sm:$0xff] %v5788
        %5805 = vst [vmem:[%s94 + $0x788] sm:$0xff] %v5789
        %5806 = vset.pattern.permute.xlu0 4
        %5807 = vperm.xlu0 %5806, %v4070
        %v5808 = vpop.permute.xlu0 %5807
        %5810 = vset.pattern.permute.xlu0 4
        %5811 = vperm.xlu0 %5810, %v4224
        %v5812 = vpop.permute.xlu0 %5811
        %5814 = vset.pattern.permute.xlu0 4
        %5815 = vperm.xlu0 %5814, %v4378
        %v5816 = vpop.permute.xlu0 %5815
        %5818 = vset.pattern.permute.xlu0 4
        %5819 = vperm.xlu0 %5818, %v4532
        %v5820 = vpop.permute.xlu0 %5819
        %5822 = vset.pattern.permute.xlu0 4
        %5823 = vperm.xlu0 %5822, %v4686
        %v5824 = vpop.permute.xlu0 %5823
        %5826 = vset.pattern.permute.xlu0 4
        %5827 = vperm.xlu0 %5826, %v4840
        %v5828 = vpop.permute.xlu0 %5827
        %5830 = vset.pattern.permute.xlu0 4
        %5831 = vperm.xlu0 %5830, %v4994
        %v5832 = vpop.permute.xlu0 %5831
        %5834 = vset.pattern.permute.xlu0 4
        %5835 = vperm.xlu0 %5834, %v5148
        %v5836 = vpop.permute.xlu0 %5835
        %v5838 = vmul.f32 %v312, %v5808
        %v5839 = vmul.f32 %v467, %v5812
        %v5840 = vmul.f32 %v622, %v5816
        %v5841 = vmul.f32 %v777, %v5820
        %v5842 = vmul.f32 %v932, %v5824
        %v5843 = vmul.f32 %v1087, %v5828
        %v5844 = vmul.f32 %v1242, %v5832
        %v5845 = vmul.f32 %v1397, %v5836
        %5846 = vset.pattern.permute.xlu0 4
        %5847 = vperm.xlu0 %5846, %v2831
        %v5848 = vpop.permute.xlu0 %5847
        %5850 = vset.pattern.permute.xlu0 4
        %5851 = vperm.xlu0 %5850, %v2986
        %v5852 = vpop.permute.xlu0 %5851
        %5854 = vset.pattern.permute.xlu0 4
        %5855 = vperm.xlu0 %5854, %v3141
        %v5856 = vpop.permute.xlu0 %5855
        %5858 = vset.pattern.permute.xlu0 4
        %5859 = vperm.xlu0 %5858, %v3296
        %v5860 = vpop.permute.xlu0 %5859
        %5862 = vset.pattern.permute.xlu0 4
        %5863 = vperm.xlu0 %5862, %v3451
        %v5864 = vpop.permute.xlu0 %5863
        %5866 = vset.pattern.permute.xlu0 4
        %5867 = vperm.xlu0 %5866, %v3606
        %v5868 = vpop.permute.xlu0 %5867
        %5870 = vset.pattern.permute.xlu0 4
        %5871 = vperm.xlu0 %5870, %v3761
        %v5872 = vpop.permute.xlu0 %5871
        %5874 = vset.pattern.permute.xlu0 4
        %5875 = vperm.xlu0 %5874, %v3916
        %v5876 = vpop.permute.xlu0 %5875
        %v5878 = vmul.f32 %v1551, %v5848
        %v5879 = vmul.f32 %v1705, %v5852
        %v5880 = vmul.f32 %v1859, %v5856
        %v5881 = vmul.f32 %v2013, %v5860
        %v5882 = vmul.f32 %v2167, %v5864
        %v5883 = vmul.f32 %v2321, %v5868
        %v5884 = vmul.f32 %v2475, %v5872
        %v5885 = vmul.f32 %v2629, %v5876
        %v5886 = vadd.f32 %v5838, %v5878
        %v5887 = vadd.f32 %v5839, %v5879
        %v5888 = vadd.f32 %v5840, %v5880
        %v5889 = vadd.f32 %v5841, %v5881
        %v5890 = vadd.f32 %v5842, %v5882
        %v5891 = vadd.f32 %v5843, %v5883
        %v5892 = vadd.f32 %v5844, %v5884
        %v5893 = vadd.f32 %v5845, %v5885
        %v5894 = vmul.f32 %v1551, %v5808
        %v5895 = vmul.f32 %v1705, %v5812
        %v5896 = vmul.f32 %v1859, %v5816
        %v5897 = vmul.f32 %v2013, %v5820
        %v5898 = vmul.f32 %v2167, %v5824
        %v5899 = vmul.f32 %v2321, %v5828
        %v5900 = vmul.f32 %v2475, %v5832
        %v5901 = vmul.f32 %v2629, %v5836
        %v5902 = vmul.f32 %v312, %v5848
        %v5903 = vmul.f32 %v467, %v5852
        %v5904 = vmul.f32 %v622, %v5856
        %v5905 = vmul.f32 %v777, %v5860
        %v5906 = vmul.f32 %v932, %v5864
        %v5907 = vmul.f32 %v1087, %v5868
        %v5908 = vmul.f32 %v1242, %v5872
        %v5909 = vmul.f32 %v1397, %v5876
        %v5910 = vsub.f32 %v5894, %v5902
        %v5911 = vsub.f32 %v5895, %v5903
        %v5912 = vsub.f32 %v5896, %v5904
        %v5913 = vsub.f32 %v5897, %v5905
        %v5914 = vsub.f32 %v5898, %v5906
        %v5915 = vsub.f32 %v5899, %v5907
        %v5916 = vsub.f32 %v5900, %v5908
        %v5917 = vsub.f32 %v5901, %v5909
        %5918 = vset.pattern.permute.xlu0 5
        %5919 = vperm.xlu0 %5918, %v4070
        %v5920 = vpop.permute.xlu0 %5919
        %5922 = vset.pattern.permute.xlu0 5
        %5923 = vperm.xlu0 %5922, %v4224
        %v5924 = vpop.permute.xlu0 %5923
        %5926 = vset.pattern.permute.xlu0 5
        %5927 = vperm.xlu0 %5926, %v4378
        %v5928 = vpop.permute.xlu0 %5927
        %5930 = vset.pattern.permute.xlu0 5
        %5931 = vperm.xlu0 %5930, %v4532
        %v5932 = vpop.permute.xlu0 %5931
        %5934 = vset.pattern.permute.xlu0 5
        %5935 = vperm.xlu0 %5934, %v4686
        %v5936 = vpop.permute.xlu0 %5935
        %5938 = vset.pattern.permute.xlu0 5
        %5939 = vperm.xlu0 %5938, %v4840
        %v5940 = vpop.permute.xlu0 %5939
        %5942 = vset.pattern.permute.xlu0 5
        %5943 = vperm.xlu0 %5942, %v4994
        %v5944 = vpop.permute.xlu0 %5943
        %5946 = vset.pattern.permute.xlu0 5
        %5947 = vperm.xlu0 %5946, %v5148
        %v5948 = vpop.permute.xlu0 %5947
        %v5950 = vmul.f32 %v312, %v5920
        %v5951 = vmul.f32 %v467, %v5924
        %v5952 = vmul.f32 %v622, %v5928
        %v5953 = vmul.f32 %v777, %v5932
        %v5954 = vmul.f32 %v932, %v5936
        %v5955 = vmul.f32 %v1087, %v5940
        %v5956 = vmul.f32 %v1242, %v5944
        %v5957 = vmul.f32 %v1397, %v5948
        %5958 = vset.pattern.permute.xlu0 5
        %5959 = vperm.xlu0 %5958, %v2831
        %v5960 = vpop.permute.xlu0 %5959
        %5962 = vset.pattern.permute.xlu0 5
        %5963 = vperm.xlu0 %5962, %v2986
        %v5964 = vpop.permute.xlu0 %5963
        %5966 = vset.pattern.permute.xlu0 5
        %5967 = vperm.xlu0 %5966, %v3141
        %v5968 = vpop.permute.xlu0 %5967
        %5970 = vset.pattern.permute.xlu0 5
        %5971 = vperm.xlu0 %5970, %v3296
        %v5972 = vpop.permute.xlu0 %5971
        %5974 = vset.pattern.permute.xlu0 5
        %5975 = vperm.xlu0 %5974, %v3451
        %v5976 = vpop.permute.xlu0 %5975
        %5978 = vset.pattern.permute.xlu0 5
        %5979 = vperm.xlu0 %5978, %v3606
        %v5980 = vpop.permute.xlu0 %5979
        %5982 = vset.pattern.permute.xlu0 5
        %5983 = vperm.xlu0 %5982, %v3761
        %v5984 = vpop.permute.xlu0 %5983
        %5986 = vset.pattern.permute.xlu0 5
        %5987 = vperm.xlu0 %5986, %v3916
        %v5988 = vpop.permute.xlu0 %5987
        %v5990 = vmul.f32 %v1551, %v5960
        %v5991 = vmul.f32 %v1705, %v5964
        %v5992 = vmul.f32 %v1859, %v5968
        %v5993 = vmul.f32 %v2013, %v5972
        %v5994 = vmul.f32 %v2167, %v5976
        %v5995 = vmul.f32 %v2321, %v5980
        %v5996 = vmul.f32 %v2475, %v5984
        %v5997 = vmul.f32 %v2629, %v5988
        %v5998 = vadd.f32 %v5950, %v5990
        %v5999 = vadd.f32 %v5951, %v5991
        %v6000 = vadd.f32 %v5952, %v5992
        %v6001 = vadd.f32 %v5953, %v5993
        %v6002 = vadd.f32 %v5954, %v5994
        %v6003 = vadd.f32 %v5955, %v5995
        %v6004 = vadd.f32 %v5956, %v5996
        %v6005 = vadd.f32 %v5957, %v5997
        %v6006 = vmul.f32 %v1551, %v5920
        %v6007 = vmul.f32 %v1705, %v5924
        %v6008 = vmul.f32 %v1859, %v5928
        %v6009 = vmul.f32 %v2013, %v5932
        %v6010 = vmul.f32 %v2167, %v5936
        %v6011 = vmul.f32 %v2321, %v5940
        %v6012 = vmul.f32 %v2475, %v5944
        %v6013 = vmul.f32 %v2629, %v5948
        %v6014 = vmul.f32 %v312, %v5960
        %v6015 = vmul.f32 %v467, %v5964
        %v6016 = vmul.f32 %v622, %v5968
        %v6017 = vmul.f32 %v777, %v5972
        %v6018 = vmul.f32 %v932, %v5976
        %v6019 = vmul.f32 %v1087, %v5980
        %v6020 = vmul.f32 %v1242, %v5984
        %v6021 = vmul.f32 %v1397, %v5988
        %v6022 = vsub.f32 %v6006, %v6014
        %v6023 = vsub.f32 %v6007, %v6015
        %v6024 = vsub.f32 %v6008, %v6016
        %v6025 = vsub.f32 %v6009, %v6017
        %v6026 = vsub.f32 %v6010, %v6018
        %v6027 = vsub.f32 %v6011, %v6019
        %v6028 = vsub.f32 %v6012, %v6020
        %v6029 = vsub.f32 %v6013, %v6021
        %6038 = vrot.lane.b32.xlu0 %v5998, 64
        %v6039 = vpop.permute.xlu0 %6038
        %6040 = vrot.lane.b32.xlu0 %v5999, 64
        %v6041 = vpop.permute.xlu0 %6040
        %6042 = vrot.lane.b32.xlu0 %v6000, 64
        %v6043 = vpop.permute.xlu0 %6042
        %6044 = vrot.lane.b32.xlu0 %v6001, 64
        %v6045 = vpop.permute.xlu0 %6044
        %6046 = vrot.lane.b32.xlu0 %v6002, 64
        %v6047 = vpop.permute.xlu0 %6046
        %6048 = vrot.lane.b32.xlu0 %v6003, 64
        %v6049 = vpop.permute.xlu0 %6048
        %6050 = vrot.lane.b32.xlu0 %v6004, 64
        %v6051 = vpop.permute.xlu0 %6050
        %6052 = vrot.lane.b32.xlu0 %v6005, 64
        %v6053 = vpop.permute.xlu0 %6052
        %v6062 = vsel %vm5421, %v5886, %v6039
        %v6063 = vsel %vm5421, %v5887, %v6041
        %v6064 = vsel %vm5421, %v5888, %v6043
        %v6065 = vsel %vm5421, %v5889, %v6045
        %v6066 = vsel %vm5421, %v5890, %v6047
        %v6067 = vsel %vm5421, %v5891, %v6049
        %v6068 = vsel %vm5421, %v5892, %v6051
        %v6069 = vsel %vm5421, %v5893, %v6053
        %6078 = vrot.lane.b32.xlu0 %v6022, 64
        %v6079 = vpop.permute.xlu0 %6078
        %6080 = vrot.lane.b32.xlu0 %v6023, 64
        %v6081 = vpop.permute.xlu0 %6080
        %6082 = vrot.lane.b32.xlu0 %v6024, 64
        %v6083 = vpop.permute.xlu0 %6082
        %6084 = vrot.lane.b32.xlu0 %v6025, 64
        %v6085 = vpop.permute.xlu0 %6084
        %6086 = vrot.lane.b32.xlu0 %v6026, 64
        %v6087 = vpop.permute.xlu0 %6086
        %6088 = vrot.lane.b32.xlu0 %v6027, 64
        %v6089 = vpop.permute.xlu0 %6088
        %6090 = vrot.lane.b32.xlu0 %v6028, 64
        %v6091 = vpop.permute.xlu0 %6090
        %6092 = vrot.lane.b32.xlu0 %v6029, 64
        %v6093 = vpop.permute.xlu0 %6092
        %v6102 = vsel %vm5421, %v5910, %v6079
        %v6103 = vsel %vm5421, %v5911, %v6081
        %v6104 = vsel %vm5421, %v5912, %v6083
        %v6105 = vsel %vm5421, %v5913, %v6085
        %v6106 = vsel %vm5421, %v5914, %v6087
        %v6107 = vsel %vm5421, %v5915, %v6089
        %v6108 = vsel %vm5421, %v5916, %v6091
        %v6109 = vsel %vm5421, %v5917, %v6093
        %6110 = vst [vmem:[%s94 + $0x10] sm:$0xff] %v6062
        %6111 = vst [vmem:[%s94 + $0x90] sm:$0xff] %v6063
        %6112 = vst [vmem:[%s94 + $0x110] sm:$0xff] %v6064
        %6113 = vst [vmem:[%s94 + $0x190] sm:$0xff] %v6065
        %6114 = vst [vmem:[%s94 + $0x210] sm:$0xff] %v6066
        %6115 = vst [vmem:[%s94 + $0x290] sm:$0xff] %v6067
        %6116 = vst [vmem:[%s94 + $0x310] sm:$0xff] %v6068
        %6117 = vst [vmem:[%s94 + $0x390] sm:$0xff] %v6069
        %6118 = vst [vmem:[%s94 + $0x410] sm:$0xff] %v6102
        %6119 = vst [vmem:[%s94 + $0x490] sm:$0xff] %v6103
        %6120 = vst [vmem:[%s94 + $0x510] sm:$0xff] %v6104
        %6121 = vst [vmem:[%s94 + $0x590] sm:$0xff] %v6105
        %6122 = vst [vmem:[%s94 + $0x610] sm:$0xff] %v6106
        %6123 = vst [vmem:[%s94 + $0x690] sm:$0xff] %v6107
        %6124 = vst [vmem:[%s94 + $0x710] sm:$0xff] %v6108
        %6125 = vst [vmem:[%s94 + $0x790] sm:$0xff] %v6109
        %6126 = vset.pattern.permute.xlu0 6
        %6127 = vperm.xlu0 %6126, %v4070
        %v6128 = vpop.permute.xlu0 %6127
        %6130 = vset.pattern.permute.xlu0 6
        %6131 = vperm.xlu0 %6130, %v4224
        %v6132 = vpop.permute.xlu0 %6131
        %6134 = vset.pattern.permute.xlu0 6
        %6135 = vperm.xlu0 %6134, %v4378
        %v6136 = vpop.permute.xlu0 %6135
        %6138 = vset.pattern.permute.xlu0 6
        %6139 = vperm.xlu0 %6138, %v4532
        %v6140 = vpop.permute.xlu0 %6139
        %6142 = vset.pattern.permute.xlu0 6
        %6143 = vperm.xlu0 %6142, %v4686
        %v6144 = vpop.permute.xlu0 %6143
        %6146 = vset.pattern.permute.xlu0 6
        %6147 = vperm.xlu0 %6146, %v4840
        %v6148 = vpop.permute.xlu0 %6147
        %6150 = vset.pattern.permute.xlu0 6
        %6151 = vperm.xlu0 %6150, %v4994
        %v6152 = vpop.permute.xlu0 %6151
        %6154 = vset.pattern.permute.xlu0 6
        %6155 = vperm.xlu0 %6154, %v5148
        %v6156 = vpop.permute.xlu0 %6155
        %v6158 = vmul.f32 %v312, %v6128
        %v6159 = vmul.f32 %v467, %v6132
        %v6160 = vmul.f32 %v622, %v6136
        %v6161 = vmul.f32 %v777, %v6140
        %v6162 = vmul.f32 %v932, %v6144
        %v6163 = vmul.f32 %v1087, %v6148
        %v6164 = vmul.f32 %v1242, %v6152
        %v6165 = vmul.f32 %v1397, %v6156
        %6166 = vset.pattern.permute.xlu0 6
        %6167 = vperm.xlu0 %6166, %v2831
        %v6168 = vpop.permute.xlu0 %6167
        %6170 = vset.pattern.permute.xlu0 6
        %6171 = vperm.xlu0 %6170, %v2986
        %v6172 = vpop.permute.xlu0 %6171
        %6174 = vset.pattern.permute.xlu0 6
        %6175 = vperm.xlu0 %6174, %v3141
        %v6176 = vpop.permute.xlu0 %6175
        %6178 = vset.pattern.permute.xlu0 6
        %6179 = vperm.xlu0 %6178, %v3296
        %v6180 = vpop.permute.xlu0 %6179
        %6182 = vset.pattern.permute.xlu0 6
        %6183 = vperm.xlu0 %6182, %v3451
        %v6184 = vpop.permute.xlu0 %6183
        %6186 = vset.pattern.permute.xlu0 6
        %6187 = vperm.xlu0 %6186, %v3606
        %v6188 = vpop.permute.xlu0 %6187
        %6190 = vset.pattern.permute.xlu0 6
        %6191 = vperm.xlu0 %6190, %v3761
        %v6192 = vpop.permute.xlu0 %6191
        %6194 = vset.pattern.permute.xlu0 6
        %6195 = vperm.xlu0 %6194, %v3916
        %v6196 = vpop.permute.xlu0 %6195
        %v6198 = vmul.f32 %v1551, %v6168
        %v6199 = vmul.f32 %v1705, %v6172
        %v6200 = vmul.f32 %v1859, %v6176
        %v6201 = vmul.f32 %v2013, %v6180
        %v6202 = vmul.f32 %v2167, %v6184
        %v6203 = vmul.f32 %v2321, %v6188
        %v6204 = vmul.f32 %v2475, %v6192
        %v6205 = vmul.f32 %v2629, %v6196
        %v6206 = vadd.f32 %v6158, %v6198
        %v6207 = vadd.f32 %v6159, %v6199
        %v6208 = vadd.f32 %v6160, %v6200
        %v6209 = vadd.f32 %v6161, %v6201
        %v6210 = vadd.f32 %v6162, %v6202
        %v6211 = vadd.f32 %v6163, %v6203
        %v6212 = vadd.f32 %v6164, %v6204
        %v6213 = vadd.f32 %v6165, %v6205
        %v6214 = vmul.f32 %v1551, %v6128
        %v6215 = vmul.f32 %v1705, %v6132
        %v6216 = vmul.f32 %v1859, %v6136
        %v6217 = vmul.f32 %v2013, %v6140
        %v6218 = vmul.f32 %v2167, %v6144
        %v6219 = vmul.f32 %v2321, %v6148
        %v6220 = vmul.f32 %v2475, %v6152
        %v6221 = vmul.f32 %v2629, %v6156
        %v6222 = vmul.f32 %v312, %v6168
        %v6223 = vmul.f32 %v467, %v6172
        %v6224 = vmul.f32 %v622, %v6176
        %v6225 = vmul.f32 %v777, %v6180
        %v6226 = vmul.f32 %v932, %v6184
        %v6227 = vmul.f32 %v1087, %v6188
        %v6228 = vmul.f32 %v1242, %v6192
        %v6229 = vmul.f32 %v1397, %v6196
        %v6230 = vsub.f32 %v6214, %v6222
        %v6231 = vsub.f32 %v6215, %v6223
        %v6232 = vsub.f32 %v6216, %v6224
        %v6233 = vsub.f32 %v6217, %v6225
        %v6234 = vsub.f32 %v6218, %v6226
        %v6235 = vsub.f32 %v6219, %v6227
        %v6236 = vsub.f32 %v6220, %v6228
        %v6237 = vsub.f32 %v6221, %v6229
        %6238 = vset.pattern.permute.xlu0 7
        %6239 = vperm.xlu0 %6238, %v4070
        %v6240 = vpop.permute.xlu0 %6239
        %6242 = vset.pattern.permute.xlu0 7
        %6243 = vperm.xlu0 %6242, %v4224
        %v6244 = vpop.permute.xlu0 %6243
        %6246 = vset.pattern.permute.xlu0 7
        %6247 = vperm.xlu0 %6246, %v4378
        %v6248 = vpop.permute.xlu0 %6247
        %6250 = vset.pattern.permute.xlu0 7
        %6251 = vperm.xlu0 %6250, %v4532
        %v6252 = vpop.permute.xlu0 %6251
        %6254 = vset.pattern.permute.xlu0 7
        %6255 = vperm.xlu0 %6254, %v4686
        %v6256 = vpop.permute.xlu0 %6255
        %6258 = vset.pattern.permute.xlu0 7
        %6259 = vperm.xlu0 %6258, %v4840
        %v6260 = vpop.permute.xlu0 %6259
        %6262 = vset.pattern.permute.xlu0 7
        %6263 = vperm.xlu0 %6262, %v4994
        %v6264 = vpop.permute.xlu0 %6263
        %6266 = vset.pattern.permute.xlu0 7
        %6267 = vperm.xlu0 %6266, %v5148
        %v6268 = vpop.permute.xlu0 %6267
        %v6270 = vmul.f32 %v312, %v6240
        %v6271 = vmul.f32 %v467, %v6244
        %v6272 = vmul.f32 %v622, %v6248
        %v6273 = vmul.f32 %v777, %v6252
        %v6274 = vmul.f32 %v932, %v6256
        %v6275 = vmul.f32 %v1087, %v6260
        %v6276 = vmul.f32 %v1242, %v6264
        %v6277 = vmul.f32 %v1397, %v6268
        %6278 = vset.pattern.permute.xlu0 7
        %6279 = vperm.xlu0 %6278, %v2831
        %v6280 = vpop.permute.xlu0 %6279
        %6282 = vset.pattern.permute.xlu0 7
        %6283 = vperm.xlu0 %6282, %v2986
        %v6284 = vpop.permute.xlu0 %6283
        %6286 = vset.pattern.permute.xlu0 7
        %6287 = vperm.xlu0 %6286, %v3141
        %v6288 = vpop.permute.xlu0 %6287
        %6290 = vset.pattern.permute.xlu0 7
        %6291 = vperm.xlu0 %6290, %v3296
        %v6292 = vpop.permute.xlu0 %6291
        %6294 = vset.pattern.permute.xlu0 7
        %6295 = vperm.xlu0 %6294, %v3451
        %v6296 = vpop.permute.xlu0 %6295
        %6298 = vset.pattern.permute.xlu0 7
        %6299 = vperm.xlu0 %6298, %v3606
        %v6300 = vpop.permute.xlu0 %6299
        %6302 = vset.pattern.permute.xlu0 7
        %6303 = vperm.xlu0 %6302, %v3761
        %v6304 = vpop.permute.xlu0 %6303
        %6306 = vset.pattern.permute.xlu0 7
        %6307 = vperm.xlu0 %6306, %v3916
        %v6308 = vpop.permute.xlu0 %6307
        %v6310 = vmul.f32 %v1551, %v6280
        %v6311 = vmul.f32 %v1705, %v6284
        %v6312 = vmul.f32 %v1859, %v6288
        %v6313 = vmul.f32 %v2013, %v6292
        %v6314 = vmul.f32 %v2167, %v6296
        %v6315 = vmul.f32 %v2321, %v6300
        %v6316 = vmul.f32 %v2475, %v6304
        %v6317 = vmul.f32 %v2629, %v6308
        %v6318 = vadd.f32 %v6270, %v6310
        %v6319 = vadd.f32 %v6271, %v6311
        %v6320 = vadd.f32 %v6272, %v6312
        %v6321 = vadd.f32 %v6273, %v6313
        %v6322 = vadd.f32 %v6274, %v6314
        %v6323 = vadd.f32 %v6275, %v6315
        %v6324 = vadd.f32 %v6276, %v6316
        %v6325 = vadd.f32 %v6277, %v6317
        %v6326 = vmul.f32 %v1551, %v6240
        %v6327 = vmul.f32 %v1705, %v6244
        %v6328 = vmul.f32 %v1859, %v6248
        %v6329 = vmul.f32 %v2013, %v6252
        %v6330 = vmul.f32 %v2167, %v6256
        %v6331 = vmul.f32 %v2321, %v6260
        %v6332 = vmul.f32 %v2475, %v6264
        %v6333 = vmul.f32 %v2629, %v6268
        %v6334 = vmul.f32 %v312, %v6280
        %v6335 = vmul.f32 %v467, %v6284
        %v6336 = vmul.f32 %v622, %v6288
        %v6337 = vmul.f32 %v777, %v6292
        %v6338 = vmul.f32 %v932, %v6296
        %v6339 = vmul.f32 %v1087, %v6300
        %v6340 = vmul.f32 %v1242, %v6304
        %v6341 = vmul.f32 %v1397, %v6308
        %v6342 = vsub.f32 %v6326, %v6334
        %v6343 = vsub.f32 %v6327, %v6335
        %v6344 = vsub.f32 %v6328, %v6336
        %v6345 = vsub.f32 %v6329, %v6337
        %v6346 = vsub.f32 %v6330, %v6338
        %v6347 = vsub.f32 %v6331, %v6339
        %v6348 = vsub.f32 %v6332, %v6340
        %v6349 = vsub.f32 %v6333, %v6341
        %6358 = vrot.lane.b32.xlu0 %v6318, 64
        %v6359 = vpop.permute.xlu0 %6358
        %6360 = vrot.lane.b32.xlu0 %v6319, 64
        %v6361 = vpop.permute.xlu0 %6360
        %6362 = vrot.lane.b32.xlu0 %v6320, 64
        %v6363 = vpop.permute.xlu0 %6362
        %6364 = vrot.lane.b32.xlu0 %v6321, 64
        %v6365 = vpop.permute.xlu0 %6364
        %6366 = vrot.lane.b32.xlu0 %v6322, 64
        %v6367 = vpop.permute.xlu0 %6366
        %6368 = vrot.lane.b32.xlu0 %v6323, 64
        %v6369 = vpop.permute.xlu0 %6368
        %6370 = vrot.lane.b32.xlu0 %v6324, 64
        %v6371 = vpop.permute.xlu0 %6370
        %6372 = vrot.lane.b32.xlu0 %v6325, 64
        %v6373 = vpop.permute.xlu0 %6372
        %v6382 = vsel %vm5421, %v6206, %v6359
        %v6383 = vsel %vm5421, %v6207, %v6361
        %v6384 = vsel %vm5421, %v6208, %v6363
        %v6385 = vsel %vm5421, %v6209, %v6365
        %v6386 = vsel %vm5421, %v6210, %v6367
        %v6387 = vsel %vm5421, %v6211, %v6369
        %v6388 = vsel %vm5421, %v6212, %v6371
        %v6389 = vsel %vm5421, %v6213, %v6373
        %6398 = vrot.lane.b32.xlu0 %v6342, 64
        %v6399 = vpop.permute.xlu0 %6398
        %6400 = vrot.lane.b32.xlu0 %v6343, 64
        %v6401 = vpop.permute.xlu0 %6400
        %6402 = vrot.lane.b32.xlu0 %v6344, 64
        %v6403 = vpop.permute.xlu0 %6402
        %6404 = vrot.lane.b32.xlu0 %v6345, 64
        %v6405 = vpop.permute.xlu0 %6404
        %6406 = vrot.lane.b32.xlu0 %v6346, 64
        %v6407 = vpop.permute.xlu0 %6406
        %6408 = vrot.lane.b32.xlu0 %v6347, 64
        %v6409 = vpop.permute.xlu0 %6408
        %6410 = vrot.lane.b32.xlu0 %v6348, 64
        %v6411 = vpop.permute.xlu0 %6410
        %6412 = vrot.lane.b32.xlu0 %v6349, 64
        %v6413 = vpop.permute.xlu0 %6412
        %v6422 = vsel %vm5421, %v6230, %v6399
        %v6423 = vsel %vm5421, %v6231, %v6401
        %v6424 = vsel %vm5421, %v6232, %v6403
        %v6425 = vsel %vm5421, %v6233, %v6405
        %v6426 = vsel %vm5421, %v6234, %v6407
        %v6427 = vsel %vm5421, %v6235, %v6409
        %v6428 = vsel %vm5421, %v6236, %v6411
        %v6429 = vsel %vm5421, %v6237, %v6413
        %6430 = vst [vmem:[%s94 + $0x18] sm:$0xff] %v6382
        %6431 = vst [vmem:[%s94 + $0x98] sm:$0xff] %v6383
        %6432 = vst [vmem:[%s94 + $0x118] sm:$0xff] %v6384
        %6433 = vst [vmem:[%s94 + $0x198] sm:$0xff] %v6385
        %6434 = vst [vmem:[%s94 + $0x218] sm:$0xff] %v6386
        %6435 = vst [vmem:[%s94 + $0x298] sm:$0xff] %v6387
        %6436 = vst [vmem:[%s94 + $0x318] sm:$0xff] %v6388
        %6437 = vst [vmem:[%s94 + $0x398] sm:$0xff] %v6389
        %6438 = vst [vmem:[%s94 + $0x418] sm:$0xff] %v6422
        %6439 = vst [vmem:[%s94 + $0x498] sm:$0xff] %v6423
        %6440 = vst [vmem:[%s94 + $0x518] sm:$0xff] %v6424
        %6441 = vst [vmem:[%s94 + $0x598] sm:$0xff] %v6425
        %6442 = vst [vmem:[%s94 + $0x618] sm:$0xff] %v6426
        %6443 = vst [vmem:[%s94 + $0x698] sm:$0xff] %v6427
        %6444 = vst [vmem:[%s94 + $0x718] sm:$0xff] %v6428
        %6445 = vst [vmem:[%s94 + $0x798] sm:$0xff] %v6429
        %6446 = vset.pattern.permute.xlu0 8
        %6447 = vperm.xlu0 %6446, %v4070
        %v6448 = vpop.permute.xlu0 %6447
        %6450 = vset.pattern.permute.xlu0 8
        %6451 = vperm.xlu0 %6450, %v4224
        %v6452 = vpop.permute.xlu0 %6451
        %6454 = vset.pattern.permute.xlu0 8
        %6455 = vperm.xlu0 %6454, %v4378
        %v6456 = vpop.permute.xlu0 %6455
        %6458 = vset.pattern.permute.xlu0 8
        %6459 = vperm.xlu0 %6458, %v4532
        %v6460 = vpop.permute.xlu0 %6459
        %6462 = vset.pattern.permute.xlu0 8
        %6463 = vperm.xlu0 %6462, %v4686
        %v6464 = vpop.permute.xlu0 %6463
        %6466 = vset.pattern.permute.xlu0 8
        %6467 = vperm.xlu0 %6466, %v4840
        %v6468 = vpop.permute.xlu0 %6467
        %6470 = vset.pattern.permute.xlu0 8
        %6471 = vperm.xlu0 %6470, %v4994
        %v6472 = vpop.permute.xlu0 %6471
        %6474 = vset.pattern.permute.xlu0 8
        %6475 = vperm.xlu0 %6474, %v5148
        %v6476 = vpop.permute.xlu0 %6475
        %v6478 = vmul.f32 %v312, %v6448
        %v6479 = vmul.f32 %v467, %v6452
        %v6480 = vmul.f32 %v622, %v6456
        %v6481 = vmul.f32 %v777, %v6460
        %v6482 = vmul.f32 %v932, %v6464
        %v6483 = vmul.f32 %v1087, %v6468
        %v6484 = vmul.f32 %v1242, %v6472
        %v6485 = vmul.f32 %v1397, %v6476
        %6486 = vset.pattern.permute.xlu0 8
        %6487 = vperm.xlu0 %6486, %v2831
        %v6488 = vpop.permute.xlu0 %6487
        %6490 = vset.pattern.permute.xlu0 8
        %6491 = vperm.xlu0 %6490, %v2986
        %v6492 = vpop.permute.xlu0 %6491
        %6494 = vset.pattern.permute.xlu0 8
        %6495 = vperm.xlu0 %6494, %v3141
        %v6496 = vpop.permute.xlu0 %6495
        %6498 = vset.pattern.permute.xlu0 8
        %6499 = vperm.xlu0 %6498, %v3296
        %v6500 = vpop.permute.xlu0 %6499
        %6502 = vset.pattern.permute.xlu0 8
        %6503 = vperm.xlu0 %6502, %v3451
        %v6504 = vpop.permute.xlu0 %6503
        %6506 = vset.pattern.permute.xlu0 8
        %6507 = vperm.xlu0 %6506, %v3606
        %v6508 = vpop.permute.xlu0 %6507
        %6510 = vset.pattern.permute.xlu0 8
        %6511 = vperm.xlu0 %6510, %v3761
        %v6512 = vpop.permute.xlu0 %6511
        %6514 = vset.pattern.permute.xlu0 8
        %6515 = vperm.xlu0 %6514, %v3916
        %v6516 = vpop.permute.xlu0 %6515
        %v6518 = vmul.f32 %v1551, %v6488
        %v6519 = vmul.f32 %v1705, %v6492
        %v6520 = vmul.f32 %v1859, %v6496
        %v6521 = vmul.f32 %v2013, %v6500
        %v6522 = vmul.f32 %v2167, %v6504
        %v6523 = vmul.f32 %v2321, %v6508
        %v6524 = vmul.f32 %v2475, %v6512
        %v6525 = vmul.f32 %v2629, %v6516
        %v6526 = vadd.f32 %v6478, %v6518
        %v6527 = vadd.f32 %v6479, %v6519
        %v6528 = vadd.f32 %v6480, %v6520
        %v6529 = vadd.f32 %v6481, %v6521
        %v6530 = vadd.f32 %v6482, %v6522
        %v6531 = vadd.f32 %v6483, %v6523
        %v6532 = vadd.f32 %v6484, %v6524
        %v6533 = vadd.f32 %v6485, %v6525
        %v6534 = vmul.f32 %v1551, %v6448
        %v6535 = vmul.f32 %v1705, %v6452
        %v6536 = vmul.f32 %v1859, %v6456
        %v6537 = vmul.f32 %v2013, %v6460
        %v6538 = vmul.f32 %v2167, %v6464
        %v6539 = vmul.f32 %v2321, %v6468
        %v6540 = vmul.f32 %v2475, %v6472
        %v6541 = vmul.f32 %v2629, %v6476
        %v6542 = vmul.f32 %v312, %v6488
        %v6543 = vmul.f32 %v467, %v6492
        %v6544 = vmul.f32 %v622, %v6496
        %v6545 = vmul.f32 %v777, %v6500
        %v6546 = vmul.f32 %v932, %v6504
        %v6547 = vmul.f32 %v1087, %v6508
        %v6548 = vmul.f32 %v1242, %v6512
        %v6549 = vmul.f32 %v1397, %v6516
        %v6550 = vsub.f32 %v6534, %v6542
        %v6551 = vsub.f32 %v6535, %v6543
        %v6552 = vsub.f32 %v6536, %v6544
        %v6553 = vsub.f32 %v6537, %v6545
        %v6554 = vsub.f32 %v6538, %v6546
        %v6555 = vsub.f32 %v6539, %v6547
        %v6556 = vsub.f32 %v6540, %v6548
        %v6557 = vsub.f32 %v6541, %v6549
        %6558 = vset.pattern.permute.xlu0 9
        %6559 = vperm.xlu0 %6558, %v4070
        %v6560 = vpop.permute.xlu0 %6559
        %6562 = vset.pattern.permute.xlu0 9
        %6563 = vperm.xlu0 %6562, %v4224
        %v6564 = vpop.permute.xlu0 %6563
        %6566 = vset.pattern.permute.xlu0 9
        %6567 = vperm.xlu0 %6566, %v4378
        %v6568 = vpop.permute.xlu0 %6567
        %6570 = vset.pattern.permute.xlu0 9
        %6571 = vperm.xlu0 %6570, %v4532
        %v6572 = vpop.permute.xlu0 %6571
        %6574 = vset.pattern.permute.xlu0 9
        %6575 = vperm.xlu0 %6574, %v4686
        %v6576 = vpop.permute.xlu0 %6575
        %6578 = vset.pattern.permute.xlu0 9
        %6579 = vperm.xlu0 %6578, %v4840
        %v6580 = vpop.permute.xlu0 %6579
        %6582 = vset.pattern.permute.xlu0 9
        %6583 = vperm.xlu0 %6582, %v4994
        %v6584 = vpop.permute.xlu0 %6583
        %6586 = vset.pattern.permute.xlu0 9
        %6587 = vperm.xlu0 %6586, %v5148
        %v6588 = vpop.permute.xlu0 %6587
        %v6590 = vmul.f32 %v312, %v6560
        %v6591 = vmul.f32 %v467, %v6564
        %v6592 = vmul.f32 %v622, %v6568
        %v6593 = vmul.f32 %v777, %v6572
        %v6594 = vmul.f32 %v932, %v6576
        %v6595 = vmul.f32 %v1087, %v6580
        %v6596 = vmul.f32 %v1242, %v6584
        %v6597 = vmul.f32 %v1397, %v6588
        %6598 = vset.pattern.permute.xlu0 9
        %6599 = vperm.xlu0 %6598, %v2831
        %v6600 = vpop.permute.xlu0 %6599
        %6602 = vset.pattern.permute.xlu0 9
        %6603 = vperm.xlu0 %6602, %v2986
        %v6604 = vpop.permute.xlu0 %6603
        %6606 = vset.pattern.permute.xlu0 9
        %6607 = vperm.xlu0 %6606, %v3141
        %v6608 = vpop.permute.xlu0 %6607
        %6610 = vset.pattern.permute.xlu0 9
        %6611 = vperm.xlu0 %6610, %v3296
        %v6612 = vpop.permute.xlu0 %6611
        %6614 = vset.pattern.permute.xlu0 9
        %6615 = vperm.xlu0 %6614, %v3451
        %v6616 = vpop.permute.xlu0 %6615
        %6618 = vset.pattern.permute.xlu0 9
        %6619 = vperm.xlu0 %6618, %v3606
        %v6620 = vpop.permute.xlu0 %6619
        %6622 = vset.pattern.permute.xlu0 9
        %6623 = vperm.xlu0 %6622, %v3761
        %v6624 = vpop.permute.xlu0 %6623
        %6626 = vset.pattern.permute.xlu0 9
        %6627 = vperm.xlu0 %6626, %v3916
        %v6628 = vpop.permute.xlu0 %6627
        %v6630 = vmul.f32 %v1551, %v6600
        %v6631 = vmul.f32 %v1705, %v6604
        %v6632 = vmul.f32 %v1859, %v6608
        %v6633 = vmul.f32 %v2013, %v6612
        %v6634 = vmul.f32 %v2167, %v6616
        %v6635 = vmul.f32 %v2321, %v6620
        %v6636 = vmul.f32 %v2475, %v6624
        %v6637 = vmul.f32 %v2629, %v6628
        %v6638 = vadd.f32 %v6590, %v6630
        %v6639 = vadd.f32 %v6591, %v6631
        %v6640 = vadd.f32 %v6592, %v6632
        %v6641 = vadd.f32 %v6593, %v6633
        %v6642 = vadd.f32 %v6594, %v6634
        %v6643 = vadd.f32 %v6595, %v6635
        %v6644 = vadd.f32 %v6596, %v6636
        %v6645 = vadd.f32 %v6597, %v6637
        %v6646 = vmul.f32 %v1551, %v6560
        %v6647 = vmul.f32 %v1705, %v6564
        %v6648 = vmul.f32 %v1859, %v6568
        %v6649 = vmul.f32 %v2013, %v6572
        %v6650 = vmul.f32 %v2167, %v6576
        %v6651 = vmul.f32 %v2321, %v6580
        %v6652 = vmul.f32 %v2475, %v6584
        %v6653 = vmul.f32 %v2629, %v6588
        %v6654 = vmul.f32 %v312, %v6600
        %v6655 = vmul.f32 %v467, %v6604
        %v6656 = vmul.f32 %v622, %v6608
        %v6657 = vmul.f32 %v777, %v6612
        %v6658 = vmul.f32 %v932, %v6616
        %v6659 = vmul.f32 %v1087, %v6620
        %v6660 = vmul.f32 %v1242, %v6624
        %v6661 = vmul.f32 %v1397, %v6628
        %v6662 = vsub.f32 %v6646, %v6654
        %v6663 = vsub.f32 %v6647, %v6655
        %v6664 = vsub.f32 %v6648, %v6656
        %v6665 = vsub.f32 %v6649, %v6657
        %v6666 = vsub.f32 %v6650, %v6658
        %v6667 = vsub.f32 %v6651, %v6659
        %v6668 = vsub.f32 %v6652, %v6660
        %v6669 = vsub.f32 %v6653, %v6661
        %6678 = vrot.lane.b32.xlu0 %v6638, 64
        %v6679 = vpop.permute.xlu0 %6678
        %6680 = vrot.lane.b32.xlu0 %v6639, 64
        %v6681 = vpop.permute.xlu0 %6680
        %6682 = vrot.lane.b32.xlu0 %v6640, 64
        %v6683 = vpop.permute.xlu0 %6682
        %6684 = vrot.lane.b32.xlu0 %v6641, 64
        %v6685 = vpop.permute.xlu0 %6684
        %6686 = vrot.lane.b32.xlu0 %v6642, 64
        %v6687 = vpop.permute.xlu0 %6686
        %6688 = vrot.lane.b32.xlu0 %v6643, 64
        %v6689 = vpop.permute.xlu0 %6688
        %6690 = vrot.lane.b32.xlu0 %v6644, 64
        %v6691 = vpop.permute.xlu0 %6690
        %6692 = vrot.lane.b32.xlu0 %v6645, 64
        %v6693 = vpop.permute.xlu0 %6692
        %v6702 = vsel %vm5421, %v6526, %v6679
        %v6703 = vsel %vm5421, %v6527, %v6681
        %v6704 = vsel %vm5421, %v6528, %v6683
        %v6705 = vsel %vm5421, %v6529, %v6685
        %v6706 = vsel %vm5421, %v6530, %v6687
        %v6707 = vsel %vm5421, %v6531, %v6689
        %v6708 = vsel %vm5421, %v6532, %v6691
        %v6709 = vsel %vm5421, %v6533, %v6693
        %6718 = vrot.lane.b32.xlu0 %v6662, 64
        %v6719 = vpop.permute.xlu0 %6718
        %6720 = vrot.lane.b32.xlu0 %v6663, 64
        %v6721 = vpop.permute.xlu0 %6720
        %6722 = vrot.lane.b32.xlu0 %v6664, 64
        %v6723 = vpop.permute.xlu0 %6722
        %6724 = vrot.lane.b32.xlu0 %v6665, 64
        %v6725 = vpop.permute.xlu0 %6724
        %6726 = vrot.lane.b32.xlu0 %v6666, 64
        %v6727 = vpop.permute.xlu0 %6726
        %6728 = vrot.lane.b32.xlu0 %v6667, 64
        %v6729 = vpop.permute.xlu0 %6728
        %6730 = vrot.lane.b32.xlu0 %v6668, 64
        %v6731 = vpop.permute.xlu0 %6730
        %6732 = vrot.lane.b32.xlu0 %v6669, 64
        %v6733 = vpop.permute.xlu0 %6732
        %v6742 = vsel %vm5421, %v6550, %v6719
        %v6743 = vsel %vm5421, %v6551, %v6721
        %v6744 = vsel %vm5421, %v6552, %v6723
        %v6745 = vsel %vm5421, %v6553, %v6725
        %v6746 = vsel %vm5421, %v6554, %v6727
        %v6747 = vsel %vm5421, %v6555, %v6729
        %v6748 = vsel %vm5421, %v6556, %v6731
        %v6749 = vsel %vm5421, %v6557, %v6733
        %6750 = vst [vmem:[%s94 + $0x20] sm:$0xff] %v6702
        %6751 = vst [vmem:[%s94 + $0xa0] sm:$0xff] %v6703
        %6752 = vst [vmem:[%s94 + $0x120] sm:$0xff] %v6704
        %6753 = vst [vmem:[%s94 + $0x1a0] sm:$0xff] %v6705
        %6754 = vst [vmem:[%s94 + $0x220] sm:$0xff] %v6706
        %6755 = vst [vmem:[%s94 + $0x2a0] sm:$0xff] %v6707
        %6756 = vst [vmem:[%s94 + $0x320] sm:$0xff] %v6708
        %6757 = vst [vmem:[%s94 + $0x3a0] sm:$0xff] %v6709
        %6758 = vst [vmem:[%s94 + $0x420] sm:$0xff] %v6742
        %6759 = vst [vmem:[%s94 + $0x4a0] sm:$0xff] %v6743
        %6760 = vst [vmem:[%s94 + $0x520] sm:$0xff] %v6744
        %6761 = vst [vmem:[%s94 + $0x5a0] sm:$0xff] %v6745
        %6762 = vst [vmem:[%s94 + $0x620] sm:$0xff] %v6746
        %6763 = vst [vmem:[%s94 + $0x6a0] sm:$0xff] %v6747
        %6764 = vst [vmem:[%s94 + $0x720] sm:$0xff] %v6748
        %6765 = vst [vmem:[%s94 + $0x7a0] sm:$0xff] %v6749
        %6766 = vset.pattern.permute.xlu0 10
        %6767 = vperm.xlu0 %6766, %v4070
        %v6768 = vpop.permute.xlu0 %6767
        %6770 = vset.pattern.permute.xlu0 10
        %6771 = vperm.xlu0 %6770, %v4224
        %v6772 = vpop.permute.xlu0 %6771
        %6774 = vset.pattern.permute.xlu0 10
        %6775 = vperm.xlu0 %6774, %v4378
        %v6776 = vpop.permute.xlu0 %6775
        %6778 = vset.pattern.permute.xlu0 10
        %6779 = vperm.xlu0 %6778, %v4532
        %v6780 = vpop.permute.xlu0 %6779
        %6782 = vset.pattern.permute.xlu0 10
        %6783 = vperm.xlu0 %6782, %v4686
        %v6784 = vpop.permute.xlu0 %6783
        %6786 = vset.pattern.permute.xlu0 10
        %6787 = vperm.xlu0 %6786, %v4840
        %v6788 = vpop.permute.xlu0 %6787
        %6790 = vset.pattern.permute.xlu0 10
        %6791 = vperm.xlu0 %6790, %v4994
        %v6792 = vpop.permute.xlu0 %6791
        %6794 = vset.pattern.permute.xlu0 10
        %6795 = vperm.xlu0 %6794, %v5148
        %v6796 = vpop.permute.xlu0 %6795
        %v6798 = vmul.f32 %v312, %v6768
        %v6799 = vmul.f32 %v467, %v6772
        %v6800 = vmul.f32 %v622, %v6776
        %v6801 = vmul.f32 %v777, %v6780
        %v6802 = vmul.f32 %v932, %v6784
        %v6803 = vmul.f32 %v1087, %v6788
        %v6804 = vmul.f32 %v1242, %v6792
        %v6805 = vmul.f32 %v1397, %v6796
        %6806 = vset.pattern.permute.xlu0 10
        %6807 = vperm.xlu0 %6806, %v2831
        %v6808 = vpop.permute.xlu0 %6807
        %6810 = vset.pattern.permute.xlu0 10
        %6811 = vperm.xlu0 %6810, %v2986
        %v6812 = vpop.permute.xlu0 %6811
        %6814 = vset.pattern.permute.xlu0 10
        %6815 = vperm.xlu0 %6814, %v3141
        %v6816 = vpop.permute.xlu0 %6815
        %6818 = vset.pattern.permute.xlu0 10
        %6819 = vperm.xlu0 %6818, %v3296
        %v6820 = vpop.permute.xlu0 %6819
        %6822 = vset.pattern.permute.xlu0 10
        %6823 = vperm.xlu0 %6822, %v3451
        %v6824 = vpop.permute.xlu0 %6823
        %6826 = vset.pattern.permute.xlu0 10
        %6827 = vperm.xlu0 %6826, %v3606
        %v6828 = vpop.permute.xlu0 %6827
        %6830 = vset.pattern.permute.xlu0 10
        %6831 = vperm.xlu0 %6830, %v3761
        %v6832 = vpop.permute.xlu0 %6831
        %6834 = vset.pattern.permute.xlu0 10
        %6835 = vperm.xlu0 %6834, %v3916
        %v6836 = vpop.permute.xlu0 %6835
        %v6838 = vmul.f32 %v1551, %v6808
        %v6839 = vmul.f32 %v1705, %v6812
        %v6840 = vmul.f32 %v1859, %v6816
        %v6841 = vmul.f32 %v2013, %v6820
        %v6842 = vmul.f32 %v2167, %v6824
        %v6843 = vmul.f32 %v2321, %v6828
        %v6844 = vmul.f32 %v2475, %v6832
        %v6845 = vmul.f32 %v2629, %v6836
        %v6846 = vadd.f32 %v6798, %v6838
        %v6847 = vadd.f32 %v6799, %v6839
        %v6848 = vadd.f32 %v6800, %v6840
        %v6849 = vadd.f32 %v6801, %v6841
        %v6850 = vadd.f32 %v6802, %v6842
        %v6851 = vadd.f32 %v6803, %v6843
        %v6852 = vadd.f32 %v6804, %v6844
        %v6853 = vadd.f32 %v6805, %v6845
        %v6854 = vmul.f32 %v1551, %v6768
        %v6855 = vmul.f32 %v1705, %v6772
        %v6856 = vmul.f32 %v1859, %v6776
        %v6857 = vmul.f32 %v2013, %v6780
        %v6858 = vmul.f32 %v2167, %v6784
        %v6859 = vmul.f32 %v2321, %v6788
        %v6860 = vmul.f32 %v2475, %v6792
        %v6861 = vmul.f32 %v2629, %v6796
        %v6862 = vmul.f32 %v312, %v6808
        %v6863 = vmul.f32 %v467, %v6812
        %v6864 = vmul.f32 %v622, %v6816
        %v6865 = vmul.f32 %v777, %v6820
        %v6866 = vmul.f32 %v932, %v6824
        %v6867 = vmul.f32 %v1087, %v6828
        %v6868 = vmul.f32 %v1242, %v6832
        %v6869 = vmul.f32 %v1397, %v6836
        %v6870 = vsub.f32 %v6854, %v6862
        %v6871 = vsub.f32 %v6855, %v6863
        %v6872 = vsub.f32 %v6856, %v6864
        %v6873 = vsub.f32 %v6857, %v6865
        %v6874 = vsub.f32 %v6858, %v6866
        %v6875 = vsub.f32 %v6859, %v6867
        %v6876 = vsub.f32 %v6860, %v6868
        %v6877 = vsub.f32 %v6861, %v6869
        %6878 = vset.pattern.permute.xlu0 11
        %6879 = vperm.xlu0 %6878, %v4070
        %v6880 = vpop.permute.xlu0 %6879
        %6882 = vset.pattern.permute.xlu0 11
        %6883 = vperm.xlu0 %6882, %v4224
        %v6884 = vpop.permute.xlu0 %6883
        %6886 = vset.pattern.permute.xlu0 11
        %6887 = vperm.xlu0 %6886, %v4378
        %v6888 = vpop.permute.xlu0 %6887
        %6890 = vset.pattern.permute.xlu0 11
        %6891 = vperm.xlu0 %6890, %v4532
        %v6892 = vpop.permute.xlu0 %6891
        %6894 = vset.pattern.permute.xlu0 11
        %6895 = vperm.xlu0 %6894, %v4686
        %v6896 = vpop.permute.xlu0 %6895
        %6898 = vset.pattern.permute.xlu0 11
        %6899 = vperm.xlu0 %6898, %v4840
        %v6900 = vpop.permute.xlu0 %6899
        %6902 = vset.pattern.permute.xlu0 11
        %6903 = vperm.xlu0 %6902, %v4994
        %v6904 = vpop.permute.xlu0 %6903
        %6906 = vset.pattern.permute.xlu0 11
        %6907 = vperm.xlu0 %6906, %v5148
        %v6908 = vpop.permute.xlu0 %6907
        %v6910 = vmul.f32 %v312, %v6880
        %v6911 = vmul.f32 %v467, %v6884
        %v6912 = vmul.f32 %v622, %v6888
        %v6913 = vmul.f32 %v777, %v6892
        %v6914 = vmul.f32 %v932, %v6896
        %v6915 = vmul.f32 %v1087, %v6900
        %v6916 = vmul.f32 %v1242, %v6904
        %v6917 = vmul.f32 %v1397, %v6908
        %6918 = vset.pattern.permute.xlu0 11
        %6919 = vperm.xlu0 %6918, %v2831
        %v6920 = vpop.permute.xlu0 %6919
        %6922 = vset.pattern.permute.xlu0 11
        %6923 = vperm.xlu0 %6922, %v2986
        %v6924 = vpop.permute.xlu0 %6923
        %6926 = vset.pattern.permute.xlu0 11
        %6927 = vperm.xlu0 %6926, %v3141
        %v6928 = vpop.permute.xlu0 %6927
        %6930 = vset.pattern.permute.xlu0 11
        %6931 = vperm.xlu0 %6930, %v3296
        %v6932 = vpop.permute.xlu0 %6931
        %6934 = vset.pattern.permute.xlu0 11
        %6935 = vperm.xlu0 %6934, %v3451
        %v6936 = vpop.permute.xlu0 %6935
        %6938 = vset.pattern.permute.xlu0 11
        %6939 = vperm.xlu0 %6938, %v3606
        %v6940 = vpop.permute.xlu0 %6939
        %6942 = vset.pattern.permute.xlu0 11
        %6943 = vperm.xlu0 %6942, %v3761
        %v6944 = vpop.permute.xlu0 %6943
        %6946 = vset.pattern.permute.xlu0 11
        %6947 = vperm.xlu0 %6946, %v3916
        %v6948 = vpop.permute.xlu0 %6947
        %v6950 = vmul.f32 %v1551, %v6920
        %v6951 = vmul.f32 %v1705, %v6924
        %v6952 = vmul.f32 %v1859, %v6928
        %v6953 = vmul.f32 %v2013, %v6932
        %v6954 = vmul.f32 %v2167, %v6936
        %v6955 = vmul.f32 %v2321, %v6940
        %v6956 = vmul.f32 %v2475, %v6944
        %v6957 = vmul.f32 %v2629, %v6948
        %v6958 = vadd.f32 %v6910, %v6950
        %v6959 = vadd.f32 %v6911, %v6951
        %v6960 = vadd.f32 %v6912, %v6952
        %v6961 = vadd.f32 %v6913, %v6953
        %v6962 = vadd.f32 %v6914, %v6954
        %v6963 = vadd.f32 %v6915, %v6955
        %v6964 = vadd.f32 %v6916, %v6956
        %v6965 = vadd.f32 %v6917, %v6957
        %v6966 = vmul.f32 %v1551, %v6880
        %v6967 = vmul.f32 %v1705, %v6884
        %v6968 = vmul.f32 %v1859, %v6888
        %v6969 = vmul.f32 %v2013, %v6892
        %v6970 = vmul.f32 %v2167, %v6896
        %v6971 = vmul.f32 %v2321, %v6900
        %v6972 = vmul.f32 %v2475, %v6904
        %v6973 = vmul.f32 %v2629, %v6908
        %v6974 = vmul.f32 %v312, %v6920
        %v6975 = vmul.f32 %v467, %v6924
        %v6976 = vmul.f32 %v622, %v6928
        %v6977 = vmul.f32 %v777, %v6932
        %v6978 = vmul.f32 %v932, %v6936
        %v6979 = vmul.f32 %v1087, %v6940
        %v6980 = vmul.f32 %v1242, %v6944
        %v6981 = vmul.f32 %v1397, %v6948
        %v6982 = vsub.f32 %v6966, %v6974
        %v6983 = vsub.f32 %v6967, %v6975
        %v6984 = vsub.f32 %v6968, %v6976
        %v6985 = vsub.f32 %v6969, %v6977
        %v6986 = vsub.f32 %v6970, %v6978
        %v6987 = vsub.f32 %v6971, %v6979
        %v6988 = vsub.f32 %v6972, %v6980
        %v6989 = vsub.f32 %v6973, %v6981
        %6998 = vrot.lane.b32.xlu0 %v6958, 64
        %v6999 = vpop.permute.xlu0 %6998
        %7000 = vrot.lane.b32.xlu0 %v6959, 64
        %v7001 = vpop.permute.xlu0 %7000
        %7002 = vrot.lane.b32.xlu0 %v6960, 64
        %v7003 = vpop.permute.xlu0 %7002
        %7004 = vrot.lane.b32.xlu0 %v6961, 64
        %v7005 = vpop.permute.xlu0 %7004
        %7006 = vrot.lane.b32.xlu0 %v6962, 64
        %v7007 = vpop.permute.xlu0 %7006
        %7008 = vrot.lane.b32.xlu0 %v6963, 64
        %v7009 = vpop.permute.xlu0 %7008
        %7010 = vrot.lane.b32.xlu0 %v6964, 64
        %v7011 = vpop.permute.xlu0 %7010
        %7012 = vrot.lane.b32.xlu0 %v6965, 64
        %v7013 = vpop.permute.xlu0 %7012
        %v7022 = vsel %vm5421, %v6846, %v6999
        %v7023 = vsel %vm5421, %v6847, %v7001
        %v7024 = vsel %vm5421, %v6848, %v7003
        %v7025 = vsel %vm5421, %v6849, %v7005
        %v7026 = vsel %vm5421, %v6850, %v7007
        %v7027 = vsel %vm5421, %v6851, %v7009
        %v7028 = vsel %vm5421, %v6852, %v7011
        %v7029 = vsel %vm5421, %v6853, %v7013
        %7038 = vrot.lane.b32.xlu0 %v6982, 64
        %v7039 = vpop.permute.xlu0 %7038
        %7040 = vrot.lane.b32.xlu0 %v6983, 64
        %v7041 = vpop.permute.xlu0 %7040
        %7042 = vrot.lane.b32.xlu0 %v6984, 64
        %v7043 = vpop.permute.xlu0 %7042
        %7044 = vrot.lane.b32.xlu0 %v6985, 64
        %v7045 = vpop.permute.xlu0 %7044
        %7046 = vrot.lane.b32.xlu0 %v6986, 64
        %v7047 = vpop.permute.xlu0 %7046
        %7048 = vrot.lane.b32.xlu0 %v6987, 64
        %v7049 = vpop.permute.xlu0 %7048
        %7050 = vrot.lane.b32.xlu0 %v6988, 64
        %v7051 = vpop.permute.xlu0 %7050
        %7052 = vrot.lane.b32.xlu0 %v6989, 64
        %v7053 = vpop.permute.xlu0 %7052
        %v7062 = vsel %vm5421, %v6870, %v7039
        %v7063 = vsel %vm5421, %v6871, %v7041
        %v7064 = vsel %vm5421, %v6872, %v7043
        %v7065 = vsel %vm5421, %v6873, %v7045
        %v7066 = vsel %vm5421, %v6874, %v7047
        %v7067 = vsel %vm5421, %v6875, %v7049
        %v7068 = vsel %vm5421, %v6876, %v7051
        %v7069 = vsel %vm5421, %v6877, %v7053
        %7070 = vst [vmem:[%s94 + $0x28] sm:$0xff] %v7022
        %7071 = vst [vmem:[%s94 + $0xa8] sm:$0xff] %v7023
        %7072 = vst [vmem:[%s94 + $0x128] sm:$0xff] %v7024
        %7073 = vst [vmem:[%s94 + $0x1a8] sm:$0xff] %v7025
        %7074 = vst [vmem:[%s94 + $0x228] sm:$0xff] %v7026
        %7075 = vst [vmem:[%s94 + $0x2a8] sm:$0xff] %v7027
        %7076 = vst [vmem:[%s94 + $0x328] sm:$0xff] %v7028
        %7077 = vst [vmem:[%s94 + $0x3a8] sm:$0xff] %v7029
        %7078 = vst [vmem:[%s94 + $0x428] sm:$0xff] %v7062
        %7079 = vst [vmem:[%s94 + $0x4a8] sm:$0xff] %v7063
        %7080 = vst [vmem:[%s94 + $0x528] sm:$0xff] %v7064
        %7081 = vst [vmem:[%s94 + $0x5a8] sm:$0xff] %v7065
        %7082 = vst [vmem:[%s94 + $0x628] sm:$0xff] %v7066
        %7083 = vst [vmem:[%s94 + $0x6a8] sm:$0xff] %v7067
        %7084 = vst [vmem:[%s94 + $0x728] sm:$0xff] %v7068
        %7085 = vst [vmem:[%s94 + $0x7a8] sm:$0xff] %v7069
        %7086 = vset.pattern.permute.xlu0 12
        %7087 = vperm.xlu0 %7086, %v4070
        %v7088 = vpop.permute.xlu0 %7087
        %7090 = vset.pattern.permute.xlu0 12
        %7091 = vperm.xlu0 %7090, %v4224
        %v7092 = vpop.permute.xlu0 %7091
        %7094 = vset.pattern.permute.xlu0 12
        %7095 = vperm.xlu0 %7094, %v4378
        %v7096 = vpop.permute.xlu0 %7095
        %7098 = vset.pattern.permute.xlu0 12
        %7099 = vperm.xlu0 %7098, %v4532
        %v7100 = vpop.permute.xlu0 %7099
        %7102 = vset.pattern.permute.xlu0 12
        %7103 = vperm.xlu0 %7102, %v4686
        %v7104 = vpop.permute.xlu0 %7103
        %7106 = vset.pattern.permute.xlu0 12
        %7107 = vperm.xlu0 %7106, %v4840
        %v7108 = vpop.permute.xlu0 %7107
        %7110 = vset.pattern.permute.xlu0 12
        %7111 = vperm.xlu0 %7110, %v4994
        %v7112 = vpop.permute.xlu0 %7111
        %7114 = vset.pattern.permute.xlu0 12
        %7115 = vperm.xlu0 %7114, %v5148
        %v7116 = vpop.permute.xlu0 %7115
        %v7118 = vmul.f32 %v312, %v7088
        %v7119 = vmul.f32 %v467, %v7092
        %v7120 = vmul.f32 %v622, %v7096
        %v7121 = vmul.f32 %v777, %v7100
        %v7122 = vmul.f32 %v932, %v7104
        %v7123 = vmul.f32 %v1087, %v7108
        %v7124 = vmul.f32 %v1242, %v7112
        %v7125 = vmul.f32 %v1397, %v7116
        %7126 = vset.pattern.permute.xlu0 12
        %7127 = vperm.xlu0 %7126, %v2831
        %v7128 = vpop.permute.xlu0 %7127
        %7130 = vset.pattern.permute.xlu0 12
        %7131 = vperm.xlu0 %7130, %v2986
        %v7132 = vpop.permute.xlu0 %7131
        %7134 = vset.pattern.permute.xlu0 12
        %7135 = vperm.xlu0 %7134, %v3141
        %v7136 = vpop.permute.xlu0 %7135
        %7138 = vset.pattern.permute.xlu0 12
        %7139 = vperm.xlu0 %7138, %v3296
        %v7140 = vpop.permute.xlu0 %7139
        %7142 = vset.pattern.permute.xlu0 12
        %7143 = vperm.xlu0 %7142, %v3451
        %v7144 = vpop.permute.xlu0 %7143
        %7146 = vset.pattern.permute.xlu0 12
        %7147 = vperm.xlu0 %7146, %v3606
        %v7148 = vpop.permute.xlu0 %7147
        %7150 = vset.pattern.permute.xlu0 12
        %7151 = vperm.xlu0 %7150, %v3761
        %v7152 = vpop.permute.xlu0 %7151
        %7154 = vset.pattern.permute.xlu0 12
        %7155 = vperm.xlu0 %7154, %v3916
        %v7156 = vpop.permute.xlu0 %7155
        %v7158 = vmul.f32 %v1551, %v7128
        %v7159 = vmul.f32 %v1705, %v7132
        %v7160 = vmul.f32 %v1859, %v7136
        %v7161 = vmul.f32 %v2013, %v7140
        %v7162 = vmul.f32 %v2167, %v7144
        %v7163 = vmul.f32 %v2321, %v7148
        %v7164 = vmul.f32 %v2475, %v7152
        %v7165 = vmul.f32 %v2629, %v7156
        %v7166 = vadd.f32 %v7118, %v7158
        %v7167 = vadd.f32 %v7119, %v7159
        %v7168 = vadd.f32 %v7120, %v7160
        %v7169 = vadd.f32 %v7121, %v7161
        %v7170 = vadd.f32 %v7122, %v7162
        %v7171 = vadd.f32 %v7123, %v7163
        %v7172 = vadd.f32 %v7124, %v7164
        %v7173 = vadd.f32 %v7125, %v7165
        %v7174 = vmul.f32 %v1551, %v7088
        %v7175 = vmul.f32 %v1705, %v7092
        %v7176 = vmul.f32 %v1859, %v7096
        %v7177 = vmul.f32 %v2013, %v7100
        %v7178 = vmul.f32 %v2167, %v7104
        %v7179 = vmul.f32 %v2321, %v7108
        %v7180 = vmul.f32 %v2475, %v7112
        %v7181 = vmul.f32 %v2629, %v7116
        %v7182 = vmul.f32 %v312, %v7128
        %v7183 = vmul.f32 %v467, %v7132
        %v7184 = vmul.f32 %v622, %v7136
        %v7185 = vmul.f32 %v777, %v7140
        %v7186 = vmul.f32 %v932, %v7144
        %v7187 = vmul.f32 %v1087, %v7148
        %v7188 = vmul.f32 %v1242, %v7152
        %v7189 = vmul.f32 %v1397, %v7156
        %v7190 = vsub.f32 %v7174, %v7182
        %v7191 = vsub.f32 %v7175, %v7183
        %v7192 = vsub.f32 %v7176, %v7184
        %v7193 = vsub.f32 %v7177, %v7185
        %v7194 = vsub.f32 %v7178, %v7186
        %v7195 = vsub.f32 %v7179, %v7187
        %v7196 = vsub.f32 %v7180, %v7188
        %v7197 = vsub.f32 %v7181, %v7189
        %7198 = vset.pattern.permute.xlu0 13
        %7199 = vperm.xlu0 %7198, %v4070
        %v7200 = vpop.permute.xlu0 %7199
        %7202 = vset.pattern.permute.xlu0 13
        %7203 = vperm.xlu0 %7202, %v4224
        %v7204 = vpop.permute.xlu0 %7203
        %7206 = vset.pattern.permute.xlu0 13
        %7207 = vperm.xlu0 %7206, %v4378
        %v7208 = vpop.permute.xlu0 %7207
        %7210 = vset.pattern.permute.xlu0 13
        %7211 = vperm.xlu0 %7210, %v4532
        %v7212 = vpop.permute.xlu0 %7211
        %7214 = vset.pattern.permute.xlu0 13
        %7215 = vperm.xlu0 %7214, %v4686
        %v7216 = vpop.permute.xlu0 %7215
        %7218 = vset.pattern.permute.xlu0 13
        %7219 = vperm.xlu0 %7218, %v4840
        %v7220 = vpop.permute.xlu0 %7219
        %7222 = vset.pattern.permute.xlu0 13
        %7223 = vperm.xlu0 %7222, %v4994
        %v7224 = vpop.permute.xlu0 %7223
        %7226 = vset.pattern.permute.xlu0 13
        %7227 = vperm.xlu0 %7226, %v5148
        %v7228 = vpop.permute.xlu0 %7227
        %v7230 = vmul.f32 %v312, %v7200
        %v7231 = vmul.f32 %v467, %v7204
        %v7232 = vmul.f32 %v622, %v7208
        %v7233 = vmul.f32 %v777, %v7212
        %v7234 = vmul.f32 %v932, %v7216
        %v7235 = vmul.f32 %v1087, %v7220
        %v7236 = vmul.f32 %v1242, %v7224
        %v7237 = vmul.f32 %v1397, %v7228
        %7238 = vset.pattern.permute.xlu0 13
        %7239 = vperm.xlu0 %7238, %v2831
        %v7240 = vpop.permute.xlu0 %7239
        %7242 = vset.pattern.permute.xlu0 13
        %7243 = vperm.xlu0 %7242, %v2986
        %v7244 = vpop.permute.xlu0 %7243
        %7246 = vset.pattern.permute.xlu0 13
        %7247 = vperm.xlu0 %7246, %v3141
        %v7248 = vpop.permute.xlu0 %7247
        %7250 = vset.pattern.permute.xlu0 13
        %7251 = vperm.xlu0 %7250, %v3296
        %v7252 = vpop.permute.xlu0 %7251
        %7254 = vset.pattern.permute.xlu0 13
        %7255 = vperm.xlu0 %7254, %v3451
        %v7256 = vpop.permute.xlu0 %7255
        %7258 = vset.pattern.permute.xlu0 13
        %7259 = vperm.xlu0 %7258, %v3606
        %v7260 = vpop.permute.xlu0 %7259
        %7262 = vset.pattern.permute.xlu0 13
        %7263 = vperm.xlu0 %7262, %v3761
        %v7264 = vpop.permute.xlu0 %7263
        %7266 = vset.pattern.permute.xlu0 13
        %7267 = vperm.xlu0 %7266, %v3916
        %v7268 = vpop.permute.xlu0 %7267
        %v7270 = vmul.f32 %v1551, %v7240
        %v7271 = vmul.f32 %v1705, %v7244
        %v7272 = vmul.f32 %v1859, %v7248
        %v7273 = vmul.f32 %v2013, %v7252
        %v7274 = vmul.f32 %v2167, %v7256
        %v7275 = vmul.f32 %v2321, %v7260
        %v7276 = vmul.f32 %v2475, %v7264
        %v7277 = vmul.f32 %v2629, %v7268
        %v7278 = vadd.f32 %v7230, %v7270
        %v7279 = vadd.f32 %v7231, %v7271
        %v7280 = vadd.f32 %v7232, %v7272
        %v7281 = vadd.f32 %v7233, %v7273
        %v7282 = vadd.f32 %v7234, %v7274
        %v7283 = vadd.f32 %v7235, %v7275
        %v7284 = vadd.f32 %v7236, %v7276
        %v7285 = vadd.f32 %v7237, %v7277
        %v7286 = vmul.f32 %v1551, %v7200
        %v7287 = vmul.f32 %v1705, %v7204
        %v7288 = vmul.f32 %v1859, %v7208
        %v7289 = vmul.f32 %v2013, %v7212
        %v7290 = vmul.f32 %v2167, %v7216
        %v7291 = vmul.f32 %v2321, %v7220
        %v7292 = vmul.f32 %v2475, %v7224
        %v7293 = vmul.f32 %v2629, %v7228
        %v7294 = vmul.f32 %v312, %v7240
        %v7295 = vmul.f32 %v467, %v7244
        %v7296 = vmul.f32 %v622, %v7248
        %v7297 = vmul.f32 %v777, %v7252
        %v7298 = vmul.f32 %v932, %v7256
        %v7299 = vmul.f32 %v1087, %v7260
        %v7300 = vmul.f32 %v1242, %v7264
        %v7301 = vmul.f32 %v1397, %v7268
        %v7302 = vsub.f32 %v7286, %v7294
        %v7303 = vsub.f32 %v7287, %v7295
        %v7304 = vsub.f32 %v7288, %v7296
        %v7305 = vsub.f32 %v7289, %v7297
        %v7306 = vsub.f32 %v7290, %v7298
        %v7307 = vsub.f32 %v7291, %v7299
        %v7308 = vsub.f32 %v7292, %v7300
        %v7309 = vsub.f32 %v7293, %v7301
        %7318 = vrot.lane.b32.xlu0 %v7278, 64
        %v7319 = vpop.permute.xlu0 %7318
        %7320 = vrot.lane.b32.xlu0 %v7279, 64
        %v7321 = vpop.permute.xlu0 %7320
        %7322 = vrot.lane.b32.xlu0 %v7280, 64
        %v7323 = vpop.permute.xlu0 %7322
        %7324 = vrot.lane.b32.xlu0 %v7281, 64
        %v7325 = vpop.permute.xlu0 %7324
        %7326 = vrot.lane.b32.xlu0 %v7282, 64
        %v7327 = vpop.permute.xlu0 %7326
        %7328 = vrot.lane.b32.xlu0 %v7283, 64
        %v7329 = vpop.permute.xlu0 %7328
        %7330 = vrot.lane.b32.xlu0 %v7284, 64
        %v7331 = vpop.permute.xlu0 %7330
        %7332 = vrot.lane.b32.xlu0 %v7285, 64
        %v7333 = vpop.permute.xlu0 %7332
        %v7342 = vsel %vm5421, %v7166, %v7319
        %v7343 = vsel %vm5421, %v7167, %v7321
        %v7344 = vsel %vm5421, %v7168, %v7323
        %v7345 = vsel %vm5421, %v7169, %v7325
        %v7346 = vsel %vm5421, %v7170, %v7327
        %v7347 = vsel %vm5421, %v7171, %v7329
        %v7348 = vsel %vm5421, %v7172, %v7331
        %v7349 = vsel %vm5421, %v7173, %v7333
        %7358 = vrot.lane.b32.xlu0 %v7302, 64
        %v7359 = vpop.permute.xlu0 %7358
        %7360 = vrot.lane.b32.xlu0 %v7303, 64
        %v7361 = vpop.permute.xlu0 %7360
        %7362 = vrot.lane.b32.xlu0 %v7304, 64
        %v7363 = vpop.permute.xlu0 %7362
        %7364 = vrot.lane.b32.xlu0 %v7305, 64
        %v7365 = vpop.permute.xlu0 %7364
        %7366 = vrot.lane.b32.xlu0 %v7306, 64
        %v7367 = vpop.permute.xlu0 %7366
        %7368 = vrot.lane.b32.xlu0 %v7307, 64
        %v7369 = vpop.permute.xlu0 %7368
        %7370 = vrot.lane.b32.xlu0 %v7308, 64
        %v7371 = vpop.permute.xlu0 %7370
        %7372 = vrot.lane.b32.xlu0 %v7309, 64
        %v7373 = vpop.permute.xlu0 %7372
        %v7382 = vsel %vm5421, %v7190, %v7359
        %v7383 = vsel %vm5421, %v7191, %v7361
        %v7384 = vsel %vm5421, %v7192, %v7363
        %v7385 = vsel %vm5421, %v7193, %v7365
        %v7386 = vsel %vm5421, %v7194, %v7367
        %v7387 = vsel %vm5421, %v7195, %v7369
        %v7388 = vsel %vm5421, %v7196, %v7371
        %v7389 = vsel %vm5421, %v7197, %v7373
        %7390 = vst [vmem:[%s94 + $0x30] sm:$0xff] %v7342
        %7391 = vst [vmem:[%s94 + $0xb0] sm:$0xff] %v7343
        %7392 = vst [vmem:[%s94 + $0x130] sm:$0xff] %v7344
        %7393 = vst [vmem:[%s94 + $0x1b0] sm:$0xff] %v7345
        %7394 = vst [vmem:[%s94 + $0x230] sm:$0xff] %v7346
        %7395 = vst [vmem:[%s94 + $0x2b0] sm:$0xff] %v7347
        %7396 = vst [vmem:[%s94 + $0x330] sm:$0xff] %v7348
        %7397 = vst [vmem:[%s94 + $0x3b0] sm:$0xff] %v7349
        %7398 = vst [vmem:[%s94 + $0x430] sm:$0xff] %v7382
        %7399 = vst [vmem:[%s94 + $0x4b0] sm:$0xff] %v7383
        %7400 = vst [vmem:[%s94 + $0x530] sm:$0xff] %v7384
        %7401 = vst [vmem:[%s94 + $0x5b0] sm:$0xff] %v7385
        %7402 = vst [vmem:[%s94 + $0x630] sm:$0xff] %v7386
        %7403 = vst [vmem:[%s94 + $0x6b0] sm:$0xff] %v7387
        %7404 = vst [vmem:[%s94 + $0x730] sm:$0xff] %v7388
        %7405 = vst [vmem:[%s94 + $0x7b0] sm:$0xff] %v7389
        %7406 = vset.pattern.permute.xlu0 14
        %7407 = vperm.xlu0 %7406, %v4070
        %v7408 = vpop.permute.xlu0 %7407
        %7410 = vset.pattern.permute.xlu0 14
        %7411 = vperm.xlu0 %7410, %v4224
        %v7412 = vpop.permute.xlu0 %7411
        %7414 = vset.pattern.permute.xlu0 14
        %7415 = vperm.xlu0 %7414, %v4378
        %v7416 = vpop.permute.xlu0 %7415
        %7418 = vset.pattern.permute.xlu0 14
        %7419 = vperm.xlu0 %7418, %v4532
        %v7420 = vpop.permute.xlu0 %7419
        %7422 = vset.pattern.permute.xlu0 14
        %7423 = vperm.xlu0 %7422, %v4686
        %v7424 = vpop.permute.xlu0 %7423
        %7426 = vset.pattern.permute.xlu0 14
        %7427 = vperm.xlu0 %7426, %v4840
        %v7428 = vpop.permute.xlu0 %7427
        %7430 = vset.pattern.permute.xlu0 14
        %7431 = vperm.xlu0 %7430, %v4994
        %v7432 = vpop.permute.xlu0 %7431
        %7434 = vset.pattern.permute.xlu0 14
        %7435 = vperm.xlu0 %7434, %v5148
        %v7436 = vpop.permute.xlu0 %7435
        %v7438 = vmul.f32 %v312, %v7408
        %v7439 = vmul.f32 %v467, %v7412
        %v7440 = vmul.f32 %v622, %v7416
        %v7441 = vmul.f32 %v777, %v7420
        %v7442 = vmul.f32 %v932, %v7424
        %v7443 = vmul.f32 %v1087, %v7428
        %v7444 = vmul.f32 %v1242, %v7432
        %v7445 = vmul.f32 %v1397, %v7436
        %7446 = vset.pattern.permute.xlu0 14
        %7447 = vperm.xlu0 %7446, %v2831
        %v7448 = vpop.permute.xlu0 %7447
        %7450 = vset.pattern.permute.xlu0 14
        %7451 = vperm.xlu0 %7450, %v2986
        %v7452 = vpop.permute.xlu0 %7451
        %7454 = vset.pattern.permute.xlu0 14
        %7455 = vperm.xlu0 %7454, %v3141
        %v7456 = vpop.permute.xlu0 %7455
        %7458 = vset.pattern.permute.xlu0 14
        %7459 = vperm.xlu0 %7458, %v3296
        %v7460 = vpop.permute.xlu0 %7459
        %7462 = vset.pattern.permute.xlu0 14
        %7463 = vperm.xlu0 %7462, %v3451
        %v7464 = vpop.permute.xlu0 %7463
        %7466 = vset.pattern.permute.xlu0 14
        %7467 = vperm.xlu0 %7466, %v3606
        %v7468 = vpop.permute.xlu0 %7467
        %7470 = vset.pattern.permute.xlu0 14
        %7471 = vperm.xlu0 %7470, %v3761
        %v7472 = vpop.permute.xlu0 %7471
        %7474 = vset.pattern.permute.xlu0 14
        %7475 = vperm.xlu0 %7474, %v3916
        %v7476 = vpop.permute.xlu0 %7475
        %v7478 = vmul.f32 %v1551, %v7448
        %v7479 = vmul.f32 %v1705, %v7452
        %v7480 = vmul.f32 %v1859, %v7456
        %v7481 = vmul.f32 %v2013, %v7460
        %v7482 = vmul.f32 %v2167, %v7464
        %v7483 = vmul.f32 %v2321, %v7468
        %v7484 = vmul.f32 %v2475, %v7472
        %v7485 = vmul.f32 %v2629, %v7476
        %v7486 = vadd.f32 %v7438, %v7478
        %v7487 = vadd.f32 %v7439, %v7479
        %v7488 = vadd.f32 %v7440, %v7480
        %v7489 = vadd.f32 %v7441, %v7481
        %v7490 = vadd.f32 %v7442, %v7482
        %v7491 = vadd.f32 %v7443, %v7483
        %v7492 = vadd.f32 %v7444, %v7484
        %v7493 = vadd.f32 %v7445, %v7485
        %v7494 = vmul.f32 %v1551, %v7408
        %v7495 = vmul.f32 %v1705, %v7412
        %v7496 = vmul.f32 %v1859, %v7416
        %v7497 = vmul.f32 %v2013, %v7420
        %v7498 = vmul.f32 %v2167, %v7424
        %v7499 = vmul.f32 %v2321, %v7428
        %v7500 = vmul.f32 %v2475, %v7432
        %v7501 = vmul.f32 %v2629, %v7436
        %v7502 = vmul.f32 %v312, %v7448
        %v7503 = vmul.f32 %v467, %v7452
        %v7504 = vmul.f32 %v622, %v7456
        %v7505 = vmul.f32 %v777, %v7460
        %v7506 = vmul.f32 %v932, %v7464
        %v7507 = vmul.f32 %v1087, %v7468
        %v7508 = vmul.f32 %v1242, %v7472
        %v7509 = vmul.f32 %v1397, %v7476
        %v7510 = vsub.f32 %v7494, %v7502
        %v7511 = vsub.f32 %v7495, %v7503
        %v7512 = vsub.f32 %v7496, %v7504
        %v7513 = vsub.f32 %v7497, %v7505
        %v7514 = vsub.f32 %v7498, %v7506
        %v7515 = vsub.f32 %v7499, %v7507
        %v7516 = vsub.f32 %v7500, %v7508
        %v7517 = vsub.f32 %v7501, %v7509
        %7518 = vset.pattern.permute.xlu0 15
        %7519 = vperm.xlu0 %7518, %v4070
        %v7520 = vpop.permute.xlu0 %7519
        %7522 = vset.pattern.permute.xlu0 15
        %7523 = vperm.xlu0 %7522, %v4224
        %v7524 = vpop.permute.xlu0 %7523
        %7526 = vset.pattern.permute.xlu0 15
        %7527 = vperm.xlu0 %7526, %v4378
        %v7528 = vpop.permute.xlu0 %7527
        %7530 = vset.pattern.permute.xlu0 15
        %7531 = vperm.xlu0 %7530, %v4532
        %v7532 = vpop.permute.xlu0 %7531
        %7534 = vset.pattern.permute.xlu0 15
        %7535 = vperm.xlu0 %7534, %v4686
        %v7536 = vpop.permute.xlu0 %7535
        %7538 = vset.pattern.permute.xlu0 15
        %7539 = vperm.xlu0 %7538, %v4840
        %v7540 = vpop.permute.xlu0 %7539
        %7542 = vset.pattern.permute.xlu0 15
        %7543 = vperm.xlu0 %7542, %v4994
        %v7544 = vpop.permute.xlu0 %7543
        %7546 = vset.pattern.permute.xlu0 15
        %7547 = vperm.xlu0 %7546, %v5148
        %v7548 = vpop.permute.xlu0 %7547
        %v7550 = vmul.f32 %v312, %v7520
        %v7551 = vmul.f32 %v467, %v7524
        %v7552 = vmul.f32 %v622, %v7528
        %v7553 = vmul.f32 %v777, %v7532
        %v7554 = vmul.f32 %v932, %v7536
        %v7555 = vmul.f32 %v1087, %v7540
        %v7556 = vmul.f32 %v1242, %v7544
        %v7557 = vmul.f32 %v1397, %v7548
        %7558 = vset.pattern.permute.xlu0 15
        %7559 = vperm.xlu0 %7558, %v2831
        %v7560 = vpop.permute.xlu0 %7559
        %7562 = vset.pattern.permute.xlu0 15
        %7563 = vperm.xlu0 %7562, %v2986
        %v7564 = vpop.permute.xlu0 %7563
        %7566 = vset.pattern.permute.xlu0 15
        %7567 = vperm.xlu0 %7566, %v3141
        %v7568 = vpop.permute.xlu0 %7567
        %7570 = vset.pattern.permute.xlu0 15
        %7571 = vperm.xlu0 %7570, %v3296
        %v7572 = vpop.permute.xlu0 %7571
        %7574 = vset.pattern.permute.xlu0 15
        %7575 = vperm.xlu0 %7574, %v3451
        %v7576 = vpop.permute.xlu0 %7575
        %7578 = vset.pattern.permute.xlu0 15
        %7579 = vperm.xlu0 %7578, %v3606
        %v7580 = vpop.permute.xlu0 %7579
        %7582 = vset.pattern.permute.xlu0 15
        %7583 = vperm.xlu0 %7582, %v3761
        %v7584 = vpop.permute.xlu0 %7583
        %7586 = vset.pattern.permute.xlu0 15
        %7587 = vperm.xlu0 %7586, %v3916
        %v7588 = vpop.permute.xlu0 %7587
        %v7590 = vmul.f32 %v1551, %v7560
        %v7591 = vmul.f32 %v1705, %v7564
        %v7592 = vmul.f32 %v1859, %v7568
        %v7593 = vmul.f32 %v2013, %v7572
        %v7594 = vmul.f32 %v2167, %v7576
        %v7595 = vmul.f32 %v2321, %v7580
        %v7596 = vmul.f32 %v2475, %v7584
        %v7597 = vmul.f32 %v2629, %v7588
        %v7598 = vadd.f32 %v7550, %v7590
        %v7599 = vadd.f32 %v7551, %v7591
        %v7600 = vadd.f32 %v7552, %v7592
        %v7601 = vadd.f32 %v7553, %v7593
        %v7602 = vadd.f32 %v7554, %v7594
        %v7603 = vadd.f32 %v7555, %v7595
        %v7604 = vadd.f32 %v7556, %v7596
        %v7605 = vadd.f32 %v7557, %v7597
        %v7606 = vmul.f32 %v1551, %v7520
        %v7607 = vmul.f32 %v1705, %v7524
        %v7608 = vmul.f32 %v1859, %v7528
        %v7609 = vmul.f32 %v2013, %v7532
        %v7610 = vmul.f32 %v2167, %v7536
        %v7611 = vmul.f32 %v2321, %v7540
        %v7612 = vmul.f32 %v2475, %v7544
        %v7613 = vmul.f32 %v2629, %v7548
        %v7614 = vmul.f32 %v312, %v7560
        %v7615 = vmul.f32 %v467, %v7564
        %v7616 = vmul.f32 %v622, %v7568
        %v7617 = vmul.f32 %v777, %v7572
        %v7618 = vmul.f32 %v932, %v7576
        %v7619 = vmul.f32 %v1087, %v7580
        %v7620 = vmul.f32 %v1242, %v7584
        %v7621 = vmul.f32 %v1397, %v7588
        %v7622 = vsub.f32 %v7606, %v7614
        %v7623 = vsub.f32 %v7607, %v7615
        %v7624 = vsub.f32 %v7608, %v7616
        %v7625 = vsub.f32 %v7609, %v7617
        %v7626 = vsub.f32 %v7610, %v7618
        %v7627 = vsub.f32 %v7611, %v7619
        %v7628 = vsub.f32 %v7612, %v7620
        %v7629 = vsub.f32 %v7613, %v7621
        %7638 = vrot.lane.b32.xlu0 %v7598, 64
        %v7639 = vpop.permute.xlu0 %7638
        %7640 = vrot.lane.b32.xlu0 %v7599, 64
        %v7641 = vpop.permute.xlu0 %7640
        %7642 = vrot.lane.b32.xlu0 %v7600, 64
        %v7643 = vpop.permute.xlu0 %7642
        %7644 = vrot.lane.b32.xlu0 %v7601, 64
        %v7645 = vpop.permute.xlu0 %7644
        %7646 = vrot.lane.b32.xlu0 %v7602, 64
        %v7647 = vpop.permute.xlu0 %7646
        %7648 = vrot.lane.b32.xlu0 %v7603, 64
        %v7649 = vpop.permute.xlu0 %7648
        %7650 = vrot.lane.b32.xlu0 %v7604, 64
        %v7651 = vpop.permute.xlu0 %7650
        %7652 = vrot.lane.b32.xlu0 %v7605, 64
        %v7653 = vpop.permute.xlu0 %7652
        %v7662 = vsel %vm5421, %v7486, %v7639
        %v7663 = vsel %vm5421, %v7487, %v7641
        %v7664 = vsel %vm5421, %v7488, %v7643
        %v7665 = vsel %vm5421, %v7489, %v7645
        %v7666 = vsel %vm5421, %v7490, %v7647
        %v7667 = vsel %vm5421, %v7491, %v7649
        %v7668 = vsel %vm5421, %v7492, %v7651
        %v7669 = vsel %vm5421, %v7493, %v7653
        %7678 = vrot.lane.b32.xlu0 %v7622, 64
        %v7679 = vpop.permute.xlu0 %7678
        %7680 = vrot.lane.b32.xlu0 %v7623, 64
        %v7681 = vpop.permute.xlu0 %7680
        %7682 = vrot.lane.b32.xlu0 %v7624, 64
        %v7683 = vpop.permute.xlu0 %7682
        %7684 = vrot.lane.b32.xlu0 %v7625, 64
        %v7685 = vpop.permute.xlu0 %7684
        %7686 = vrot.lane.b32.xlu0 %v7626, 64
        %v7687 = vpop.permute.xlu0 %7686
        %7688 = vrot.lane.b32.xlu0 %v7627, 64
        %v7689 = vpop.permute.xlu0 %7688
        %7690 = vrot.lane.b32.xlu0 %v7628, 64
        %v7691 = vpop.permute.xlu0 %7690
        %7692 = vrot.lane.b32.xlu0 %v7629, 64
        %v7693 = vpop.permute.xlu0 %7692
        %v7702 = vsel %vm5421, %v7510, %v7679
        %v7703 = vsel %vm5421, %v7511, %v7681
        %v7704 = vsel %vm5421, %v7512, %v7683
        %v7705 = vsel %vm5421, %v7513, %v7685
        %v7706 = vsel %vm5421, %v7514, %v7687
        %v7707 = vsel %vm5421, %v7515, %v7689
        %v7708 = vsel %vm5421, %v7516, %v7691
        %v7709 = vsel %vm5421, %v7517, %v7693
        %7710 = vst [vmem:[%s94 + $0x38] sm:$0xff] %v7662
        %7711 = vst [vmem:[%s94 + $0xb8] sm:$0xff] %v7663
        %7712 = vst [vmem:[%s94 + $0x138] sm:$0xff] %v7664
        %7713 = vst [vmem:[%s94 + $0x1b8] sm:$0xff] %v7665
        %7714 = vst [vmem:[%s94 + $0x238] sm:$0xff] %v7666
        %7715 = vst [vmem:[%s94 + $0x2b8] sm:$0xff] %v7667
        %7716 = vst [vmem:[%s94 + $0x338] sm:$0xff] %v7668
        %7717 = vst [vmem:[%s94 + $0x3b8] sm:$0xff] %v7669
        %7718 = vst [vmem:[%s94 + $0x438] sm:$0xff] %v7702
        %7719 = vst [vmem:[%s94 + $0x4b8] sm:$0xff] %v7703
        %7720 = vst [vmem:[%s94 + $0x538] sm:$0xff] %v7704
        %7721 = vst [vmem:[%s94 + $0x5b8] sm:$0xff] %v7705
        %7722 = vst [vmem:[%s94 + $0x638] sm:$0xff] %v7706
        %7723 = vst [vmem:[%s94 + $0x6b8] sm:$0xff] %v7707
        %7724 = vst [vmem:[%s94 + $0x738] sm:$0xff] %v7708
        %7725 = vst [vmem:[%s94 + $0x7b8] sm:$0xff] %v7709
        %7726 = vset.pattern.permute.xlu0 16
        %7727 = vperm.xlu0 %7726, %v4070
        %v7728 = vpop.permute.xlu0 %7727
        %7730 = vset.pattern.permute.xlu0 16
        %7731 = vperm.xlu0 %7730, %v4224
        %v7732 = vpop.permute.xlu0 %7731
        %7734 = vset.pattern.permute.xlu0 16
        %7735 = vperm.xlu0 %7734, %v4378
        %v7736 = vpop.permute.xlu0 %7735
        %7738 = vset.pattern.permute.xlu0 16
        %7739 = vperm.xlu0 %7738, %v4532
        %v7740 = vpop.permute.xlu0 %7739
        %7742 = vset.pattern.permute.xlu0 16
        %7743 = vperm.xlu0 %7742, %v4686
        %v7744 = vpop.permute.xlu0 %7743
        %7746 = vset.pattern.permute.xlu0 16
        %7747 = vperm.xlu0 %7746, %v4840
        %v7748 = vpop.permute.xlu0 %7747
        %7750 = vset.pattern.permute.xlu0 16
        %7751 = vperm.xlu0 %7750, %v4994
        %v7752 = vpop.permute.xlu0 %7751
        %7754 = vset.pattern.permute.xlu0 16
        %7755 = vperm.xlu0 %7754, %v5148
        %v7756 = vpop.permute.xlu0 %7755
        %v7758 = vmul.f32 %v312, %v7728
        %v7759 = vmul.f32 %v467, %v7732
        %v7760 = vmul.f32 %v622, %v7736
        %v7761 = vmul.f32 %v777, %v7740
        %v7762 = vmul.f32 %v932, %v7744
        %v7763 = vmul.f32 %v1087, %v7748
        %v7764 = vmul.f32 %v1242, %v7752
        %v7765 = vmul.f32 %v1397, %v7756
        %7766 = vset.pattern.permute.xlu0 16
        %7767 = vperm.xlu0 %7766, %v2831
        %v7768 = vpop.permute.xlu0 %7767
        %7770 = vset.pattern.permute.xlu0 16
        %7771 = vperm.xlu0 %7770, %v2986
        %v7772 = vpop.permute.xlu0 %7771
        %7774 = vset.pattern.permute.xlu0 16
        %7775 = vperm.xlu0 %7774, %v3141
        %v7776 = vpop.permute.xlu0 %7775
        %7778 = vset.pattern.permute.xlu0 16
        %7779 = vperm.xlu0 %7778, %v3296
        %v7780 = vpop.permute.xlu0 %7779
        %7782 = vset.pattern.permute.xlu0 16
        %7783 = vperm.xlu0 %7782, %v3451
        %v7784 = vpop.permute.xlu0 %7783
        %7786 = vset.pattern.permute.xlu0 16
        %7787 = vperm.xlu0 %7786, %v3606
        %v7788 = vpop.permute.xlu0 %7787
        %7790 = vset.pattern.permute.xlu0 16
        %7791 = vperm.xlu0 %7790, %v3761
        %v7792 = vpop.permute.xlu0 %7791
        %7794 = vset.pattern.permute.xlu0 16
        %7795 = vperm.xlu0 %7794, %v3916
        %v7796 = vpop.permute.xlu0 %7795
        %v7798 = vmul.f32 %v1551, %v7768
        %v7799 = vmul.f32 %v1705, %v7772
        %v7800 = vmul.f32 %v1859, %v7776
        %v7801 = vmul.f32 %v2013, %v7780
        %v7802 = vmul.f32 %v2167, %v7784
        %v7803 = vmul.f32 %v2321, %v7788
        %v7804 = vmul.f32 %v2475, %v7792
        %v7805 = vmul.f32 %v2629, %v7796
        %v7806 = vadd.f32 %v7758, %v7798
        %v7807 = vadd.f32 %v7759, %v7799
        %v7808 = vadd.f32 %v7760, %v7800
        %v7809 = vadd.f32 %v7761, %v7801
        %v7810 = vadd.f32 %v7762, %v7802
        %v7811 = vadd.f32 %v7763, %v7803
        %v7812 = vadd.f32 %v7764, %v7804
        %v7813 = vadd.f32 %v7765, %v7805
        %v7814 = vmul.f32 %v1551, %v7728
        %v7815 = vmul.f32 %v1705, %v7732
        %v7816 = vmul.f32 %v1859, %v7736
        %v7817 = vmul.f32 %v2013, %v7740
        %v7818 = vmul.f32 %v2167, %v7744
        %v7819 = vmul.f32 %v2321, %v7748
        %v7820 = vmul.f32 %v2475, %v7752
        %v7821 = vmul.f32 %v2629, %v7756
        %v7822 = vmul.f32 %v312, %v7768
        %v7823 = vmul.f32 %v467, %v7772
        %v7824 = vmul.f32 %v622, %v7776
        %v7825 = vmul.f32 %v777, %v7780
        %v7826 = vmul.f32 %v932, %v7784
        %v7827 = vmul.f32 %v1087, %v7788
        %v7828 = vmul.f32 %v1242, %v7792
        %v7829 = vmul.f32 %v1397, %v7796
        %v7830 = vsub.f32 %v7814, %v7822
        %v7831 = vsub.f32 %v7815, %v7823
        %v7832 = vsub.f32 %v7816, %v7824
        %v7833 = vsub.f32 %v7817, %v7825
        %v7834 = vsub.f32 %v7818, %v7826
        %v7835 = vsub.f32 %v7819, %v7827
        %v7836 = vsub.f32 %v7820, %v7828
        %v7837 = vsub.f32 %v7821, %v7829
        %7838 = vset.pattern.permute.xlu0 17
        %7839 = vperm.xlu0 %7838, %v4070
        %v7840 = vpop.permute.xlu0 %7839
        %7842 = vset.pattern.permute.xlu0 17
        %7843 = vperm.xlu0 %7842, %v4224
        %v7844 = vpop.permute.xlu0 %7843
        %7846 = vset.pattern.permute.xlu0 17
        %7847 = vperm.xlu0 %7846, %v4378
        %v7848 = vpop.permute.xlu0 %7847
        %7850 = vset.pattern.permute.xlu0 17
        %7851 = vperm.xlu0 %7850, %v4532
        %v7852 = vpop.permute.xlu0 %7851
        %7854 = vset.pattern.permute.xlu0 17
        %7855 = vperm.xlu0 %7854, %v4686
        %v7856 = vpop.permute.xlu0 %7855
        %7858 = vset.pattern.permute.xlu0 17
        %7859 = vperm.xlu0 %7858, %v4840
        %v7860 = vpop.permute.xlu0 %7859
        %7862 = vset.pattern.permute.xlu0 17
        %7863 = vperm.xlu0 %7862, %v4994
        %v7864 = vpop.permute.xlu0 %7863
        %7866 = vset.pattern.permute.xlu0 17
        %7867 = vperm.xlu0 %7866, %v5148
        %v7868 = vpop.permute.xlu0 %7867
        %v7870 = vmul.f32 %v312, %v7840
        %v7871 = vmul.f32 %v467, %v7844
        %v7872 = vmul.f32 %v622, %v7848
        %v7873 = vmul.f32 %v777, %v7852
        %v7874 = vmul.f32 %v932, %v7856
        %v7875 = vmul.f32 %v1087, %v7860
        %v7876 = vmul.f32 %v1242, %v7864
        %v7877 = vmul.f32 %v1397, %v7868
        %7878 = vset.pattern.permute.xlu0 17
        %7879 = vperm.xlu0 %7878, %v2831
        %v7880 = vpop.permute.xlu0 %7879
        %7882 = vset.pattern.permute.xlu0 17
        %7883 = vperm.xlu0 %7882, %v2986
        %v7884 = vpop.permute.xlu0 %7883
        %7886 = vset.pattern.permute.xlu0 17
        %7887 = vperm.xlu0 %7886, %v3141
        %v7888 = vpop.permute.xlu0 %7887
        %7890 = vset.pattern.permute.xlu0 17
        %7891 = vperm.xlu0 %7890, %v3296
        %v7892 = vpop.permute.xlu0 %7891
        %7894 = vset.pattern.permute.xlu0 17
        %7895 = vperm.xlu0 %7894, %v3451
        %v7896 = vpop.permute.xlu0 %7895
        %7898 = vset.pattern.permute.xlu0 17
        %7899 = vperm.xlu0 %7898, %v3606
        %v7900 = vpop.permute.xlu0 %7899
        %7902 = vset.pattern.permute.xlu0 17
        %7903 = vperm.xlu0 %7902, %v3761
        %v7904 = vpop.permute.xlu0 %7903
        %7906 = vset.pattern.permute.xlu0 17
        %7907 = vperm.xlu0 %7906, %v3916
        %v7908 = vpop.permute.xlu0 %7907
        %v7910 = vmul.f32 %v1551, %v7880
        %v7911 = vmul.f32 %v1705, %v7884
        %v7912 = vmul.f32 %v1859, %v7888
        %v7913 = vmul.f32 %v2013, %v7892
        %v7914 = vmul.f32 %v2167, %v7896
        %v7915 = vmul.f32 %v2321, %v7900
        %v7916 = vmul.f32 %v2475, %v7904
        %v7917 = vmul.f32 %v2629, %v7908
        %v7918 = vadd.f32 %v7870, %v7910
        %v7919 = vadd.f32 %v7871, %v7911
        %v7920 = vadd.f32 %v7872, %v7912
        %v7921 = vadd.f32 %v7873, %v7913
        %v7922 = vadd.f32 %v7874, %v7914
        %v7923 = vadd.f32 %v7875, %v7915
        %v7924 = vadd.f32 %v7876, %v7916
        %v7925 = vadd.f32 %v7877, %v7917
        %v7926 = vmul.f32 %v1551, %v7840
        %v7927 = vmul.f32 %v1705, %v7844
        %v7928 = vmul.f32 %v1859, %v7848
        %v7929 = vmul.f32 %v2013, %v7852
        %v7930 = vmul.f32 %v2167, %v7856
        %v7931 = vmul.f32 %v2321, %v7860
        %v7932 = vmul.f32 %v2475, %v7864
        %v7933 = vmul.f32 %v2629, %v7868
        %v7934 = vmul.f32 %v312, %v7880
        %v7935 = vmul.f32 %v467, %v7884
        %v7936 = vmul.f32 %v622, %v7888
        %v7937 = vmul.f32 %v777, %v7892
        %v7938 = vmul.f32 %v932, %v7896
        %v7939 = vmul.f32 %v1087, %v7900
        %v7940 = vmul.f32 %v1242, %v7904
        %v7941 = vmul.f32 %v1397, %v7908
        %v7942 = vsub.f32 %v7926, %v7934
        %v7943 = vsub.f32 %v7927, %v7935
        %v7944 = vsub.f32 %v7928, %v7936
        %v7945 = vsub.f32 %v7929, %v7937
        %v7946 = vsub.f32 %v7930, %v7938
        %v7947 = vsub.f32 %v7931, %v7939
        %v7948 = vsub.f32 %v7932, %v7940
        %v7949 = vsub.f32 %v7933, %v7941
        %7958 = vrot.lane.b32.xlu0 %v7918, 64
        %v7959 = vpop.permute.xlu0 %7958
        %7960 = vrot.lane.b32.xlu0 %v7919, 64
        %v7961 = vpop.permute.xlu0 %7960
        %7962 = vrot.lane.b32.xlu0 %v7920, 64
        %v7963 = vpop.permute.xlu0 %7962
        %7964 = vrot.lane.b32.xlu0 %v7921, 64
        %v7965 = vpop.permute.xlu0 %7964
        %7966 = vrot.lane.b32.xlu0 %v7922, 64
        %v7967 = vpop.permute.xlu0 %7966
        %7968 = vrot.lane.b32.xlu0 %v7923, 64
        %v7969 = vpop.permute.xlu0 %7968
        %7970 = vrot.lane.b32.xlu0 %v7924, 64
        %v7971 = vpop.permute.xlu0 %7970
        %7972 = vrot.lane.b32.xlu0 %v7925, 64
        %v7973 = vpop.permute.xlu0 %7972
        %v7982 = vsel %vm5421, %v7806, %v7959
        %v7983 = vsel %vm5421, %v7807, %v7961
        %v7984 = vsel %vm5421, %v7808, %v7963
        %v7985 = vsel %vm5421, %v7809, %v7965
        %v7986 = vsel %vm5421, %v7810, %v7967
        %v7987 = vsel %vm5421, %v7811, %v7969
        %v7988 = vsel %vm5421, %v7812, %v7971
        %v7989 = vsel %vm5421, %v7813, %v7973
        %7998 = vrot.lane.b32.xlu0 %v7942, 64
        %v7999 = vpop.permute.xlu0 %7998
        %8000 = vrot.lane.b32.xlu0 %v7943, 64
        %v8001 = vpop.permute.xlu0 %8000
        %8002 = vrot.lane.b32.xlu0 %v7944, 64
        %v8003 = vpop.permute.xlu0 %8002
        %8004 = vrot.lane.b32.xlu0 %v7945, 64
        %v8005 = vpop.permute.xlu0 %8004
        %8006 = vrot.lane.b32.xlu0 %v7946, 64
        %v8007 = vpop.permute.xlu0 %8006
        %8008 = vrot.lane.b32.xlu0 %v7947, 64
        %v8009 = vpop.permute.xlu0 %8008
        %8010 = vrot.lane.b32.xlu0 %v7948, 64
        %v8011 = vpop.permute.xlu0 %8010
        %8012 = vrot.lane.b32.xlu0 %v7949, 64
        %v8013 = vpop.permute.xlu0 %8012
        %v8022 = vsel %vm5421, %v7830, %v7999
        %v8023 = vsel %vm5421, %v7831, %v8001
        %v8024 = vsel %vm5421, %v7832, %v8003
        %v8025 = vsel %vm5421, %v7833, %v8005
        %v8026 = vsel %vm5421, %v7834, %v8007
        %v8027 = vsel %vm5421, %v7835, %v8009
        %v8028 = vsel %vm5421, %v7836, %v8011
        %v8029 = vsel %vm5421, %v7837, %v8013
        %8030 = vst [vmem:[%s94 + $0x40] sm:$0xff] %v7982
        %8031 = vst [vmem:[%s94 + $0xc0] sm:$0xff] %v7983
        %8032 = vst [vmem:[%s94 + $0x140] sm:$0xff] %v7984
        %8033 = vst [vmem:[%s94 + $0x1c0] sm:$0xff] %v7985
        %8034 = vst [vmem:[%s94 + $0x240] sm:$0xff] %v7986
        %8035 = vst [vmem:[%s94 + $0x2c0] sm:$0xff] %v7987
        %8036 = vst [vmem:[%s94 + $0x340] sm:$0xff] %v7988
        %8037 = vst [vmem:[%s94 + $0x3c0] sm:$0xff] %v7989
        %8038 = vst [vmem:[%s94 + $0x440] sm:$0xff] %v8022
        %8039 = vst [vmem:[%s94 + $0x4c0] sm:$0xff] %v8023
        %8040 = vst [vmem:[%s94 + $0x540] sm:$0xff] %v8024
        %8041 = vst [vmem:[%s94 + $0x5c0] sm:$0xff] %v8025
        %8042 = vst [vmem:[%s94 + $0x640] sm:$0xff] %v8026
        %8043 = vst [vmem:[%s94 + $0x6c0] sm:$0xff] %v8027
        %8044 = vst [vmem:[%s94 + $0x740] sm:$0xff] %v8028
        %8045 = vst [vmem:[%s94 + $0x7c0] sm:$0xff] %v8029
        %8046 = vset.pattern.permute.xlu0 18
        %8047 = vperm.xlu0 %8046, %v4070
        %v8048 = vpop.permute.xlu0 %8047
        %8050 = vset.pattern.permute.xlu0 18
        %8051 = vperm.xlu0 %8050, %v4224
        %v8052 = vpop.permute.xlu0 %8051
        %8054 = vset.pattern.permute.xlu0 18
        %8055 = vperm.xlu0 %8054, %v4378
        %v8056 = vpop.permute.xlu0 %8055
        %8058 = vset.pattern.permute.xlu0 18
        %8059 = vperm.xlu0 %8058, %v4532
        %v8060 = vpop.permute.xlu0 %8059
        %8062 = vset.pattern.permute.xlu0 18
        %8063 = vperm.xlu0 %8062, %v4686
        %v8064 = vpop.permute.xlu0 %8063
        %8066 = vset.pattern.permute.xlu0 18
        %8067 = vperm.xlu0 %8066, %v4840
        %v8068 = vpop.permute.xlu0 %8067
        %8070 = vset.pattern.permute.xlu0 18
        %8071 = vperm.xlu0 %8070, %v4994
        %v8072 = vpop.permute.xlu0 %8071
        %8074 = vset.pattern.permute.xlu0 18
        %8075 = vperm.xlu0 %8074, %v5148
        %v8076 = vpop.permute.xlu0 %8075
        %v8078 = vmul.f32 %v312, %v8048
        %v8079 = vmul.f32 %v467, %v8052
        %v8080 = vmul.f32 %v622, %v8056
        %v8081 = vmul.f32 %v777, %v8060
        %v8082 = vmul.f32 %v932, %v8064
        %v8083 = vmul.f32 %v1087, %v8068
        %v8084 = vmul.f32 %v1242, %v8072
        %v8085 = vmul.f32 %v1397, %v8076
        %8086 = vset.pattern.permute.xlu0 18
        %8087 = vperm.xlu0 %8086, %v2831
        %v8088 = vpop.permute.xlu0 %8087
        %8090 = vset.pattern.permute.xlu0 18
        %8091 = vperm.xlu0 %8090, %v2986
        %v8092 = vpop.permute.xlu0 %8091
        %8094 = vset.pattern.permute.xlu0 18
        %8095 = vperm.xlu0 %8094, %v3141
        %v8096 = vpop.permute.xlu0 %8095
        %8098 = vset.pattern.permute.xlu0 18
        %8099 = vperm.xlu0 %8098, %v3296
        %v8100 = vpop.permute.xlu0 %8099
        %8102 = vset.pattern.permute.xlu0 18
        %8103 = vperm.xlu0 %8102, %v3451
        %v8104 = vpop.permute.xlu0 %8103
        %8106 = vset.pattern.permute.xlu0 18
        %8107 = vperm.xlu0 %8106, %v3606
        %v8108 = vpop.permute.xlu0 %8107
        %8110 = vset.pattern.permute.xlu0 18
        %8111 = vperm.xlu0 %8110, %v3761
        %v8112 = vpop.permute.xlu0 %8111
        %8114 = vset.pattern.permute.xlu0 18
        %8115 = vperm.xlu0 %8114, %v3916
        %v8116 = vpop.permute.xlu0 %8115
        %v8118 = vmul.f32 %v1551, %v8088
        %v8119 = vmul.f32 %v1705, %v8092
        %v8120 = vmul.f32 %v1859, %v8096
        %v8121 = vmul.f32 %v2013, %v8100
        %v8122 = vmul.f32 %v2167, %v8104
        %v8123 = vmul.f32 %v2321, %v8108
        %v8124 = vmul.f32 %v2475, %v8112
        %v8125 = vmul.f32 %v2629, %v8116
        %v8126 = vadd.f32 %v8078, %v8118
        %v8127 = vadd.f32 %v8079, %v8119
        %v8128 = vadd.f32 %v8080, %v8120
        %v8129 = vadd.f32 %v8081, %v8121
        %v8130 = vadd.f32 %v8082, %v8122
        %v8131 = vadd.f32 %v8083, %v8123
        %v8132 = vadd.f32 %v8084, %v8124
        %v8133 = vadd.f32 %v8085, %v8125
        %v8134 = vmul.f32 %v1551, %v8048
        %v8135 = vmul.f32 %v1705, %v8052
        %v8136 = vmul.f32 %v1859, %v8056
        %v8137 = vmul.f32 %v2013, %v8060
        %v8138 = vmul.f32 %v2167, %v8064
        %v8139 = vmul.f32 %v2321, %v8068
        %v8140 = vmul.f32 %v2475, %v8072
        %v8141 = vmul.f32 %v2629, %v8076
        %v8142 = vmul.f32 %v312, %v8088
        %v8143 = vmul.f32 %v467, %v8092
        %v8144 = vmul.f32 %v622, %v8096
        %v8145 = vmul.f32 %v777, %v8100
        %v8146 = vmul.f32 %v932, %v8104
        %v8147 = vmul.f32 %v1087, %v8108
        %v8148 = vmul.f32 %v1242, %v8112
        %v8149 = vmul.f32 %v1397, %v8116
        %v8150 = vsub.f32 %v8134, %v8142
        %v8151 = vsub.f32 %v8135, %v8143
        %v8152 = vsub.f32 %v8136, %v8144
        %v8153 = vsub.f32 %v8137, %v8145
        %v8154 = vsub.f32 %v8138, %v8146
        %v8155 = vsub.f32 %v8139, %v8147
        %v8156 = vsub.f32 %v8140, %v8148
        %v8157 = vsub.f32 %v8141, %v8149
        %8158 = vset.pattern.permute.xlu0 19
        %8159 = vperm.xlu0 %8158, %v4070
        %v8160 = vpop.permute.xlu0 %8159
        %8162 = vset.pattern.permute.xlu0 19
        %8163 = vperm.xlu0 %8162, %v4224
        %v8164 = vpop.permute.xlu0 %8163
        %8166 = vset.pattern.permute.xlu0 19
        %8167 = vperm.xlu0 %8166, %v4378
        %v8168 = vpop.permute.xlu0 %8167
        %8170 = vset.pattern.permute.xlu0 19
        %8171 = vperm.xlu0 %8170, %v4532
        %v8172 = vpop.permute.xlu0 %8171
        %8174 = vset.pattern.permute.xlu0 19
        %8175 = vperm.xlu0 %8174, %v4686
        %v8176 = vpop.permute.xlu0 %8175
        %8178 = vset.pattern.permute.xlu0 19
        %8179 = vperm.xlu0 %8178, %v4840
        %v8180 = vpop.permute.xlu0 %8179
        %8182 = vset.pattern.permute.xlu0 19
        %8183 = vperm.xlu0 %8182, %v4994
        %v8184 = vpop.permute.xlu0 %8183
        %8186 = vset.pattern.permute.xlu0 19
        %8187 = vperm.xlu0 %8186, %v5148
        %v8188 = vpop.permute.xlu0 %8187
        %v8190 = vmul.f32 %v312, %v8160
        %v8191 = vmul.f32 %v467, %v8164
        %v8192 = vmul.f32 %v622, %v8168
        %v8193 = vmul.f32 %v777, %v8172
        %v8194 = vmul.f32 %v932, %v8176
        %v8195 = vmul.f32 %v1087, %v8180
        %v8196 = vmul.f32 %v1242, %v8184
        %v8197 = vmul.f32 %v1397, %v8188
        %8198 = vset.pattern.permute.xlu0 19
        %8199 = vperm.xlu0 %8198, %v2831
        %v8200 = vpop.permute.xlu0 %8199
        %8202 = vset.pattern.permute.xlu0 19
        %8203 = vperm.xlu0 %8202, %v2986
        %v8204 = vpop.permute.xlu0 %8203
        %8206 = vset.pattern.permute.xlu0 19
        %8207 = vperm.xlu0 %8206, %v3141
        %v8208 = vpop.permute.xlu0 %8207
        %8210 = vset.pattern.permute.xlu0 19
        %8211 = vperm.xlu0 %8210, %v3296
        %v8212 = vpop.permute.xlu0 %8211
        %8214 = vset.pattern.permute.xlu0 19
        %8215 = vperm.xlu0 %8214, %v3451
        %v8216 = vpop.permute.xlu0 %8215
        %8218 = vset.pattern.permute.xlu0 19
        %8219 = vperm.xlu0 %8218, %v3606
        %v8220 = vpop.permute.xlu0 %8219
        %8222 = vset.pattern.permute.xlu0 19
        %8223 = vperm.xlu0 %8222, %v3761
        %v8224 = vpop.permute.xlu0 %8223
        %8226 = vset.pattern.permute.xlu0 19
        %8227 = vperm.xlu0 %8226, %v3916
        %v8228 = vpop.permute.xlu0 %8227
        %v8230 = vmul.f32 %v1551, %v8200
        %v8231 = vmul.f32 %v1705, %v8204
        %v8232 = vmul.f32 %v1859, %v8208
        %v8233 = vmul.f32 %v2013, %v8212
        %v8234 = vmul.f32 %v2167, %v8216
        %v8235 = vmul.f32 %v2321, %v8220
        %v8236 = vmul.f32 %v2475, %v8224
        %v8237 = vmul.f32 %v2629, %v8228
        %v8238 = vadd.f32 %v8190, %v8230
        %v8239 = vadd.f32 %v8191, %v8231
        %v8240 = vadd.f32 %v8192, %v8232
        %v8241 = vadd.f32 %v8193, %v8233
        %v8242 = vadd.f32 %v8194, %v8234
        %v8243 = vadd.f32 %v8195, %v8235
        %v8244 = vadd.f32 %v8196, %v8236
        %v8245 = vadd.f32 %v8197, %v8237
        %v8246 = vmul.f32 %v1551, %v8160
        %v8247 = vmul.f32 %v1705, %v8164
        %v8248 = vmul.f32 %v1859, %v8168
        %v8249 = vmul.f32 %v2013, %v8172
        %v8250 = vmul.f32 %v2167, %v8176
        %v8251 = vmul.f32 %v2321, %v8180
        %v8252 = vmul.f32 %v2475, %v8184
        %v8253 = vmul.f32 %v2629, %v8188
        %v8254 = vmul.f32 %v312, %v8200
        %v8255 = vmul.f32 %v467, %v8204
        %v8256 = vmul.f32 %v622, %v8208
        %v8257 = vmul.f32 %v777, %v8212
        %v8258 = vmul.f32 %v932, %v8216
        %v8259 = vmul.f32 %v1087, %v8220
        %v8260 = vmul.f32 %v1242, %v8224
        %v8261 = vmul.f32 %v1397, %v8228
        %v8262 = vsub.f32 %v8246, %v8254
        %v8263 = vsub.f32 %v8247, %v8255
        %v8264 = vsub.f32 %v8248, %v8256
        %v8265 = vsub.f32 %v8249, %v8257
        %v8266 = vsub.f32 %v8250, %v8258
        %v8267 = vsub.f32 %v8251, %v8259
        %v8268 = vsub.f32 %v8252, %v8260
        %v8269 = vsub.f32 %v8253, %v8261
        %8278 = vrot.lane.b32.xlu0 %v8238, 64
        %v8279 = vpop.permute.xlu0 %8278
        %8280 = vrot.lane.b32.xlu0 %v8239, 64
        %v8281 = vpop.permute.xlu0 %8280
        %8282 = vrot.lane.b32.xlu0 %v8240, 64
        %v8283 = vpop.permute.xlu0 %8282
        %8284 = vrot.lane.b32.xlu0 %v8241, 64
        %v8285 = vpop.permute.xlu0 %8284
        %8286 = vrot.lane.b32.xlu0 %v8242, 64
        %v8287 = vpop.permute.xlu0 %8286
        %8288 = vrot.lane.b32.xlu0 %v8243, 64
        %v8289 = vpop.permute.xlu0 %8288
        %8290 = vrot.lane.b32.xlu0 %v8244, 64
        %v8291 = vpop.permute.xlu0 %8290
        %8292 = vrot.lane.b32.xlu0 %v8245, 64
        %v8293 = vpop.permute.xlu0 %8292
        %v8302 = vsel %vm5421, %v8126, %v8279
        %v8303 = vsel %vm5421, %v8127, %v8281
        %v8304 = vsel %vm5421, %v8128, %v8283
        %v8305 = vsel %vm5421, %v8129, %v8285
        %v8306 = vsel %vm5421, %v8130, %v8287
        %v8307 = vsel %vm5421, %v8131, %v8289
        %v8308 = vsel %vm5421, %v8132, %v8291
        %v8309 = vsel %vm5421, %v8133, %v8293
        %8318 = vrot.lane.b32.xlu0 %v8262, 64
        %v8319 = vpop.permute.xlu0 %8318
        %8320 = vrot.lane.b32.xlu0 %v8263, 64
        %v8321 = vpop.permute.xlu0 %8320
        %8322 = vrot.lane.b32.xlu0 %v8264, 64
        %v8323 = vpop.permute.xlu0 %8322
        %8324 = vrot.lane.b32.xlu0 %v8265, 64
        %v8325 = vpop.permute.xlu0 %8324
        %8326 = vrot.lane.b32.xlu0 %v8266, 64
        %v8327 = vpop.permute.xlu0 %8326
        %8328 = vrot.lane.b32.xlu0 %v8267, 64
        %v8329 = vpop.permute.xlu0 %8328
        %8330 = vrot.lane.b32.xlu0 %v8268, 64
        %v8331 = vpop.permute.xlu0 %8330
        %8332 = vrot.lane.b32.xlu0 %v8269, 64
        %v8333 = vpop.permute.xlu0 %8332
        %v8342 = vsel %vm5421, %v8150, %v8319
        %v8343 = vsel %vm5421, %v8151, %v8321
        %v8344 = vsel %vm5421, %v8152, %v8323
        %v8345 = vsel %vm5421, %v8153, %v8325
        %v8346 = vsel %vm5421, %v8154, %v8327
        %v8347 = vsel %vm5421, %v8155, %v8329
        %v8348 = vsel %vm5421, %v8156, %v8331
        %v8349 = vsel %vm5421, %v8157, %v8333
        %8350 = vst [vmem:[%s94 + $0x48] sm:$0xff] %v8302
        %8351 = vst [vmem:[%s94 + $0xc8] sm:$0xff] %v8303
        %8352 = vst [vmem:[%s94 + $0x148] sm:$0xff] %v8304
        %8353 = vst [vmem:[%s94 + $0x1c8] sm:$0xff] %v8305
        %8354 = vst [vmem:[%s94 + $0x248] sm:$0xff] %v8306
        %8355 = vst [vmem:[%s94 + $0x2c8] sm:$0xff] %v8307
        %8356 = vst [vmem:[%s94 + $0x348] sm:$0xff] %v8308
        %8357 = vst [vmem:[%s94 + $0x3c8] sm:$0xff] %v8309
        %8358 = vst [vmem:[%s94 + $0x448] sm:$0xff] %v8342
        %8359 = vst [vmem:[%s94 + $0x4c8] sm:$0xff] %v8343
        %8360 = vst [vmem:[%s94 + $0x548] sm:$0xff] %v8344
        %8361 = vst [vmem:[%s94 + $0x5c8] sm:$0xff] %v8345
        %8362 = vst [vmem:[%s94 + $0x648] sm:$0xff] %v8346
        %8363 = vst [vmem:[%s94 + $0x6c8] sm:$0xff] %v8347
        %8364 = vst [vmem:[%s94 + $0x748] sm:$0xff] %v8348
        %8365 = vst [vmem:[%s94 + $0x7c8] sm:$0xff] %v8349
        %8366 = vset.pattern.permute.xlu0 20
        %8367 = vperm.xlu0 %8366, %v4070
        %v8368 = vpop.permute.xlu0 %8367
        %8370 = vset.pattern.permute.xlu0 20
        %8371 = vperm.xlu0 %8370, %v4224
        %v8372 = vpop.permute.xlu0 %8371
        %8374 = vset.pattern.permute.xlu0 20
        %8375 = vperm.xlu0 %8374, %v4378
        %v8376 = vpop.permute.xlu0 %8375
        %8378 = vset.pattern.permute.xlu0 20
        %8379 = vperm.xlu0 %8378, %v4532
        %v8380 = vpop.permute.xlu0 %8379
        %8382 = vset.pattern.permute.xlu0 20
        %8383 = vperm.xlu0 %8382, %v4686
        %v8384 = vpop.permute.xlu0 %8383
        %8386 = vset.pattern.permute.xlu0 20
        %8387 = vperm.xlu0 %8386, %v4840
        %v8388 = vpop.permute.xlu0 %8387
        %8390 = vset.pattern.permute.xlu0 20
        %8391 = vperm.xlu0 %8390, %v4994
        %v8392 = vpop.permute.xlu0 %8391
        %8394 = vset.pattern.permute.xlu0 20
        %8395 = vperm.xlu0 %8394, %v5148
        %v8396 = vpop.permute.xlu0 %8395
        %v8398 = vmul.f32 %v312, %v8368
        %v8399 = vmul.f32 %v467, %v8372
        %v8400 = vmul.f32 %v622, %v8376
        %v8401 = vmul.f32 %v777, %v8380
        %v8402 = vmul.f32 %v932, %v8384
        %v8403 = vmul.f32 %v1087, %v8388
        %v8404 = vmul.f32 %v1242, %v8392
        %v8405 = vmul.f32 %v1397, %v8396
        %8406 = vset.pattern.permute.xlu0 20
        %8407 = vperm.xlu0 %8406, %v2831
        %v8408 = vpop.permute.xlu0 %8407
        %8410 = vset.pattern.permute.xlu0 20
        %8411 = vperm.xlu0 %8410, %v2986
        %v8412 = vpop.permute.xlu0 %8411
        %8414 = vset.pattern.permute.xlu0 20
        %8415 = vperm.xlu0 %8414, %v3141
        %v8416 = vpop.permute.xlu0 %8415
        %8418 = vset.pattern.permute.xlu0 20
        %8419 = vperm.xlu0 %8418, %v3296
        %v8420 = vpop.permute.xlu0 %8419
        %8422 = vset.pattern.permute.xlu0 20
        %8423 = vperm.xlu0 %8422, %v3451
        %v8424 = vpop.permute.xlu0 %8423
        %8426 = vset.pattern.permute.xlu0 20
        %8427 = vperm.xlu0 %8426, %v3606
        %v8428 = vpop.permute.xlu0 %8427
        %8430 = vset.pattern.permute.xlu0 20
        %8431 = vperm.xlu0 %8430, %v3761
        %v8432 = vpop.permute.xlu0 %8431
        %8434 = vset.pattern.permute.xlu0 20
        %8435 = vperm.xlu0 %8434, %v3916
        %v8436 = vpop.permute.xlu0 %8435
        %v8438 = vmul.f32 %v1551, %v8408
        %v8439 = vmul.f32 %v1705, %v8412
        %v8440 = vmul.f32 %v1859, %v8416
        %v8441 = vmul.f32 %v2013, %v8420
        %v8442 = vmul.f32 %v2167, %v8424
        %v8443 = vmul.f32 %v2321, %v8428
        %v8444 = vmul.f32 %v2475, %v8432
        %v8445 = vmul.f32 %v2629, %v8436
        %v8446 = vadd.f32 %v8398, %v8438
        %v8447 = vadd.f32 %v8399, %v8439
        %v8448 = vadd.f32 %v8400, %v8440
        %v8449 = vadd.f32 %v8401, %v8441
        %v8450 = vadd.f32 %v8402, %v8442
        %v8451 = vadd.f32 %v8403, %v8443
        %v8452 = vadd.f32 %v8404, %v8444
        %v8453 = vadd.f32 %v8405, %v8445
        %v8454 = vmul.f32 %v1551, %v8368
        %v8455 = vmul.f32 %v1705, %v8372
        %v8456 = vmul.f32 %v1859, %v8376
        %v8457 = vmul.f32 %v2013, %v8380
        %v8458 = vmul.f32 %v2167, %v8384
        %v8459 = vmul.f32 %v2321, %v8388
        %v8460 = vmul.f32 %v2475, %v8392
        %v8461 = vmul.f32 %v2629, %v8396
        %v8462 = vmul.f32 %v312, %v8408
        %v8463 = vmul.f32 %v467, %v8412
        %v8464 = vmul.f32 %v622, %v8416
        %v8465 = vmul.f32 %v777, %v8420
        %v8466 = vmul.f32 %v932, %v8424
        %v8467 = vmul.f32 %v1087, %v8428
        %v8468 = vmul.f32 %v1242, %v8432
        %v8469 = vmul.f32 %v1397, %v8436
        %v8470 = vsub.f32 %v8454, %v8462
        %v8471 = vsub.f32 %v8455, %v8463
        %v8472 = vsub.f32 %v8456, %v8464
        %v8473 = vsub.f32 %v8457, %v8465
        %v8474 = vsub.f32 %v8458, %v8466
        %v8475 = vsub.f32 %v8459, %v8467
        %v8476 = vsub.f32 %v8460, %v8468
        %v8477 = vsub.f32 %v8461, %v8469
        %8478 = vset.pattern.permute.xlu0 21
        %8479 = vperm.xlu0 %8478, %v4070
        %v8480 = vpop.permute.xlu0 %8479
        %8482 = vset.pattern.permute.xlu0 21
        %8483 = vperm.xlu0 %8482, %v4224
        %v8484 = vpop.permute.xlu0 %8483
        %8486 = vset.pattern.permute.xlu0 21
        %8487 = vperm.xlu0 %8486, %v4378
        %v8488 = vpop.permute.xlu0 %8487
        %8490 = vset.pattern.permute.xlu0 21
        %8491 = vperm.xlu0 %8490, %v4532
        %v8492 = vpop.permute.xlu0 %8491
        %8494 = vset.pattern.permute.xlu0 21
        %8495 = vperm.xlu0 %8494, %v4686
        %v8496 = vpop.permute.xlu0 %8495
        %8498 = vset.pattern.permute.xlu0 21
        %8499 = vperm.xlu0 %8498, %v4840
        %v8500 = vpop.permute.xlu0 %8499
        %8502 = vset.pattern.permute.xlu0 21
        %8503 = vperm.xlu0 %8502, %v4994
        %v8504 = vpop.permute.xlu0 %8503
        %8506 = vset.pattern.permute.xlu0 21
        %8507 = vperm.xlu0 %8506, %v5148
        %v8508 = vpop.permute.xlu0 %8507
        %v8510 = vmul.f32 %v312, %v8480
        %v8511 = vmul.f32 %v467, %v8484
        %v8512 = vmul.f32 %v622, %v8488
        %v8513 = vmul.f32 %v777, %v8492
        %v8514 = vmul.f32 %v932, %v8496
        %v8515 = vmul.f32 %v1087, %v8500
        %v8516 = vmul.f32 %v1242, %v8504
        %v8517 = vmul.f32 %v1397, %v8508
        %8518 = vset.pattern.permute.xlu0 21
        %8519 = vperm.xlu0 %8518, %v2831
        %v8520 = vpop.permute.xlu0 %8519
        %8522 = vset.pattern.permute.xlu0 21
        %8523 = vperm.xlu0 %8522, %v2986
        %v8524 = vpop.permute.xlu0 %8523
        %8526 = vset.pattern.permute.xlu0 21
        %8527 = vperm.xlu0 %8526, %v3141
        %v8528 = vpop.permute.xlu0 %8527
        %8530 = vset.pattern.permute.xlu0 21
        %8531 = vperm.xlu0 %8530, %v3296
        %v8532 = vpop.permute.xlu0 %8531
        %8534 = vset.pattern.permute.xlu0 21
        %8535 = vperm.xlu0 %8534, %v3451
        %v8536 = vpop.permute.xlu0 %8535
        %8538 = vset.pattern.permute.xlu0 21
        %8539 = vperm.xlu0 %8538, %v3606
        %v8540 = vpop.permute.xlu0 %8539
        %8542 = vset.pattern.permute.xlu0 21
        %8543 = vperm.xlu0 %8542, %v3761
        %v8544 = vpop.permute.xlu0 %8543
        %8546 = vset.pattern.permute.xlu0 21
        %8547 = vperm.xlu0 %8546, %v3916
        %v8548 = vpop.permute.xlu0 %8547
        %v8550 = vmul.f32 %v1551, %v8520
        %v8551 = vmul.f32 %v1705, %v8524
        %v8552 = vmul.f32 %v1859, %v8528
        %v8553 = vmul.f32 %v2013, %v8532
        %v8554 = vmul.f32 %v2167, %v8536
        %v8555 = vmul.f32 %v2321, %v8540
        %v8556 = vmul.f32 %v2475, %v8544
        %v8557 = vmul.f32 %v2629, %v8548
        %v8558 = vadd.f32 %v8510, %v8550
        %v8559 = vadd.f32 %v8511, %v8551
        %v8560 = vadd.f32 %v8512, %v8552
        %v8561 = vadd.f32 %v8513, %v8553
        %v8562 = vadd.f32 %v8514, %v8554
        %v8563 = vadd.f32 %v8515, %v8555
        %v8564 = vadd.f32 %v8516, %v8556
        %v8565 = vadd.f32 %v8517, %v8557
        %v8566 = vmul.f32 %v1551, %v8480
        %v8567 = vmul.f32 %v1705, %v8484
        %v8568 = vmul.f32 %v1859, %v8488
        %v8569 = vmul.f32 %v2013, %v8492
        %v8570 = vmul.f32 %v2167, %v8496
        %v8571 = vmul.f32 %v2321, %v8500
        %v8572 = vmul.f32 %v2475, %v8504
        %v8573 = vmul.f32 %v2629, %v8508
        %v8574 = vmul.f32 %v312, %v8520
        %v8575 = vmul.f32 %v467, %v8524
        %v8576 = vmul.f32 %v622, %v8528
        %v8577 = vmul.f32 %v777, %v8532
        %v8578 = vmul.f32 %v932, %v8536
        %v8579 = vmul.f32 %v1087, %v8540
        %v8580 = vmul.f32 %v1242, %v8544
        %v8581 = vmul.f32 %v1397, %v8548
        %v8582 = vsub.f32 %v8566, %v8574
        %v8583 = vsub.f32 %v8567, %v8575
        %v8584 = vsub.f32 %v8568, %v8576
        %v8585 = vsub.f32 %v8569, %v8577
        %v8586 = vsub.f32 %v8570, %v8578
        %v8587 = vsub.f32 %v8571, %v8579
        %v8588 = vsub.f32 %v8572, %v8580
        %v8589 = vsub.f32 %v8573, %v8581
        %8598 = vrot.lane.b32.xlu0 %v8558, 64
        %v8599 = vpop.permute.xlu0 %8598
        %8600 = vrot.lane.b32.xlu0 %v8559, 64
        %v8601 = vpop.permute.xlu0 %8600
        %8602 = vrot.lane.b32.xlu0 %v8560, 64
        %v8603 = vpop.permute.xlu0 %8602
        %8604 = vrot.lane.b32.xlu0 %v8561, 64
        %v8605 = vpop.permute.xlu0 %8604
        %8606 = vrot.lane.b32.xlu0 %v8562, 64
        %v8607 = vpop.permute.xlu0 %8606
        %8608 = vrot.lane.b32.xlu0 %v8563, 64
        %v8609 = vpop.permute.xlu0 %8608
        %8610 = vrot.lane.b32.xlu0 %v8564, 64
        %v8611 = vpop.permute.xlu0 %8610
        %8612 = vrot.lane.b32.xlu0 %v8565, 64
        %v8613 = vpop.permute.xlu0 %8612
        %v8622 = vsel %vm5421, %v8446, %v8599
        %v8623 = vsel %vm5421, %v8447, %v8601
        %v8624 = vsel %vm5421, %v8448, %v8603
        %v8625 = vsel %vm5421, %v8449, %v8605
        %v8626 = vsel %vm5421, %v8450, %v8607
        %v8627 = vsel %vm5421, %v8451, %v8609
        %v8628 = vsel %vm5421, %v8452, %v8611
        %v8629 = vsel %vm5421, %v8453, %v8613
        %8638 = vrot.lane.b32.xlu0 %v8582, 64
        %v8639 = vpop.permute.xlu0 %8638
        %8640 = vrot.lane.b32.xlu0 %v8583, 64
        %v8641 = vpop.permute.xlu0 %8640
        %8642 = vrot.lane.b32.xlu0 %v8584, 64
        %v8643 = vpop.permute.xlu0 %8642
        %8644 = vrot.lane.b32.xlu0 %v8585, 64
        %v8645 = vpop.permute.xlu0 %8644
        %8646 = vrot.lane.b32.xlu0 %v8586, 64
        %v8647 = vpop.permute.xlu0 %8646
        %8648 = vrot.lane.b32.xlu0 %v8587, 64
        %v8649 = vpop.permute.xlu0 %8648
        %8650 = vrot.lane.b32.xlu0 %v8588, 64
        %v8651 = vpop.permute.xlu0 %8650
        %8652 = vrot.lane.b32.xlu0 %v8589, 64
        %v8653 = vpop.permute.xlu0 %8652
        %v8662 = vsel %vm5421, %v8470, %v8639
        %v8663 = vsel %vm5421, %v8471, %v8641
        %v8664 = vsel %vm5421, %v8472, %v8643
        %v8665 = vsel %vm5421, %v8473, %v8645
        %v8666 = vsel %vm5421, %v8474, %v8647
        %v8667 = vsel %vm5421, %v8475, %v8649
        %v8668 = vsel %vm5421, %v8476, %v8651
        %v8669 = vsel %vm5421, %v8477, %v8653
        %8670 = vst [vmem:[%s94 + $0x50] sm:$0xff] %v8622
        %8671 = vst [vmem:[%s94 + $0xd0] sm:$0xff] %v8623
        %8672 = vst [vmem:[%s94 + $0x150] sm:$0xff] %v8624
        %8673 = vst [vmem:[%s94 + $0x1d0] sm:$0xff] %v8625
        %8674 = vst [vmem:[%s94 + $0x250] sm:$0xff] %v8626
        %8675 = vst [vmem:[%s94 + $0x2d0] sm:$0xff] %v8627
        %8676 = vst [vmem:[%s94 + $0x350] sm:$0xff] %v8628
        %8677 = vst [vmem:[%s94 + $0x3d0] sm:$0xff] %v8629
        %8678 = vst [vmem:[%s94 + $0x450] sm:$0xff] %v8662
        %8679 = vst [vmem:[%s94 + $0x4d0] sm:$0xff] %v8663
        %8680 = vst [vmem:[%s94 + $0x550] sm:$0xff] %v8664
        %8681 = vst [vmem:[%s94 + $0x5d0] sm:$0xff] %v8665
        %8682 = vst [vmem:[%s94 + $0x650] sm:$0xff] %v8666
        %8683 = vst [vmem:[%s94 + $0x6d0] sm:$0xff] %v8667
        %8684 = vst [vmem:[%s94 + $0x750] sm:$0xff] %v8668
        %8685 = vst [vmem:[%s94 + $0x7d0] sm:$0xff] %v8669
        %8686 = vset.pattern.permute.xlu0 22
        %8687 = vperm.xlu0 %8686, %v4070
        %v8688 = vpop.permute.xlu0 %8687
        %8690 = vset.pattern.permute.xlu0 22
        %8691 = vperm.xlu0 %8690, %v4224
        %v8692 = vpop.permute.xlu0 %8691
        %8694 = vset.pattern.permute.xlu0 22
        %8695 = vperm.xlu0 %8694, %v4378
        %v8696 = vpop.permute.xlu0 %8695
        %8698 = vset.pattern.permute.xlu0 22
        %8699 = vperm.xlu0 %8698, %v4532
        %v8700 = vpop.permute.xlu0 %8699
        %8702 = vset.pattern.permute.xlu0 22
        %8703 = vperm.xlu0 %8702, %v4686
        %v8704 = vpop.permute.xlu0 %8703
        %8706 = vset.pattern.permute.xlu0 22
        %8707 = vperm.xlu0 %8706, %v4840
        %v8708 = vpop.permute.xlu0 %8707
        %8710 = vset.pattern.permute.xlu0 22
        %8711 = vperm.xlu0 %8710, %v4994
        %v8712 = vpop.permute.xlu0 %8711
        %8714 = vset.pattern.permute.xlu0 22
        %8715 = vperm.xlu0 %8714, %v5148
        %v8716 = vpop.permute.xlu0 %8715
        %v8718 = vmul.f32 %v312, %v8688
        %v8719 = vmul.f32 %v467, %v8692
        %v8720 = vmul.f32 %v622, %v8696
        %v8721 = vmul.f32 %v777, %v8700
        %v8722 = vmul.f32 %v932, %v8704
        %v8723 = vmul.f32 %v1087, %v8708
        %v8724 = vmul.f32 %v1242, %v8712
        %v8725 = vmul.f32 %v1397, %v8716
        %8726 = vset.pattern.permute.xlu0 22
        %8727 = vperm.xlu0 %8726, %v2831
        %v8728 = vpop.permute.xlu0 %8727
        %8730 = vset.pattern.permute.xlu0 22
        %8731 = vperm.xlu0 %8730, %v2986
        %v8732 = vpop.permute.xlu0 %8731
        %8734 = vset.pattern.permute.xlu0 22
        %8735 = vperm.xlu0 %8734, %v3141
        %v8736 = vpop.permute.xlu0 %8735
        %8738 = vset.pattern.permute.xlu0 22
        %8739 = vperm.xlu0 %8738, %v3296
        %v8740 = vpop.permute.xlu0 %8739
        %8742 = vset.pattern.permute.xlu0 22
        %8743 = vperm.xlu0 %8742, %v3451
        %v8744 = vpop.permute.xlu0 %8743
        %8746 = vset.pattern.permute.xlu0 22
        %8747 = vperm.xlu0 %8746, %v3606
        %v8748 = vpop.permute.xlu0 %8747
        %8750 = vset.pattern.permute.xlu0 22
        %8751 = vperm.xlu0 %8750, %v3761
        %v8752 = vpop.permute.xlu0 %8751
        %8754 = vset.pattern.permute.xlu0 22
        %8755 = vperm.xlu0 %8754, %v3916
        %v8756 = vpop.permute.xlu0 %8755
        %v8758 = vmul.f32 %v1551, %v8728
        %v8759 = vmul.f32 %v1705, %v8732
        %v8760 = vmul.f32 %v1859, %v8736
        %v8761 = vmul.f32 %v2013, %v8740
        %v8762 = vmul.f32 %v2167, %v8744
        %v8763 = vmul.f32 %v2321, %v8748
        %v8764 = vmul.f32 %v2475, %v8752
        %v8765 = vmul.f32 %v2629, %v8756
        %v8766 = vadd.f32 %v8718, %v8758
        %v8767 = vadd.f32 %v8719, %v8759
        %v8768 = vadd.f32 %v8720, %v8760
        %v8769 = vadd.f32 %v8721, %v8761
        %v8770 = vadd.f32 %v8722, %v8762
        %v8771 = vadd.f32 %v8723, %v8763
        %v8772 = vadd.f32 %v8724, %v8764
        %v8773 = vadd.f32 %v8725, %v8765
        %v8774 = vmul.f32 %v1551, %v8688
        %v8775 = vmul.f32 %v1705, %v8692
        %v8776 = vmul.f32 %v1859, %v8696
        %v8777 = vmul.f32 %v2013, %v8700
        %v8778 = vmul.f32 %v2167, %v8704
        %v8779 = vmul.f32 %v2321, %v8708
        %v8780 = vmul.f32 %v2475, %v8712
        %v8781 = vmul.f32 %v2629, %v8716
        %v8782 = vmul.f32 %v312, %v8728
        %v8783 = vmul.f32 %v467, %v8732
        %v8784 = vmul.f32 %v622, %v8736
        %v8785 = vmul.f32 %v777, %v8740
        %v8786 = vmul.f32 %v932, %v8744
        %v8787 = vmul.f32 %v1087, %v8748
        %v8788 = vmul.f32 %v1242, %v8752
        %v8789 = vmul.f32 %v1397, %v8756
        %v8790 = vsub.f32 %v8774, %v8782
        %v8791 = vsub.f32 %v8775, %v8783
        %v8792 = vsub.f32 %v8776, %v8784
        %v8793 = vsub.f32 %v8777, %v8785
        %v8794 = vsub.f32 %v8778, %v8786
        %v8795 = vsub.f32 %v8779, %v8787
        %v8796 = vsub.f32 %v8780, %v8788
        %v8797 = vsub.f32 %v8781, %v8789
        %8798 = vset.pattern.permute.xlu0 23
        %8799 = vperm.xlu0 %8798, %v4070
        %v8800 = vpop.permute.xlu0 %8799
        %8802 = vset.pattern.permute.xlu0 23
        %8803 = vperm.xlu0 %8802, %v4224
        %v8804 = vpop.permute.xlu0 %8803
        %8806 = vset.pattern.permute.xlu0 23
        %8807 = vperm.xlu0 %8806, %v4378
        %v8808 = vpop.permute.xlu0 %8807
        %8810 = vset.pattern.permute.xlu0 23
        %8811 = vperm.xlu0 %8810, %v4532
        %v8812 = vpop.permute.xlu0 %8811
        %8814 = vset.pattern.permute.xlu0 23
        %8815 = vperm.xlu0 %8814, %v4686
        %v8816 = vpop.permute.xlu0 %8815
        %8818 = vset.pattern.permute.xlu0 23
        %8819 = vperm.xlu0 %8818, %v4840
        %v8820 = vpop.permute.xlu0 %8819
        %8822 = vset.pattern.permute.xlu0 23
        %8823 = vperm.xlu0 %8822, %v4994
        %v8824 = vpop.permute.xlu0 %8823
        %8826 = vset.pattern.permute.xlu0 23
        %8827 = vperm.xlu0 %8826, %v5148
        %v8828 = vpop.permute.xlu0 %8827
        %v8830 = vmul.f32 %v312, %v8800
        %v8831 = vmul.f32 %v467, %v8804
        %v8832 = vmul.f32 %v622, %v8808
        %v8833 = vmul.f32 %v777, %v8812
        %v8834 = vmul.f32 %v932, %v8816
        %v8835 = vmul.f32 %v1087, %v8820
        %v8836 = vmul.f32 %v1242, %v8824
        %v8837 = vmul.f32 %v1397, %v8828
        %8838 = vset.pattern.permute.xlu0 23
        %8839 = vperm.xlu0 %8838, %v2831
        %v8840 = vpop.permute.xlu0 %8839
        %8842 = vset.pattern.permute.xlu0 23
        %8843 = vperm.xlu0 %8842, %v2986
        %v8844 = vpop.permute.xlu0 %8843
        %8846 = vset.pattern.permute.xlu0 23
        %8847 = vperm.xlu0 %8846, %v3141
        %v8848 = vpop.permute.xlu0 %8847
        %8850 = vset.pattern.permute.xlu0 23
        %8851 = vperm.xlu0 %8850, %v3296
        %v8852 = vpop.permute.xlu0 %8851
        %8854 = vset.pattern.permute.xlu0 23
        %8855 = vperm.xlu0 %8854, %v3451
        %v8856 = vpop.permute.xlu0 %8855
        %8858 = vset.pattern.permute.xlu0 23
        %8859 = vperm.xlu0 %8858, %v3606
        %v8860 = vpop.permute.xlu0 %8859
        %8862 = vset.pattern.permute.xlu0 23
        %8863 = vperm.xlu0 %8862, %v3761
        %v8864 = vpop.permute.xlu0 %8863
        %8866 = vset.pattern.permute.xlu0 23
        %8867 = vperm.xlu0 %8866, %v3916
        %v8868 = vpop.permute.xlu0 %8867
        %v8870 = vmul.f32 %v1551, %v8840
        %v8871 = vmul.f32 %v1705, %v8844
        %v8872 = vmul.f32 %v1859, %v8848
        %v8873 = vmul.f32 %v2013, %v8852
        %v8874 = vmul.f32 %v2167, %v8856
        %v8875 = vmul.f32 %v2321, %v8860
        %v8876 = vmul.f32 %v2475, %v8864
        %v8877 = vmul.f32 %v2629, %v8868
        %v8878 = vadd.f32 %v8830, %v8870
        %v8879 = vadd.f32 %v8831, %v8871
        %v8880 = vadd.f32 %v8832, %v8872
        %v8881 = vadd.f32 %v8833, %v8873
        %v8882 = vadd.f32 %v8834, %v8874
        %v8883 = vadd.f32 %v8835, %v8875
        %v8884 = vadd.f32 %v8836, %v8876
        %v8885 = vadd.f32 %v8837, %v8877
        %v8886 = vmul.f32 %v1551, %v8800
        %v8887 = vmul.f32 %v1705, %v8804
        %v8888 = vmul.f32 %v1859, %v8808
        %v8889 = vmul.f32 %v2013, %v8812
        %v8890 = vmul.f32 %v2167, %v8816
        %v8891 = vmul.f32 %v2321, %v8820
        %v8892 = vmul.f32 %v2475, %v8824
        %v8893 = vmul.f32 %v2629, %v8828
        %v8894 = vmul.f32 %v312, %v8840
        %v8895 = vmul.f32 %v467, %v8844
        %v8896 = vmul.f32 %v622, %v8848
        %v8897 = vmul.f32 %v777, %v8852
        %v8898 = vmul.f32 %v932, %v8856
        %v8899 = vmul.f32 %v1087, %v8860
        %v8900 = vmul.f32 %v1242, %v8864
        %v8901 = vmul.f32 %v1397, %v8868
        %v8902 = vsub.f32 %v8886, %v8894
        %v8903 = vsub.f32 %v8887, %v8895
        %v8904 = vsub.f32 %v8888, %v8896
        %v8905 = vsub.f32 %v8889, %v8897
        %v8906 = vsub.f32 %v8890, %v8898
        %v8907 = vsub.f32 %v8891, %v8899
        %v8908 = vsub.f32 %v8892, %v8900
        %v8909 = vsub.f32 %v8893, %v8901
        %8918 = vrot.lane.b32.xlu0 %v8878, 64
        %v8919 = vpop.permute.xlu0 %8918
        %8920 = vrot.lane.b32.xlu0 %v8879, 64
        %v8921 = vpop.permute.xlu0 %8920
        %8922 = vrot.lane.b32.xlu0 %v8880, 64
        %v8923 = vpop.permute.xlu0 %8922
        %8924 = vrot.lane.b32.xlu0 %v8881, 64
        %v8925 = vpop.permute.xlu0 %8924
        %8926 = vrot.lane.b32.xlu0 %v8882, 64
        %v8927 = vpop.permute.xlu0 %8926
        %8928 = vrot.lane.b32.xlu0 %v8883, 64
        %v8929 = vpop.permute.xlu0 %8928
        %8930 = vrot.lane.b32.xlu0 %v8884, 64
        %v8931 = vpop.permute.xlu0 %8930
        %8932 = vrot.lane.b32.xlu0 %v8885, 64
        %v8933 = vpop.permute.xlu0 %8932
        %v8942 = vsel %vm5421, %v8766, %v8919
        %v8943 = vsel %vm5421, %v8767, %v8921
        %v8944 = vsel %vm5421, %v8768, %v8923
        %v8945 = vsel %vm5421, %v8769, %v8925
        %v8946 = vsel %vm5421, %v8770, %v8927
        %v8947 = vsel %vm5421, %v8771, %v8929
        %v8948 = vsel %vm5421, %v8772, %v8931
        %v8949 = vsel %vm5421, %v8773, %v8933
        %8958 = vrot.lane.b32.xlu0 %v8902, 64
        %v8959 = vpop.permute.xlu0 %8958
        %8960 = vrot.lane.b32.xlu0 %v8903, 64
        %v8961 = vpop.permute.xlu0 %8960
        %8962 = vrot.lane.b32.xlu0 %v8904, 64
        %v8963 = vpop.permute.xlu0 %8962
        %8964 = vrot.lane.b32.xlu0 %v8905, 64
        %v8965 = vpop.permute.xlu0 %8964
        %8966 = vrot.lane.b32.xlu0 %v8906, 64
        %v8967 = vpop.permute.xlu0 %8966
        %8968 = vrot.lane.b32.xlu0 %v8907, 64
        %v8969 = vpop.permute.xlu0 %8968
        %8970 = vrot.lane.b32.xlu0 %v8908, 64
        %v8971 = vpop.permute.xlu0 %8970
        %8972 = vrot.lane.b32.xlu0 %v8909, 64
        %v8973 = vpop.permute.xlu0 %8972
        %v8982 = vsel %vm5421, %v8790, %v8959
        %v8983 = vsel %vm5421, %v8791, %v8961
        %v8984 = vsel %vm5421, %v8792, %v8963
        %v8985 = vsel %vm5421, %v8793, %v8965
        %v8986 = vsel %vm5421, %v8794, %v8967
        %v8987 = vsel %vm5421, %v8795, %v8969
        %v8988 = vsel %vm5421, %v8796, %v8971
        %v8989 = vsel %vm5421, %v8797, %v8973
        %8990 = vst [vmem:[%s94 + $0x58] sm:$0xff] %v8942
        %8991 = vst [vmem:[%s94 + $0xd8] sm:$0xff] %v8943
        %8992 = vst [vmem:[%s94 + $0x158] sm:$0xff] %v8944
        %8993 = vst [vmem:[%s94 + $0x1d8] sm:$0xff] %v8945
        %8994 = vst [vmem:[%s94 + $0x258] sm:$0xff] %v8946
        %8995 = vst [vmem:[%s94 + $0x2d8] sm:$0xff] %v8947
        %8996 = vst [vmem:[%s94 + $0x358] sm:$0xff] %v8948
        %8997 = vst [vmem:[%s94 + $0x3d8] sm:$0xff] %v8949
        %8998 = vst [vmem:[%s94 + $0x458] sm:$0xff] %v8982
        %8999 = vst [vmem:[%s94 + $0x4d8] sm:$0xff] %v8983
        %9000 = vst [vmem:[%s94 + $0x558] sm:$0xff] %v8984
        %9001 = vst [vmem:[%s94 + $0x5d8] sm:$0xff] %v8985
        %9002 = vst [vmem:[%s94 + $0x658] sm:$0xff] %v8986
        %9003 = vst [vmem:[%s94 + $0x6d8] sm:$0xff] %v8987
        %9004 = vst [vmem:[%s94 + $0x758] sm:$0xff] %v8988
        %9005 = vst [vmem:[%s94 + $0x7d8] sm:$0xff] %v8989
        %9006 = vset.pattern.permute.xlu0 24
        %9007 = vperm.xlu0 %9006, %v4070
        %v9008 = vpop.permute.xlu0 %9007
        %9010 = vset.pattern.permute.xlu0 24
        %9011 = vperm.xlu0 %9010, %v4224
        %v9012 = vpop.permute.xlu0 %9011
        %9014 = vset.pattern.permute.xlu0 24
        %9015 = vperm.xlu0 %9014, %v4378
        %v9016 = vpop.permute.xlu0 %9015
        %9018 = vset.pattern.permute.xlu0 24
        %9019 = vperm.xlu0 %9018, %v4532
        %v9020 = vpop.permute.xlu0 %9019
        %9022 = vset.pattern.permute.xlu0 24
        %9023 = vperm.xlu0 %9022, %v4686
        %v9024 = vpop.permute.xlu0 %9023
        %9026 = vset.pattern.permute.xlu0 24
        %9027 = vperm.xlu0 %9026, %v4840
        %v9028 = vpop.permute.xlu0 %9027
        %9030 = vset.pattern.permute.xlu0 24
        %9031 = vperm.xlu0 %9030, %v4994
        %v9032 = vpop.permute.xlu0 %9031
        %9034 = vset.pattern.permute.xlu0 24
        %9035 = vperm.xlu0 %9034, %v5148
        %v9036 = vpop.permute.xlu0 %9035
        %v9038 = vmul.f32 %v312, %v9008
        %v9039 = vmul.f32 %v467, %v9012
        %v9040 = vmul.f32 %v622, %v9016
        %v9041 = vmul.f32 %v777, %v9020
        %v9042 = vmul.f32 %v932, %v9024
        %v9043 = vmul.f32 %v1087, %v9028
        %v9044 = vmul.f32 %v1242, %v9032
        %v9045 = vmul.f32 %v1397, %v9036
        %9046 = vset.pattern.permute.xlu0 24
        %9047 = vperm.xlu0 %9046, %v2831
        %v9048 = vpop.permute.xlu0 %9047
        %9050 = vset.pattern.permute.xlu0 24
        %9051 = vperm.xlu0 %9050, %v2986
        %v9052 = vpop.permute.xlu0 %9051
        %9054 = vset.pattern.permute.xlu0 24
        %9055 = vperm.xlu0 %9054, %v3141
        %v9056 = vpop.permute.xlu0 %9055
        %9058 = vset.pattern.permute.xlu0 24
        %9059 = vperm.xlu0 %9058, %v3296
        %v9060 = vpop.permute.xlu0 %9059
        %9062 = vset.pattern.permute.xlu0 24
        %9063 = vperm.xlu0 %9062, %v3451
        %v9064 = vpop.permute.xlu0 %9063
        %9066 = vset.pattern.permute.xlu0 24
        %9067 = vperm.xlu0 %9066, %v3606
        %v9068 = vpop.permute.xlu0 %9067
        %9070 = vset.pattern.permute.xlu0 24
        %9071 = vperm.xlu0 %9070, %v3761
        %v9072 = vpop.permute.xlu0 %9071
        %9074 = vset.pattern.permute.xlu0 24
        %9075 = vperm.xlu0 %9074, %v3916
        %v9076 = vpop.permute.xlu0 %9075
        %v9078 = vmul.f32 %v1551, %v9048
        %v9079 = vmul.f32 %v1705, %v9052
        %v9080 = vmul.f32 %v1859, %v9056
        %v9081 = vmul.f32 %v2013, %v9060
        %v9082 = vmul.f32 %v2167, %v9064
        %v9083 = vmul.f32 %v2321, %v9068
        %v9084 = vmul.f32 %v2475, %v9072
        %v9085 = vmul.f32 %v2629, %v9076
        %v9086 = vadd.f32 %v9038, %v9078
        %v9087 = vadd.f32 %v9039, %v9079
        %v9088 = vadd.f32 %v9040, %v9080
        %v9089 = vadd.f32 %v9041, %v9081
        %v9090 = vadd.f32 %v9042, %v9082
        %v9091 = vadd.f32 %v9043, %v9083
        %v9092 = vadd.f32 %v9044, %v9084
        %v9093 = vadd.f32 %v9045, %v9085
        %v9094 = vmul.f32 %v1551, %v9008
        %v9095 = vmul.f32 %v1705, %v9012
        %v9096 = vmul.f32 %v1859, %v9016
        %v9097 = vmul.f32 %v2013, %v9020
        %v9098 = vmul.f32 %v2167, %v9024
        %v9099 = vmul.f32 %v2321, %v9028
        %v9100 = vmul.f32 %v2475, %v9032
        %v9101 = vmul.f32 %v2629, %v9036
        %v9102 = vmul.f32 %v312, %v9048
        %v9103 = vmul.f32 %v467, %v9052
        %v9104 = vmul.f32 %v622, %v9056
        %v9105 = vmul.f32 %v777, %v9060
        %v9106 = vmul.f32 %v932, %v9064
        %v9107 = vmul.f32 %v1087, %v9068
        %v9108 = vmul.f32 %v1242, %v9072
        %v9109 = vmul.f32 %v1397, %v9076
        %v9110 = vsub.f32 %v9094, %v9102
        %v9111 = vsub.f32 %v9095, %v9103
        %v9112 = vsub.f32 %v9096, %v9104
        %v9113 = vsub.f32 %v9097, %v9105
        %v9114 = vsub.f32 %v9098, %v9106
        %v9115 = vsub.f32 %v9099, %v9107
        %v9116 = vsub.f32 %v9100, %v9108
        %v9117 = vsub.f32 %v9101, %v9109
        %9118 = vset.pattern.permute.xlu0 25
        %9119 = vperm.xlu0 %9118, %v4070
        %v9120 = vpop.permute.xlu0 %9119
        %9122 = vset.pattern.permute.xlu0 25
        %9123 = vperm.xlu0 %9122, %v4224
        %v9124 = vpop.permute.xlu0 %9123
        %9126 = vset.pattern.permute.xlu0 25
        %9127 = vperm.xlu0 %9126, %v4378
        %v9128 = vpop.permute.xlu0 %9127
        %9130 = vset.pattern.permute.xlu0 25
        %9131 = vperm.xlu0 %9130, %v4532
        %v9132 = vpop.permute.xlu0 %9131
        %9134 = vset.pattern.permute.xlu0 25
        %9135 = vperm.xlu0 %9134, %v4686
        %v9136 = vpop.permute.xlu0 %9135
        %9138 = vset.pattern.permute.xlu0 25
        %9139 = vperm.xlu0 %9138, %v4840
        %v9140 = vpop.permute.xlu0 %9139
        %9142 = vset.pattern.permute.xlu0 25
        %9143 = vperm.xlu0 %9142, %v4994
        %v9144 = vpop.permute.xlu0 %9143
        %9146 = vset.pattern.permute.xlu0 25
        %9147 = vperm.xlu0 %9146, %v5148
        %v9148 = vpop.permute.xlu0 %9147
        %v9150 = vmul.f32 %v312, %v9120
        %v9151 = vmul.f32 %v467, %v9124
        %v9152 = vmul.f32 %v622, %v9128
        %v9153 = vmul.f32 %v777, %v9132
        %v9154 = vmul.f32 %v932, %v9136
        %v9155 = vmul.f32 %v1087, %v9140
        %v9156 = vmul.f32 %v1242, %v9144
        %v9157 = vmul.f32 %v1397, %v9148
        %9158 = vset.pattern.permute.xlu0 25
        %9159 = vperm.xlu0 %9158, %v2831
        %v9160 = vpop.permute.xlu0 %9159
        %9162 = vset.pattern.permute.xlu0 25
        %9163 = vperm.xlu0 %9162, %v2986
        %v9164 = vpop.permute.xlu0 %9163
        %9166 = vset.pattern.permute.xlu0 25
        %9167 = vperm.xlu0 %9166, %v3141
        %v9168 = vpop.permute.xlu0 %9167
        %9170 = vset.pattern.permute.xlu0 25
        %9171 = vperm.xlu0 %9170, %v3296
        %v9172 = vpop.permute.xlu0 %9171
        %9174 = vset.pattern.permute.xlu0 25
        %9175 = vperm.xlu0 %9174, %v3451
        %v9176 = vpop.permute.xlu0 %9175
        %9178 = vset.pattern.permute.xlu0 25
        %9179 = vperm.xlu0 %9178, %v3606
        %v9180 = vpop.permute.xlu0 %9179
        %9182 = vset.pattern.permute.xlu0 25
        %9183 = vperm.xlu0 %9182, %v3761
        %v9184 = vpop.permute.xlu0 %9183
        %9186 = vset.pattern.permute.xlu0 25
        %9187 = vperm.xlu0 %9186, %v3916
        %v9188 = vpop.permute.xlu0 %9187
        %v9190 = vmul.f32 %v1551, %v9160
        %v9191 = vmul.f32 %v1705, %v9164
        %v9192 = vmul.f32 %v1859, %v9168
        %v9193 = vmul.f32 %v2013, %v9172
        %v9194 = vmul.f32 %v2167, %v9176
        %v9195 = vmul.f32 %v2321, %v9180
        %v9196 = vmul.f32 %v2475, %v9184
        %v9197 = vmul.f32 %v2629, %v9188
        %v9198 = vadd.f32 %v9150, %v9190
        %v9199 = vadd.f32 %v9151, %v9191
        %v9200 = vadd.f32 %v9152, %v9192
        %v9201 = vadd.f32 %v9153, %v9193
        %v9202 = vadd.f32 %v9154, %v9194
        %v9203 = vadd.f32 %v9155, %v9195
        %v9204 = vadd.f32 %v9156, %v9196
        %v9205 = vadd.f32 %v9157, %v9197
        %v9206 = vmul.f32 %v1551, %v9120
        %v9207 = vmul.f32 %v1705, %v9124
        %v9208 = vmul.f32 %v1859, %v9128
        %v9209 = vmul.f32 %v2013, %v9132
        %v9210 = vmul.f32 %v2167, %v9136
        %v9211 = vmul.f32 %v2321, %v9140
        %v9212 = vmul.f32 %v2475, %v9144
        %v9213 = vmul.f32 %v2629, %v9148
        %v9214 = vmul.f32 %v312, %v9160
        %v9215 = vmul.f32 %v467, %v9164
        %v9216 = vmul.f32 %v622, %v9168
        %v9217 = vmul.f32 %v777, %v9172
        %v9218 = vmul.f32 %v932, %v9176
        %v9219 = vmul.f32 %v1087, %v9180
        %v9220 = vmul.f32 %v1242, %v9184
        %v9221 = vmul.f32 %v1397, %v9188
        %v9222 = vsub.f32 %v9206, %v9214
        %v9223 = vsub.f32 %v9207, %v9215
        %v9224 = vsub.f32 %v9208, %v9216
        %v9225 = vsub.f32 %v9209, %v9217
        %v9226 = vsub.f32 %v9210, %v9218
        %v9227 = vsub.f32 %v9211, %v9219
        %v9228 = vsub.f32 %v9212, %v9220
        %v9229 = vsub.f32 %v9213, %v9221
        %9238 = vrot.lane.b32.xlu0 %v9198, 64
        %v9239 = vpop.permute.xlu0 %9238
        %9240 = vrot.lane.b32.xlu0 %v9199, 64
        %v9241 = vpop.permute.xlu0 %9240
        %9242 = vrot.lane.b32.xlu0 %v9200, 64
        %v9243 = vpop.permute.xlu0 %9242
        %9244 = vrot.lane.b32.xlu0 %v9201, 64
        %v9245 = vpop.permute.xlu0 %9244
        %9246 = vrot.lane.b32.xlu0 %v9202, 64
        %v9247 = vpop.permute.xlu0 %9246
        %9248 = vrot.lane.b32.xlu0 %v9203, 64
        %v9249 = vpop.permute.xlu0 %9248
        %9250 = vrot.lane.b32.xlu0 %v9204, 64
        %v9251 = vpop.permute.xlu0 %9250
        %9252 = vrot.lane.b32.xlu0 %v9205, 64
        %v9253 = vpop.permute.xlu0 %9252
        %v9262 = vsel %vm5421, %v9086, %v9239
        %v9263 = vsel %vm5421, %v9087, %v9241
        %v9264 = vsel %vm5421, %v9088, %v9243
        %v9265 = vsel %vm5421, %v9089, %v9245
        %v9266 = vsel %vm5421, %v9090, %v9247
        %v9267 = vsel %vm5421, %v9091, %v9249
        %v9268 = vsel %vm5421, %v9092, %v9251
        %v9269 = vsel %vm5421, %v9093, %v9253
        %9278 = vrot.lane.b32.xlu0 %v9222, 64
        %v9279 = vpop.permute.xlu0 %9278
        %9280 = vrot.lane.b32.xlu0 %v9223, 64
        %v9281 = vpop.permute.xlu0 %9280
        %9282 = vrot.lane.b32.xlu0 %v9224, 64
        %v9283 = vpop.permute.xlu0 %9282
        %9284 = vrot.lane.b32.xlu0 %v9225, 64
        %v9285 = vpop.permute.xlu0 %9284
        %9286 = vrot.lane.b32.xlu0 %v9226, 64
        %v9287 = vpop.permute.xlu0 %9286
        %9288 = vrot.lane.b32.xlu0 %v9227, 64
        %v9289 = vpop.permute.xlu0 %9288
        %9290 = vrot.lane.b32.xlu0 %v9228, 64
        %v9291 = vpop.permute.xlu0 %9290
        %9292 = vrot.lane.b32.xlu0 %v9229, 64
        %v9293 = vpop.permute.xlu0 %9292
        %v9302 = vsel %vm5421, %v9110, %v9279
        %v9303 = vsel %vm5421, %v9111, %v9281
        %v9304 = vsel %vm5421, %v9112, %v9283
        %v9305 = vsel %vm5421, %v9113, %v9285
        %v9306 = vsel %vm5421, %v9114, %v9287
        %v9307 = vsel %vm5421, %v9115, %v9289
        %v9308 = vsel %vm5421, %v9116, %v9291
        %v9309 = vsel %vm5421, %v9117, %v9293
        %9310 = vst [vmem:[%s94 + $0x60] sm:$0xff] %v9262
        %9311 = vst [vmem:[%s94 + $0xe0] sm:$0xff] %v9263
        %9312 = vst [vmem:[%s94 + $0x160] sm:$0xff] %v9264
        %9313 = vst [vmem:[%s94 + $0x1e0] sm:$0xff] %v9265
        %9314 = vst [vmem:[%s94 + $0x260] sm:$0xff] %v9266
        %9315 = vst [vmem:[%s94 + $0x2e0] sm:$0xff] %v9267
        %9316 = vst [vmem:[%s94 + $0x360] sm:$0xff] %v9268
        %9317 = vst [vmem:[%s94 + $0x3e0] sm:$0xff] %v9269
        %9318 = vst [vmem:[%s94 + $0x460] sm:$0xff] %v9302
        %9319 = vst [vmem:[%s94 + $0x4e0] sm:$0xff] %v9303
        %9320 = vst [vmem:[%s94 + $0x560] sm:$0xff] %v9304
        %9321 = vst [vmem:[%s94 + $0x5e0] sm:$0xff] %v9305
        %9322 = vst [vmem:[%s94 + $0x660] sm:$0xff] %v9306
        %9323 = vst [vmem:[%s94 + $0x6e0] sm:$0xff] %v9307
        %9324 = vst [vmem:[%s94 + $0x760] sm:$0xff] %v9308
        %9325 = vst [vmem:[%s94 + $0x7e0] sm:$0xff] %v9309
        %9326 = vset.pattern.permute.xlu0 26
        %9327 = vperm.xlu0 %9326, %v4070
        %v9328 = vpop.permute.xlu0 %9327
        %9330 = vset.pattern.permute.xlu0 26
        %9331 = vperm.xlu0 %9330, %v4224
        %v9332 = vpop.permute.xlu0 %9331
        %9334 = vset.pattern.permute.xlu0 26
        %9335 = vperm.xlu0 %9334, %v4378
        %v9336 = vpop.permute.xlu0 %9335
        %9338 = vset.pattern.permute.xlu0 26
        %9339 = vperm.xlu0 %9338, %v4532
        %v9340 = vpop.permute.xlu0 %9339
        %9342 = vset.pattern.permute.xlu0 26
        %9343 = vperm.xlu0 %9342, %v4686
        %v9344 = vpop.permute.xlu0 %9343
        %9346 = vset.pattern.permute.xlu0 26
        %9347 = vperm.xlu0 %9346, %v4840
        %v9348 = vpop.permute.xlu0 %9347
        %9350 = vset.pattern.permute.xlu0 26
        %9351 = vperm.xlu0 %9350, %v4994
        %v9352 = vpop.permute.xlu0 %9351
        %9354 = vset.pattern.permute.xlu0 26
        %9355 = vperm.xlu0 %9354, %v5148
        %v9356 = vpop.permute.xlu0 %9355
        %v9358 = vmul.f32 %v312, %v9328
        %v9359 = vmul.f32 %v467, %v9332
        %v9360 = vmul.f32 %v622, %v9336
        %v9361 = vmul.f32 %v777, %v9340
        %v9362 = vmul.f32 %v932, %v9344
        %v9363 = vmul.f32 %v1087, %v9348
        %v9364 = vmul.f32 %v1242, %v9352
        %v9365 = vmul.f32 %v1397, %v9356
        %9366 = vset.pattern.permute.xlu0 26
        %9367 = vperm.xlu0 %9366, %v2831
        %v9368 = vpop.permute.xlu0 %9367
        %9370 = vset.pattern.permute.xlu0 26
        %9371 = vperm.xlu0 %9370, %v2986
        %v9372 = vpop.permute.xlu0 %9371
        %9374 = vset.pattern.permute.xlu0 26
        %9375 = vperm.xlu0 %9374, %v3141
        %v9376 = vpop.permute.xlu0 %9375
        %9378 = vset.pattern.permute.xlu0 26
        %9379 = vperm.xlu0 %9378, %v3296
        %v9380 = vpop.permute.xlu0 %9379
        %9382 = vset.pattern.permute.xlu0 26
        %9383 = vperm.xlu0 %9382, %v3451
        %v9384 = vpop.permute.xlu0 %9383
        %9386 = vset.pattern.permute.xlu0 26
        %9387 = vperm.xlu0 %9386, %v3606
        %v9388 = vpop.permute.xlu0 %9387
        %9390 = vset.pattern.permute.xlu0 26
        %9391 = vperm.xlu0 %9390, %v3761
        %v9392 = vpop.permute.xlu0 %9391
        %9394 = vset.pattern.permute.xlu0 26
        %9395 = vperm.xlu0 %9394, %v3916
        %v9396 = vpop.permute.xlu0 %9395
        %v9398 = vmul.f32 %v1551, %v9368
        %v9399 = vmul.f32 %v1705, %v9372
        %v9400 = vmul.f32 %v1859, %v9376
        %v9401 = vmul.f32 %v2013, %v9380
        %v9402 = vmul.f32 %v2167, %v9384
        %v9403 = vmul.f32 %v2321, %v9388
        %v9404 = vmul.f32 %v2475, %v9392
        %v9405 = vmul.f32 %v2629, %v9396
        %v9406 = vadd.f32 %v9358, %v9398
        %v9407 = vadd.f32 %v9359, %v9399
        %v9408 = vadd.f32 %v9360, %v9400
        %v9409 = vadd.f32 %v9361, %v9401
        %v9410 = vadd.f32 %v9362, %v9402
        %v9411 = vadd.f32 %v9363, %v9403
        %v9412 = vadd.f32 %v9364, %v9404
        %v9413 = vadd.f32 %v9365, %v9405
        %v9414 = vmul.f32 %v1551, %v9328
        %v9415 = vmul.f32 %v1705, %v9332
        %v9416 = vmul.f32 %v1859, %v9336
        %v9417 = vmul.f32 %v2013, %v9340
        %v9418 = vmul.f32 %v2167, %v9344
        %v9419 = vmul.f32 %v2321, %v9348
        %v9420 = vmul.f32 %v2475, %v9352
        %v9421 = vmul.f32 %v2629, %v9356
        %v9422 = vmul.f32 %v312, %v9368
        %v9423 = vmul.f32 %v467, %v9372
        %v9424 = vmul.f32 %v622, %v9376
        %v9425 = vmul.f32 %v777, %v9380
        %v9426 = vmul.f32 %v932, %v9384
        %v9427 = vmul.f32 %v1087, %v9388
        %v9428 = vmul.f32 %v1242, %v9392
        %v9429 = vmul.f32 %v1397, %v9396
        %v9430 = vsub.f32 %v9414, %v9422
        %v9431 = vsub.f32 %v9415, %v9423
        %v9432 = vsub.f32 %v9416, %v9424
        %v9433 = vsub.f32 %v9417, %v9425
        %v9434 = vsub.f32 %v9418, %v9426
        %v9435 = vsub.f32 %v9419, %v9427
        %v9436 = vsub.f32 %v9420, %v9428
        %v9437 = vsub.f32 %v9421, %v9429
        %9438 = vset.pattern.permute.xlu0 27
        %9439 = vperm.xlu0 %9438, %v4070
        %v9440 = vpop.permute.xlu0 %9439
        %9442 = vset.pattern.permute.xlu0 27
        %9443 = vperm.xlu0 %9442, %v4224
        %v9444 = vpop.permute.xlu0 %9443
        %9446 = vset.pattern.permute.xlu0 27
        %9447 = vperm.xlu0 %9446, %v4378
        %v9448 = vpop.permute.xlu0 %9447
        %9450 = vset.pattern.permute.xlu0 27
        %9451 = vperm.xlu0 %9450, %v4532
        %v9452 = vpop.permute.xlu0 %9451
        %9454 = vset.pattern.permute.xlu0 27
        %9455 = vperm.xlu0 %9454, %v4686
        %v9456 = vpop.permute.xlu0 %9455
        %9458 = vset.pattern.permute.xlu0 27
        %9459 = vperm.xlu0 %9458, %v4840
        %v9460 = vpop.permute.xlu0 %9459
        %9462 = vset.pattern.permute.xlu0 27
        %9463 = vperm.xlu0 %9462, %v4994
        %v9464 = vpop.permute.xlu0 %9463
        %9466 = vset.pattern.permute.xlu0 27
        %9467 = vperm.xlu0 %9466, %v5148
        %v9468 = vpop.permute.xlu0 %9467
        %v9470 = vmul.f32 %v312, %v9440
        %v9471 = vmul.f32 %v467, %v9444
        %v9472 = vmul.f32 %v622, %v9448
        %v9473 = vmul.f32 %v777, %v9452
        %v9474 = vmul.f32 %v932, %v9456
        %v9475 = vmul.f32 %v1087, %v9460
        %v9476 = vmul.f32 %v1242, %v9464
        %v9477 = vmul.f32 %v1397, %v9468
        %9478 = vset.pattern.permute.xlu0 27
        %9479 = vperm.xlu0 %9478, %v2831
        %v9480 = vpop.permute.xlu0 %9479
        %9482 = vset.pattern.permute.xlu0 27
        %9483 = vperm.xlu0 %9482, %v2986
        %v9484 = vpop.permute.xlu0 %9483
        %9486 = vset.pattern.permute.xlu0 27
        %9487 = vperm.xlu0 %9486, %v3141
        %v9488 = vpop.permute.xlu0 %9487
        %9490 = vset.pattern.permute.xlu0 27
        %9491 = vperm.xlu0 %9490, %v3296
        %v9492 = vpop.permute.xlu0 %9491
        %9494 = vset.pattern.permute.xlu0 27
        %9495 = vperm.xlu0 %9494, %v3451
        %v9496 = vpop.permute.xlu0 %9495
        %9498 = vset.pattern.permute.xlu0 27
        %9499 = vperm.xlu0 %9498, %v3606
        %v9500 = vpop.permute.xlu0 %9499
        %9502 = vset.pattern.permute.xlu0 27
        %9503 = vperm.xlu0 %9502, %v3761
        %v9504 = vpop.permute.xlu0 %9503
        %9506 = vset.pattern.permute.xlu0 27
        %9507 = vperm.xlu0 %9506, %v3916
        %v9508 = vpop.permute.xlu0 %9507
        %v9510 = vmul.f32 %v1551, %v9480
        %v9511 = vmul.f32 %v1705, %v9484
        %v9512 = vmul.f32 %v1859, %v9488
        %v9513 = vmul.f32 %v2013, %v9492
        %v9514 = vmul.f32 %v2167, %v9496
        %v9515 = vmul.f32 %v2321, %v9500
        %v9516 = vmul.f32 %v2475, %v9504
        %v9517 = vmul.f32 %v2629, %v9508
        %v9518 = vadd.f32 %v9470, %v9510
        %v9519 = vadd.f32 %v9471, %v9511
        %v9520 = vadd.f32 %v9472, %v9512
        %v9521 = vadd.f32 %v9473, %v9513
        %v9522 = vadd.f32 %v9474, %v9514
        %v9523 = vadd.f32 %v9475, %v9515
        %v9524 = vadd.f32 %v9476, %v9516
        %v9525 = vadd.f32 %v9477, %v9517
        %v9526 = vmul.f32 %v1551, %v9440
        %v9527 = vmul.f32 %v1705, %v9444
        %v9528 = vmul.f32 %v1859, %v9448
        %v9529 = vmul.f32 %v2013, %v9452
        %v9530 = vmul.f32 %v2167, %v9456
        %v9531 = vmul.f32 %v2321, %v9460
        %v9532 = vmul.f32 %v2475, %v9464
        %v9533 = vmul.f32 %v2629, %v9468
        %v9534 = vmul.f32 %v312, %v9480
        %v9535 = vmul.f32 %v467, %v9484
        %v9536 = vmul.f32 %v622, %v9488
        %v9537 = vmul.f32 %v777, %v9492
        %v9538 = vmul.f32 %v932, %v9496
        %v9539 = vmul.f32 %v1087, %v9500
        %v9540 = vmul.f32 %v1242, %v9504
        %v9541 = vmul.f32 %v1397, %v9508
        %v9542 = vsub.f32 %v9526, %v9534
        %v9543 = vsub.f32 %v9527, %v9535
        %v9544 = vsub.f32 %v9528, %v9536
        %v9545 = vsub.f32 %v9529, %v9537
        %v9546 = vsub.f32 %v9530, %v9538
        %v9547 = vsub.f32 %v9531, %v9539
        %v9548 = vsub.f32 %v9532, %v9540
        %v9549 = vsub.f32 %v9533, %v9541
        %9558 = vrot.lane.b32.xlu0 %v9518, 64
        %v9559 = vpop.permute.xlu0 %9558
        %9560 = vrot.lane.b32.xlu0 %v9519, 64
        %v9561 = vpop.permute.xlu0 %9560
        %9562 = vrot.lane.b32.xlu0 %v9520, 64
        %v9563 = vpop.permute.xlu0 %9562
        %9564 = vrot.lane.b32.xlu0 %v9521, 64
        %v9565 = vpop.permute.xlu0 %9564
        %9566 = vrot.lane.b32.xlu0 %v9522, 64
        %v9567 = vpop.permute.xlu0 %9566
        %9568 = vrot.lane.b32.xlu0 %v9523, 64
        %v9569 = vpop.permute.xlu0 %9568
        %9570 = vrot.lane.b32.xlu0 %v9524, 64
        %v9571 = vpop.permute.xlu0 %9570
        %9572 = vrot.lane.b32.xlu0 %v9525, 64
        %v9573 = vpop.permute.xlu0 %9572
        %v9582 = vsel %vm5421, %v9406, %v9559
        %v9583 = vsel %vm5421, %v9407, %v9561
        %v9584 = vsel %vm5421, %v9408, %v9563
        %v9585 = vsel %vm5421, %v9409, %v9565
        %v9586 = vsel %vm5421, %v9410, %v9567
        %v9587 = vsel %vm5421, %v9411, %v9569
        %v9588 = vsel %vm5421, %v9412, %v9571
        %v9589 = vsel %vm5421, %v9413, %v9573
        %9598 = vrot.lane.b32.xlu0 %v9542, 64
        %v9599 = vpop.permute.xlu0 %9598
        %9600 = vrot.lane.b32.xlu0 %v9543, 64
        %v9601 = vpop.permute.xlu0 %9600
        %9602 = vrot.lane.b32.xlu0 %v9544, 64
        %v9603 = vpop.permute.xlu0 %9602
        %9604 = vrot.lane.b32.xlu0 %v9545, 64
        %v9605 = vpop.permute.xlu0 %9604
        %9606 = vrot.lane.b32.xlu0 %v9546, 64
        %v9607 = vpop.permute.xlu0 %9606
        %9608 = vrot.lane.b32.xlu0 %v9547, 64
        %v9609 = vpop.permute.xlu0 %9608
        %9610 = vrot.lane.b32.xlu0 %v9548, 64
        %v9611 = vpop.permute.xlu0 %9610
        %9612 = vrot.lane.b32.xlu0 %v9549, 64
        %v9613 = vpop.permute.xlu0 %9612
        %v9622 = vsel %vm5421, %v9430, %v9599
        %v9623 = vsel %vm5421, %v9431, %v9601
        %v9624 = vsel %vm5421, %v9432, %v9603
        %v9625 = vsel %vm5421, %v9433, %v9605
        %v9626 = vsel %vm5421, %v9434, %v9607
        %v9627 = vsel %vm5421, %v9435, %v9609
        %v9628 = vsel %vm5421, %v9436, %v9611
        %v9629 = vsel %vm5421, %v9437, %v9613
        %9630 = vst [vmem:[%s94 + $0x68] sm:$0xff] %v9582
        %9631 = vst [vmem:[%s94 + $0xe8] sm:$0xff] %v9583
        %9632 = vst [vmem:[%s94 + $0x168] sm:$0xff] %v9584
        %9633 = vst [vmem:[%s94 + $0x1e8] sm:$0xff] %v9585
        %9634 = vst [vmem:[%s94 + $0x268] sm:$0xff] %v9586
        %9635 = vst [vmem:[%s94 + $0x2e8] sm:$0xff] %v9587
        %9636 = vst [vmem:[%s94 + $0x368] sm:$0xff] %v9588
        %9637 = vst [vmem:[%s94 + $0x3e8] sm:$0xff] %v9589
        %9638 = vst [vmem:[%s94 + $0x468] sm:$0xff] %v9622
        %9639 = vst [vmem:[%s94 + $0x4e8] sm:$0xff] %v9623
        %9640 = vst [vmem:[%s94 + $0x568] sm:$0xff] %v9624
        %9641 = vst [vmem:[%s94 + $0x5e8] sm:$0xff] %v9625
        %9642 = vst [vmem:[%s94 + $0x668] sm:$0xff] %v9626
        %9643 = vst [vmem:[%s94 + $0x6e8] sm:$0xff] %v9627
        %9644 = vst [vmem:[%s94 + $0x768] sm:$0xff] %v9628
        %9645 = vst [vmem:[%s94 + $0x7e8] sm:$0xff] %v9629
        %9646 = vset.pattern.permute.xlu0 28
        %9647 = vperm.xlu0 %9646, %v4070
        %v9648 = vpop.permute.xlu0 %9647
        %9650 = vset.pattern.permute.xlu0 28
        %9651 = vperm.xlu0 %9650, %v4224
        %v9652 = vpop.permute.xlu0 %9651
        %9654 = vset.pattern.permute.xlu0 28
        %9655 = vperm.xlu0 %9654, %v4378
        %v9656 = vpop.permute.xlu0 %9655
        %9658 = vset.pattern.permute.xlu0 28
        %9659 = vperm.xlu0 %9658, %v4532
        %v9660 = vpop.permute.xlu0 %9659
        %9662 = vset.pattern.permute.xlu0 28
        %9663 = vperm.xlu0 %9662, %v4686
        %v9664 = vpop.permute.xlu0 %9663
        %9666 = vset.pattern.permute.xlu0 28
        %9667 = vperm.xlu0 %9666, %v4840
        %v9668 = vpop.permute.xlu0 %9667
        %9670 = vset.pattern.permute.xlu0 28
        %9671 = vperm.xlu0 %9670, %v4994
        %v9672 = vpop.permute.xlu0 %9671
        %9674 = vset.pattern.permute.xlu0 28
        %9675 = vperm.xlu0 %9674, %v5148
        %v9676 = vpop.permute.xlu0 %9675
        %v9678 = vmul.f32 %v312, %v9648
        %v9679 = vmul.f32 %v467, %v9652
        %v9680 = vmul.f32 %v622, %v9656
        %v9681 = vmul.f32 %v777, %v9660
        %v9682 = vmul.f32 %v932, %v9664
        %v9683 = vmul.f32 %v1087, %v9668
        %v9684 = vmul.f32 %v1242, %v9672
        %v9685 = vmul.f32 %v1397, %v9676
        %9686 = vset.pattern.permute.xlu0 28
        %9687 = vperm.xlu0 %9686, %v2831
        %v9688 = vpop.permute.xlu0 %9687
        %9690 = vset.pattern.permute.xlu0 28
        %9691 = vperm.xlu0 %9690, %v2986
        %v9692 = vpop.permute.xlu0 %9691
        %9694 = vset.pattern.permute.xlu0 28
        %9695 = vperm.xlu0 %9694, %v3141
        %v9696 = vpop.permute.xlu0 %9695
        %9698 = vset.pattern.permute.xlu0 28
        %9699 = vperm.xlu0 %9698, %v3296
        %v9700 = vpop.permute.xlu0 %9699
        %9702 = vset.pattern.permute.xlu0 28
        %9703 = vperm.xlu0 %9702, %v3451
        %v9704 = vpop.permute.xlu0 %9703
        %9706 = vset.pattern.permute.xlu0 28
        %9707 = vperm.xlu0 %9706, %v3606
        %v9708 = vpop.permute.xlu0 %9707
        %9710 = vset.pattern.permute.xlu0 28
        %9711 = vperm.xlu0 %9710, %v3761
        %v9712 = vpop.permute.xlu0 %9711
        %9714 = vset.pattern.permute.xlu0 28
        %9715 = vperm.xlu0 %9714, %v3916
        %v9716 = vpop.permute.xlu0 %9715
        %v9718 = vmul.f32 %v1551, %v9688
        %v9719 = vmul.f32 %v1705, %v9692
        %v9720 = vmul.f32 %v1859, %v9696
        %v9721 = vmul.f32 %v2013, %v9700
        %v9722 = vmul.f32 %v2167, %v9704
        %v9723 = vmul.f32 %v2321, %v9708
        %v9724 = vmul.f32 %v2475, %v9712
        %v9725 = vmul.f32 %v2629, %v9716
        %v9726 = vadd.f32 %v9678, %v9718
        %v9727 = vadd.f32 %v9679, %v9719
        %v9728 = vadd.f32 %v9680, %v9720
        %v9729 = vadd.f32 %v9681, %v9721
        %v9730 = vadd.f32 %v9682, %v9722
        %v9731 = vadd.f32 %v9683, %v9723
        %v9732 = vadd.f32 %v9684, %v9724
        %v9733 = vadd.f32 %v9685, %v9725
        %v9734 = vmul.f32 %v1551, %v9648
        %v9735 = vmul.f32 %v1705, %v9652
        %v9736 = vmul.f32 %v1859, %v9656
        %v9737 = vmul.f32 %v2013, %v9660
        %v9738 = vmul.f32 %v2167, %v9664
        %v9739 = vmul.f32 %v2321, %v9668
        %v9740 = vmul.f32 %v2475, %v9672
        %v9741 = vmul.f32 %v2629, %v9676
        %v9742 = vmul.f32 %v312, %v9688
        %v9743 = vmul.f32 %v467, %v9692
        %v9744 = vmul.f32 %v622, %v9696
        %v9745 = vmul.f32 %v777, %v9700
        %v9746 = vmul.f32 %v932, %v9704
        %v9747 = vmul.f32 %v1087, %v9708
        %v9748 = vmul.f32 %v1242, %v9712
        %v9749 = vmul.f32 %v1397, %v9716
        %v9750 = vsub.f32 %v9734, %v9742
        %v9751 = vsub.f32 %v9735, %v9743
        %v9752 = vsub.f32 %v9736, %v9744
        %v9753 = vsub.f32 %v9737, %v9745
        %v9754 = vsub.f32 %v9738, %v9746
        %v9755 = vsub.f32 %v9739, %v9747
        %v9756 = vsub.f32 %v9740, %v9748
        %v9757 = vsub.f32 %v9741, %v9749
        %9758 = vset.pattern.permute.xlu0 29
        %9759 = vperm.xlu0 %9758, %v4070
        %v9760 = vpop.permute.xlu0 %9759
        %9762 = vset.pattern.permute.xlu0 29
        %9763 = vperm.xlu0 %9762, %v4224
        %v9764 = vpop.permute.xlu0 %9763
        %9766 = vset.pattern.permute.xlu0 29
        %9767 = vperm.xlu0 %9766, %v4378
        %v9768 = vpop.permute.xlu0 %9767
        %9770 = vset.pattern.permute.xlu0 29
        %9771 = vperm.xlu0 %9770, %v4532
        %v9772 = vpop.permute.xlu0 %9771
        %9774 = vset.pattern.permute.xlu0 29
        %9775 = vperm.xlu0 %9774, %v4686
        %v9776 = vpop.permute.xlu0 %9775
        %9778 = vset.pattern.permute.xlu0 29
        %9779 = vperm.xlu0 %9778, %v4840
        %v9780 = vpop.permute.xlu0 %9779
        %9782 = vset.pattern.permute.xlu0 29
        %9783 = vperm.xlu0 %9782, %v4994
        %v9784 = vpop.permute.xlu0 %9783
        %9786 = vset.pattern.permute.xlu0 29
        %9787 = vperm.xlu0 %9786, %v5148
        %v9788 = vpop.permute.xlu0 %9787
        %v9790 = vmul.f32 %v312, %v9760
        %v9791 = vmul.f32 %v467, %v9764
        %v9792 = vmul.f32 %v622, %v9768
        %v9793 = vmul.f32 %v777, %v9772
        %v9794 = vmul.f32 %v932, %v9776
        %v9795 = vmul.f32 %v1087, %v9780
        %v9796 = vmul.f32 %v1242, %v9784
        %v9797 = vmul.f32 %v1397, %v9788
        %9798 = vset.pattern.permute.xlu0 29
        %9799 = vperm.xlu0 %9798, %v2831
        %v9800 = vpop.permute.xlu0 %9799
        %9802 = vset.pattern.permute.xlu0 29
        %9803 = vperm.xlu0 %9802, %v2986
        %v9804 = vpop.permute.xlu0 %9803
        %9806 = vset.pattern.permute.xlu0 29
        %9807 = vperm.xlu0 %9806, %v3141
        %v9808 = vpop.permute.xlu0 %9807
        %9810 = vset.pattern.permute.xlu0 29
        %9811 = vperm.xlu0 %9810, %v3296
        %v9812 = vpop.permute.xlu0 %9811
        %9814 = vset.pattern.permute.xlu0 29
        %9815 = vperm.xlu0 %9814, %v3451
        %v9816 = vpop.permute.xlu0 %9815
        %9818 = vset.pattern.permute.xlu0 29
        %9819 = vperm.xlu0 %9818, %v3606
        %v9820 = vpop.permute.xlu0 %9819
        %9822 = vset.pattern.permute.xlu0 29
        %9823 = vperm.xlu0 %9822, %v3761
        %v9824 = vpop.permute.xlu0 %9823
        %9826 = vset.pattern.permute.xlu0 29
        %9827 = vperm.xlu0 %9826, %v3916
        %v9828 = vpop.permute.xlu0 %9827
        %v9830 = vmul.f32 %v1551, %v9800
        %v9831 = vmul.f32 %v1705, %v9804
        %v9832 = vmul.f32 %v1859, %v9808
        %v9833 = vmul.f32 %v2013, %v9812
        %v9834 = vmul.f32 %v2167, %v9816
        %v9835 = vmul.f32 %v2321, %v9820
        %v9836 = vmul.f32 %v2475, %v9824
        %v9837 = vmul.f32 %v2629, %v9828
        %v9838 = vadd.f32 %v9790, %v9830
        %v9839 = vadd.f32 %v9791, %v9831
        %v9840 = vadd.f32 %v9792, %v9832
        %v9841 = vadd.f32 %v9793, %v9833
        %v9842 = vadd.f32 %v9794, %v9834
        %v9843 = vadd.f32 %v9795, %v9835
        %v9844 = vadd.f32 %v9796, %v9836
        %v9845 = vadd.f32 %v9797, %v9837
        %v9846 = vmul.f32 %v1551, %v9760
        %v9847 = vmul.f32 %v1705, %v9764
        %v9848 = vmul.f32 %v1859, %v9768
        %v9849 = vmul.f32 %v2013, %v9772
        %v9850 = vmul.f32 %v2167, %v9776
        %v9851 = vmul.f32 %v2321, %v9780
        %v9852 = vmul.f32 %v2475, %v9784
        %v9853 = vmul.f32 %v2629, %v9788
        %v9854 = vmul.f32 %v312, %v9800
        %v9855 = vmul.f32 %v467, %v9804
        %v9856 = vmul.f32 %v622, %v9808
        %v9857 = vmul.f32 %v777, %v9812
        %v9858 = vmul.f32 %v932, %v9816
        %v9859 = vmul.f32 %v1087, %v9820
        %v9860 = vmul.f32 %v1242, %v9824
        %v9861 = vmul.f32 %v1397, %v9828
        %v9862 = vsub.f32 %v9846, %v9854
        %v9863 = vsub.f32 %v9847, %v9855
        %v9864 = vsub.f32 %v9848, %v9856
        %v9865 = vsub.f32 %v9849, %v9857
        %v9866 = vsub.f32 %v9850, %v9858
        %v9867 = vsub.f32 %v9851, %v9859
        %v9868 = vsub.f32 %v9852, %v9860
        %v9869 = vsub.f32 %v9853, %v9861
        %9878 = vrot.lane.b32.xlu0 %v9838, 64
        %v9879 = vpop.permute.xlu0 %9878
        %9880 = vrot.lane.b32.xlu0 %v9839, 64
        %v9881 = vpop.permute.xlu0 %9880
        %9882 = vrot.lane.b32.xlu0 %v9840, 64
        %v9883 = vpop.permute.xlu0 %9882
        %9884 = vrot.lane.b32.xlu0 %v9841, 64
        %v9885 = vpop.permute.xlu0 %9884
        %9886 = vrot.lane.b32.xlu0 %v9842, 64
        %v9887 = vpop.permute.xlu0 %9886
        %9888 = vrot.lane.b32.xlu0 %v9843, 64
        %v9889 = vpop.permute.xlu0 %9888
        %9890 = vrot.lane.b32.xlu0 %v9844, 64
        %v9891 = vpop.permute.xlu0 %9890
        %9892 = vrot.lane.b32.xlu0 %v9845, 64
        %v9893 = vpop.permute.xlu0 %9892
        %v9902 = vsel %vm5421, %v9726, %v9879
        %v9903 = vsel %vm5421, %v9727, %v9881
        %v9904 = vsel %vm5421, %v9728, %v9883
        %v9905 = vsel %vm5421, %v9729, %v9885
        %v9906 = vsel %vm5421, %v9730, %v9887
        %v9907 = vsel %vm5421, %v9731, %v9889
        %v9908 = vsel %vm5421, %v9732, %v9891
        %v9909 = vsel %vm5421, %v9733, %v9893
        %9918 = vrot.lane.b32.xlu0 %v9862, 64
        %v9919 = vpop.permute.xlu0 %9918
        %9920 = vrot.lane.b32.xlu0 %v9863, 64
        %v9921 = vpop.permute.xlu0 %9920
        %9922 = vrot.lane.b32.xlu0 %v9864, 64
        %v9923 = vpop.permute.xlu0 %9922
        %9924 = vrot.lane.b32.xlu0 %v9865, 64
        %v9925 = vpop.permute.xlu0 %9924
        %9926 = vrot.lane.b32.xlu0 %v9866, 64
        %v9927 = vpop.permute.xlu0 %9926
        %9928 = vrot.lane.b32.xlu0 %v9867, 64
        %v9929 = vpop.permute.xlu0 %9928
        %9930 = vrot.lane.b32.xlu0 %v9868, 64
        %v9931 = vpop.permute.xlu0 %9930
        %9932 = vrot.lane.b32.xlu0 %v9869, 64
        %v9933 = vpop.permute.xlu0 %9932
        %v9942 = vsel %vm5421, %v9750, %v9919
        %v9943 = vsel %vm5421, %v9751, %v9921
        %v9944 = vsel %vm5421, %v9752, %v9923
        %v9945 = vsel %vm5421, %v9753, %v9925
        %v9946 = vsel %vm5421, %v9754, %v9927
        %v9947 = vsel %vm5421, %v9755, %v9929
        %v9948 = vsel %vm5421, %v9756, %v9931
        %v9949 = vsel %vm5421, %v9757, %v9933
        %9950 = vst [vmem:[%s94 + $0x70] sm:$0xff] %v9902
        %9951 = vst [vmem:[%s94 + $0xf0] sm:$0xff] %v9903
        %9952 = vst [vmem:[%s94 + $0x170] sm:$0xff] %v9904
        %9953 = vst [vmem:[%s94 + $0x1f0] sm:$0xff] %v9905
        %9954 = vst [vmem:[%s94 + $0x270] sm:$0xff] %v9906
        %9955 = vst [vmem:[%s94 + $0x2f0] sm:$0xff] %v9907
        %9956 = vst [vmem:[%s94 + $0x370] sm:$0xff] %v9908
        %9957 = vst [vmem:[%s94 + $0x3f0] sm:$0xff] %v9909
        %9958 = vst [vmem:[%s94 + $0x470] sm:$0xff] %v9942
        %9959 = vst [vmem:[%s94 + $0x4f0] sm:$0xff] %v9943
        %9960 = vst [vmem:[%s94 + $0x570] sm:$0xff] %v9944
        %9961 = vst [vmem:[%s94 + $0x5f0] sm:$0xff] %v9945
        %9962 = vst [vmem:[%s94 + $0x670] sm:$0xff] %v9946
        %9963 = vst [vmem:[%s94 + $0x6f0] sm:$0xff] %v9947
        %9964 = vst [vmem:[%s94 + $0x770] sm:$0xff] %v9948
        %9965 = vst [vmem:[%s94 + $0x7f0] sm:$0xff] %v9949
        %9966 = vset.pattern.permute.xlu0 30
        %9967 = vperm.xlu0 %9966, %v4070
        %v9968 = vpop.permute.xlu0 %9967
        %9970 = vset.pattern.permute.xlu0 30
        %9971 = vperm.xlu0 %9970, %v4224
        %v9972 = vpop.permute.xlu0 %9971
        %9974 = vset.pattern.permute.xlu0 30
        %9975 = vperm.xlu0 %9974, %v4378
        %v9976 = vpop.permute.xlu0 %9975
        %9978 = vset.pattern.permute.xlu0 30
        %9979 = vperm.xlu0 %9978, %v4532
        %v9980 = vpop.permute.xlu0 %9979
        %9982 = vset.pattern.permute.xlu0 30
        %9983 = vperm.xlu0 %9982, %v4686
        %v9984 = vpop.permute.xlu0 %9983
        %9986 = vset.pattern.permute.xlu0 30
        %9987 = vperm.xlu0 %9986, %v4840
        %v9988 = vpop.permute.xlu0 %9987
        %9990 = vset.pattern.permute.xlu0 30
        %9991 = vperm.xlu0 %9990, %v4994
        %v9992 = vpop.permute.xlu0 %9991
        %9994 = vset.pattern.permute.xlu0 30
        %9995 = vperm.xlu0 %9994, %v5148
        %v9996 = vpop.permute.xlu0 %9995
        %v9998 = vmul.f32 %v312, %v9968
        %v9999 = vmul.f32 %v467, %v9972
        %v10000 = vmul.f32 %v622, %v9976
        %v10001 = vmul.f32 %v777, %v9980
        %v10002 = vmul.f32 %v932, %v9984
        %v10003 = vmul.f32 %v1087, %v9988
        %v10004 = vmul.f32 %v1242, %v9992
        %v10005 = vmul.f32 %v1397, %v9996
        %10006 = vset.pattern.permute.xlu0 30
        %10007 = vperm.xlu0 %10006, %v2831
        %v10008 = vpop.permute.xlu0 %10007
        %10010 = vset.pattern.permute.xlu0 30
        %10011 = vperm.xlu0 %10010, %v2986
        %v10012 = vpop.permute.xlu0 %10011
        %10014 = vset.pattern.permute.xlu0 30
        %10015 = vperm.xlu0 %10014, %v3141
        %v10016 = vpop.permute.xlu0 %10015
        %10018 = vset.pattern.permute.xlu0 30
        %10019 = vperm.xlu0 %10018, %v3296
        %v10020 = vpop.permute.xlu0 %10019
        %10022 = vset.pattern.permute.xlu0 30
        %10023 = vperm.xlu0 %10022, %v3451
        %v10024 = vpop.permute.xlu0 %10023
        %10026 = vset.pattern.permute.xlu0 30
        %10027 = vperm.xlu0 %10026, %v3606
        %v10028 = vpop.permute.xlu0 %10027
        %10030 = vset.pattern.permute.xlu0 30
        %10031 = vperm.xlu0 %10030, %v3761
        %v10032 = vpop.permute.xlu0 %10031
        %10034 = vset.pattern.permute.xlu0 30
        %10035 = vperm.xlu0 %10034, %v3916
        %v10036 = vpop.permute.xlu0 %10035
        %v10038 = vmul.f32 %v1551, %v10008
        %v10039 = vmul.f32 %v1705, %v10012
        %v10040 = vmul.f32 %v1859, %v10016
        %v10041 = vmul.f32 %v2013, %v10020
        %v10042 = vmul.f32 %v2167, %v10024
        %v10043 = vmul.f32 %v2321, %v10028
        %v10044 = vmul.f32 %v2475, %v10032
        %v10045 = vmul.f32 %v2629, %v10036
        %v10046 = vadd.f32 %v9998, %v10038
        %v10047 = vadd.f32 %v9999, %v10039
        %v10048 = vadd.f32 %v10000, %v10040
        %v10049 = vadd.f32 %v10001, %v10041
        %v10050 = vadd.f32 %v10002, %v10042
        %v10051 = vadd.f32 %v10003, %v10043
        %v10052 = vadd.f32 %v10004, %v10044
        %v10053 = vadd.f32 %v10005, %v10045
        %v10054 = vmul.f32 %v1551, %v9968
        %v10055 = vmul.f32 %v1705, %v9972
        %v10056 = vmul.f32 %v1859, %v9976
        %v10057 = vmul.f32 %v2013, %v9980
        %v10058 = vmul.f32 %v2167, %v9984
        %v10059 = vmul.f32 %v2321, %v9988
        %v10060 = vmul.f32 %v2475, %v9992
        %v10061 = vmul.f32 %v2629, %v9996
        %v10062 = vmul.f32 %v312, %v10008
        %v10063 = vmul.f32 %v467, %v10012
        %v10064 = vmul.f32 %v622, %v10016
        %v10065 = vmul.f32 %v777, %v10020
        %v10066 = vmul.f32 %v932, %v10024
        %v10067 = vmul.f32 %v1087, %v10028
        %v10068 = vmul.f32 %v1242, %v10032
        %v10069 = vmul.f32 %v1397, %v10036
        %v10070 = vsub.f32 %v10054, %v10062
        %v10071 = vsub.f32 %v10055, %v10063
        %v10072 = vsub.f32 %v10056, %v10064
        %v10073 = vsub.f32 %v10057, %v10065
        %v10074 = vsub.f32 %v10058, %v10066
        %v10075 = vsub.f32 %v10059, %v10067
        %v10076 = vsub.f32 %v10060, %v10068
        %v10077 = vsub.f32 %v10061, %v10069
        %10078 = vset.pattern.permute.xlu0 31
        %10079 = vperm.xlu0 %10078, %v4070
        %v10080 = vpop.permute.xlu0 %10079
        %10082 = vset.pattern.permute.xlu0 31
        %10083 = vperm.xlu0 %10082, %v4224
        %v10084 = vpop.permute.xlu0 %10083
        %10086 = vset.pattern.permute.xlu0 31
        %10087 = vperm.xlu0 %10086, %v4378
        %v10088 = vpop.permute.xlu0 %10087
        %10090 = vset.pattern.permute.xlu0 31
        %10091 = vperm.xlu0 %10090, %v4532
        %v10092 = vpop.permute.xlu0 %10091
        %10094 = vset.pattern.permute.xlu0 31
        %10095 = vperm.xlu0 %10094, %v4686
        %v10096 = vpop.permute.xlu0 %10095
        %10098 = vset.pattern.permute.xlu0 31
        %10099 = vperm.xlu0 %10098, %v4840
        %v10100 = vpop.permute.xlu0 %10099
        %10102 = vset.pattern.permute.xlu0 31
        %10103 = vperm.xlu0 %10102, %v4994
        %v10104 = vpop.permute.xlu0 %10103
        %10106 = vset.pattern.permute.xlu0 31
        %10107 = vperm.xlu0 %10106, %v5148
        %v10108 = vpop.permute.xlu0 %10107
        %v10110 = vmul.f32 %v312, %v10080
        %v10111 = vmul.f32 %v467, %v10084
        %v10112 = vmul.f32 %v622, %v10088
        %v10113 = vmul.f32 %v777, %v10092
        %v10114 = vmul.f32 %v932, %v10096
        %v10115 = vmul.f32 %v1087, %v10100
        %v10116 = vmul.f32 %v1242, %v10104
        %v10117 = vmul.f32 %v1397, %v10108
        %10118 = vset.pattern.permute.xlu0 31
        %10119 = vperm.xlu0 %10118, %v2831
        %v10120 = vpop.permute.xlu0 %10119
        %10122 = vset.pattern.permute.xlu0 31
        %10123 = vperm.xlu0 %10122, %v2986
        %v10124 = vpop.permute.xlu0 %10123
        %10126 = vset.pattern.permute.xlu0 31
        %10127 = vperm.xlu0 %10126, %v3141
        %v10128 = vpop.permute.xlu0 %10127
        %10130 = vset.pattern.permute.xlu0 31
        %10131 = vperm.xlu0 %10130, %v3296
        %v10132 = vpop.permute.xlu0 %10131
        %10134 = vset.pattern.permute.xlu0 31
        %10135 = vperm.xlu0 %10134, %v3451
        %v10136 = vpop.permute.xlu0 %10135
        %10138 = vset.pattern.permute.xlu0 31
        %10139 = vperm.xlu0 %10138, %v3606
        %v10140 = vpop.permute.xlu0 %10139
        %10142 = vset.pattern.permute.xlu0 31
        %10143 = vperm.xlu0 %10142, %v3761
        %v10144 = vpop.permute.xlu0 %10143
        %10146 = vset.pattern.permute.xlu0 31
        %10147 = vperm.xlu0 %10146, %v3916
        %v10148 = vpop.permute.xlu0 %10147
        %v10150 = vmul.f32 %v1551, %v10120
        %v10151 = vmul.f32 %v1705, %v10124
        %v10152 = vmul.f32 %v1859, %v10128
        %v10153 = vmul.f32 %v2013, %v10132
        %v10154 = vmul.f32 %v2167, %v10136
        %v10155 = vmul.f32 %v2321, %v10140
        %v10156 = vmul.f32 %v2475, %v10144
        %v10157 = vmul.f32 %v2629, %v10148
        %v10158 = vadd.f32 %v10110, %v10150
        %v10159 = vadd.f32 %v10111, %v10151
        %v10160 = vadd.f32 %v10112, %v10152
        %v10161 = vadd.f32 %v10113, %v10153
        %v10162 = vadd.f32 %v10114, %v10154
        %v10163 = vadd.f32 %v10115, %v10155
        %v10164 = vadd.f32 %v10116, %v10156
        %v10165 = vadd.f32 %v10117, %v10157
        %v10166 = vmul.f32 %v1551, %v10080
        %v10167 = vmul.f32 %v1705, %v10084
        %v10168 = vmul.f32 %v1859, %v10088
        %v10169 = vmul.f32 %v2013, %v10092
        %v10170 = vmul.f32 %v2167, %v10096
        %v10171 = vmul.f32 %v2321, %v10100
        %v10172 = vmul.f32 %v2475, %v10104
        %v10173 = vmul.f32 %v2629, %v10108
        %v10174 = vmul.f32 %v312, %v10120
        %v10175 = vmul.f32 %v467, %v10124
        %v10176 = vmul.f32 %v622, %v10128
        %v10177 = vmul.f32 %v777, %v10132
        %v10178 = vmul.f32 %v932, %v10136
        %v10179 = vmul.f32 %v1087, %v10140
        %v10180 = vmul.f32 %v1242, %v10144
        %v10181 = vmul.f32 %v1397, %v10148
        %v10182 = vsub.f32 %v10166, %v10174
        %v10183 = vsub.f32 %v10167, %v10175
        %v10184 = vsub.f32 %v10168, %v10176
        %v10185 = vsub.f32 %v10169, %v10177
        %v10186 = vsub.f32 %v10170, %v10178
        %v10187 = vsub.f32 %v10171, %v10179
        %v10188 = vsub.f32 %v10172, %v10180
        %v10189 = vsub.f32 %v10173, %v10181
        %10198 = vrot.lane.b32.xlu0 %v10158, 64
        %v10199 = vpop.permute.xlu0 %10198
        %10200 = vrot.lane.b32.xlu0 %v10159, 64
        %v10201 = vpop.permute.xlu0 %10200
        %10202 = vrot.lane.b32.xlu0 %v10160, 64
        %v10203 = vpop.permute.xlu0 %10202
        %10204 = vrot.lane.b32.xlu0 %v10161, 64
        %v10205 = vpop.permute.xlu0 %10204
        %10206 = vrot.lane.b32.xlu0 %v10162, 64
        %v10207 = vpop.permute.xlu0 %10206
        %10208 = vrot.lane.b32.xlu0 %v10163, 64
        %v10209 = vpop.permute.xlu0 %10208
        %10210 = vrot.lane.b32.xlu0 %v10164, 64
        %v10211 = vpop.permute.xlu0 %10210
        %10212 = vrot.lane.b32.xlu0 %v10165, 64
        %v10213 = vpop.permute.xlu0 %10212
        %v10222 = vsel %vm5421, %v10046, %v10199
        %v10223 = vsel %vm5421, %v10047, %v10201
        %v10224 = vsel %vm5421, %v10048, %v10203
        %v10225 = vsel %vm5421, %v10049, %v10205
        %v10226 = vsel %vm5421, %v10050, %v10207
        %v10227 = vsel %vm5421, %v10051, %v10209
        %v10228 = vsel %vm5421, %v10052, %v10211
        %v10229 = vsel %vm5421, %v10053, %v10213
        %10238 = vrot.lane.b32.xlu0 %v10182, 64
        %v10239 = vpop.permute.xlu0 %10238
        %10240 = vrot.lane.b32.xlu0 %v10183, 64
        %v10241 = vpop.permute.xlu0 %10240
        %10242 = vrot.lane.b32.xlu0 %v10184, 64
        %v10243 = vpop.permute.xlu0 %10242
        %10244 = vrot.lane.b32.xlu0 %v10185, 64
        %v10245 = vpop.permute.xlu0 %10244
        %10246 = vrot.lane.b32.xlu0 %v10186, 64
        %v10247 = vpop.permute.xlu0 %10246
        %10248 = vrot.lane.b32.xlu0 %v10187, 64
        %v10249 = vpop.permute.xlu0 %10248
        %10250 = vrot.lane.b32.xlu0 %v10188, 64
        %v10251 = vpop.permute.xlu0 %10250
        %10252 = vrot.lane.b32.xlu0 %v10189, 64
        %v10253 = vpop.permute.xlu0 %10252
        %v10262 = vsel %vm5421, %v10070, %v10239
        %v10263 = vsel %vm5421, %v10071, %v10241
        %v10264 = vsel %vm5421, %v10072, %v10243
        %v10265 = vsel %vm5421, %v10073, %v10245
        %v10266 = vsel %vm5421, %v10074, %v10247
        %v10267 = vsel %vm5421, %v10075, %v10249
        %v10268 = vsel %vm5421, %v10076, %v10251
        %v10269 = vsel %vm5421, %v10077, %v10253
        %10270 = vst [vmem:[%s94 + $0x78] sm:$0xff] %v10222
        %10271 = vst [vmem:[%s94 + $0xf8] sm:$0xff] %v10223
        %10272 = vst [vmem:[%s94 + $0x178] sm:$0xff] %v10224
        %10273 = vst [vmem:[%s94 + $0x1f8] sm:$0xff] %v10225
        %10274 = vst [vmem:[%s94 + $0x278] sm:$0xff] %v10226
        %10275 = vst [vmem:[%s94 + $0x2f8] sm:$0xff] %v10227
        %10276 = vst [vmem:[%s94 + $0x378] sm:$0xff] %v10228
        %10277 = vst [vmem:[%s94 + $0x3f8] sm:$0xff] %v10229
        %10278 = vst [vmem:[%s94 + $0x478] sm:$0xff] %v10262
        %10279 = vst [vmem:[%s94 + $0x4f8] sm:$0xff] %v10263
        %10280 = vst [vmem:[%s94 + $0x578] sm:$0xff] %v10264
        %10281 = vst [vmem:[%s94 + $0x5f8] sm:$0xff] %v10265
        %10282 = vst [vmem:[%s94 + $0x678] sm:$0xff] %v10266
        %10283 = vst [vmem:[%s94 + $0x6f8] sm:$0xff] %v10267
        %10284 = vst [vmem:[%s94 + $0x778] sm:$0xff] %v10268
        %10285 = vst [vmem:[%s94 + $0x7f8] sm:$0xff] %v10269
        %s10286 = sand.u32 %s44, 1
        %s10287 = scalar_lea.sflag [#allocation3], %s10286
        %s10288 = sand.u32 %s44, 1
        %s10289 = smul.addr %s10288, 2048
        %s10290 = scalar_lea.vmem [#allocation2], %s10289
        // Predicated region
        $region25: #{tpu_custom_call.1} parent=23 // pred_check
          %p10291 = pneg %p54
        $region26: #{tpu_custom_call.1} parent=23 // pred_check_branch
          %10293 = sbr.rel (%p10291) target = $region28
        $region27: #{tpu_custom_call.1} parent=23 // pred_region
          %s10294 = smul.u32 16, %s15
          %10296 = vsyncadd %s10287, 0
          %s10297 = smul.addr %s10294, 8
          %s10298 = scalar_lea.hbm %s1, %s10297
          %s10299 = sshll.u32 %s10290, 4
          %s10300 = int_to_ptr.vmem [resolvable:$true] %s10299
          %s10301 = sshll.u32 %s10298, 4
          %s10302 = int_to_ptr.hbm [resolvable:$true] %s10301
          %10307 = dma.vmem_to_hbm [thread:$0]  %s10300, 32768, %s10302, %s10287, 2048, 4096, 128
        $region28: #{tpu_custom_call.1} parent=23 // pred_fallthru
          _
      $region24: #{tpu_custom_call.1} parent=5 // pred_fallthru
        _
      %p10308 = scmp.le.s32.totalorder 2, %s10
      // Predicated region
      $region29: #{tpu_custom_call.1} parent=5 // pred_check
        %p10309 = pneg %p10308
      $region30: #{tpu_custom_call.1} parent=5 // pred_check_branch
        %10311 = sbr.rel (%p10309) target = $region32
      $region31: #{tpu_custom_call.1} parent=5 // pred_region
        %s10312 = ssub.s32 %s10, 2
        // Predicated region
        $region33: #{tpu_custom_call.1} parent=31 // pred_check
          %p10313 = pneg %p60
        $region34: #{tpu_custom_call.1} parent=31 // pred_check_branch
          %10315 = sbr.rel (%p10313) target = $region36
        $region35: #{tpu_custom_call.1} parent=31 // pred_region
          %s10316 = sand.u32 %s45, 1
          %s10317 = scalar_lea.sflag [#allocation3], %s10316
          %s10318 = sand.u32 %s45, 1
          %s10319 = smul.addr %s10318, 2048
          %s10320 = scalar_lea.vmem [#allocation2], %s10319
          %10322 = dma.done %s10317, 32768
        $region36: #{tpu_custom_call.1} parent=31 // pred_fallthru
          _
      $region32: #{tpu_custom_call.1} parent=5 // pred_fallthru
        _
    $region6: #{tpu_custom_call.1} parent=1 // loop_footer
      %s14 = sadd.s32 1, %s10
    $region7: #{tpu_custom_call.1} parent=1 // loop_footer_branch
      %9 = sbr.rel target = $region3
    $region8: #{tpu_custom_call.1} parent=1 // loop_exit
      _
    %10323 = vsyncpa [#allocation3], 1
    %s10324 = scalar_lea.sflag [#allocation3], 1
    %10325 = vsyncpa %s10324, 1

</llo_original>
